<compile_context>
chip_gen: v5e
topology: v5e:2x2
jax: 0.10.0
libtpu: 0.0.40
codegen_flags: <defaults>
</compile_context>

<pallas_src>
import jax
import jax.numpy as jnp
from jax import lax
from jax.experimental import pallas as pl
from jax.experimental.pallas import tpu as pltpu

KH = KW = 3   # 3x3 convolutions, padding=1
LANE = 128


def _round_up(x, m):
    return ((x + m - 1) // m) * m


def resblock_kernel(x_ref, w1_ref, w2_ref, b1_ref, b2_ref, o_ref, buf_ref):
    """One batch element per grid step.

    x_ref  : (1, H, W, C)    raw activation, f32 (C may be < Cp)
    w1_ref : (9, Cp, Cp)     conv1 per-tap weights, BN1 scale folded, bf16
    w2_ref : (9, Cp, Cp)     conv2 per-tap weights, BN2 scale folded, bf16
    b1_ref : (1, Cp)         BN1 folded bias, f32
    b2_ref : (1, Cp)         BN2 folded bias, f32
    o_ref  : (1, H, W, Cp)   output, f32
    buf_ref: (H+2, Wp2, Cp)  VMEM scratch reused for padded input and padded
                             conv1 intermediate, bf16 (Wp2 = round_up(W+2, 8))
    """
    H, W, Cp = o_ref.shape[1], o_ref.shape[2], o_ref.shape[3]
    C = x_ref.shape[3]
    Wp2 = buf_ref.shape[1]
    cdtype = buf_ref.dtype

    # ---- stage the zero-padded, bf16-cast input into the VMEM scratch ----
    xin = x_ref[0].astype(cdtype)                                   # (H, W, C)
    if C < Cp:
        # Lane-sparse demo case: zero everything (halo border + padded
        # channels), then drop the real channels in with one masked store.
        buf_ref[...] = jnp.zeros(buf_ref.shape, cdtype)
        buf_ref[1:H + 1, 1:W + 1, :C] = xin
    else:
        # Real-model case (C == Cp): only the 1-px halo border needs zeroing
        # each step; the interior is fully overwritten below.
        buf_ref[0:1, :, :] = jnp.zeros((1, Wp2, Cp), cdtype)
        buf_ref[H + 1:H + 2, :, :] = jnp.zeros((1, Wp2, Cp), cdtype)
        buf_ref[:, 0:1, :] = jnp.zeros((H + 2, 1, Cp), cdtype)
        buf_ref[:, W + 1:W + 2, :] = jnp.zeros((H + 2, 1, Cp), cdtype)
        buf_ref[1:H + 1, 1:W + 1, :] = xin

    def conv3x3(w_ref):
        # 9 accumulated MXU matmuls (K = Cp), reading window slices straight
        # from the padded buffer -- no im2col patch matrix.
        acc = jnp.zeros((H * W, Cp), jnp.float32)
        for ky in range(KH):
            for kx in range(KW):
                tap = buf_ref[ky:ky + H, kx:kx + W, :].reshape(H * W, Cp)
                acc = acc + jnp.dot(tap, w_ref[ky * KW + kx],
                                    preferred_element_type=jnp.float32)
        return acc

    # ---- conv1 (BN1 scale folded) + bias + ReLU (f32 elementwise) ----
    y1 = jnp.maximum(conv3x3(w1_ref) + b1_ref[...], 0.0)           # (H*W, Cp)

    # identity shortcut: centre tap of the padded (bf16-cast) input, read
    # before the buffer gets overwritten with the conv1 intermediate.
    res = buf_ref[1:H + 1, 1:W + 1, :].reshape(H * W, Cp).astype(jnp.float32)

    # ---- overwrite the interior of the same scratch with the intermediate ----
    buf_ref[1:H + 1, 1:W + 1, :] = y1.astype(cdtype).reshape(H, W, Cp)

    # ---- conv2 (BN2 scale folded) + bias + residual + final ReLU ----
    y2 = conv3x3(w2_ref)
    out = jnp.maximum(y2 + b2_ref[...] + res, 0.0)
    o_ref[...] = out.reshape(1, H, W, Cp).astype(o_ref.dtype)


def residual_block(x_nhwc, w1_folded, b1, w2_folded, b2,
                   compute_dtype=jnp.bfloat16):
    """x_nhwc: (N, H, W, C) f32.  Conv weights HWIO (BN scale folded).
    Returns (N, H, W, C) f32."""
    N, H, W, C = x_nhwc.shape
    assert w1_folded.shape[-1] == C, "identity shortcut requires Cin == Cout"

    Cp = _round_up(C, LANE)          # lane-dense channel count
    Wp2 = _round_up(W + 2, 8)        # sublane-aligned scratch row pitch

    def pack_weight(w):
        # (3,3,C,C) HWIO -> zero-pad channels -> (9, Cp, Cp) per-tap matrices
        wp = jnp.pad(w, ((0, 0), (0, 0), (0, Cp - C), (0, Cp - C)))
        return wp.reshape(KH * KW, Cp, Cp).astype(compute_dtype)

    w1m = pack_weight(w1_folded)
    w2m = pack_weight(w2_folded)
    b1p = jnp.pad(b1.reshape(1, C), ((0, 0), (0, Cp - C))).astype(jnp.float32)
    b2p = jnp.pad(b2.reshape(1, C), ((0, 0), (0, Cp - C))).astype(jnp.float32)

    out_p = pl.pallas_call(
        resblock_kernel,
        out_shape=jax.ShapeDtypeStruct((N, H, W, Cp), jnp.float32),
        grid_spec=pltpu.PrefetchScalarGridSpec(
            num_scalar_prefetch=0,
            grid=(N,),
            in_specs=[
                pl.BlockSpec((1, H, W, C), lambda n: (n, 0, 0, 0)),
                pl.BlockSpec((KH * KW, Cp, Cp), lambda n: (0, 0, 0)),
                pl.BlockSpec((KH * KW, Cp, Cp), lambda n: (0, 0, 0)),
                pl.BlockSpec((1, Cp), lambda n: (0, 0)),
                pl.BlockSpec((1, Cp), lambda n: (0, 0)),
            ],
            out_specs=pl.BlockSpec((1, H, W, Cp), lambda n: (n, 0, 0, 0)),
            scratch_shapes=[pltpu.VMEM((H + 2, Wp2, Cp), compute_dtype)],
        ),
        compiler_params=pltpu.CompilerParams(
            dimension_semantics=("parallel",)),
    )(x_nhwc.astype(jnp.float32), w1m, w2m, b1p, b2p)

    # drop padded channels only when padding was actually added (glue)
    return out_p[..., :C] if C != Cp else out_p


def reference_block(x_nhwc, w1_folded, b1, w2_folded, b2):
    """Pure-JAX reference matching the kernel's bf16-operand / f32-accum math."""
    dn = ("NHWC", "HWIO", "NHWC")
    q = lambda a: a.astype(jnp.bfloat16).astype(jnp.float32)
    xq = q(x_nhwc)
    y = lax.conv_general_dilated(xq, q(w1_folded), (1, 1), "SAME",
                                 dimension_numbers=dn,
                                 precision=lax.Precision.HIGHEST)
    y = jax.nn.relu(y + b1.reshape(1, 1, 1, -1))
    y2 = lax.conv_general_dilated(q(y), q(w2_folded), (1, 1), "SAME",
                                  dimension_numbers=dn,
                                  precision=lax.Precision.HIGHEST)
    return jax.nn.relu(y2 + b2.reshape(1, 1, 1, -1) + xq)


if __name__ == "__main__":
    # small shapes consistent with the module
    N, C, H, W = 2, 4, 16, 16   # inchannel == outchannel == 4, stride = 1
    eps = 1e-5

    key = jax.random.PRNGKey(0)
    keys = jax.random.split(key, 10)

    # deterministic synthetic parameters (HWIO conv weights; PyTorch is OIHW)
    x_nchw = jax.random.normal(keys[0], (N, C, H, W), jnp.float32)
    w1 = jax.random.normal(keys[1], (KH, KW, C, C), jnp.float32) * 0.1
    w2 = jax.random.normal(keys[2], (KH, KW, C, C), jnp.float32) * 0.1

    gamma1 = 1.0 + 0.1 * jax.random.normal(keys[3], (C,), jnp.float32)
    beta1 = 0.1 * jax.random.normal(keys[4], (C,), jnp.float32)
    mean1 = 0.1 * jax.random.normal(keys[5], (C,), jnp.float32)
    var1 = jax.random.uniform(keys[6], (C,), jnp.float32, 0.5, 1.5)

    gamma2 = 1.0 + 0.1 * jax.random.normal(keys[7], (C,), jnp.float32)
    beta2 = 0.1 * jax.random.normal(keys[8], (C,), jnp.float32)
    mean2 = 0.1 * jax.random.normal(keys[9], (C,), jnp.float32)
    var2 = jnp.linspace(0.6, 1.4, C, dtype=jnp.float32)

    # fold BatchNorm (inference form) into conv weights / biases
    scale1 = gamma1 / jnp.sqrt(var1 + eps)
    bias1 = beta1 - mean1 * scale1
    w1_folded = w1 * scale1[None, None, None, :]

    scale2 = gamma2 / jnp.sqrt(var2 + eps)
    bias2 = beta2 - mean2 * scale2
    w2_folded = w2 * scale2[None, None, None, :]

    # NCHW (PyTorch) -> NHWC (kernel layout)
    x_nhwc = jnp.transpose(x_nchw, (0, 2, 3, 1))

    out = residual_block(x_nhwc, w1_folded, bias1, w2_folded, bias2)
    out = jax.block_until_ready(out)

    ref = reference_block(x_nhwc, w1_folded, bias1, w2_folded, bias2)
    ref = jax.block_until_ready(ref)

    assert out.shape == (N, H, W, C)
    if not jnp.allclose(out, ref, atol=2e-2, rtol=2e-2):
        raise AssertionError("Pallas kernel does not match reference")

    print("KERNEL_OK")
</pallas_src>

<mosaic_0001>
module attributes {stable_mosaic.version = 11 : i64} {
  func.func @resblock_kernel(%arg0: i32, %arg1: memref<1x16x16x4xf32, #tpu.memory_space<vmem>>, %arg2: memref<9x128x128xbf16, #tpu.memory_space<vmem>>, %arg3: memref<9x128x128xbf16, #tpu.memory_space<vmem>>, %arg4: memref<1x128xf32, #tpu.memory_space<vmem>>, %arg5: memref<1x128xf32, #tpu.memory_space<vmem>>, %arg6: memref<1x16x16x128xf32, #tpu.memory_space<vmem>>, %arg7: memref<18x24x128xbf16, #tpu.memory_space<vmem>>) attributes {dimension_semantics = [#tpu.dimension_semantics<parallel>], iteration_bounds = array<i64: 2>, scalar_prefetch = 0 : i64, scratch_operands = 1 : i64, tpu.core_type = #tpu.core_type<tc>, window_params = [{transform_indices = @transform_0, window_bounds = array<i64: 1, 16, 16, 4>}, {pipeline_mode = #tpu.pipeline_mode<synchronous>, transform_indices = @transform_1, window_bounds = array<i64: 9, 128, 128>}, {pipeline_mode = #tpu.pipeline_mode<synchronous>, transform_indices = @transform_2, window_bounds = array<i64: 9, 128, 128>}, {pipeline_mode = #tpu.pipeline_mode<synchronous>, transform_indices = @transform_3, window_bounds = array<i64: 1, 128>}, {pipeline_mode = #tpu.pipeline_mode<synchronous>, transform_indices = @transform_4, window_bounds = array<i64: 1, 128>}, {transform_indices = @transform_5, window_bounds = array<i64: 1, 16, 16, 128>}]} {
    %c0 = arith.constant 0 : index
    %c0_0 = arith.constant 0 : index
    %c0_1 = arith.constant 0 : index
    %c0_2 = arith.constant 0 : index
    %0 = vector.load %arg1[%c0, %c0_0, %c0_1, %c0_2] : memref<1x16x16x4xf32, #tpu.memory_space<vmem>>, vector<1x16x16x4xf32>
    %1 = vector.shape_cast %0 : vector<1x16x16x4xf32> to vector<16x16x4xf32>
    %2 = arith.truncf %1 : vector<16x16x4xf32> to vector<16x16x4xbf16>
    %cst = arith.constant 0.000000e+00 : bf16
    %3 = vector.broadcast %cst : bf16 to vector<18x24x128xbf16>
    %c0_3 = arith.constant 0 : index
    %c0_4 = arith.constant 0 : index
    %c0_5 = arith.constant 0 : index
    %4 = vector.load %arg7[%c0_3, %c0_4, %c0_5] : memref<18x24x128xbf16, #tpu.memory_space<vmem>>, vector<18x24x128xbf16>
    tpu.vector_store %arg7[%c0_3, %c0_4, %c0_5], %3 {strides = array<i32>} : memref<18x24x128xbf16, #tpu.memory_space<vmem>>, vector<18x24x128xbf16>,
    %c1 = arith.constant 1 : index
    %c1_6 = arith.constant 1 : index
    %c0_7 = arith.constant 0 : index
    %5 = vector.load %arg7[%c1, %c1_6, %c0_7] : memref<18x24x128xbf16, #tpu.memory_space<vmem>>, vector<16x16x4xbf16>
    tpu.vector_store %arg7[%c1, %c1_6, %c0_7], %2 {strides = array<i32>} : memref<18x24x128xbf16, #tpu.memory_space<vmem>>, vector<16x16x4xbf16>,
    %cst_8 = arith.constant 0.000000e+00 : f32
    %6 = vector.broadcast %cst_8 : f32 to vector<256x128xf32>
    %c0_9 = arith.constant 0 : index
    %c0_10 = arith.constant 0 : index
    %c0_11 = arith.constant 0 : index
    %7 = vector.load %arg7[%c0_9, %c0_10, %c0_11] : memref<18x24x128xbf16, #tpu.memory_space<vmem>>, vector<16x16x128xbf16>
    %8 = vector.shape_cast %7 : vector<16x16x128xbf16> to vector<256x128xbf16>
    %c0_12 = arith.constant 0 : index
    %c0_13 = arith.constant 0 : index
    %c0_14 = arith.constant 0 : index
    %9 = vector.load %arg2[%c0_12, %c0_13, %c0_14] : memref<9x128x128xbf16, #tpu.memory_space<vmem>>, vector<1x128x128xbf16>
    %10 = vector.shape_cast %9 : vector<1x128x128xbf16> to vector<128x128xbf16>
    %cst_15 = arith.constant dense<0.000000e+00> : vector<256x128xf32>
    %11 = tpu.matmul %8, %10, %cst_15 {dimension_numbers = #tpu.dot_dimension_numbers<[1], [0], [0], [1], [0, 0, 1, 1], [], []>} : vector<256x128xbf16>, vector<128x128xbf16>, vector<256x128xf32> -> vector<256x128xf32>
    %12 = arith.addf %6, %11 : vector<256x128xf32>
    %c0_16 = arith.constant 0 : index
    %c1_17 = arith.constant 1 : index
    %c0_18 = arith.constant 0 : index
    %13 = vector.load %arg7[%c0_16, %c1_17, %c0_18] : memref<18x24x128xbf16, #tpu.memory_space<vmem>>, vector<16x16x128xbf16>
    %14 = vector.shape_cast %13 : vector<16x16x128xbf16> to vector<256x128xbf16>
    %c1_19 = arith.constant 1 : index
    %c0_20 = arith.constant 0 : index
    %c0_21 = arith.constant 0 : index
    %15 = vector.load %arg2[%c1_19, %c0_20, %c0_21] : memref<9x128x128xbf16, #tpu.memory_space<vmem>>, vector<1x128x128xbf16>
    %16 = vector.shape_cast %15 : vector<1x128x128xbf16> to vector<128x128xbf16>
    %cst_22 = arith.constant dense<0.000000e+00> : vector<256x128xf32>
    %17 = tpu.matmul %14, %16, %cst_22 {dimension_numbers = #tpu.dot_dimension_numbers<[1], [0], [0], [1], [0, 0, 1, 1], [], []>} : vector<256x128xbf16>, vector<128x128xbf16>, vector<256x128xf32> -> vector<256x128xf32>
    %18 = arith.addf %12, %17 : vector<256x128xf32>
    %c0_23 = arith.constant 0 : index
    %c2 = arith.constant 2 : index
    %c0_24 = arith.constant 0 : index
    %19 = vector.load %arg7[%c0_23, %c2, %c0_24] : memref<18x24x128xbf16, #tpu.memory_space<vmem>>, vector<16x16x128xbf16>
    %20 = vector.shape_cast %19 : vector<16x16x128xbf16> to vector<256x128xbf16>
    %c2_25 = arith.constant 2 : index
    %c0_26 = arith.constant 0 : index
    %c0_27 = arith.constant 0 : index
    %21 = vector.load %arg2[%c2_25, %c0_26, %c0_27] : memref<9x128x128xbf16, #tpu.memory_space<vmem>>, vector<1x128x128xbf16>
    %22 = vector.shape_cast %21 : vector<1x128x128xbf16> to vector<128x128xbf16>
    %cst_28 = arith.constant dense<0.000000e+00> : vector<256x128xf32>
    %23 = tpu.matmul %20, %22, %cst_28 {dimension_numbers = #tpu.dot_dimension_numbers<[1], [0], [0], [1], [0, 0, 1, 1], [], []>} : vector<256x128xbf16>, vector<128x128xbf16>, vector<256x128xf32> -> vector<256x128xf32>
    %24 = arith.addf %18, %23 : vector<256x128xf32>
    %c1_29 = arith.constant 1 : index
    %c0_30 = arith.constant 0 : index
    %c0_31 = arith.constant 0 : index
    %25 = vector.load %arg7[%c1_29, %c0_30, %c0_31] : memref<18x24x128xbf16, #tpu.memory_space<vmem>>, vector<16x16x128xbf16>
    %26 = vector.shape_cast %25 : vector<16x16x128xbf16> to vector<256x128xbf16>
    %c3 = arith.constant 3 : index
    %c0_32 = arith.constant 0 : index
    %c0_33 = arith.constant 0 : index
    %27 = vector.load %arg2[%c3, %c0_32, %c0_33] : memref<9x128x128xbf16, #tpu.memory_space<vmem>>, vector<1x128x128xbf16>
    %28 = vector.shape_cast %27 : vector<1x128x128xbf16> to vector<128x128xbf16>
    %cst_34 = arith.constant dense<0.000000e+00> : vector<256x128xf32>
    %29 = tpu.matmul %26, %28, %cst_34 {dimension_numbers = #tpu.dot_dimension_numbers<[1], [0], [0], [1], [0, 0, 1, 1], [], []>} : vector<256x128xbf16>, vector<128x128xbf16>, vector<256x128xf32> -> vector<256x128xf32>
    %30 = arith.addf %24, %29 : vector<256x128xf32>
    %c1_35 = arith.constant 1 : index
    %c1_36 = arith.constant 1 : index
    %c0_37 = arith.constant 0 : index
    %31 = vector.load %arg7[%c1_35, %c1_36, %c0_37] : memref<18x24x128xbf16, #tpu.memory_space<vmem>>, vector<16x16x128xbf16>
    %32 = vector.shape_cast %31 : vector<16x16x128xbf16> to vector<256x128xbf16>
    %c4 = arith.constant 4 : index
    %c0_38 = arith.constant 0 : index
    %c0_39 = arith.constant 0 : index
    %33 = vector.load %arg2[%c4, %c0_38, %c0_39] : memref<9x128x128xbf16, #tpu.memory_space<vmem>>, vector<1x128x128xbf16>
    %34 = vector.shape_cast %33 : vector<1x128x128xbf16> to vector<128x128xbf16>
    %cst_40 = arith.constant dense<0.000000e+00> : vector<256x128xf32>
    %35 = tpu.matmul %32, %34, %cst_40 {dimension_numbers = #tpu.dot_dimension_numbers<[1], [0], [0], [1], [0, 0, 1, 1], [], []>} : vector<256x128xbf16>, vector<128x128xbf16>, vector<256x128xf32> -> vector<256x128xf32>
    %36 = arith.addf %30, %35 : vector<256x128xf32>
    %c1_41 = arith.constant 1 : index
    %c2_42 = arith.constant 2 : index
    %c0_43 = arith.constant 0 : index
    %37 = vector.load %arg7[%c1_41, %c2_42, %c0_43] : memref<18x24x128xbf16, #tpu.memory_space<vmem>>, vector<16x16x128xbf16>
    %38 = vector.shape_cast %37 : vector<16x16x128xbf16> to vector<256x128xbf16>
    %c5 = arith.constant 5 : index
    %c0_44 = arith.constant 0 : index
    %c0_45 = arith.constant 0 : index
    %39 = vector.load %arg2[%c5, %c0_44, %c0_45] : memref<9x128x128xbf16, #tpu.memory_space<vmem>>, vector<1x128x128xbf16>
    %40 = vector.shape_cast %39 : vector<1x128x128xbf16> to vector<128x128xbf16>
    %cst_46 = arith.constant dense<0.000000e+00> : vector<256x128xf32>
    %41 = tpu.matmul %38, %40, %cst_46 {dimension_numbers = #tpu.dot_dimension_numbers<[1], [0], [0], [1], [0, 0, 1, 1], [], []>} : vector<256x128xbf16>, vector<128x128xbf16>, vector<256x128xf32> -> vector<256x128xf32>
    %42 = arith.addf %36, %41 : vector<256x128xf32>
    %c2_47 = arith.constant 2 : index
    %c0_48 = arith.constant 0 : index
    %c0_49 = arith.constant 0 : index
    %43 = vector.load %arg7[%c2_47, %c0_48, %c0_49] : memref<18x24x128xbf16, #tpu.memory_space<vmem>>, vector<16x16x128xbf16>
    %44 = vector.shape_cast %43 : vector<16x16x128xbf16> to vector<256x128xbf16>
    %c6 = arith.constant 6 : index
    %c0_50 = arith.constant 0 : index
    %c0_51 = arith.constant 0 : index
    %45 = vector.load %arg2[%c6, %c0_50, %c0_51] : memref<9x128x128xbf16, #tpu.memory_space<vmem>>, vector<1x128x128xbf16>
    %46 = vector.shape_cast %45 : vector<1x128x128xbf16> to vector<128x128xbf16>
    %cst_52 = arith.constant dense<0.000000e+00> : vector<256x128xf32>
    %47 = tpu.matmul %44, %46, %cst_52 {dimension_numbers = #tpu.dot_dimension_numbers<[1], [0], [0], [1], [0, 0, 1, 1], [], []>} : vector<256x128xbf16>, vector<128x128xbf16>, vector<256x128xf32> -> vector<256x128xf32>
    %48 = arith.addf %42, %47 : vector<256x128xf32>
    %c2_53 = arith.constant 2 : index
    %c1_54 = arith.constant 1 : index
    %c0_55 = arith.constant 0 : index
    %49 = vector.load %arg7[%c2_53, %c1_54, %c0_55] : memref<18x24x128xbf16, #tpu.memory_space<vmem>>, vector<16x16x128xbf16>
    %50 = vector.shape_cast %49 : vector<16x16x128xbf16> to vector<256x128xbf16>
    %c7 = arith.constant 7 : index
    %c0_56 = arith.constant 0 : index
    %c0_57 = arith.constant 0 : index
    %51 = vector.load %arg2[%c7, %c0_56, %c0_57] : memref<9x128x128xbf16, #tpu.memory_space<vmem>>, vector<1x128x128xbf16>
    %52 = vector.shape_cast %51 : vector<1x128x128xbf16> to vector<128x128xbf16>
    %cst_58 = arith.constant dense<0.000000e+00> : vector<256x128xf32>
    %53 = tpu.matmul %50, %52, %cst_58 {dimension_numbers = #tpu.dot_dimension_numbers<[1], [0], [0], [1], [0, 0, 1, 1], [], []>} : vector<256x128xbf16>, vector<128x128xbf16>, vector<256x128xf32> -> vector<256x128xf32>
    %54 = arith.addf %48, %53 : vector<256x128xf32>
    %c2_59 = arith.constant 2 : index
    %c2_60 = arith.constant 2 : index
    %c0_61 = arith.constant 0 : index
    %55 = vector.load %arg7[%c2_59, %c2_60, %c0_61] : memref<18x24x128xbf16, #tpu.memory_space<vmem>>, vector<16x16x128xbf16>
    %56 = vector.shape_cast %55 : vector<16x16x128xbf16> to vector<256x128xbf16>
    %c8 = arith.constant 8 : index
    %c0_62 = arith.constant 0 : index
    %c0_63 = arith.constant 0 : index
    %57 = vector.load %arg2[%c8, %c0_62, %c0_63] : memref<9x128x128xbf16, #tpu.memory_space<vmem>>, vector<1x128x128xbf16>
    %58 = vector.shape_cast %57 : vector<1x128x128xbf16> to vector<128x128xbf16>
    %cst_64 = arith.constant dense<0.000000e+00> : vector<256x128xf32>
    %59 = tpu.matmul %56, %58, %cst_64 {dimension_numbers = #tpu.dot_dimension_numbers<[1], [0], [0], [1], [0, 0, 1, 1], [], []>} : vector<256x128xbf16>, vector<128x128xbf16>, vector<256x128xf32> -> vector<256x128xf32>
    %60 = arith.addf %54, %59 : vector<256x128xf32>
    %c0_65 = arith.constant 0 : index
    %c0_66 = arith.constant 0 : index
    %61 = vector.load %arg4[%c0_65, %c0_66] : memref<1x128xf32, #tpu.memory_space<vmem>>, vector<1x128xf32>
    %62 = vector.broadcast %61 : vector<1x128xf32> to vector<256x128xf32>
    %63 = arith.addf %60, %62 : vector<256x128xf32>
    %cst_67 = arith.constant 0.000000e+00 : f32
    %64 = vector.broadcast %cst_67 : f32 to vector<256x128xf32>
    %65 = arith.maximumf %63, %64 : vector<256x128xf32>
    %c1_68 = arith.constant 1 : index
    %c1_69 = arith.constant 1 : index
    %c0_70 = arith.constant 0 : index
    %66 = vector.load %arg7[%c1_68, %c1_69, %c0_70] : memref<18x24x128xbf16, #tpu.memory_space<vmem>>, vector<16x16x128xbf16>
    %67 = vector.shape_cast %66 : vector<16x16x128xbf16> to vector<256x128xbf16>
    %68 = arith.extf %67 : vector<256x128xbf16> to vector<256x128xf32>
    %69 = arith.truncf %65 : vector<256x128xf32> to vector<256x128xbf16>
    %70 = vector.shape_cast %69 : vector<256x128xbf16> to vector<16x16x128xbf16>
    %c1_71 = arith.constant 1 : index
    %c1_72 = arith.constant 1 : index
    %c0_73 = arith.constant 0 : index
    %71 = vector.load %arg7[%c1_71, %c1_72, %c0_73] : memref<18x24x128xbf16, #tpu.memory_space<vmem>>, vector<16x16x128xbf16>
    tpu.vector_store %arg7[%c1_71, %c1_72, %c0_73], %70 {strides = array<i32>} : memref<18x24x128xbf16, #tpu.memory_space<vmem>>, vector<16x16x128xbf16>,
    %cst_74 = arith.constant 0.000000e+00 : f32
    %72 = vector.broadcast %cst_74 : f32 to vector<256x128xf32>
    %c0_75 = arith.constant 0 : index
    %c0_76 = arith.constant 0 : index
    %c0_77 = arith.constant 0 : index
    %73 = vector.load %arg7[%c0_75, %c0_76, %c0_77] : memref<18x24x128xbf16, #tpu.memory_space<vmem>>, vector<16x16x128xbf16>
    %74 = vector.shape_cast %73 : vector<16x16x128xbf16> to vector<256x128xbf16>
    %c0_78 = arith.constant 0 : index
    %c0_79 = arith.constant 0 : index
    %c0_80 = arith.constant 0 : index
    %75 = vector.load %arg3[%c0_78, %c0_79, %c0_80] : memref<9x128x128xbf16, #tpu.memory_space<vmem>>, vector<1x128x128xbf16>
    %76 = vector.shape_cast %75 : vector<1x128x128xbf16> to vector<128x128xbf16>
    %cst_81 = arith.constant dense<0.000000e+00> : vector<256x128xf32>
    %77 = tpu.matmul %74, %76, %cst_81 {dimension_numbers = #tpu.dot_dimension_numbers<[1], [0], [0], [1], [0, 0, 1, 1], [], []>} : vector<256x128xbf16>, vector<128x128xbf16>, vector<256x128xf32> -> vector<256x128xf32>
    %78 = arith.addf %72, %77 : vector<256x128xf32>
    %c0_82 = arith.constant 0 : index
    %c1_83 = arith.constant 1 : index
    %c0_84 = arith.constant 0 : index
    %79 = vector.load %arg7[%c0_82, %c1_83, %c0_84] : memref<18x24x128xbf16, #tpu.memory_space<vmem>>, vector<16x16x128xbf16>
    %80 = vector.shape_cast %79 : vector<16x16x128xbf16> to vector<256x128xbf16>
    %c1_85 = arith.constant 1 : index
    %c0_86 = arith.constant 0 : index
    %c0_87 = arith.constant 0 : index
    %81 = vector.load %arg3[%c1_85, %c0_86, %c0_87] : memref<9x128x128xbf16, #tpu.memory_space<vmem>>, vector<1x128x128xbf16>
    %82 = vector.shape_cast %81 : vector<1x128x128xbf16> to vector<128x128xbf16>
    %cst_88 = arith.constant dense<0.000000e+00> : vector<256x128xf32>
    %83 = tpu.matmul %80, %82, %cst_88 {dimension_numbers = #tpu.dot_dimension_numbers<[1], [0], [0], [1], [0, 0, 1, 1], [], []>} : vector<256x128xbf16>, vector<128x128xbf16>, vector<256x128xf32> -> vector<256x128xf32>
    %84 = arith.addf %78, %83 : vector<256x128xf32>
    %c0_89 = arith.constant 0 : index
    %c2_90 = arith.constant 2 : index
    %c0_91 = arith.constant 0 : index
    %85 = vector.load %arg7[%c0_89, %c2_90, %c0_91] : memref<18x24x128xbf16, #tpu.memory_space<vmem>>, vector<16x16x128xbf16>
    %86 = vector.shape_cast %85 : vector<16x16x128xbf16> to vector<256x128xbf16>
    %c2_92 = arith.constant 2 : index
    %c0_93 = arith.constant 0 : index
    %c0_94 = arith.constant 0 : index
    %87 = vector.load %arg3[%c2_92, %c0_93, %c0_94] : memref<9x128x128xbf16, #tpu.memory_space<vmem>>, vector<1x128x128xbf16>
    %88 = vector.shape_cast %87 : vector<1x128x128xbf16> to vector<128x128xbf16>
    %cst_95 = arith.constant dense<0.000000e+00> : vector<256x128xf32>
    %89 = tpu.matmul %86, %88, %cst_95 {dimension_numbers = #tpu.dot_dimension_numbers<[1], [0], [0], [1], [0, 0, 1, 1], [], []>} : vector<256x128xbf16>, vector<128x128xbf16>, vector<256x128xf32> -> vector<256x128xf32>
    %90 = arith.addf %84, %89 : vector<256x128xf32>
    %c1_96 = arith.constant 1 : index
    %c0_97 = arith.constant 0 : index
    %c0_98 = arith.constant 0 : index
    %91 = vector.load %arg7[%c1_96, %c0_97, %c0_98] : memref<18x24x128xbf16, #tpu.memory_space<vmem>>, vector<16x16x128xbf16>
    %92 = vector.shape_cast %91 : vector<16x16x128xbf16> to vector<256x128xbf16>
    %c3_99 = arith.constant 3 : index
    %c0_100 = arith.constant 0 : index
    %c0_101 = arith.constant 0 : index
    %93 = vector.load %arg3[%c3_99, %c0_100, %c0_101] : memref<9x128x128xbf16, #tpu.memory_space<vmem>>, vector<1x128x128xbf16>
    %94 = vector.shape_cast %93 : vector<1x128x128xbf16> to vector<128x128xbf16>
    %cst_102 = arith.constant dense<0.000000e+00> : vector<256x128xf32>
    %95 = tpu.matmul %92, %94, %cst_102 {dimension_numbers = #tpu.dot_dimension_numbers<[1], [0], [0], [1], [0, 0, 1, 1], [], []>} : vector<256x128xbf16>, vector<128x128xbf16>, vector<256x128xf32> -> vector<256x128xf32>
    %96 = arith.addf %90, %95 : vector<256x128xf32>
    %c1_103 = arith.constant 1 : index
    %c1_104 = arith.constant 1 : index
    %c0_105 = arith.constant 0 : index
    %97 = vector.load %arg7[%c1_103, %c1_104, %c0_105] : memref<18x24x128xbf16, #tpu.memory_space<vmem>>, vector<16x16x128xbf16>
    %98 = vector.shape_cast %97 : vector<16x16x128xbf16> to vector<256x128xbf16>
    %c4_106 = arith.constant 4 : index
    %c0_107 = arith.constant 0 : index
    %c0_108 = arith.constant 0 : index
    %99 = vector.load %arg3[%c4_106, %c0_107, %c0_108] : memref<9x128x128xbf16, #tpu.memory_space<vmem>>, vector<1x128x128xbf16>
    %100 = vector.shape_cast %99 : vector<1x128x128xbf16> to vector<128x128xbf16>
    %cst_109 = arith.constant dense<0.000000e+00> : vector<256x128xf32>
    %101 = tpu.matmul %98, %100, %cst_109 {dimension_numbers = #tpu.dot_dimension_numbers<[1], [0], [0], [1], [0, 0, 1, 1], [], []>} : vector<256x128xbf16>, vector<128x128xbf16>, vector<256x128xf32> -> vector<256x128xf32>
    %102 = arith.addf %96, %101 : vector<256x128xf32>
    %c1_110 = arith.constant 1 : index
    %c2_111 = arith.constant 2 : index
    %c0_112 = arith.constant 0 : index
    %103 = vector.load %arg7[%c1_110, %c2_111, %c0_112] : memref<18x24x128xbf16, #tpu.memory_space<vmem>>, vector<16x16x128xbf16>
    %104 = vector.shape_cast %103 : vector<16x16x128xbf16> to vector<256x128xbf16>
    %c5_113 = arith.constant 5 : index
    %c0_114 = arith.constant 0 : index
    %c0_115 = arith.constant 0 : index
    %105 = vector.load %arg3[%c5_113, %c0_114, %c0_115] : memref<9x128x128xbf16, #tpu.memory_space<vmem>>, vector<1x128x128xbf16>
    %106 = vector.shape_cast %105 : vector<1x128x128xbf16> to vector<128x128xbf16>
    %cst_116 = arith.constant dense<0.000000e+00> : vector<256x128xf32>
    %107 = tpu.matmul %104, %106, %cst_116 {dimension_numbers = #tpu.dot_dimension_numbers<[1], [0], [0], [1], [0, 0, 1, 1], [], []>} : vector<256x128xbf16>, vector<128x128xbf16>, vector<256x128xf32> -> vector<256x128xf32>
    %108 = arith.addf %102, %107 : vector<256x128xf32>
    %c2_117 = arith.constant 2 : index
    %c0_118 = arith.constant 0 : index
    %c0_119 = arith.constant 0 : index
    %109 = vector.load %arg7[%c2_117, %c0_118, %c0_119] : memref<18x24x128xbf16, #tpu.memory_space<vmem>>, vector<16x16x128xbf16>
    %110 = vector.shape_cast %109 : vector<16x16x128xbf16> to vector<256x128xbf16>
    %c6_120 = arith.constant 6 : index
    %c0_121 = arith.constant 0 : index
    %c0_122 = arith.constant 0 : index
    %111 = vector.load %arg3[%c6_120, %c0_121, %c0_122] : memref<9x128x128xbf16, #tpu.memory_space<vmem>>, vector<1x128x128xbf16>
    %112 = vector.shape_cast %111 : vector<1x128x128xbf16> to vector<128x128xbf16>
    %cst_123 = arith.constant dense<0.000000e+00> : vector<256x128xf32>
    %113 = tpu.matmul %110, %112, %cst_123 {dimension_numbers = #tpu.dot_dimension_numbers<[1], [0], [0], [1], [0, 0, 1, 1], [], []>} : vector<256x128xbf16>, vector<128x128xbf16>, vector<256x128xf32> -> vector<256x128xf32>
    %114 = arith.addf %108, %113 : vector<256x128xf32>
    %c2_124 = arith.constant 2 : index
    %c1_125 = arith.constant 1 : index
    %c0_126 = arith.constant 0 : index
    %115 = vector.load %arg7[%c2_124, %c1_125, %c0_126] : memref<18x24x128xbf16, #tpu.memory_space<vmem>>, vector<16x16x128xbf16>
    %116 = vector.shape_cast %115 : vector<16x16x128xbf16> to vector<256x128xbf16>
    %c7_127 = arith.constant 7 : index
    %c0_128 = arith.constant 0 : index
    %c0_129 = arith.constant 0 : index
    %117 = vector.load %arg3[%c7_127, %c0_128, %c0_129] : memref<9x128x128xbf16, #tpu.memory_space<vmem>>, vector<1x128x128xbf16>
    %118 = vector.shape_cast %117 : vector<1x128x128xbf16> to vector<128x128xbf16>
    %cst_130 = arith.constant dense<0.000000e+00> : vector<256x128xf32>
    %119 = tpu.matmul %116, %118, %cst_130 {dimension_numbers = #tpu.dot_dimension_numbers<[1], [0], [0], [1], [0, 0, 1, 1], [], []>} : vector<256x128xbf16>, vector<128x128xbf16>, vector<256x128xf32> -> vector<256x128xf32>
    %120 = arith.addf %114, %119 : vector<256x128xf32>
    %c2_131 = arith.constant 2 : index
    %c2_132 = arith.constant 2 : index
    %c0_133 = arith.constant 0 : index
    %121 = vector.load %arg7[%c2_131, %c2_132, %c0_133] : memref<18x24x128xbf16, #tpu.memory_space<vmem>>, vector<16x16x128xbf16>
    %122 = vector.shape_cast %121 : vector<16x16x128xbf16> to vector<256x128xbf16>
    %c8_134 = arith.constant 8 : index
    %c0_135 = arith.constant 0 : index
    %c0_136 = arith.constant 0 : index
    %123 = vector.load %arg3[%c8_134, %c0_135, %c0_136] : memref<9x128x128xbf16, #tpu.memory_space<vmem>>, vector<1x128x128xbf16>
    %124 = vector.shape_cast %123 : vector<1x128x128xbf16> to vector<128x128xbf16>
    %cst_137 = arith.constant dense<0.000000e+00> : vector<256x128xf32>
    %125 = tpu.matmul %122, %124, %cst_137 {dimension_numbers = #tpu.dot_dimension_numbers<[1], [0], [0], [1], [0, 0, 1, 1], [], []>} : vector<256x128xbf16>, vector<128x128xbf16>, vector<256x128xf32> -> vector<256x128xf32>
    %126 = arith.addf %120, %125 : vector<256x128xf32>
    %c0_138 = arith.constant 0 : index
    %c0_139 = arith.constant 0 : index
    %127 = vector.load %arg5[%c0_138, %c0_139] : memref<1x128xf32, #tpu.memory_space<vmem>>, vector<1x128xf32>
    %128 = vector.broadcast %127 : vector<1x128xf32> to vector<256x128xf32>
    %129 = arith.addf %126, %128 : vector<256x128xf32>
    %130 = arith.addf %129, %68 : vector<256x128xf32>
    %cst_140 = arith.constant 0.000000e+00 : f32
    %131 = vector.broadcast %cst_140 : f32 to vector<256x128xf32>
    %132 = arith.maximumf %130, %131 : vector<256x128xf32>
    %133 = vector.shape_cast %132 : vector<256x128xf32> to vector<1x16x16x128xf32>
    %c0_141 = arith.constant 0 : index
    %c0_142 = arith.constant 0 : index
    %c0_143 = arith.constant 0 : index
    %c0_144 = arith.constant 0 : index
    %134 = vector.load %arg6[%c0_141, %c0_142, %c0_143, %c0_144] : memref<1x16x16x128xf32, #tpu.memory_space<vmem>>, vector<1x16x16x128xf32>
    tpu.vector_store %arg6[%c0_141, %c0_142, %c0_143, %c0_144], %133 {strides = array<i32>} : memref<1x16x16x128xf32, #tpu.memory_space<vmem>>, vector<1x16x16x128xf32>,
    return
  }
  func.func @transform_0(%arg0: i32) -> (i32, i32, i32, i32) {
    %c0_i32 = arith.constant 0 : i32
    %c0_i32_0 = arith.constant 0 : i32
    %c0_i32_1 = arith.constant 0 : i32
    %c0_i32_2 = arith.constant 0 : i32
    return %arg0, %c0_i32, %c0_i32_0, %c0_i32_1 : i32, i32, i32, i32
  }
  func.func @transform_1(%arg0: i32) -> (i32, i32, i32) {
    %c0_i32 = arith.constant 0 : i32
    %c0_i32_0 = arith.constant 0 : i32
    %c0_i32_1 = arith.constant 0 : i32
    %c0_i32_2 = arith.constant 0 : i32
    return %c0_i32, %c0_i32_0, %c0_i32_1 : i32, i32, i32
  }
  func.func @transform_2(%arg0: i32) -> (i32, i32, i32) {
    %c0_i32 = arith.constant 0 : i32
    %c0_i32_0 = arith.constant 0 : i32
    %c0_i32_1 = arith.constant 0 : i32
    %c0_i32_2 = arith.constant 0 : i32
    return %c0_i32, %c0_i32_0, %c0_i32_1 : i32, i32, i32
  }
  func.func @transform_3(%arg0: i32) -> (i32, i32) {
    %c0_i32 = arith.constant 0 : i32
    %c0_i32_0 = arith.constant 0 : i32
    %c0_i32_1 = arith.constant 0 : i32
    return %c0_i32, %c0_i32_0 : i32, i32
  }
  func.func @transform_4(%arg0: i32) -> (i32, i32) {
    %c0_i32 = arith.constant 0 : i32
    %c0_i32_0 = arith.constant 0 : i32
    %c0_i32_1 = arith.constant 0 : i32
    return %c0_i32, %c0_i32_0 : i32, i32
  }
  func.func @transform_5(%arg0: i32) -> (i32, i32, i32, i32) {
    %c0_i32 = arith.constant 0 : i32
    %c0_i32_0 = arith.constant 0 : i32
    %c0_i32_1 = arith.constant 0 : i32
    %c0_i32_2 = arith.constant 0 : i32
    return %arg0, %c0_i32, %c0_i32_0, %c0_i32_1 : i32, i32, i32, i32
  }
}

</mosaic_0001>

<llo_original>
// kernel: tpu_custom_call.1
$region0: #{tpu_custom_call.1}
  #allocation0 [shape = 'u32[]', space=smem, size = 0x4, offset = 0x4, fixed_abs, tag = 'smem constant byte address 0x4 - core index']
  #allocation1 [shape = 'u32[72,128]{1,0:T(1,128)}', space=vmem, size = 0x9000, scoped, tag = 'internal scratch']
  #allocation2 [shape = 'bf16[18,24,128]{2,1,0:T(8,128)(2,1)}', space=vmem, size = 0x1b000, scoped, tag = 'scratch operand']
  %s0 = inlined_call_operand.vmem [shape: f32[2,16,16,4], index: 0, kind: input, shape index: {}]
  %s1 = inlined_call_operand.vmem [shape: bf16[9,128,128], index: 1, kind: input, shape index: {}]
  %s2 = inlined_call_operand.hbm [shape: bf16[9,128,128], index: 2, kind: input, shape index: {}]
  %s3 = inlined_call_operand.vmem [shape: f32[1,128], index: 3, kind: input, shape index: {}]
  %s4 = inlined_call_operand.vmem [shape: f32[1,128], index: 4, kind: input, shape index: {}]
  %s5 = inlined_call_operand.hbm [shape: f32[2,16,16,128], index: 5, kind: output, shape index: {}]
  %s6 = sld [smem:[#allocation0]]
  $region57: #{tpu_custom_call.1} parent=0
    _
  %s8 = ssub.s32 1, %s6
  %s9 = scalar_select 0, %s8, %s6
  $region1: #{tpu_custom_call.1} parent=0
    #allocation3 [shape = 'u8[294912]{0}', space=vmem, size = 0x48000, scoped, tag = 'input window, operand 2, single buffered']
    #allocation4 [shape = 's32[2]{0}', space=sflag, size = 0x8, scoped, tag = 'scoped memory for tpu_custom_call.1']
    #allocation5 [shape = 's32[2]{0}', space=sflag, size = 0x8, scoped, tag = 'scoped memory for tpu_custom_call.1']
    #allocation6 [shape = 'u8[262144]{0}', space=vmem, size = 0x40000, scoped, tag = 'output window, operand 0']
    %10 = vsyncpa [#allocation4], 0
    %11 = vsyncpa [#allocation5], 0
    %s12 = scalar_lea.sflag [#allocation5], 1
    %13 = vsyncpa %s12, 0
    loop: start=0, step=1, limit=4
    $region2: #{tpu_custom_call.1} parent=1 // loop_pre_header
      _
    $region3: #{tpu_custom_call.1} parent=1 // loop_header
      %s15 = sphi 0, %s19
      %p16 = scmp.ge.s32.totalorder %s15, 4
      %s25 = sphi 0, %s27
      %s28 = sphi 0, %s25
      %s29 = sphi 0, %s28
      %s45 = sphi 0, %s29
      %s49 = sphi 0, %s49
      %s51 = sphi 0, %s49
      %s52 = sphi 0, %s51
      %s66 = sphi 0, %s52
      %s70 = sphi 0, %s70
      %s72 = sphi 0, %s70
      %s73 = sphi 0, %s72
      %s87 = sphi 0, %s73
      %s91 = sphi 0, %s91
      %s93 = sphi 0, %s91
      %s94 = sphi 0, %s93
      %s108 = sphi 0, %s94
      %s112 = sphi 0, %s112
      %s114 = sphi 0, %s112
      %s115 = sphi 0, %s114
      %s129 = sphi 0, %s115
      %s135 = sphi 0, %s137
      %s138 = sphi 0, %s135
      %s139 = sphi 0, %s138
      %s155 = sphi 0, %s139
    $region4: #{tpu_custom_call.1} parent=1 // loop_header_branch
      %18 = sbr.rel (%p16) target = $region8
    $region5: #{tpu_custom_call.1} parent=1 // loop_body
      %s20 = ssub.s32 %s15, 1
      %s21 = ssub.s32 %s15, 2
      %s22 = sadd.s32 %s15, 1
      %s23 = ssub.s32 %s15, %s22
      %p24 = scmp.eq.s32.totalorder %s23, 0
      %s26 = sadd.s32 %s25, 1
      %s27 = scalar_select %p24, %s25, %s26
      %p30 = pneg %p24
      %p31 = scmp.eq.s32.totalorder %s15, 1
      %p32 = por %p30, %p31
      %p33 = scmp.ne.s32.totalorder %s25, %s28
      %p34 = scmp.eq.s32.totalorder %s15, 0
      %p35 = por %p33, %p34
      %p36 = scmp.ne.s32.totalorder %s25, %s28
      %p37 = scmp.eq.s32.totalorder %s20, 1
      %p38 = por %p36, %p37
      %p39 = scmp.ne.s32.totalorder %s28, %s29
      %p40 = scmp.eq.s32.totalorder %s20, 0
      %p41 = por %p39, %p40
      %p42 = scmp.ne.s32.totalorder %s28, %s29
      %p43 = scmp.eq.s32.totalorder %s21, 1
      %p44 = por %p42, %p43
      %p46 = scmp.ne.s32.totalorder %s29, %s45
      %p47 = scmp.eq.s32.totalorder %s21, 0
      %p48 = por %p46, %p47
      %s50 = sadd.s32 %s49, 1
      %p53 = scmp.eq.s32.totalorder %s15, 1
      %p54 = scmp.ne.s32.totalorder %s49, %s51
      %p55 = scmp.eq.s32.totalorder %s15, 0
      %p56 = por %p54, %p55
      %p57 = scmp.ne.s32.totalorder %s49, %s51
      %p58 = scmp.eq.s32.totalorder %s20, 1
      %p59 = por %p57, %p58
      %p60 = scmp.ne.s32.totalorder %s51, %s52
      %p61 = scmp.eq.s32.totalorder %s20, 0
      %p62 = por %p60, %p61
      %p63 = scmp.ne.s32.totalorder %s51, %s52
      %p64 = scmp.eq.s32.totalorder %s21, 1
      %p65 = por %p63, %p64
      %p67 = scmp.ne.s32.totalorder %s52, %s66
      %p68 = scmp.eq.s32.totalorder %s21, 0
      %p69 = por %p67, %p68
      %s71 = sadd.s32 %s70, 1
      %p74 = scmp.eq.s32.totalorder %s15, 1
      %p75 = scmp.ne.s32.totalorder %s70, %s72
      %p76 = scmp.eq.s32.totalorder %s15, 0
      %p77 = por %p75, %p76
      %p78 = scmp.ne.s32.totalorder %s70, %s72
      %p79 = scmp.eq.s32.totalorder %s20, 1
      %p80 = por %p78, %p79
      %p81 = scmp.ne.s32.totalorder %s72, %s73
      %p82 = scmp.eq.s32.totalorder %s20, 0
      %p83 = por %p81, %p82
      %p84 = scmp.ne.s32.totalorder %s72, %s73
      %p85 = scmp.eq.s32.totalorder %s21, 1
      %p86 = por %p84, %p85
      %p88 = scmp.ne.s32.totalorder %s73, %s87
      %p89 = scmp.eq.s32.totalorder %s21, 0
      %p90 = por %p88, %p89
      %s92 = sadd.s32 %s91, 1
      %p95 = scmp.eq.s32.totalorder %s15, 1
      %p96 = scmp.ne.s32.totalorder %s91, %s93
      %p97 = scmp.eq.s32.totalorder %s15, 0
      %p98 = por %p96, %p97
      %p99 = scmp.ne.s32.totalorder %s91, %s93
      %p100 = scmp.eq.s32.totalorder %s20, 1
      %p101 = por %p99, %p100
      %p102 = scmp.ne.s32.totalorder %s93, %s94
      %p103 = scmp.eq.s32.totalorder %s20, 0
      %p104 = por %p102, %p103
      %p105 = scmp.ne.s32.totalorder %s93, %s94
      %p106 = scmp.eq.s32.totalorder %s21, 1
      %p107 = por %p105, %p106
      %p109 = scmp.ne.s32.totalorder %s94, %s108
      %p110 = scmp.eq.s32.totalorder %s21, 0
      %p111 = por %p109, %p110
      %s113 = sadd.s32 %s112, 1
      %p116 = scmp.eq.s32.totalorder %s15, 1
      %p117 = scmp.ne.s32.totalorder %s112, %s114
      %p118 = scmp.eq.s32.totalorder %s15, 0
      %p119 = por %p117, %p118
      %p120 = scmp.ne.s32.totalorder %s112, %s114
      %p121 = scmp.eq.s32.totalorder %s20, 1
      %p122 = por %p120, %p121
      %p123 = scmp.ne.s32.totalorder %s114, %s115
      %p124 = scmp.eq.s32.totalorder %s20, 0
      %p125 = por %p123, %p124
      %p126 = scmp.ne.s32.totalorder %s114, %s115
      %p127 = scmp.eq.s32.totalorder %s21, 1
      %p128 = por %p126, %p127
      %p130 = scmp.ne.s32.totalorder %s115, %s129
      %p131 = scmp.eq.s32.totalorder %s21, 0
      %p132 = por %p130, %p131
      %s133 = ssub.s32 %s15, %s22
      %p134 = scmp.eq.s32.totalorder %s133, 0
      %s136 = sadd.s32 %s135, 1
      %s137 = scalar_select %p134, %s135, %s136
      %p140 = pneg %p134
      %p141 = scmp.eq.s32.totalorder %s15, 1
      %p142 = por %p140, %p141
      %p143 = scmp.ne.s32.totalorder %s135, %s138
      %p144 = scmp.eq.s32.totalorder %s15, 0
      %p145 = por %p143, %p144
      %p146 = scmp.ne.s32.totalorder %s135, %s138
      %p147 = scmp.eq.s32.totalorder %s20, 1
      %p148 = por %p146, %p147
      %p149 = scmp.ne.s32.totalorder %s138, %s139
      %p150 = scmp.eq.s32.totalorder %s20, 0
      %p151 = por %p149, %p150
      %p152 = scmp.ne.s32.totalorder %s138, %s139
      %p153 = scmp.eq.s32.totalorder %s21, 1
      %p154 = por %p152, %p153
      %p156 = scmp.ne.s32.totalorder %s139, %s155
      %p157 = scmp.eq.s32.totalorder %s21, 0
      %p158 = por %p156, %p157
      %p159 = scmp.le.s32.totalorder 1, %s15
      %p160 = scmp.lt.s32.totalorder %s15, 3
      %p161 = pnand %p159, %p160
      %p162 = pneg %p161
      // Predicated region
      $region9: #{tpu_custom_call.1} parent=5 // pred_check
        _
      $region10: #{tpu_custom_call.1} parent=5 // pred_check_branch
        %164 = sbr.rel (%p161) target = $region12
      $region11: #{tpu_custom_call.1} parent=5 // pred_region
        %s165 = ssub.s32 %s15, 1
        // Predicated region
        $region13: #{tpu_custom_call.1} parent=11 // pred_check
          %p166 = pneg %p62
        $region14: #{tpu_custom_call.1} parent=11 // pred_check_branch
          %168 = sbr.rel (%p166) target = $region16
        $region15: #{tpu_custom_call.1} parent=11 // pred_region
          _
        $region16: #{tpu_custom_call.1} parent=11 // pred_fallthru
          _
        // Predicated region
        $region17: #{tpu_custom_call.1} parent=11 // pred_check
          %p169 = pneg %p83
        $region18: #{tpu_custom_call.1} parent=11 // pred_check_branch
          %171 = sbr.rel (%p169) target = $region20
        $region19: #{tpu_custom_call.1} parent=11 // pred_region
          %173 = vsyncadd [#allocation4], 0
          %s174 = sshll.u32 %s2, 4
          %s175 = int_to_ptr.hbm [resolvable:$true] %s174
          %s176 = sshll.u32 [#allocation3], 4
          %s177 = int_to_ptr.vmem [resolvable:$true] %s176
          %182 = dma.hbm_to_vmem [thread:$0]  %s175, 9216, %s177, [#allocation4], 64, 64, 4
        $region20: #{tpu_custom_call.1} parent=11 // pred_fallthru
          _
        // Predicated region
        $region21: #{tpu_custom_call.1} parent=11 // pred_check
          %p183 = pneg %p104
        $region22: #{tpu_custom_call.1} parent=11 // pred_check_branch
          %185 = sbr.rel (%p183) target = $region24
        $region23: #{tpu_custom_call.1} parent=11 // pred_region
          _
        $region24: #{tpu_custom_call.1} parent=11 // pred_fallthru
          _
        // Predicated region
        $region25: #{tpu_custom_call.1} parent=11 // pred_check
          %p186 = pneg %p125
        $region26: #{tpu_custom_call.1} parent=11 // pred_check_branch
          %188 = sbr.rel (%p186) target = $region28
        $region27: #{tpu_custom_call.1} parent=11 // pred_region
          _
        $region28: #{tpu_custom_call.1} parent=11 // pred_fallthru
          _
      $region12: #{tpu_custom_call.1} parent=5 // pred_fallthru
        _
      %p189 = scmp.lt.s32.totalorder %s15, 2
      // Predicated region
      $region29: #{tpu_custom_call.1} parent=5 // pred_check
        %p190 = pneg %p189
      $region30: #{tpu_custom_call.1} parent=5 // pred_check_branch
        %192 = sbr.rel (%p190) target = $region32
      $region31: #{tpu_custom_call.1} parent=5 // pred_region
        // Predicated region
        $region33: #{tpu_custom_call.1} parent=31 // pred_check
          %p193 = pneg %p35
        $region34: #{tpu_custom_call.1} parent=31 // pred_check_branch
          %195 = sbr.rel (%p193) target = $region36
        $region35: #{tpu_custom_call.1} parent=31 // pred_region
          %p196 = scmp.lt.s32.totalorder %s15, 1
          %s197 = scalar_select %p196, %s15, 1
          %s198 = smul.addr %s197, 32
          %s199 = smul.addr %s198, 8
          %s200 = scalar_lea.vmem %s0, %s199
        $region36: #{tpu_custom_call.1} parent=31 // pred_fallthru
          _
      $region32: #{tpu_custom_call.1} parent=5 // pred_fallthru
        _
      %p201 = scmp.le.s32.totalorder 1, %s15
      %p202 = scmp.lt.s32.totalorder %s15, 3
      %p203 = pnand %p201, %p202
      %p204 = pneg %p203
      // Predicated region
      $region37: #{tpu_custom_call.1} parent=5 // pred_check
        _
      $region38: #{tpu_custom_call.1} parent=5 // pred_check_branch
        %206 = sbr.rel (%p203) target = $region40
      $region39: #{tpu_custom_call.1} parent=5 // pred_region
        %s207 = ssub.s32 %s15, 1
        // Predicated region
        $region41: #{tpu_custom_call.1} parent=39 // pred_check
          %p208 = pneg %p83
        $region42: #{tpu_custom_call.1} parent=39 // pred_check_branch
          %210 = sbr.rel (%p208) target = $region44
        $region43: #{tpu_custom_call.1} parent=39 // pred_region
          %212 = dma.done [#allocation4], 9216
        $region44: #{tpu_custom_call.1} parent=39 // pred_fallthru
          _
        %p213 = scmp.lt.s32.totalorder %s20, 1
        %s214 = scalar_select %p213, %s20, 1
        %s215 = smul.addr %s214, 32
        %s216 = smul.addr %s215, 8
        %s217 = scalar_lea.vmem %s0, %s216
        %p218 = pneg %p41
        %p219 = pneg %p38
        %p220 = pneg %p62
        %p221 = pneg %p59
        %p222 = pneg %p83
        %p223 = pneg %p80
        %p224 = pneg %p104
        %p225 = pneg %p101
        %p226 = pneg %p125
        %p227 = pneg %p122
        %p228 = pneg %p151
        %p229 = pneg %p148
        %s230 = sand.u32 %s138, 1
        %s231 = scalar_lea.sflag [#allocation5], %s230
        %s232 = sand.u32 %s138, 1
        %s233 = smul.addr %s232, 256
        %s234 = scalar_lea.vmem [#allocation6], %s233
        %p235 = scmp.lt.s32.totalorder %s20, 1
        %s236 = scalar_select %p235, %s20, 1
        %s237 = smul.addr %s236, 32
        %s238 = smul.addr %s237, 8
        %s239 = scalar_lea.vmem %s0, %s238
        %v241 = vld [vmem:[%s239] sm:$0xff]
        %v242 = vld [vmem:[%s239 + $0x8] sm:$0xff]
        %v243 = vld [vmem:[%s239 + $0x10] sm:$0xff]
        %v244 = vld [vmem:[%s239 + $0x18] sm:$0xff]
        %v245 = vld [vmem:[%s239 + $0x20] sm:$0xff]
        %v246 = vld [vmem:[%s239 + $0x28] sm:$0xff]
        %v247 = vld [vmem:[%s239 + $0x30] sm:$0xff]
        %v248 = vld [vmem:[%s239 + $0x38] sm:$0xff]
        %v249 = vld [vmem:[%s239 + $0x40] sm:$0xff]
        %v250 = vld [vmem:[%s239 + $0x48] sm:$0xff]
        %v251 = vld [vmem:[%s239 + $0x50] sm:$0xff]
        %v252 = vld [vmem:[%s239 + $0x58] sm:$0xff]
        %v253 = vld [vmem:[%s239 + $0x60] sm:$0xff]
        %v254 = vld [vmem:[%s239 + $0x68] sm:$0xff]
        %v255 = vld [vmem:[%s239 + $0x70] sm:$0xff]
        %v256 = vld [vmem:[%s239 + $0x78] sm:$0xff]
        %v257 = vld [vmem:[%s239 + $0x80] sm:$0xff]
        %v258 = vld [vmem:[%s239 + $0x88] sm:$0xff]
        %v259 = vld [vmem:[%s239 + $0x90] sm:$0xff]
        %v260 = vld [vmem:[%s239 + $0x98] sm:$0xff]
        %v261 = vld [vmem:[%s239 + $0xa0] sm:$0xff]
        %v262 = vld [vmem:[%s239 + $0xa8] sm:$0xff]
        %v263 = vld [vmem:[%s239 + $0xb0] sm:$0xff]
        %v264 = vld [vmem:[%s239 + $0xb8] sm:$0xff]
        %v265 = vld [vmem:[%s239 + $0xc0] sm:$0xff]
        %v266 = vld [vmem:[%s239 + $0xc8] sm:$0xff]
        %v267 = vld [vmem:[%s239 + $0xd0] sm:$0xff]
        %v268 = vld [vmem:[%s239 + $0xd8] sm:$0xff]
        %v269 = vld [vmem:[%s239 + $0xe0] sm:$0xff]
        %v270 = vld [vmem:[%s239 + $0xe8] sm:$0xff]
        %v271 = vld [vmem:[%s239 + $0xf0] sm:$0xff]
        %v272 = vld [vmem:[%s239 + $0xf8] sm:$0xff]
        %v273 = vpack.c.bf16 %v241, %v241
        %v274 = vpack.c.bf16 %v242, %v242
        %v275 = vpack.c.bf16 %v243, %v243
        %v276 = vpack.c.bf16 %v244, %v244
        %v277 = vpack.c.bf16 %v245, %v245
        %v278 = vpack.c.bf16 %v246, %v246
        %v279 = vpack.c.bf16 %v247, %v247
        %v280 = vpack.c.bf16 %v248, %v248
        %v281 = vpack.c.bf16 %v249, %v249
        %v282 = vpack.c.bf16 %v250, %v250
        %v283 = vpack.c.bf16 %v251, %v251
        %v284 = vpack.c.bf16 %v252, %v252
        %v285 = vpack.c.bf16 %v253, %v253
        %v286 = vpack.c.bf16 %v254, %v254
        %v287 = vpack.c.bf16 %v255, %v255
        %v288 = vpack.c.bf16 %v256, %v256
        %v289 = vpack.c.bf16 %v257, %v257
        %v290 = vpack.c.bf16 %v258, %v258
        %v291 = vpack.c.bf16 %v259, %v259
        %v292 = vpack.c.bf16 %v260, %v260
        %v293 = vpack.c.bf16 %v261, %v261
        %v294 = vpack.c.bf16 %v262, %v262
        %v295 = vpack.c.bf16 %v263, %v263
        %v296 = vpack.c.bf16 %v264, %v264
        %v297 = vpack.c.bf16 %v265, %v265
        %v298 = vpack.c.bf16 %v266, %v266
        %v299 = vpack.c.bf16 %v267, %v267
        %v300 = vpack.c.bf16 %v268, %v268
        %v301 = vpack.c.bf16 %v269, %v269
        %v302 = vpack.c.bf16 %v270, %v270
        %v303 = vpack.c.bf16 %v271, %v271
        %v304 = vpack.c.bf16 %v272, %v272
        %305 = vst [vmem:[#allocation2] sm:$0xf] 0
        %306 = vst [vmem:[#allocation2 + $0x4] sm:$0xf] 0
        %307 = vst [vmem:[#allocation2 + $0x8] sm:$0xf] 0
        %308 = vst [vmem:[#allocation2 + $0xc] sm:$0xf] 0
        %309 = vst [vmem:[#allocation2 + $0x10] sm:$0xf] 0
        %310 = vst [vmem:[#allocation2 + $0x14] sm:$0xf] 0
        %311 = vst [vmem:[#allocation2 + $0x18] sm:$0xf] 0
        %312 = vst [vmem:[#allocation2 + $0x1c] sm:$0xf] 0
        %313 = vst [vmem:[#allocation2 + $0x20] sm:$0xf] 0
        %314 = vst [vmem:[#allocation2 + $0x24] sm:$0xf] 0
        %315 = vst [vmem:[#allocation2 + $0x28] sm:$0xf] 0
        %316 = vst [vmem:[#allocation2 + $0x2c] sm:$0xf] 0
        %317 = vst [vmem:[#allocation2 + $0x30] sm:$0xf] 0
        %318 = vst [vmem:[#allocation2 + $0x34] sm:$0xf] 0
        %319 = vst [vmem:[#allocation2 + $0x38] sm:$0xf] 0
        %320 = vst [vmem:[#allocation2 + $0x3c] sm:$0xf] 0
        %321 = vst [vmem:[#allocation2 + $0x40] sm:$0xf] 0
        %322 = vst [vmem:[#allocation2 + $0x44] sm:$0xf] 0
        %323 = vst [vmem:[#allocation2 + $0x48] sm:$0xf] 0
        %324 = vst [vmem:[#allocation2 + $0x4c] sm:$0xf] 0
        %325 = vst [vmem:[#allocation2 + $0x50] sm:$0xf] 0
        %326 = vst [vmem:[#allocation2 + $0x54] sm:$0xf] 0
        %327 = vst [vmem:[#allocation2 + $0x58] sm:$0xf] 0
        %328 = vst [vmem:[#allocation2 + $0x5c] sm:$0xf] 0
        %329 = vst [vmem:[#allocation2 + $0x60] sm:$0xf] 0
        %330 = vst [vmem:[#allocation2 + $0x64] sm:$0xf] 0
        %331 = vst [vmem:[#allocation2 + $0x68] sm:$0xf] 0
        %332 = vst [vmem:[#allocation2 + $0x6c] sm:$0xf] 0
        %333 = vst [vmem:[#allocation2 + $0x70] sm:$0xf] 0
        %334 = vst [vmem:[#allocation2 + $0x74] sm:$0xf] 0
        %335 = vst [vmem:[#allocation2 + $0x78] sm:$0xf] 0
        %336 = vst [vmem:[#allocation2 + $0x7c] sm:$0xf] 0
        %337 = vst [vmem:[#allocation2 + $0x80] sm:$0xf] 0
        %338 = vst [vmem:[#allocation2 + $0x84] sm:$0xf] 0
        %339 = vst [vmem:[#allocation2 + $0x88] sm:$0xf] 0
        %340 = vst [vmem:[#allocation2 + $0x8c] sm:$0xf] 0
        %341 = vst [vmem:[#allocation2 + $0x90] sm:$0xf] 0
        %342 = vst [vmem:[#allocation2 + $0x94] sm:$0xf] 0
        %343 = vst [vmem:[#allocation2 + $0x98] sm:$0xf] 0
        %344 = vst [vmem:[#allocation2 + $0x9c] sm:$0xf] 0
        %345 = vst [vmem:[#allocation2 + $0xa0] sm:$0xf] 0
        %346 = vst [vmem:[#allocation2 + $0xa4] sm:$0xf] 0
        %347 = vst [vmem:[#allocation2 + $0xa8] sm:$0xf] 0
        %348 = vst [vmem:[#allocation2 + $0xac] sm:$0xf] 0
        %349 = vst [vmem:[#allocation2 + $0xb0] sm:$0xf] 0
        %350 = vst [vmem:[#allocation2 + $0xb4] sm:$0xf] 0
        %351 = vst [vmem:[#allocation2 + $0xb8] sm:$0xf] 0
        %352 = vst [vmem:[#allocation2 + $0xbc] sm:$0xf] 0
        %353 = vst [vmem:[#allocation2 + $0xc0] sm:$0xf] 0
        %354 = vst [vmem:[#allocation2 + $0xc4] sm:$0xf] 0
        %355 = vst [vmem:[#allocation2 + $0xc8] sm:$0xf] 0
        %356 = vst [vmem:[#allocation2 + $0xcc] sm:$0xf] 0
        %357 = vst [vmem:[#allocation2 + $0xd0] sm:$0xf] 0
        %358 = vst [vmem:[#allocation2 + $0xd4] sm:$0xf] 0
        %vm359 = vsmask.f32 256
        %vm360 = vsmask.f32 4368
        %vm361 = vmor %vm359, %vm360
        %v363 = vshrl.u32 %v273, 16
        %v365 = vrot.slane %v363, 7
        %v366 = vshll.u32 %v273, 16
        %v368 = vor.u32 %v365, %v366
        %v369 = vrot.slane %v365, 4
        %v371 = vshrl.u32 %v274, 16
        %v373 = vrot.slane %v371, 7
        %v374 = vshll.u32 %v274, 16
        %v376 = vor.u32 %v373, %v374
        %v377 = vsel %vm361, %v369, %v376
        %v378 = vrot.slane %v373, 4
        %v380 = vshrl.u32 %v275, 16
        %v382 = vrot.slane %v380, 7
        %v383 = vshll.u32 %v275, 16
        %v385 = vor.u32 %v382, %v383
        %v386 = vrot.slane %v382, 4
        %v388 = vshrl.u32 %v276, 16
        %v390 = vrot.slane %v388, 7
        %v391 = vshll.u32 %v276, 16
        %v393 = vor.u32 %v390, %v391
        %v394 = vsel %vm361, %v386, %v393
        %v395 = vrot.slane %v390, 4
        %v397 = vshrl.u32 %v277, 16
        %v399 = vrot.slane %v397, 7
        %v400 = vshll.u32 %v277, 16
        %v402 = vor.u32 %v399, %v400
        %v403 = vrot.slane %v399, 4
        %v405 = vshrl.u32 %v278, 16
        %v407 = vrot.slane %v405, 7
        %v408 = vshll.u32 %v278, 16
        %v410 = vor.u32 %v407, %v408
        %v411 = vsel %vm361, %v403, %v410
        %v412 = vrot.slane %v407, 4
        %v414 = vshrl.u32 %v279, 16
        %v416 = vrot.slane %v414, 7
        %v417 = vshll.u32 %v279, 16
        %v419 = vor.u32 %v416, %v417
        %v420 = vrot.slane %v416, 4
        %v422 = vshrl.u32 %v280, 16
        %v424 = vrot.slane %v422, 7
        %v425 = vshll.u32 %v280, 16
        %v427 = vor.u32 %v424, %v425
        %v428 = vsel %vm361, %v420, %v427
        %v429 = vrot.slane %v424, 4
        %v431 = vshrl.u32 %v281, 16
        %v433 = vrot.slane %v431, 7
        %v434 = vshll.u32 %v281, 16
        %v436 = vor.u32 %v433, %v434
        %v437 = vrot.slane %v433, 4
        %v439 = vshrl.u32 %v282, 16
        %v441 = vrot.slane %v439, 7
        %v442 = vshll.u32 %v282, 16
        %v444 = vor.u32 %v441, %v442
        %v445 = vsel %vm361, %v437, %v444
        %v446 = vrot.slane %v441, 4
        %v448 = vshrl.u32 %v283, 16
        %v450 = vrot.slane %v448, 7
        %v451 = vshll.u32 %v283, 16
        %v453 = vor.u32 %v450, %v451
        %v454 = vrot.slane %v450, 4
        %v456 = vshrl.u32 %v284, 16
        %v458 = vrot.slane %v456, 7
        %v459 = vshll.u32 %v284, 16
        %v461 = vor.u32 %v458, %v459
        %v462 = vsel %vm361, %v454, %v461
        %v463 = vrot.slane %v458, 4
        %v465 = vshrl.u32 %v285, 16
        %v467 = vrot.slane %v465, 7
        %v468 = vshll.u32 %v285, 16
        %v470 = vor.u32 %v467, %v468
        %v471 = vrot.slane %v467, 4
        %v473 = vshrl.u32 %v286, 16
        %v475 = vrot.slane %v473, 7
        %v476 = vshll.u32 %v286, 16
        %v478 = vor.u32 %v475, %v476
        %v479 = vsel %vm361, %v471, %v478
        %v480 = vrot.slane %v475, 4
        %v482 = vshrl.u32 %v287, 16
        %v484 = vrot.slane %v482, 7
        %v485 = vshll.u32 %v287, 16
        %v487 = vor.u32 %v484, %v485
        %v488 = vrot.slane %v484, 4
        %v490 = vshrl.u32 %v288, 16
        %v492 = vrot.slane %v490, 7
        %v493 = vshll.u32 %v288, 16
        %v495 = vor.u32 %v492, %v493
        %v496 = vsel %vm361, %v488, %v495
        %v497 = vrot.slane %v492, 4
        %v499 = vshrl.u32 %v289, 16
        %v501 = vrot.slane %v499, 7
        %v502 = vshll.u32 %v289, 16
        %v504 = vor.u32 %v501, %v502
        %v505 = vrot.slane %v501, 4
        %v507 = vshrl.u32 %v290, 16
        %v509 = vrot.slane %v507, 7
        %v510 = vshll.u32 %v290, 16
        %v512 = vor.u32 %v509, %v510
        %v513 = vsel %vm361, %v505, %v512
        %v514 = vrot.slane %v509, 4
        %v516 = vshrl.u32 %v291, 16
        %v518 = vrot.slane %v516, 7
        %v519 = vshll.u32 %v291, 16
        %v521 = vor.u32 %v518, %v519
        %v522 = vrot.slane %v518, 4
        %v524 = vshrl.u32 %v292, 16
        %v526 = vrot.slane %v524, 7
        %v527 = vshll.u32 %v292, 16
        %v529 = vor.u32 %v526, %v527
        %v530 = vsel %vm361, %v522, %v529
        %v531 = vrot.slane %v526, 4
        %v533 = vshrl.u32 %v293, 16
        %v535 = vrot.slane %v533, 7
        %v536 = vshll.u32 %v293, 16
        %v538 = vor.u32 %v535, %v536
        %v539 = vrot.slane %v535, 4
        %v541 = vshrl.u32 %v294, 16
        %v543 = vrot.slane %v541, 7
        %v544 = vshll.u32 %v294, 16
        %v546 = vor.u32 %v543, %v544
        %v547 = vsel %vm361, %v539, %v546
        %v548 = vrot.slane %v543, 4
        %v550 = vshrl.u32 %v295, 16
        %v552 = vrot.slane %v550, 7
        %v553 = vshll.u32 %v295, 16
        %v555 = vor.u32 %v552, %v553
        %v556 = vrot.slane %v552, 4
        %v558 = vshrl.u32 %v296, 16
        %v560 = vrot.slane %v558, 7
        %v561 = vshll.u32 %v296, 16
        %v563 = vor.u32 %v560, %v561
        %v564 = vsel %vm361, %v556, %v563
        %v565 = vrot.slane %v560, 4
        %v567 = vshrl.u32 %v297, 16
        %v569 = vrot.slane %v567, 7
        %v570 = vshll.u32 %v297, 16
        %v572 = vor.u32 %v569, %v570
        %v573 = vrot.slane %v569, 4
        %v575 = vshrl.u32 %v298, 16
        %v577 = vrot.slane %v575, 7
        %v578 = vshll.u32 %v298, 16
        %v580 = vor.u32 %v577, %v578
        %v581 = vsel %vm361, %v573, %v580
        %v582 = vrot.slane %v577, 4
        %v584 = vshrl.u32 %v299, 16
        %v586 = vrot.slane %v584, 7
        %v587 = vshll.u32 %v299, 16
        %v589 = vor.u32 %v586, %v587
        %v590 = vrot.slane %v586, 4
        %v592 = vshrl.u32 %v300, 16
        %v594 = vrot.slane %v592, 7
        %v595 = vshll.u32 %v300, 16
        %v597 = vor.u32 %v594, %v595
        %v598 = vsel %vm361, %v590, %v597
        %v599 = vrot.slane %v594, 4
        %v601 = vshrl.u32 %v301, 16
        %v603 = vrot.slane %v601, 7
        %v604 = vshll.u32 %v301, 16
        %v606 = vor.u32 %v603, %v604
        %v607 = vrot.slane %v603, 4
        %v609 = vshrl.u32 %v302, 16
        %v611 = vrot.slane %v609, 7
        %v612 = vshll.u32 %v302, 16
        %v614 = vor.u32 %v611, %v612
        %v615 = vsel %vm361, %v607, %v614
        %v616 = vrot.slane %v611, 4
        %v618 = vshrl.u32 %v303, 16
        %v620 = vrot.slane %v618, 7
        %v621 = vshll.u32 %v303, 16
        %v623 = vor.u32 %v620, %v621
        %v624 = vrot.slane %v620, 4
        %v626 = vshrl.u32 %v304, 16
        %v628 = vrot.slane %v626, 7
        %v629 = vshll.u32 %v304, 16
        %v631 = vor.u32 %v628, %v629
        %v632 = vsel %vm361, %v624, %v631
        %v633 = vrot.slane %v628, 4
        %s682 = scalar_lea.vmem [#allocation2], 12
        %vm683 = vcmask 27648
        %vm684 = vsmask.f32 7938
        %vm685 = vmand %vm683, %vm684
        %v686 = vld [vmem:[%s682] sm:$0xf]
        %v687 = vsel %vm685, %v368, %v686
        %688 = vst [vmem:[%s682] sm:$0xf] %v687
        %vm689 = vcmask 27648
        %690 = vst.msk [vmem:[%s682 + $0x4] sm:$0xf] %vm689, %v377
        %vm691 = vcmask 24576
        %vm692 = vmand %vm691, %vm359
        %v693 = vld [vmem:[%s682 + $0x8] sm:$0x1]
        %v694 = vsel %vm692, %v378, %v693
        %695 = vst [vmem:[%s682 + $0x8] sm:$0x1] %v694
        %v696 = vld [vmem:[%s682 + $0xc] sm:$0xf]
        %v697 = vsel %vm685, %v385, %v696
        %698 = vst [vmem:[%s682 + $0xc] sm:$0xf] %v697
        %699 = vst.msk [vmem:[%s682 + $0x10] sm:$0xf] %vm689, %v394
        %v700 = vld [vmem:[%s682 + $0x14] sm:$0x1]
        %v701 = vsel %vm692, %v395, %v700
        %702 = vst [vmem:[%s682 + $0x14] sm:$0x1] %v701
        %v703 = vld [vmem:[%s682 + $0x18] sm:$0xf]
        %v704 = vsel %vm685, %v402, %v703
        %705 = vst [vmem:[%s682 + $0x18] sm:$0xf] %v704
        %706 = vst.msk [vmem:[%s682 + $0x1c] sm:$0xf] %vm689, %v411
        %v707 = vld [vmem:[%s682 + $0x20] sm:$0x1]
        %v708 = vsel %vm692, %v412, %v707
        %709 = vst [vmem:[%s682 + $0x20] sm:$0x1] %v708
        %v710 = vld [vmem:[%s682 + $0x24] sm:$0xf]
        %v711 = vsel %vm685, %v419, %v710
        %712 = vst [vmem:[%s682 + $0x24] sm:$0xf] %v711
        %713 = vst.msk [vmem:[%s682 + $0x28] sm:$0xf] %vm689, %v428
        %v714 = vld [vmem:[%s682 + $0x2c] sm:$0x1]
        %v715 = vsel %vm692, %v429, %v714
        %716 = vst [vmem:[%s682 + $0x2c] sm:$0x1] %v715
        %v717 = vld [vmem:[%s682 + $0x30] sm:$0xf]
        %v718 = vsel %vm685, %v436, %v717
        %719 = vst [vmem:[%s682 + $0x30] sm:$0xf] %v718
        %720 = vst.msk [vmem:[%s682 + $0x34] sm:$0xf] %vm689, %v445
        %v721 = vld [vmem:[%s682 + $0x38] sm:$0x1]
        %v722 = vsel %vm692, %v446, %v721
        %723 = vst [vmem:[%s682 + $0x38] sm:$0x1] %v722
        %v724 = vld [vmem:[%s682 + $0x3c] sm:$0xf]
        %v725 = vsel %vm685, %v453, %v724
        %726 = vst [vmem:[%s682 + $0x3c] sm:$0xf] %v725
        %727 = vst.msk [vmem:[%s682 + $0x40] sm:$0xf] %vm689, %v462
        %v728 = vld [vmem:[%s682 + $0x44] sm:$0x1]
        %v729 = vsel %vm692, %v463, %v728
        %730 = vst [vmem:[%s682 + $0x44] sm:$0x1] %v729
        %v731 = vld [vmem:[%s682 + $0x48] sm:$0xf]
        %v732 = vsel %vm685, %v470, %v731
        %733 = vst [vmem:[%s682 + $0x48] sm:$0xf] %v732
        %734 = vst.msk [vmem:[%s682 + $0x4c] sm:$0xf] %vm689, %v479
        %v735 = vld [vmem:[%s682 + $0x50] sm:$0x1]
        %v736 = vsel %vm692, %v480, %v735
        %737 = vst [vmem:[%s682 + $0x50] sm:$0x1] %v736
        %v738 = vld [vmem:[%s682 + $0x54] sm:$0xf]
        %v739 = vsel %vm685, %v487, %v738
        %740 = vst [vmem:[%s682 + $0x54] sm:$0xf] %v739
        %741 = vst.msk [vmem:[%s682 + $0x58] sm:$0xf] %vm689, %v496
        %v742 = vld [vmem:[%s682 + $0x5c] sm:$0x1]
        %v743 = vsel %vm692, %v497, %v742
        %744 = vst [vmem:[%s682 + $0x5c] sm:$0x1] %v743
        %v745 = vld [vmem:[%s682 + $0x60] sm:$0xf]
        %v746 = vsel %vm685, %v504, %v745
        %747 = vst [vmem:[%s682 + $0x60] sm:$0xf] %v746
        %748 = vst.msk [vmem:[%s682 + $0x64] sm:$0xf] %vm689, %v513
        %v749 = vld [vmem:[%s682 + $0x68] sm:$0x1]
        %v750 = vsel %vm692, %v514, %v749
        %751 = vst [vmem:[%s682 + $0x68] sm:$0x1] %v750
        %v752 = vld [vmem:[%s682 + $0x6c] sm:$0xf]
        %v753 = vsel %vm685, %v521, %v752
        %754 = vst [vmem:[%s682 + $0x6c] sm:$0xf] %v753
        %755 = vst.msk [vmem:[%s682 + $0x70] sm:$0xf] %vm689, %v530
        %v756 = vld [vmem:[%s682 + $0x74] sm:$0x1]
        %v757 = vsel %vm692, %v531, %v756
        %758 = vst [vmem:[%s682 + $0x74] sm:$0x1] %v757
        %v759 = vld [vmem:[%s682 + $0x78] sm:$0xf]
        %v760 = vsel %vm685, %v538, %v759
        %761 = vst [vmem:[%s682 + $0x78] sm:$0xf] %v760
        %762 = vst.msk [vmem:[%s682 + $0x7c] sm:$0xf] %vm689, %v547
        %v763 = vld [vmem:[%s682 + $0x80] sm:$0x1]
        %v764 = vsel %vm692, %v548, %v763
        %765 = vst [vmem:[%s682 + $0x80] sm:$0x1] %v764
        %v766 = vld [vmem:[%s682 + $0x84] sm:$0xf]
        %v767 = vsel %vm685, %v555, %v766
        %768 = vst [vmem:[%s682 + $0x84] sm:$0xf] %v767
        %769 = vst.msk [vmem:[%s682 + $0x88] sm:$0xf] %vm689, %v564
        %v770 = vld [vmem:[%s682 + $0x8c] sm:$0x1]
        %v771 = vsel %vm692, %v565, %v770
        %772 = vst [vmem:[%s682 + $0x8c] sm:$0x1] %v771
        %v773 = vld [vmem:[%s682 + $0x90] sm:$0xf]
        %v774 = vsel %vm685, %v572, %v773
        %775 = vst [vmem:[%s682 + $0x90] sm:$0xf] %v774
        %776 = vst.msk [vmem:[%s682 + $0x94] sm:$0xf] %vm689, %v581
        %v777 = vld [vmem:[%s682 + $0x98] sm:$0x1]
        %v778 = vsel %vm692, %v582, %v777
        %779 = vst [vmem:[%s682 + $0x98] sm:$0x1] %v778
        %v780 = vld [vmem:[%s682 + $0x9c] sm:$0xf]
        %v781 = vsel %vm685, %v589, %v780
        %782 = vst [vmem:[%s682 + $0x9c] sm:$0xf] %v781
        %783 = vst.msk [vmem:[%s682 + $0xa0] sm:$0xf] %vm689, %v598
        %v784 = vld [vmem:[%s682 + $0xa4] sm:$0x1]
        %v785 = vsel %vm692, %v599, %v784
        %786 = vst [vmem:[%s682 + $0xa4] sm:$0x1] %v785
        %v787 = vld [vmem:[%s682 + $0xa8] sm:$0xf]
        %v788 = vsel %vm685, %v606, %v787
        %789 = vst [vmem:[%s682 + $0xa8] sm:$0xf] %v788
        %790 = vst.msk [vmem:[%s682 + $0xac] sm:$0xf] %vm689, %v615
        %v791 = vld [vmem:[%s682 + $0xb0] sm:$0x1]
        %v792 = vsel %vm692, %v616, %v791
        %793 = vst [vmem:[%s682 + $0xb0] sm:$0x1] %v792
        %v794 = vld [vmem:[%s682 + $0xb4] sm:$0xf]
        %v795 = vsel %vm685, %v623, %v794
        %796 = vst [vmem:[%s682 + $0xb4] sm:$0xf] %v795
        %797 = vst.msk [vmem:[%s682 + $0xb8] sm:$0xf] %vm689, %v632
        %v798 = vld [vmem:[%s682 + $0xbc] sm:$0x1]
        %v799 = vsel %vm692, %v633, %v798
        %800 = vst [vmem:[%s682 + $0xbc] sm:$0x1] %v799
        %v801 = vld [vmem:[#allocation2] sm:$0xf]
        %v802 = vld [vmem:[#allocation2 + $0x4] sm:$0xf]
        %v803 = vld [vmem:[#allocation2 + $0xc] sm:$0xf]
        %v804 = vld [vmem:[#allocation2 + $0x10] sm:$0xf]
        %v805 = vld [vmem:[#allocation2 + $0x18] sm:$0xf]
        %v806 = vld [vmem:[#allocation2 + $0x1c] sm:$0xf]
        %v807 = vld [vmem:[#allocation2 + $0x24] sm:$0xf]
        %v808 = vld [vmem:[#allocation2 + $0x28] sm:$0xf]
        %v809 = vld [vmem:[#allocation2 + $0x30] sm:$0xf]
        %v810 = vld [vmem:[#allocation2 + $0x34] sm:$0xf]
        %v811 = vld [vmem:[#allocation2 + $0x3c] sm:$0xf]
        %v812 = vld [vmem:[#allocation2 + $0x40] sm:$0xf]
        %v813 = vld [vmem:[#allocation2 + $0x48] sm:$0xf]
        %v814 = vld [vmem:[#allocation2 + $0x4c] sm:$0xf]
        %v815 = vld [vmem:[#allocation2 + $0x54] sm:$0xf]
        %v816 = vld [vmem:[#allocation2 + $0x58] sm:$0xf]
        %v817 = vld [vmem:[#allocation2 + $0x60] sm:$0xf]
        %v818 = vld [vmem:[#allocation2 + $0x64] sm:$0xf]
        %v819 = vld [vmem:[#allocation2 + $0x6c] sm:$0xf]
        %v820 = vld [vmem:[#allocation2 + $0x70] sm:$0xf]
        %v821 = vld [vmem:[#allocation2 + $0x78] sm:$0xf]
        %v822 = vld [vmem:[#allocation2 + $0x7c] sm:$0xf]
        %v823 = vld [vmem:[#allocation2 + $0x84] sm:$0xf]
        %v824 = vld [vmem:[#allocation2 + $0x88] sm:$0xf]
        %v825 = vld [vmem:[#allocation2 + $0x90] sm:$0xf]
        %v826 = vld [vmem:[#allocation2 + $0x94] sm:$0xf]
        %v827 = vld [vmem:[#allocation2 + $0x9c] sm:$0xf]
        %v828 = vld [vmem:[#allocation2 + $0xa0] sm:$0xf]
        %v829 = vld [vmem:[#allocation2 + $0xa8] sm:$0xf]
        %v830 = vld [vmem:[#allocation2 + $0xac] sm:$0xf]
        %v831 = vld [vmem:[#allocation2 + $0xb4] sm:$0xf]
        %v832 = vld [vmem:[#allocation2 + $0xb8] sm:$0xf]
        %v833 = vld [vmem:[%s1] sm:$0xf]
        %v834 = vld [vmem:[%s1 + $0x4] sm:$0xf]
        %v835 = vld [vmem:[%s1 + $0x8] sm:$0xf]
        %v836 = vld [vmem:[%s1 + $0xc] sm:$0xf]
        %v837 = vld [vmem:[%s1 + $0x10] sm:$0xf]
        %v838 = vld [vmem:[%s1 + $0x14] sm:$0xf]
        %v839 = vld [vmem:[%s1 + $0x18] sm:$0xf]
        %v840 = vld [vmem:[%s1 + $0x1c] sm:$0xf]
        %v841 = vld [vmem:[%s1 + $0x20] sm:$0xf]
        %v842 = vld [vmem:[%s1 + $0x24] sm:$0xf]
        %v843 = vld [vmem:[%s1 + $0x28] sm:$0xf]
        %v844 = vld [vmem:[%s1 + $0x2c] sm:$0xf]
        %v845 = vld [vmem:[%s1 + $0x30] sm:$0xf]
        %v846 = vld [vmem:[%s1 + $0x34] sm:$0xf]
        %v847 = vld [vmem:[%s1 + $0x38] sm:$0xf]
        %v848 = vld [vmem:[%s1 + $0x3c] sm:$0xf]
        %v849 = vld [vmem:[#allocation2 + $0x8] sm:$0x1]
        %v850 = vld [vmem:[#allocation2 + $0x14] sm:$0x1]
        %v851 = vld [vmem:[#allocation2 + $0x20] sm:$0x1]
        %v852 = vld [vmem:[#allocation2 + $0x2c] sm:$0x1]
        %v853 = vld [vmem:[#allocation2 + $0x38] sm:$0x1]
        %v854 = vld [vmem:[#allocation2 + $0x44] sm:$0x1]
        %v855 = vld [vmem:[#allocation2 + $0x50] sm:$0x1]
        %v856 = vld [vmem:[#allocation2 + $0x5c] sm:$0x1]
        %v857 = vld [vmem:[#allocation2 + $0x68] sm:$0x1]
        %v858 = vld [vmem:[#allocation2 + $0x74] sm:$0x1]
        %v859 = vld [vmem:[#allocation2 + $0x80] sm:$0x1]
        %v860 = vld [vmem:[#allocation2 + $0x8c] sm:$0x1]
        %v861 = vld [vmem:[#allocation2 + $0x98] sm:$0x1]
        %v862 = vld [vmem:[#allocation2 + $0xa4] sm:$0x1]
        %v863 = vld [vmem:[#allocation2 + $0xb0] sm:$0x1]
        %v864 = vld [vmem:[#allocation2 + $0xbc] sm:$0x1]
        %vm865 = vsmask.f32 3328
        %vm866 = vsmask.f32 7440
        %vm867 = vmor %vm865, %vm866
        %v869 = vshrl.u32 %v801, 16
        %v871 = vrot.slane %v869, 4
        %v872 = vshll.u32 %v801, 16
        %v874 = vrot.slane %v872, 5
        %v875 = vor.u32 %v871, %v874
        %v876 = vrot.slane %v875, 4
        %v878 = vshll.u32 %v802, 16
        %v880 = vrot.slane %v878, 5
        %v881 = vsel %vm867, %v876, %v880
        %v882 = vshrl.u32 %v802, 16
        %v884 = vrot.slane %v882, 4
        %v885 = vor.u32 %v884, %v880
        %v886 = vrot.slane %v885, 4
        %v888 = vshll.u32 %v849, 16
        %v890 = vrot.slane %v888, 5
        %v891 = vsel %vm867, %v886, %v890
        %v893 = vshrl.u32 %v803, 16
        %v895 = vrot.slane %v893, 4
        %v896 = vshll.u32 %v803, 16
        %v898 = vrot.slane %v896, 5
        %v899 = vor.u32 %v895, %v898
        %v900 = vrot.slane %v899, 4
        %v902 = vshll.u32 %v804, 16
        %v904 = vrot.slane %v902, 5
        %v905 = vsel %vm867, %v900, %v904
        %v906 = vshrl.u32 %v804, 16
        %v908 = vrot.slane %v906, 4
        %v909 = vor.u32 %v908, %v904
        %v910 = vrot.slane %v909, 4
        %v912 = vshll.u32 %v850, 16
        %v914 = vrot.slane %v912, 5
        %v915 = vsel %vm867, %v910, %v914
        %v917 = vshrl.u32 %v805, 16
        %v919 = vrot.slane %v917, 4
        %v920 = vshll.u32 %v805, 16
        %v922 = vrot.slane %v920, 5
        %v923 = vor.u32 %v919, %v922
        %v924 = vrot.slane %v923, 4
        %v926 = vshll.u32 %v806, 16
        %v928 = vrot.slane %v926, 5
        %v929 = vsel %vm867, %v924, %v928
        %v930 = vshrl.u32 %v806, 16
        %v932 = vrot.slane %v930, 4
        %v933 = vor.u32 %v932, %v928
        %v934 = vrot.slane %v933, 4
        %v936 = vshll.u32 %v851, 16
        %v938 = vrot.slane %v936, 5
        %v939 = vsel %vm867, %v934, %v938
        %v941 = vshrl.u32 %v807, 16
        %v943 = vrot.slane %v941, 4
        %v944 = vshll.u32 %v807, 16
        %v946 = vrot.slane %v944, 5
        %v947 = vor.u32 %v943, %v946
        %v948 = vrot.slane %v947, 4
        %v950 = vshll.u32 %v808, 16
        %v952 = vrot.slane %v950, 5
        %v953 = vsel %vm867, %v948, %v952
        %v954 = vshrl.u32 %v808, 16
        %v956 = vrot.slane %v954, 4
        %v957 = vor.u32 %v956, %v952
        %v958 = vrot.slane %v957, 4
        %v960 = vshll.u32 %v852, 16
        %v962 = vrot.slane %v960, 5
        %v963 = vsel %vm867, %v958, %v962
        %v965 = vshrl.u32 %v809, 16
        %v967 = vrot.slane %v965, 4
        %v968 = vshll.u32 %v809, 16
        %v970 = vrot.slane %v968, 5
        %v971 = vor.u32 %v967, %v970
        %v972 = vrot.slane %v971, 4
        %v974 = vshll.u32 %v810, 16
        %v976 = vrot.slane %v974, 5
        %v977 = vsel %vm867, %v972, %v976
        %v978 = vshrl.u32 %v810, 16
        %v980 = vrot.slane %v978, 4
        %v981 = vor.u32 %v980, %v976
        %v982 = vrot.slane %v981, 4
        %v984 = vshll.u32 %v853, 16
        %v986 = vrot.slane %v984, 5
        %v987 = vsel %vm867, %v982, %v986
        %v989 = vshrl.u32 %v811, 16
        %v991 = vrot.slane %v989, 4
        %v992 = vshll.u32 %v811, 16
        %v994 = vrot.slane %v992, 5
        %v995 = vor.u32 %v991, %v994
        %v996 = vrot.slane %v995, 4
        %v998 = vshll.u32 %v812, 16
        %v1000 = vrot.slane %v998, 5
        %v1001 = vsel %vm867, %v996, %v1000
        %v1002 = vshrl.u32 %v812, 16
        %v1004 = vrot.slane %v1002, 4
        %v1005 = vor.u32 %v1004, %v1000
        %v1006 = vrot.slane %v1005, 4
        %v1008 = vshll.u32 %v854, 16
        %v1010 = vrot.slane %v1008, 5
        %v1011 = vsel %vm867, %v1006, %v1010
        %v1013 = vshrl.u32 %v813, 16
        %v1015 = vrot.slane %v1013, 4
        %v1016 = vshll.u32 %v813, 16
        %v1018 = vrot.slane %v1016, 5
        %v1019 = vor.u32 %v1015, %v1018
        %v1020 = vrot.slane %v1019, 4
        %v1022 = vshll.u32 %v814, 16
        %v1024 = vrot.slane %v1022, 5
        %v1025 = vsel %vm867, %v1020, %v1024
        %v1026 = vshrl.u32 %v814, 16
        %v1028 = vrot.slane %v1026, 4
        %v1029 = vor.u32 %v1028, %v1024
        %v1030 = vrot.slane %v1029, 4
        %v1032 = vshll.u32 %v855, 16
        %v1034 = vrot.slane %v1032, 5
        %v1035 = vsel %vm867, %v1030, %v1034
        %v1037 = vshrl.u32 %v815, 16
        %v1039 = vrot.slane %v1037, 4
        %v1040 = vshll.u32 %v815, 16
        %v1042 = vrot.slane %v1040, 5
        %v1043 = vor.u32 %v1039, %v1042
        %v1044 = vrot.slane %v1043, 4
        %v1046 = vshll.u32 %v816, 16
        %v1048 = vrot.slane %v1046, 5
        %v1049 = vsel %vm867, %v1044, %v1048
        %v1050 = vshrl.u32 %v816, 16
        %v1052 = vrot.slane %v1050, 4
        %v1053 = vor.u32 %v1052, %v1048
        %v1054 = vrot.slane %v1053, 4
        %v1056 = vshll.u32 %v856, 16
        %v1058 = vrot.slane %v1056, 5
        %v1059 = vsel %vm867, %v1054, %v1058
        %v1061 = vshrl.u32 %v817, 16
        %v1063 = vrot.slane %v1061, 4
        %v1064 = vshll.u32 %v817, 16
        %v1066 = vrot.slane %v1064, 5
        %v1067 = vor.u32 %v1063, %v1066
        %v1068 = vrot.slane %v1067, 4
        %v1070 = vshll.u32 %v818, 16
        %v1072 = vrot.slane %v1070, 5
        %v1073 = vsel %vm867, %v1068, %v1072
        %v1074 = vshrl.u32 %v818, 16
        %v1076 = vrot.slane %v1074, 4
        %v1077 = vor.u32 %v1076, %v1072
        %v1078 = vrot.slane %v1077, 4
        %v1080 = vshll.u32 %v857, 16
        %v1082 = vrot.slane %v1080, 5
        %v1083 = vsel %vm867, %v1078, %v1082
        %v1085 = vshrl.u32 %v819, 16
        %v1087 = vrot.slane %v1085, 4
        %v1088 = vshll.u32 %v819, 16
        %v1090 = vrot.slane %v1088, 5
        %v1091 = vor.u32 %v1087, %v1090
        %v1092 = vrot.slane %v1091, 4
        %v1094 = vshll.u32 %v820, 16
        %v1096 = vrot.slane %v1094, 5
        %v1097 = vsel %vm867, %v1092, %v1096
        %v1098 = vshrl.u32 %v820, 16
        %v1100 = vrot.slane %v1098, 4
        %v1101 = vor.u32 %v1100, %v1096
        %v1102 = vrot.slane %v1101, 4
        %v1104 = vshll.u32 %v858, 16
        %v1106 = vrot.slane %v1104, 5
        %v1107 = vsel %vm867, %v1102, %v1106
        %v1109 = vshrl.u32 %v821, 16
        %v1111 = vrot.slane %v1109, 4
        %v1112 = vshll.u32 %v821, 16
        %v1114 = vrot.slane %v1112, 5
        %v1115 = vor.u32 %v1111, %v1114
        %v1116 = vrot.slane %v1115, 4
        %v1118 = vshll.u32 %v822, 16
        %v1120 = vrot.slane %v1118, 5
        %v1121 = vsel %vm867, %v1116, %v1120
        %v1122 = vshrl.u32 %v822, 16
        %v1124 = vrot.slane %v1122, 4
        %v1125 = vor.u32 %v1124, %v1120
        %v1126 = vrot.slane %v1125, 4
        %v1128 = vshll.u32 %v859, 16
        %v1130 = vrot.slane %v1128, 5
        %v1131 = vsel %vm867, %v1126, %v1130
        %v1133 = vshrl.u32 %v823, 16
        %v1135 = vrot.slane %v1133, 4
        %v1136 = vshll.u32 %v823, 16
        %v1138 = vrot.slane %v1136, 5
        %v1139 = vor.u32 %v1135, %v1138
        %v1140 = vrot.slane %v1139, 4
        %v1142 = vshll.u32 %v824, 16
        %v1144 = vrot.slane %v1142, 5
        %v1145 = vsel %vm867, %v1140, %v1144
        %v1146 = vshrl.u32 %v824, 16
        %v1148 = vrot.slane %v1146, 4
        %v1149 = vor.u32 %v1148, %v1144
        %v1150 = vrot.slane %v1149, 4
        %v1152 = vshll.u32 %v860, 16
        %v1154 = vrot.slane %v1152, 5
        %v1155 = vsel %vm867, %v1150, %v1154
        %v1157 = vshrl.u32 %v825, 16
        %v1159 = vrot.slane %v1157, 4
        %v1160 = vshll.u32 %v825, 16
        %v1162 = vrot.slane %v1160, 5
        %v1163 = vor.u32 %v1159, %v1162
        %v1164 = vrot.slane %v1163, 4
        %v1166 = vshll.u32 %v826, 16
        %v1168 = vrot.slane %v1166, 5
        %v1169 = vsel %vm867, %v1164, %v1168
        %v1170 = vshrl.u32 %v826, 16
        %v1172 = vrot.slane %v1170, 4
        %v1173 = vor.u32 %v1172, %v1168
        %v1174 = vrot.slane %v1173, 4
        %v1176 = vshll.u32 %v861, 16
        %v1178 = vrot.slane %v1176, 5
        %v1179 = vsel %vm867, %v1174, %v1178
        %v1181 = vshrl.u32 %v827, 16
        %v1183 = vrot.slane %v1181, 4
        %v1184 = vshll.u32 %v827, 16
        %v1186 = vrot.slane %v1184, 5
        %v1187 = vor.u32 %v1183, %v1186
        %v1188 = vrot.slane %v1187, 4
        %v1190 = vshll.u32 %v828, 16
        %v1192 = vrot.slane %v1190, 5
        %v1193 = vsel %vm867, %v1188, %v1192
        %v1194 = vshrl.u32 %v828, 16
        %v1196 = vrot.slane %v1194, 4
        %v1197 = vor.u32 %v1196, %v1192
        %v1198 = vrot.slane %v1197, 4
        %v1200 = vshll.u32 %v862, 16
        %v1202 = vrot.slane %v1200, 5
        %v1203 = vsel %vm867, %v1198, %v1202
        %v1205 = vshrl.u32 %v829, 16
        %v1207 = vrot.slane %v1205, 4
        %v1208 = vshll.u32 %v829, 16
        %v1210 = vrot.slane %v1208, 5
        %v1211 = vor.u32 %v1207, %v1210
        %v1212 = vrot.slane %v1211, 4
        %v1214 = vshll.u32 %v830, 16
        %v1216 = vrot.slane %v1214, 5
        %v1217 = vsel %vm867, %v1212, %v1216
        %v1218 = vshrl.u32 %v830, 16
        %v1220 = vrot.slane %v1218, 4
        %v1221 = vor.u32 %v1220, %v1216
        %v1222 = vrot.slane %v1221, 4
        %v1224 = vshll.u32 %v863, 16
        %v1226 = vrot.slane %v1224, 5
        %v1227 = vsel %vm867, %v1222, %v1226
        %v1229 = vshrl.u32 %v831, 16
        %v1231 = vrot.slane %v1229, 4
        %v1232 = vshll.u32 %v831, 16
        %v1234 = vrot.slane %v1232, 5
        %v1235 = vor.u32 %v1231, %v1234
        %v1236 = vrot.slane %v1235, 4
        %v1238 = vshll.u32 %v832, 16
        %v1240 = vrot.slane %v1238, 5
        %v1241 = vsel %vm867, %v1236, %v1240
        %v1242 = vshrl.u32 %v832, 16
        %v1244 = vrot.slane %v1242, 4
        %v1245 = vor.u32 %v1244, %v1240
        %v1246 = vrot.slane %v1245, 4
        %v1248 = vshll.u32 %v864, 16
        %v1250 = vrot.slane %v1248, 5
        %v1251 = vsel %vm867, %v1246, %v1250
        %s1252 = scalar_lea.vmem %s1, 64
        %v1253 = vld [vmem:[%s1252] sm:$0xf]
        %v1254 = vld [vmem:[%s1252 + $0x4] sm:$0xf]
        %v1255 = vld [vmem:[%s1252 + $0x8] sm:$0xf]
        %v1256 = vld [vmem:[%s1252 + $0xc] sm:$0xf]
        %v1257 = vld [vmem:[%s1252 + $0x10] sm:$0xf]
        %v1258 = vld [vmem:[%s1252 + $0x14] sm:$0xf]
        %v1259 = vld [vmem:[%s1252 + $0x18] sm:$0xf]
        %v1260 = vld [vmem:[%s1252 + $0x1c] sm:$0xf]
        %v1261 = vld [vmem:[%s1252 + $0x20] sm:$0xf]
        %v1262 = vld [vmem:[%s1252 + $0x24] sm:$0xf]
        %v1263 = vld [vmem:[%s1252 + $0x28] sm:$0xf]
        %v1264 = vld [vmem:[%s1252 + $0x2c] sm:$0xf]
        %v1265 = vld [vmem:[%s1252 + $0x30] sm:$0xf]
        %v1266 = vld [vmem:[%s1252 + $0x34] sm:$0xf]
        %v1267 = vld [vmem:[%s1252 + $0x38] sm:$0xf]
        %v1268 = vld [vmem:[%s1252 + $0x3c] sm:$0xf]
        %v1269 = vunpack.c.l.b16 %v881
        %v1270 = vunpack.c.l.b16 %v891
        %v1271 = vunpack.c.l.b16 %v905
        %v1272 = vunpack.c.l.b16 %v915
        %v1273 = vunpack.c.l.b16 %v929
        %v1274 = vunpack.c.l.b16 %v939
        %v1275 = vunpack.c.l.b16 %v953
        %v1276 = vunpack.c.l.b16 %v963
        %v1277 = vunpack.c.l.b16 %v977
        %v1278 = vunpack.c.l.b16 %v987
        %v1279 = vunpack.c.l.b16 %v1001
        %v1280 = vunpack.c.l.b16 %v1011
        %v1281 = vunpack.c.l.b16 %v1025
        %v1282 = vunpack.c.l.b16 %v1035
        %v1283 = vunpack.c.l.b16 %v1049
        %v1284 = vunpack.c.l.b16 %v1059
        %v1285 = vunpack.c.l.b16 %v1073
        %v1286 = vunpack.c.l.b16 %v1083
        %v1287 = vunpack.c.l.b16 %v1097
        %v1288 = vunpack.c.l.b16 %v1107
        %v1289 = vunpack.c.l.b16 %v1121
        %v1290 = vunpack.c.l.b16 %v1131
        %v1291 = vunpack.c.l.b16 %v1145
        %v1292 = vunpack.c.l.b16 %v1155
        %v1293 = vunpack.c.l.b16 %v1169
        %v1294 = vunpack.c.l.b16 %v1179
        %v1295 = vunpack.c.l.b16 %v1193
        %v1296 = vunpack.c.l.b16 %v1203
        %v1297 = vunpack.c.l.b16 %v1217
        %v1298 = vunpack.c.l.b16 %v1227
        %v1299 = vunpack.c.l.b16 %v1241
        %v1300 = vunpack.c.l.b16 %v1251
        %v1301 = vpack.c.b16 %v1270, %v1269
        %v1302 = vpack.c.b16 %v1272, %v1271
        %v1303 = vpack.c.b16 %v1274, %v1273
        %v1304 = vpack.c.b16 %v1276, %v1275
        %v1305 = vpack.c.b16 %v1278, %v1277
        %v1306 = vpack.c.b16 %v1280, %v1279
        %v1307 = vpack.c.b16 %v1282, %v1281
        %v1308 = vpack.c.b16 %v1284, %v1283
        %v1309 = vpack.c.b16 %v1286, %v1285
        %v1310 = vpack.c.b16 %v1288, %v1287
        %v1311 = vpack.c.b16 %v1290, %v1289
        %v1312 = vpack.c.b16 %v1292, %v1291
        %v1313 = vpack.c.b16 %v1294, %v1293
        %v1314 = vpack.c.b16 %v1296, %v1295
        %v1315 = vpack.c.b16 %v1298, %v1297
        %v1316 = vpack.c.b16 %v1300, %v1299
        %v1349 = vunpack.c.l.b16 %v1253
        %v1350 = vunpack.c.l.b16 %v1254
        %v1351 = vunpack.c.l.b16 %v1255
        %v1352 = vunpack.c.l.b16 %v1256
        %v1353 = vunpack.c.l.b16 %v1257
        %v1354 = vunpack.c.l.b16 %v1258
        %v1355 = vunpack.c.l.b16 %v1259
        %v1356 = vunpack.c.l.b16 %v1260
        %v1357 = vunpack.c.l.b16 %v1261
        %v1358 = vunpack.c.l.b16 %v1262
        %v1359 = vunpack.c.l.b16 %v1263
        %v1360 = vunpack.c.l.b16 %v1264
        %v1361 = vunpack.c.l.b16 %v1265
        %v1362 = vunpack.c.l.b16 %v1266
        %v1363 = vunpack.c.l.b16 %v1267
        %v1364 = vunpack.c.l.b16 %v1268
        %v1365 = vpack.c.b16 %v1350, %v1349
        %v1366 = vpack.c.b16 %v1352, %v1351
        %v1367 = vpack.c.b16 %v1354, %v1353
        %v1368 = vpack.c.b16 %v1356, %v1355
        %v1369 = vpack.c.b16 %v1358, %v1357
        %v1370 = vpack.c.b16 %v1360, %v1359
        %v1371 = vpack.c.b16 %v1362, %v1361
        %v1372 = vpack.c.b16 %v1364, %v1363
        %1381 = vmatpush.bf16.msra.mxu0 %v1372
        %1382 = vmatpush.bf16.msra.mxu0 %v1371
        %1383 = vmatpush.bf16.msra.mxu0 %v1370
        %1384 = vmatpush.bf16.msra.mxu0 %v1369
        %1385 = vmatpush.bf16.msra.mxu0 %v1368
        %1386 = vmatpush.bf16.msra.mxu0 %v1367
        %1387 = vmatpush.bf16.msra.mxu0 %v1366
        %1388 = vmatpush.bf16.msra.mxu0 %v1365
        %1389 = vmatmul.bf16.gmra.mxu0 %v1301
        %v1390 = vpop.f32.mrf.mxu0
        %v1391 = vadd.f32 0.0, %v1390
        %v1392 = vpop.f32.mrf.mxu0
        %v1393 = vadd.f32 0.0, %v1392
        %1394 = vmatmul.bf16.gmra.mxu0 %v1302
        %v1395 = vpop.f32.mrf.mxu0
        %v1396 = vadd.f32 0.0, %v1395
        %v1397 = vpop.f32.mrf.mxu0
        %v1398 = vadd.f32 0.0, %v1397
        %1399 = vmatmul.bf16.gmra.mxu0 %v1303
        %v1400 = vpop.f32.mrf.mxu0
        %v1401 = vadd.f32 0.0, %v1400
        %v1402 = vpop.f32.mrf.mxu0
        %v1403 = vadd.f32 0.0, %v1402
        %1404 = vmatmul.bf16.gmra.mxu0 %v1304
        %v1405 = vpop.f32.mrf.mxu0
        %v1406 = vadd.f32 0.0, %v1405
        %v1407 = vpop.f32.mrf.mxu0
        %v1408 = vadd.f32 0.0, %v1407
        %1409 = vmatmul.bf16.gmra.mxu0 %v1305
        %v1410 = vpop.f32.mrf.mxu0
        %v1411 = vadd.f32 0.0, %v1410
        %v1412 = vpop.f32.mrf.mxu0
        %v1413 = vadd.f32 0.0, %v1412
        %1414 = vmatmul.bf16.gmra.mxu0 %v1306
        %v1415 = vpop.f32.mrf.mxu0
        %v1416 = vadd.f32 0.0, %v1415
        %v1417 = vpop.f32.mrf.mxu0
        %v1418 = vadd.f32 0.0, %v1417
        %1419 = vmatmul.bf16.gmra.mxu0 %v1307
        %v1420 = vpop.f32.mrf.mxu0
        %v1421 = vadd.f32 0.0, %v1420
        %v1422 = vpop.f32.mrf.mxu0
        %v1423 = vadd.f32 0.0, %v1422
        %1424 = vmatmul.bf16.gmra.mxu0 %v1308
        %v1425 = vpop.f32.mrf.mxu0
        %v1426 = vadd.f32 0.0, %v1425
        %v1427 = vpop.f32.mrf.mxu0
        %v1428 = vadd.f32 0.0, %v1427
        %1429 = vmatmul.bf16.gmra.mxu0 %v1309
        %v1430 = vpop.f32.mrf.mxu0
        %v1431 = vadd.f32 0.0, %v1430
        %v1432 = vpop.f32.mrf.mxu0
        %v1433 = vadd.f32 0.0, %v1432
        %1434 = vmatmul.bf16.gmra.mxu0 %v1310
        %v1435 = vpop.f32.mrf.mxu0
        %v1436 = vadd.f32 0.0, %v1435
        %v1437 = vpop.f32.mrf.mxu0
        %v1438 = vadd.f32 0.0, %v1437
        %1439 = vmatmul.bf16.gmra.mxu0 %v1311
        %v1440 = vpop.f32.mrf.mxu0
        %v1441 = vadd.f32 0.0, %v1440
        %v1442 = vpop.f32.mrf.mxu0
        %v1443 = vadd.f32 0.0, %v1442
        %1444 = vmatmul.bf16.gmra.mxu0 %v1312
        %v1445 = vpop.f32.mrf.mxu0
        %v1446 = vadd.f32 0.0, %v1445
        %v1447 = vpop.f32.mrf.mxu0
        %v1448 = vadd.f32 0.0, %v1447
        %1449 = vmatmul.bf16.gmra.mxu0 %v1313
        %v1450 = vpop.f32.mrf.mxu0
        %v1451 = vadd.f32 0.0, %v1450
        %v1452 = vpop.f32.mrf.mxu0
        %v1453 = vadd.f32 0.0, %v1452
        %1454 = vmatmul.bf16.gmra.mxu0 %v1314
        %v1455 = vpop.f32.mrf.mxu0
        %v1456 = vadd.f32 0.0, %v1455
        %v1457 = vpop.f32.mrf.mxu0
        %v1458 = vadd.f32 0.0, %v1457
        %1459 = vmatmul.bf16.gmra.mxu0 %v1315
        %v1460 = vpop.f32.mrf.mxu0
        %v1461 = vadd.f32 0.0, %v1460
        %v1462 = vpop.f32.mrf.mxu0
        %v1463 = vadd.f32 0.0, %v1462
        %1464 = vmatmul.bf16.gmra.mxu0 %v1316
        %v1465 = vpop.f32.mrf.mxu0
        %v1466 = vadd.f32 0.0, %v1465
        %v1467 = vpop.f32.mrf.mxu0
        %v1468 = vadd.f32 0.0, %v1467
        %1469 = vdwg.mxu0
        %v1502 = vunpack.c.l.b16 %v801
        %v1503 = vunpack.c.l.b16 %v802
        %v1504 = vunpack.c.l.b16 %v803
        %v1505 = vunpack.c.l.b16 %v804
        %v1506 = vunpack.c.l.b16 %v805
        %v1507 = vunpack.c.l.b16 %v806
        %v1508 = vunpack.c.l.b16 %v807
        %v1509 = vunpack.c.l.b16 %v808
        %v1510 = vunpack.c.l.b16 %v809
        %v1511 = vunpack.c.l.b16 %v810
        %v1512 = vunpack.c.l.b16 %v811
        %v1513 = vunpack.c.l.b16 %v812
        %v1514 = vunpack.c.l.b16 %v813
        %v1515 = vunpack.c.l.b16 %v814
        %v1516 = vunpack.c.l.b16 %v815
        %v1517 = vunpack.c.l.b16 %v816
        %v1518 = vunpack.c.l.b16 %v817
        %v1519 = vunpack.c.l.b16 %v818
        %v1520 = vunpack.c.l.b16 %v819
        %v1521 = vunpack.c.l.b16 %v820
        %v1522 = vunpack.c.l.b16 %v821
        %v1523 = vunpack.c.l.b16 %v822
        %v1524 = vunpack.c.l.b16 %v823
        %v1525 = vunpack.c.l.b16 %v824
        %v1526 = vunpack.c.l.b16 %v825
        %v1527 = vunpack.c.l.b16 %v826
        %v1528 = vunpack.c.l.b16 %v827
        %v1529 = vunpack.c.l.b16 %v828
        %v1530 = vunpack.c.l.b16 %v829
        %v1531 = vunpack.c.l.b16 %v830
        %v1532 = vunpack.c.l.b16 %v831
        %v1533 = vunpack.c.l.b16 %v832
        %v1534 = vpack.c.b16 %v1503, %v1502
        %v1535 = vpack.c.b16 %v1505, %v1504
        %v1536 = vpack.c.b16 %v1507, %v1506
        %v1537 = vpack.c.b16 %v1509, %v1508
        %v1538 = vpack.c.b16 %v1511, %v1510
        %v1539 = vpack.c.b16 %v1513, %v1512
        %v1540 = vpack.c.b16 %v1515, %v1514
        %v1541 = vpack.c.b16 %v1517, %v1516
        %v1542 = vpack.c.b16 %v1519, %v1518
        %v1543 = vpack.c.b16 %v1521, %v1520
        %v1544 = vpack.c.b16 %v1523, %v1522
        %v1545 = vpack.c.b16 %v1525, %v1524
        %v1546 = vpack.c.b16 %v1527, %v1526
        %v1547 = vpack.c.b16 %v1529, %v1528
        %v1548 = vpack.c.b16 %v1531, %v1530
        %v1549 = vpack.c.b16 %v1533, %v1532
        %v1582 = vunpack.c.l.b16 %v833
        %v1583 = vunpack.c.l.b16 %v834
        %v1584 = vunpack.c.l.b16 %v835
        %v1585 = vunpack.c.l.b16 %v836
        %v1586 = vunpack.c.l.b16 %v837
        %v1587 = vunpack.c.l.b16 %v838
        %v1588 = vunpack.c.l.b16 %v839
        %v1589 = vunpack.c.l.b16 %v840
        %v1590 = vunpack.c.l.b16 %v841
        %v1591 = vunpack.c.l.b16 %v842
        %v1592 = vunpack.c.l.b16 %v843
        %v1593 = vunpack.c.l.b16 %v844
        %v1594 = vunpack.c.l.b16 %v845
        %v1595 = vunpack.c.l.b16 %v846
        %v1596 = vunpack.c.l.b16 %v847
        %v1597 = vunpack.c.l.b16 %v848
        %v1598 = vpack.c.b16 %v1583, %v1582
        %v1599 = vpack.c.b16 %v1585, %v1584
        %v1600 = vpack.c.b16 %v1587, %v1586
        %v1601 = vpack.c.b16 %v1589, %v1588
        %v1602 = vpack.c.b16 %v1591, %v1590
        %v1603 = vpack.c.b16 %v1593, %v1592
        %v1604 = vpack.c.b16 %v1595, %v1594
        %v1605 = vpack.c.b16 %v1597, %v1596
        %1614 = vmatpush.bf16.msra.mxu0 %v1605
        %1615 = vmatpush.bf16.msra.mxu0 %v1604
        %1616 = vmatpush.bf16.msra.mxu0 %v1603
        %1617 = vmatpush.bf16.msra.mxu0 %v1602
        %1618 = vmatpush.bf16.msra.mxu0 %v1601
        %1619 = vmatpush.bf16.msra.mxu0 %v1600
        %1620 = vmatpush.bf16.msra.mxu0 %v1599
        %1621 = vmatpush.bf16.msra.mxu0 %v1598
        %1622 = vmatmul.bf16.gmra.mxu0 %v1534
        %v1623 = vpop.f32.mrf.mxu0
        %v1624 = vadd.f32 %v1391, %v1623
        %v1625 = vpop.f32.mrf.mxu0
        %v1626 = vadd.f32 %v1393, %v1625
        %1627 = vmatmul.bf16.gmra.mxu0 %v1535
        %v1628 = vpop.f32.mrf.mxu0
        %v1629 = vadd.f32 %v1396, %v1628
        %v1630 = vpop.f32.mrf.mxu0
        %v1631 = vadd.f32 %v1398, %v1630
        %1632 = vmatmul.bf16.gmra.mxu0 %v1536
        %v1633 = vpop.f32.mrf.mxu0
        %v1634 = vadd.f32 %v1401, %v1633
        %v1635 = vpop.f32.mrf.mxu0
        %v1636 = vadd.f32 %v1403, %v1635
        %1637 = vmatmul.bf16.gmra.mxu0 %v1537
        %v1638 = vpop.f32.mrf.mxu0
        %v1639 = vadd.f32 %v1406, %v1638
        %v1640 = vpop.f32.mrf.mxu0
        %v1641 = vadd.f32 %v1408, %v1640
        %1642 = vmatmul.bf16.gmra.mxu0 %v1538
        %v1643 = vpop.f32.mrf.mxu0
        %v1644 = vadd.f32 %v1411, %v1643
        %v1645 = vpop.f32.mrf.mxu0
        %v1646 = vadd.f32 %v1413, %v1645
        %1647 = vmatmul.bf16.gmra.mxu0 %v1539
        %v1648 = vpop.f32.mrf.mxu0
        %v1649 = vadd.f32 %v1416, %v1648
        %v1650 = vpop.f32.mrf.mxu0
        %v1651 = vadd.f32 %v1418, %v1650
        %1652 = vmatmul.bf16.gmra.mxu0 %v1540
        %v1653 = vpop.f32.mrf.mxu0
        %v1654 = vadd.f32 %v1421, %v1653
        %v1655 = vpop.f32.mrf.mxu0
        %v1656 = vadd.f32 %v1423, %v1655
        %1657 = vmatmul.bf16.gmra.mxu0 %v1541
        %v1658 = vpop.f32.mrf.mxu0
        %v1659 = vadd.f32 %v1426, %v1658
        %v1660 = vpop.f32.mrf.mxu0
        %v1661 = vadd.f32 %v1428, %v1660
        %1662 = vmatmul.bf16.gmra.mxu0 %v1542
        %v1663 = vpop.f32.mrf.mxu0
        %v1664 = vadd.f32 %v1431, %v1663
        %v1665 = vpop.f32.mrf.mxu0
        %v1666 = vadd.f32 %v1433, %v1665
        %1667 = vmatmul.bf16.gmra.mxu0 %v1543
        %v1668 = vpop.f32.mrf.mxu0
        %v1669 = vadd.f32 %v1436, %v1668
        %v1670 = vpop.f32.mrf.mxu0
        %v1671 = vadd.f32 %v1438, %v1670
        %1672 = vmatmul.bf16.gmra.mxu0 %v1544
        %v1673 = vpop.f32.mrf.mxu0
        %v1674 = vadd.f32 %v1441, %v1673
        %v1675 = vpop.f32.mrf.mxu0
        %v1676 = vadd.f32 %v1443, %v1675
        %1677 = vmatmul.bf16.gmra.mxu0 %v1545
        %v1678 = vpop.f32.mrf.mxu0
        %v1679 = vadd.f32 %v1446, %v1678
        %v1680 = vpop.f32.mrf.mxu0
        %v1681 = vadd.f32 %v1448, %v1680
        %1682 = vmatmul.bf16.gmra.mxu0 %v1546
        %v1683 = vpop.f32.mrf.mxu0
        %v1684 = vadd.f32 %v1451, %v1683
        %v1685 = vpop.f32.mrf.mxu0
        %v1686 = vadd.f32 %v1453, %v1685
        %1687 = vmatmul.bf16.gmra.mxu0 %v1547
        %v1688 = vpop.f32.mrf.mxu0
        %v1689 = vadd.f32 %v1456, %v1688
        %v1690 = vpop.f32.mrf.mxu0
        %v1691 = vadd.f32 %v1458, %v1690
        %1692 = vmatmul.bf16.gmra.mxu0 %v1548
        %v1693 = vpop.f32.mrf.mxu0
        %v1694 = vadd.f32 %v1461, %v1693
        %v1695 = vpop.f32.mrf.mxu0
        %v1696 = vadd.f32 %v1463, %v1695
        %1697 = vmatmul.bf16.gmra.mxu0 %v1549
        %v1698 = vpop.f32.mrf.mxu0
        %v1699 = vadd.f32 %v1466, %v1698
        %v1700 = vpop.f32.mrf.mxu0
        %v1701 = vadd.f32 %v1468, %v1700
        %1702 = vdwg.mxu0
        %v1703 = vld [vmem:[#allocation2] sm:$0xe]
        %v1704 = vld [vmem:[#allocation2 + $0xc] sm:$0xe]
        %v1705 = vld [vmem:[#allocation2 + $0x18] sm:$0xe]
        %v1706 = vld [vmem:[#allocation2 + $0x24] sm:$0xe]
        %v1707 = vld [vmem:[#allocation2 + $0x30] sm:$0xe]
        %v1708 = vld [vmem:[#allocation2 + $0x3c] sm:$0xe]
        %v1709 = vld [vmem:[#allocation2 + $0x48] sm:$0xe]
        %v1710 = vld [vmem:[#allocation2 + $0x54] sm:$0xe]
        %v1711 = vld [vmem:[#allocation2 + $0x60] sm:$0xe]
        %v1712 = vld [vmem:[#allocation2 + $0x6c] sm:$0xe]
        %v1713 = vld [vmem:[#allocation2 + $0x78] sm:$0xe]
        %v1714 = vld [vmem:[#allocation2 + $0x84] sm:$0xe]
        %v1715 = vld [vmem:[#allocation2 + $0x90] sm:$0xe]
        %v1716 = vld [vmem:[#allocation2 + $0x9c] sm:$0xe]
        %v1717 = vld [vmem:[#allocation2 + $0xa8] sm:$0xe]
        %v1718 = vld [vmem:[#allocation2 + $0xb4] sm:$0xe]
        %vm1751 = vcmask 1042432
        %vm1752 = vcmask 1046532
        %vm1753 = vmor %vm1751, %vm1752
        %v1754 = vrot.slane %v1703, 5
        %v1755 = vrot.slane %v1754, 4
        %v1756 = vrot.slane %v802, 5
        %v1757 = vsel %vm1753, %v1755, %v1756
        %v1758 = vrot.slane %v1756, 4
        %v1759 = vrot.slane %v849, 5
        %v1760 = vsel %vm1753, %v1758, %v1759
        %v1761 = vrot.slane %v1704, 5
        %v1762 = vrot.slane %v1761, 4
        %v1763 = vrot.slane %v804, 5
        %v1764 = vsel %vm1753, %v1762, %v1763
        %v1765 = vrot.slane %v1763, 4
        %v1766 = vrot.slane %v850, 5
        %v1767 = vsel %vm1753, %v1765, %v1766
        %v1768 = vrot.slane %v1705, 5
        %v1769 = vrot.slane %v1768, 4
        %v1770 = vrot.slane %v806, 5
        %v1771 = vsel %vm1753, %v1769, %v1770
        %v1772 = vrot.slane %v1770, 4
        %v1773 = vrot.slane %v851, 5
        %v1774 = vsel %vm1753, %v1772, %v1773
        %v1775 = vrot.slane %v1706, 5
        %v1776 = vrot.slane %v1775, 4
        %v1777 = vrot.slane %v808, 5
        %v1778 = vsel %vm1753, %v1776, %v1777
        %v1779 = vrot.slane %v1777, 4
        %v1780 = vrot.slane %v852, 5
        %v1781 = vsel %vm1753, %v1779, %v1780
        %v1782 = vrot.slane %v1707, 5
        %v1783 = vrot.slane %v1782, 4
        %v1784 = vrot.slane %v810, 5
        %v1785 = vsel %vm1753, %v1783, %v1784
        %v1786 = vrot.slane %v1784, 4
        %v1787 = vrot.slane %v853, 5
        %v1788 = vsel %vm1753, %v1786, %v1787
        %v1789 = vrot.slane %v1708, 5
        %v1790 = vrot.slane %v1789, 4
        %v1791 = vrot.slane %v812, 5
        %v1792 = vsel %vm1753, %v1790, %v1791
        %v1793 = vrot.slane %v1791, 4
        %v1794 = vrot.slane %v854, 5
        %v1795 = vsel %vm1753, %v1793, %v1794
        %v1796 = vrot.slane %v1709, 5
        %v1797 = vrot.slane %v1796, 4
        %v1798 = vrot.slane %v814, 5
        %v1799 = vsel %vm1753, %v1797, %v1798
        %v1800 = vrot.slane %v1798, 4
        %v1801 = vrot.slane %v855, 5
        %v1802 = vsel %vm1753, %v1800, %v1801
        %v1803 = vrot.slane %v1710, 5
        %v1804 = vrot.slane %v1803, 4
        %v1805 = vrot.slane %v816, 5
        %v1806 = vsel %vm1753, %v1804, %v1805
        %v1807 = vrot.slane %v1805, 4
        %v1808 = vrot.slane %v856, 5
        %v1809 = vsel %vm1753, %v1807, %v1808
        %v1810 = vrot.slane %v1711, 5
        %v1811 = vrot.slane %v1810, 4
        %v1812 = vrot.slane %v818, 5
        %v1813 = vsel %vm1753, %v1811, %v1812
        %v1814 = vrot.slane %v1812, 4
        %v1815 = vrot.slane %v857, 5
        %v1816 = vsel %vm1753, %v1814, %v1815
        %v1817 = vrot.slane %v1712, 5
        %v1818 = vrot.slane %v1817, 4
        %v1819 = vrot.slane %v820, 5
        %v1820 = vsel %vm1753, %v1818, %v1819
        %v1821 = vrot.slane %v1819, 4
        %v1822 = vrot.slane %v858, 5
        %v1823 = vsel %vm1753, %v1821, %v1822
        %v1824 = vrot.slane %v1713, 5
        %v1825 = vrot.slane %v1824, 4
        %v1826 = vrot.slane %v822, 5
        %v1827 = vsel %vm1753, %v1825, %v1826
        %v1828 = vrot.slane %v1826, 4
        %v1829 = vrot.slane %v859, 5
        %v1830 = vsel %vm1753, %v1828, %v1829
        %v1831 = vrot.slane %v1714, 5
        %v1832 = vrot.slane %v1831, 4
        %v1833 = vrot.slane %v824, 5
        %v1834 = vsel %vm1753, %v1832, %v1833
        %v1835 = vrot.slane %v1833, 4
        %v1836 = vrot.slane %v860, 5
        %v1837 = vsel %vm1753, %v1835, %v1836
        %v1838 = vrot.slane %v1715, 5
        %v1839 = vrot.slane %v1838, 4
        %v1840 = vrot.slane %v826, 5
        %v1841 = vsel %vm1753, %v1839, %v1840
        %v1842 = vrot.slane %v1840, 4
        %v1843 = vrot.slane %v861, 5
        %v1844 = vsel %vm1753, %v1842, %v1843
        %v1845 = vrot.slane %v1716, 5
        %v1846 = vrot.slane %v1845, 4
        %v1847 = vrot.slane %v828, 5
        %v1848 = vsel %vm1753, %v1846, %v1847
        %v1849 = vrot.slane %v1847, 4
        %v1850 = vrot.slane %v862, 5
        %v1851 = vsel %vm1753, %v1849, %v1850
        %v1852 = vrot.slane %v1717, 5
        %v1853 = vrot.slane %v1852, 4
        %v1854 = vrot.slane %v830, 5
        %v1855 = vsel %vm1753, %v1853, %v1854
        %v1856 = vrot.slane %v1854, 4
        %v1857 = vrot.slane %v863, 5
        %v1858 = vsel %vm1753, %v1856, %v1857
        %v1859 = vrot.slane %v1718, 5
        %v1860 = vrot.slane %v1859, 4
        %v1861 = vrot.slane %v832, 5
        %v1862 = vsel %vm1753, %v1860, %v1861
        %v1863 = vrot.slane %v1861, 4
        %v1864 = vrot.slane %v864, 5
        %v1865 = vsel %vm1753, %v1863, %v1864
        %s1866 = scalar_lea.vmem %s1, 128
        %v1867 = vld [vmem:[%s1866] sm:$0xf]
        %v1868 = vld [vmem:[%s1866 + $0x4] sm:$0xf]
        %v1869 = vld [vmem:[%s1866 + $0x8] sm:$0xf]
        %v1870 = vld [vmem:[%s1866 + $0xc] sm:$0xf]
        %v1871 = vld [vmem:[%s1866 + $0x10] sm:$0xf]
        %v1872 = vld [vmem:[%s1866 + $0x14] sm:$0xf]
        %v1873 = vld [vmem:[%s1866 + $0x18] sm:$0xf]
        %v1874 = vld [vmem:[%s1866 + $0x1c] sm:$0xf]
        %v1875 = vld [vmem:[%s1866 + $0x20] sm:$0xf]
        %v1876 = vld [vmem:[%s1866 + $0x24] sm:$0xf]
        %v1877 = vld [vmem:[%s1866 + $0x28] sm:$0xf]
        %v1878 = vld [vmem:[%s1866 + $0x2c] sm:$0xf]
        %v1879 = vld [vmem:[%s1866 + $0x30] sm:$0xf]
        %v1880 = vld [vmem:[%s1866 + $0x34] sm:$0xf]
        %v1881 = vld [vmem:[%s1866 + $0x38] sm:$0xf]
        %v1882 = vld [vmem:[%s1866 + $0x3c] sm:$0xf]
        %v1883 = vunpack.c.l.b16 %v1757
        %v1884 = vunpack.c.l.b16 %v1760
        %v1885 = vunpack.c.l.b16 %v1764
        %v1886 = vunpack.c.l.b16 %v1767
        %v1887 = vunpack.c.l.b16 %v1771
        %v1888 = vunpack.c.l.b16 %v1774
        %v1889 = vunpack.c.l.b16 %v1778
        %v1890 = vunpack.c.l.b16 %v1781
        %v1891 = vunpack.c.l.b16 %v1785
        %v1892 = vunpack.c.l.b16 %v1788
        %v1893 = vunpack.c.l.b16 %v1792
        %v1894 = vunpack.c.l.b16 %v1795
        %v1895 = vunpack.c.l.b16 %v1799
        %v1896 = vunpack.c.l.b16 %v1802
        %v1897 = vunpack.c.l.b16 %v1806
        %v1898 = vunpack.c.l.b16 %v1809
        %v1899 = vunpack.c.l.b16 %v1813
        %v1900 = vunpack.c.l.b16 %v1816
        %v1901 = vunpack.c.l.b16 %v1820
        %v1902 = vunpack.c.l.b16 %v1823
        %v1903 = vunpack.c.l.b16 %v1827
        %v1904 = vunpack.c.l.b16 %v1830
        %v1905 = vunpack.c.l.b16 %v1834
        %v1906 = vunpack.c.l.b16 %v1837
        %v1907 = vunpack.c.l.b16 %v1841
        %v1908 = vunpack.c.l.b16 %v1844
        %v1909 = vunpack.c.l.b16 %v1848
        %v1910 = vunpack.c.l.b16 %v1851
        %v1911 = vunpack.c.l.b16 %v1855
        %v1912 = vunpack.c.l.b16 %v1858
        %v1913 = vunpack.c.l.b16 %v1862
        %v1914 = vunpack.c.l.b16 %v1865
        %v1915 = vpack.c.b16 %v1884, %v1883
        %v1916 = vpack.c.b16 %v1886, %v1885
        %v1917 = vpack.c.b16 %v1888, %v1887
        %v1918 = vpack.c.b16 %v1890, %v1889
        %v1919 = vpack.c.b16 %v1892, %v1891
        %v1920 = vpack.c.b16 %v1894, %v1893
        %v1921 = vpack.c.b16 %v1896, %v1895
        %v1922 = vpack.c.b16 %v1898, %v1897
        %v1923 = vpack.c.b16 %v1900, %v1899
        %v1924 = vpack.c.b16 %v1902, %v1901
        %v1925 = vpack.c.b16 %v1904, %v1903
        %v1926 = vpack.c.b16 %v1906, %v1905
        %v1927 = vpack.c.b16 %v1908, %v1907
        %v1928 = vpack.c.b16 %v1910, %v1909
        %v1929 = vpack.c.b16 %v1912, %v1911
        %v1930 = vpack.c.b16 %v1914, %v1913
        %v1963 = vunpack.c.l.b16 %v1867
        %v1964 = vunpack.c.l.b16 %v1868
        %v1965 = vunpack.c.l.b16 %v1869
        %v1966 = vunpack.c.l.b16 %v1870
        %v1967 = vunpack.c.l.b16 %v1871
        %v1968 = vunpack.c.l.b16 %v1872
        %v1969 = vunpack.c.l.b16 %v1873
        %v1970 = vunpack.c.l.b16 %v1874
        %v1971 = vunpack.c.l.b16 %v1875
        %v1972 = vunpack.c.l.b16 %v1876
        %v1973 = vunpack.c.l.b16 %v1877
        %v1974 = vunpack.c.l.b16 %v1878
        %v1975 = vunpack.c.l.b16 %v1879
        %v1976 = vunpack.c.l.b16 %v1880
        %v1977 = vunpack.c.l.b16 %v1881
        %v1978 = vunpack.c.l.b16 %v1882
        %v1979 = vpack.c.b16 %v1964, %v1963
        %v1980 = vpack.c.b16 %v1966, %v1965
        %v1981 = vpack.c.b16 %v1968, %v1967
        %v1982 = vpack.c.b16 %v1970, %v1969
        %v1983 = vpack.c.b16 %v1972, %v1971
        %v1984 = vpack.c.b16 %v1974, %v1973
        %v1985 = vpack.c.b16 %v1976, %v1975
        %v1986 = vpack.c.b16 %v1978, %v1977
        %1995 = vmatpush.bf16.msra.mxu0 %v1986
        %1996 = vmatpush.bf16.msra.mxu0 %v1985
        %1997 = vmatpush.bf16.msra.mxu0 %v1984
        %1998 = vmatpush.bf16.msra.mxu0 %v1983
        %1999 = vmatpush.bf16.msra.mxu0 %v1982
        %2000 = vmatpush.bf16.msra.mxu0 %v1981
        %2001 = vmatpush.bf16.msra.mxu0 %v1980
        %2002 = vmatpush.bf16.msra.mxu0 %v1979
        %2003 = vmatmul.bf16.gmra.mxu0 %v1915
        %v2004 = vpop.f32.mrf.mxu0
        %v2005 = vadd.f32 0.0, %v2004
        %v2006 = vpop.f32.mrf.mxu0
        %v2007 = vadd.f32 0.0, %v2006
        %2008 = vmatmul.bf16.gmra.mxu0 %v1916
        %v2009 = vpop.f32.mrf.mxu0
        %v2010 = vadd.f32 0.0, %v2009
        %v2011 = vpop.f32.mrf.mxu0
        %v2012 = vadd.f32 0.0, %v2011
        %2013 = vmatmul.bf16.gmra.mxu0 %v1917
        %v2014 = vpop.f32.mrf.mxu0
        %v2015 = vadd.f32 0.0, %v2014
        %v2016 = vpop.f32.mrf.mxu0
        %v2017 = vadd.f32 0.0, %v2016
        %2018 = vmatmul.bf16.gmra.mxu0 %v1918
        %v2019 = vpop.f32.mrf.mxu0
        %v2020 = vadd.f32 0.0, %v2019
        %v2021 = vpop.f32.mrf.mxu0
        %v2022 = vadd.f32 0.0, %v2021
        %2023 = vmatmul.bf16.gmra.mxu0 %v1919
        %v2024 = vpop.f32.mrf.mxu0
        %v2025 = vadd.f32 0.0, %v2024
        %v2026 = vpop.f32.mrf.mxu0
        %v2027 = vadd.f32 0.0, %v2026
        %2028 = vmatmul.bf16.gmra.mxu0 %v1920
        %v2029 = vpop.f32.mrf.mxu0
        %v2030 = vadd.f32 0.0, %v2029
        %v2031 = vpop.f32.mrf.mxu0
        %v2032 = vadd.f32 0.0, %v2031
        %2033 = vmatmul.bf16.gmra.mxu0 %v1921
        %v2034 = vpop.f32.mrf.mxu0
        %v2035 = vadd.f32 0.0, %v2034
        %v2036 = vpop.f32.mrf.mxu0
        %v2037 = vadd.f32 0.0, %v2036
        %2038 = vmatmul.bf16.gmra.mxu0 %v1922
        %v2039 = vpop.f32.mrf.mxu0
        %v2040 = vadd.f32 0.0, %v2039
        %v2041 = vpop.f32.mrf.mxu0
        %v2042 = vadd.f32 0.0, %v2041
        %2043 = vmatmul.bf16.gmra.mxu0 %v1923
        %v2044 = vpop.f32.mrf.mxu0
        %v2045 = vadd.f32 0.0, %v2044
        %v2046 = vpop.f32.mrf.mxu0
        %v2047 = vadd.f32 0.0, %v2046
        %2048 = vmatmul.bf16.gmra.mxu0 %v1924
        %v2049 = vpop.f32.mrf.mxu0
        %v2050 = vadd.f32 0.0, %v2049
        %v2051 = vpop.f32.mrf.mxu0
        %v2052 = vadd.f32 0.0, %v2051
        %2053 = vmatmul.bf16.gmra.mxu0 %v1925
        %v2054 = vpop.f32.mrf.mxu0
        %v2055 = vadd.f32 0.0, %v2054
        %v2056 = vpop.f32.mrf.mxu0
        %v2057 = vadd.f32 0.0, %v2056
        %2058 = vmatmul.bf16.gmra.mxu0 %v1926
        %v2059 = vpop.f32.mrf.mxu0
        %v2060 = vadd.f32 0.0, %v2059
        %v2061 = vpop.f32.mrf.mxu0
        %v2062 = vadd.f32 0.0, %v2061
        %2063 = vmatmul.bf16.gmra.mxu0 %v1927
        %v2064 = vpop.f32.mrf.mxu0
        %v2065 = vadd.f32 0.0, %v2064
        %v2066 = vpop.f32.mrf.mxu0
        %v2067 = vadd.f32 0.0, %v2066
        %2068 = vmatmul.bf16.gmra.mxu0 %v1928
        %v2069 = vpop.f32.mrf.mxu0
        %v2070 = vadd.f32 0.0, %v2069
        %v2071 = vpop.f32.mrf.mxu0
        %v2072 = vadd.f32 0.0, %v2071
        %2073 = vmatmul.bf16.gmra.mxu0 %v1929
        %v2074 = vpop.f32.mrf.mxu0
        %v2075 = vadd.f32 0.0, %v2074
        %v2076 = vpop.f32.mrf.mxu0
        %v2077 = vadd.f32 0.0, %v2076
        %2078 = vmatmul.bf16.gmra.mxu0 %v1930
        %v2079 = vpop.f32.mrf.mxu0
        %v2080 = vadd.f32 0.0, %v2079
        %v2081 = vpop.f32.mrf.mxu0
        %v2082 = vadd.f32 0.0, %v2081
        %2083 = vdwg.mxu0
        %v2084 = vadd.f32 %v1624, %v2005
        %v2085 = vadd.f32 %v1626, %v2007
        %v2086 = vadd.f32 %v1629, %v2010
        %v2087 = vadd.f32 %v1631, %v2012
        %v2088 = vadd.f32 %v1634, %v2015
        %v2089 = vadd.f32 %v1636, %v2017
        %v2090 = vadd.f32 %v1639, %v2020
        %v2091 = vadd.f32 %v1641, %v2022
        %v2092 = vadd.f32 %v1644, %v2025
        %v2093 = vadd.f32 %v1646, %v2027
        %v2094 = vadd.f32 %v1649, %v2030
        %v2095 = vadd.f32 %v1651, %v2032
        %v2096 = vadd.f32 %v1654, %v2035
        %v2097 = vadd.f32 %v1656, %v2037
        %v2098 = vadd.f32 %v1659, %v2040
        %v2099 = vadd.f32 %v1661, %v2042
        %v2100 = vadd.f32 %v1664, %v2045
        %v2101 = vadd.f32 %v1666, %v2047
        %v2102 = vadd.f32 %v1669, %v2050
        %v2103 = vadd.f32 %v1671, %v2052
        %v2104 = vadd.f32 %v1674, %v2055
        %v2105 = vadd.f32 %v1676, %v2057
        %v2106 = vadd.f32 %v1679, %v2060
        %v2107 = vadd.f32 %v1681, %v2062
        %v2108 = vadd.f32 %v1684, %v2065
        %v2109 = vadd.f32 %v1686, %v2067
        %v2110 = vadd.f32 %v1689, %v2070
        %v2111 = vadd.f32 %v1691, %v2072
        %v2112 = vadd.f32 %v1694, %v2075
        %v2113 = vadd.f32 %v1696, %v2077
        %v2114 = vadd.f32 %v1699, %v2080
        %v2115 = vadd.f32 %v1701, %v2082
        %v2116 = vld [vmem:[%s682] sm:$0xf]
        %v2117 = vld [vmem:[%s682 + $0x4] sm:$0xf]
        %v2118 = vld [vmem:[%s682 + $0xc] sm:$0xf]
        %v2119 = vld [vmem:[%s682 + $0x10] sm:$0xf]
        %v2120 = vld [vmem:[%s682 + $0x18] sm:$0xf]
        %v2121 = vld [vmem:[%s682 + $0x1c] sm:$0xf]
        %v2122 = vld [vmem:[%s682 + $0x24] sm:$0xf]
        %v2123 = vld [vmem:[%s682 + $0x28] sm:$0xf]
        %v2124 = vld [vmem:[%s682 + $0x30] sm:$0xf]
        %v2125 = vld [vmem:[%s682 + $0x34] sm:$0xf]
        %v2126 = vld [vmem:[%s682 + $0x3c] sm:$0xf]
        %v2127 = vld [vmem:[%s682 + $0x40] sm:$0xf]
        %v2128 = vld [vmem:[%s682 + $0x48] sm:$0xf]
        %v2129 = vld [vmem:[%s682 + $0x4c] sm:$0xf]
        %v2130 = vld [vmem:[%s682 + $0x54] sm:$0xf]
        %v2131 = vld [vmem:[%s682 + $0x58] sm:$0xf]
        %v2132 = vld [vmem:[%s682 + $0x60] sm:$0xf]
        %v2133 = vld [vmem:[%s682 + $0x64] sm:$0xf]
        %v2134 = vld [vmem:[%s682 + $0x6c] sm:$0xf]
        %v2135 = vld [vmem:[%s682 + $0x70] sm:$0xf]
        %v2136 = vld [vmem:[%s682 + $0x78] sm:$0xf]
        %v2137 = vld [vmem:[%s682 + $0x7c] sm:$0xf]
        %v2138 = vld [vmem:[%s682 + $0x84] sm:$0xf]
        %v2139 = vld [vmem:[%s682 + $0x88] sm:$0xf]
        %v2140 = vld [vmem:[%s682 + $0x90] sm:$0xf]
        %v2141 = vld [vmem:[%s682 + $0x94] sm:$0xf]
        %v2142 = vld [vmem:[%s682 + $0x9c] sm:$0xf]
        %v2143 = vld [vmem:[%s682 + $0xa0] sm:$0xf]
        %v2144 = vld [vmem:[%s682 + $0xa8] sm:$0xf]
        %v2145 = vld [vmem:[%s682 + $0xac] sm:$0xf]
        %v2146 = vld [vmem:[%s682 + $0xb4] sm:$0xf]
        %v2147 = vld [vmem:[%s682 + $0xb8] sm:$0xf]
        %s2148 = scalar_lea.vmem %s1, 192
        %v2149 = vld [vmem:[%s2148] sm:$0xf]
        %v2150 = vld [vmem:[%s2148 + $0x4] sm:$0xf]
        %v2151 = vld [vmem:[%s2148 + $0x8] sm:$0xf]
        %v2152 = vld [vmem:[%s2148 + $0xc] sm:$0xf]
        %v2153 = vld [vmem:[%s2148 + $0x10] sm:$0xf]
        %v2154 = vld [vmem:[%s2148 + $0x14] sm:$0xf]
        %v2155 = vld [vmem:[%s2148 + $0x18] sm:$0xf]
        %v2156 = vld [vmem:[%s2148 + $0x1c] sm:$0xf]
        %v2157 = vld [vmem:[%s2148 + $0x20] sm:$0xf]
        %v2158 = vld [vmem:[%s2148 + $0x24] sm:$0xf]
        %v2159 = vld [vmem:[%s2148 + $0x28] sm:$0xf]
        %v2160 = vld [vmem:[%s2148 + $0x2c] sm:$0xf]
        %v2161 = vld [vmem:[%s2148 + $0x30] sm:$0xf]
        %v2162 = vld [vmem:[%s2148 + $0x34] sm:$0xf]
        %v2163 = vld [vmem:[%s2148 + $0x38] sm:$0xf]
        %v2164 = vld [vmem:[%s2148 + $0x3c] sm:$0xf]
        %v2197 = vunpack.c.l.b16 %v2116
        %v2198 = vunpack.c.l.b16 %v2117
        %v2199 = vunpack.c.l.b16 %v2118
        %v2200 = vunpack.c.l.b16 %v2119
        %v2201 = vunpack.c.l.b16 %v2120
        %v2202 = vunpack.c.l.b16 %v2121
        %v2203 = vunpack.c.l.b16 %v2122
        %v2204 = vunpack.c.l.b16 %v2123
        %v2205 = vunpack.c.l.b16 %v2124
        %v2206 = vunpack.c.l.b16 %v2125
        %v2207 = vunpack.c.l.b16 %v2126
        %v2208 = vunpack.c.l.b16 %v2127
        %v2209 = vunpack.c.l.b16 %v2128
        %v2210 = vunpack.c.l.b16 %v2129
        %v2211 = vunpack.c.l.b16 %v2130
        %v2212 = vunpack.c.l.b16 %v2131
        %v2213 = vunpack.c.l.b16 %v2132
        %v2214 = vunpack.c.l.b16 %v2133
        %v2215 = vunpack.c.l.b16 %v2134
        %v2216 = vunpack.c.l.b16 %v2135
        %v2217 = vunpack.c.l.b16 %v2136
        %v2218 = vunpack.c.l.b16 %v2137
        %v2219 = vunpack.c.l.b16 %v2138
        %v2220 = vunpack.c.l.b16 %v2139
        %v2221 = vunpack.c.l.b16 %v2140
        %v2222 = vunpack.c.l.b16 %v2141
        %v2223 = vunpack.c.l.b16 %v2142
        %v2224 = vunpack.c.l.b16 %v2143
        %v2225 = vunpack.c.l.b16 %v2144
        %v2226 = vunpack.c.l.b16 %v2145
        %v2227 = vunpack.c.l.b16 %v2146
        %v2228 = vunpack.c.l.b16 %v2147
        %v2229 = vpack.c.b16 %v2198, %v2197
        %v2230 = vpack.c.b16 %v2200, %v2199
        %v2231 = vpack.c.b16 %v2202, %v2201
        %v2232 = vpack.c.b16 %v2204, %v2203
        %v2233 = vpack.c.b16 %v2206, %v2205
        %v2234 = vpack.c.b16 %v2208, %v2207
        %v2235 = vpack.c.b16 %v2210, %v2209
        %v2236 = vpack.c.b16 %v2212, %v2211
        %v2237 = vpack.c.b16 %v2214, %v2213
        %v2238 = vpack.c.b16 %v2216, %v2215
        %v2239 = vpack.c.b16 %v2218, %v2217
        %v2240 = vpack.c.b16 %v2220, %v2219
        %v2241 = vpack.c.b16 %v2222, %v2221
        %v2242 = vpack.c.b16 %v2224, %v2223
        %v2243 = vpack.c.b16 %v2226, %v2225
        %v2244 = vpack.c.b16 %v2228, %v2227
        %v2277 = vunpack.c.l.b16 %v2149
        %v2278 = vunpack.c.l.b16 %v2150
        %v2279 = vunpack.c.l.b16 %v2151
        %v2280 = vunpack.c.l.b16 %v2152
        %v2281 = vunpack.c.l.b16 %v2153
        %v2282 = vunpack.c.l.b16 %v2154
        %v2283 = vunpack.c.l.b16 %v2155
        %v2284 = vunpack.c.l.b16 %v2156
        %v2285 = vunpack.c.l.b16 %v2157
        %v2286 = vunpack.c.l.b16 %v2158
        %v2287 = vunpack.c.l.b16 %v2159
        %v2288 = vunpack.c.l.b16 %v2160
        %v2289 = vunpack.c.l.b16 %v2161
        %v2290 = vunpack.c.l.b16 %v2162
        %v2291 = vunpack.c.l.b16 %v2163
        %v2292 = vunpack.c.l.b16 %v2164
        %v2293 = vpack.c.b16 %v2278, %v2277
        %v2294 = vpack.c.b16 %v2280, %v2279
        %v2295 = vpack.c.b16 %v2282, %v2281
        %v2296 = vpack.c.b16 %v2284, %v2283
        %v2297 = vpack.c.b16 %v2286, %v2285
        %v2298 = vpack.c.b16 %v2288, %v2287
        %v2299 = vpack.c.b16 %v2290, %v2289
        %v2300 = vpack.c.b16 %v2292, %v2291
        %2309 = vmatpush.bf16.msra.mxu0 %v2300
        %2310 = vmatpush.bf16.msra.mxu0 %v2299
        %2311 = vmatpush.bf16.msra.mxu0 %v2298
        %2312 = vmatpush.bf16.msra.mxu0 %v2297
        %2313 = vmatpush.bf16.msra.mxu0 %v2296
        %2314 = vmatpush.bf16.msra.mxu0 %v2295
        %2315 = vmatpush.bf16.msra.mxu0 %v2294
        %2316 = vmatpush.bf16.msra.mxu0 %v2293
        %2317 = vmatmul.bf16.gmra.mxu0 %v2229
        %v2318 = vpop.f32.mrf.mxu0
        %v2319 = vadd.f32 0.0, %v2318
        %v2320 = vpop.f32.mrf.mxu0
        %v2321 = vadd.f32 0.0, %v2320
        %2322 = vmatmul.bf16.gmra.mxu0 %v2230
        %v2323 = vpop.f32.mrf.mxu0
        %v2324 = vadd.f32 0.0, %v2323
        %v2325 = vpop.f32.mrf.mxu0
        %v2326 = vadd.f32 0.0, %v2325
        %2327 = vmatmul.bf16.gmra.mxu0 %v2231
        %v2328 = vpop.f32.mrf.mxu0
        %v2329 = vadd.f32 0.0, %v2328
        %v2330 = vpop.f32.mrf.mxu0
        %v2331 = vadd.f32 0.0, %v2330
        %2332 = vmatmul.bf16.gmra.mxu0 %v2232
        %v2333 = vpop.f32.mrf.mxu0
        %v2334 = vadd.f32 0.0, %v2333
        %v2335 = vpop.f32.mrf.mxu0
        %v2336 = vadd.f32 0.0, %v2335
        %2337 = vmatmul.bf16.gmra.mxu0 %v2233
        %v2338 = vpop.f32.mrf.mxu0
        %v2339 = vadd.f32 0.0, %v2338
        %v2340 = vpop.f32.mrf.mxu0
        %v2341 = vadd.f32 0.0, %v2340
        %2342 = vmatmul.bf16.gmra.mxu0 %v2234
        %v2343 = vpop.f32.mrf.mxu0
        %v2344 = vadd.f32 0.0, %v2343
        %v2345 = vpop.f32.mrf.mxu0
        %v2346 = vadd.f32 0.0, %v2345
        %2347 = vmatmul.bf16.gmra.mxu0 %v2235
        %v2348 = vpop.f32.mrf.mxu0
        %v2349 = vadd.f32 0.0, %v2348
        %v2350 = vpop.f32.mrf.mxu0
        %v2351 = vadd.f32 0.0, %v2350
        %2352 = vmatmul.bf16.gmra.mxu0 %v2236
        %v2353 = vpop.f32.mrf.mxu0
        %v2354 = vadd.f32 0.0, %v2353
        %v2355 = vpop.f32.mrf.mxu0
        %v2356 = vadd.f32 0.0, %v2355
        %2357 = vmatmul.bf16.gmra.mxu0 %v2237
        %v2358 = vpop.f32.mrf.mxu0
        %v2359 = vadd.f32 0.0, %v2358
        %v2360 = vpop.f32.mrf.mxu0
        %v2361 = vadd.f32 0.0, %v2360
        %2362 = vmatmul.bf16.gmra.mxu0 %v2238
        %v2363 = vpop.f32.mrf.mxu0
        %v2364 = vadd.f32 0.0, %v2363
        %v2365 = vpop.f32.mrf.mxu0
        %v2366 = vadd.f32 0.0, %v2365
        %2367 = vmatmul.bf16.gmra.mxu0 %v2239
        %v2368 = vpop.f32.mrf.mxu0
        %v2369 = vadd.f32 0.0, %v2368
        %v2370 = vpop.f32.mrf.mxu0
        %v2371 = vadd.f32 0.0, %v2370
        %2372 = vmatmul.bf16.gmra.mxu0 %v2240
        %v2373 = vpop.f32.mrf.mxu0
        %v2374 = vadd.f32 0.0, %v2373
        %v2375 = vpop.f32.mrf.mxu0
        %v2376 = vadd.f32 0.0, %v2375
        %2377 = vmatmul.bf16.gmra.mxu0 %v2241
        %v2378 = vpop.f32.mrf.mxu0
        %v2379 = vadd.f32 0.0, %v2378
        %v2380 = vpop.f32.mrf.mxu0
        %v2381 = vadd.f32 0.0, %v2380
        %2382 = vmatmul.bf16.gmra.mxu0 %v2242
        %v2383 = vpop.f32.mrf.mxu0
        %v2384 = vadd.f32 0.0, %v2383
        %v2385 = vpop.f32.mrf.mxu0
        %v2386 = vadd.f32 0.0, %v2385
        %2387 = vmatmul.bf16.gmra.mxu0 %v2243
        %v2388 = vpop.f32.mrf.mxu0
        %v2389 = vadd.f32 0.0, %v2388
        %v2390 = vpop.f32.mrf.mxu0
        %v2391 = vadd.f32 0.0, %v2390
        %2392 = vmatmul.bf16.gmra.mxu0 %v2244
        %v2393 = vpop.f32.mrf.mxu0
        %v2394 = vadd.f32 0.0, %v2393
        %v2395 = vpop.f32.mrf.mxu0
        %v2396 = vadd.f32 0.0, %v2395
        %2397 = vdwg.mxu0
        %v2398 = vadd.f32 %v2084, %v2319
        %v2399 = vadd.f32 %v2085, %v2321
        %v2400 = vadd.f32 %v2086, %v2324
        %v2401 = vadd.f32 %v2087, %v2326
        %v2402 = vadd.f32 %v2088, %v2329
        %v2403 = vadd.f32 %v2089, %v2331
        %v2404 = vadd.f32 %v2090, %v2334
        %v2405 = vadd.f32 %v2091, %v2336
        %v2406 = vadd.f32 %v2092, %v2339
        %v2407 = vadd.f32 %v2093, %v2341
        %v2408 = vadd.f32 %v2094, %v2344
        %v2409 = vadd.f32 %v2095, %v2346
        %v2410 = vadd.f32 %v2096, %v2349
        %v2411 = vadd.f32 %v2097, %v2351
        %v2412 = vadd.f32 %v2098, %v2354
        %v2413 = vadd.f32 %v2099, %v2356
        %v2414 = vadd.f32 %v2100, %v2359
        %v2415 = vadd.f32 %v2101, %v2361
        %v2416 = vadd.f32 %v2102, %v2364
        %v2417 = vadd.f32 %v2103, %v2366
        %v2418 = vadd.f32 %v2104, %v2369
        %v2419 = vadd.f32 %v2105, %v2371
        %v2420 = vadd.f32 %v2106, %v2374
        %v2421 = vadd.f32 %v2107, %v2376
        %v2422 = vadd.f32 %v2108, %v2379
        %v2423 = vadd.f32 %v2109, %v2381
        %v2424 = vadd.f32 %v2110, %v2384
        %v2425 = vadd.f32 %v2111, %v2386
        %v2426 = vadd.f32 %v2112, %v2389
        %v2427 = vadd.f32 %v2113, %v2391
        %v2428 = vadd.f32 %v2114, %v2394
        %v2429 = vadd.f32 %v2115, %v2396
        %v2430 = vld [vmem:[%s682] sm:$0xf]
        %v2431 = vld [vmem:[%s682 + $0x4] sm:$0xf]
        %v2432 = vld [vmem:[%s682 + $0x8] sm:$0x1]
        %v2433 = vld [vmem:[%s682 + $0xc] sm:$0xf]
        %v2434 = vld [vmem:[%s682 + $0x10] sm:$0xf]
        %v2435 = vld [vmem:[%s682 + $0x14] sm:$0x1]
        %v2436 = vld [vmem:[%s682 + $0x18] sm:$0xf]
        %v2437 = vld [vmem:[%s682 + $0x1c] sm:$0xf]
        %v2438 = vld [vmem:[%s682 + $0x20] sm:$0x1]
        %v2439 = vld [vmem:[%s682 + $0x24] sm:$0xf]
        %v2440 = vld [vmem:[%s682 + $0x28] sm:$0xf]
        %v2441 = vld [vmem:[%s682 + $0x2c] sm:$0x1]
        %v2442 = vld [vmem:[%s682 + $0x30] sm:$0xf]
        %v2443 = vld [vmem:[%s682 + $0x34] sm:$0xf]
        %v2444 = vld [vmem:[%s682 + $0x38] sm:$0x1]
        %v2445 = vld [vmem:[%s682 + $0x3c] sm:$0xf]
        %v2446 = vld [vmem:[%s682 + $0x40] sm:$0xf]
        %v2447 = vld [vmem:[%s682 + $0x44] sm:$0x1]
        %v2448 = vld [vmem:[%s682 + $0x48] sm:$0xf]
        %v2449 = vld [vmem:[%s682 + $0x4c] sm:$0xf]
        %v2450 = vld [vmem:[%s682 + $0x50] sm:$0x1]
        %v2451 = vld [vmem:[%s682 + $0x54] sm:$0xf]
        %v2452 = vld [vmem:[%s682 + $0x58] sm:$0xf]
        %v2453 = vld [vmem:[%s682 + $0x5c] sm:$0x1]
        %v2454 = vld [vmem:[%s682 + $0x60] sm:$0xf]
        %v2455 = vld [vmem:[%s682 + $0x64] sm:$0xf]
        %v2456 = vld [vmem:[%s682 + $0x68] sm:$0x1]
        %v2457 = vld [vmem:[%s682 + $0x6c] sm:$0xf]
        %v2458 = vld [vmem:[%s682 + $0x70] sm:$0xf]
        %v2459 = vld [vmem:[%s682 + $0x74] sm:$0x1]
        %v2460 = vld [vmem:[%s682 + $0x78] sm:$0xf]
        %v2461 = vld [vmem:[%s682 + $0x7c] sm:$0xf]
        %v2462 = vld [vmem:[%s682 + $0x80] sm:$0x1]
        %v2463 = vld [vmem:[%s682 + $0x84] sm:$0xf]
        %v2464 = vld [vmem:[%s682 + $0x88] sm:$0xf]
        %v2465 = vld [vmem:[%s682 + $0x8c] sm:$0x1]
        %v2466 = vld [vmem:[%s682 + $0x90] sm:$0xf]
        %v2467 = vld [vmem:[%s682 + $0x94] sm:$0xf]
        %v2468 = vld [vmem:[%s682 + $0x98] sm:$0x1]
        %v2469 = vld [vmem:[%s682 + $0x9c] sm:$0xf]
        %v2470 = vld [vmem:[%s682 + $0xa0] sm:$0xf]
        %v2471 = vld [vmem:[%s682 + $0xa4] sm:$0x1]
        %v2472 = vld [vmem:[%s682 + $0xa8] sm:$0xf]
        %v2473 = vld [vmem:[%s682 + $0xac] sm:$0xf]
        %v2474 = vld [vmem:[%s682 + $0xb0] sm:$0x1]
        %v2475 = vld [vmem:[%s682 + $0xb4] sm:$0xf]
        %v2476 = vld [vmem:[%s682 + $0xb8] sm:$0xf]
        %v2477 = vld [vmem:[%s682 + $0xbc] sm:$0x1]
        %v2479 = vshrl.u32 %v2430, 16
        %v2481 = vrot.slane %v2479, 4
        %v2482 = vshll.u32 %v2430, 16
        %v2484 = vrot.slane %v2482, 5
        %v2485 = vor.u32 %v2481, %v2484
        %v2486 = vrot.slane %v2485, 4
        %v2488 = vshll.u32 %v2431, 16
        %v2490 = vrot.slane %v2488, 5
        %v2491 = vsel %vm867, %v2486, %v2490
        %v2492 = vshrl.u32 %v2431, 16
        %v2494 = vrot.slane %v2492, 4
        %v2495 = vor.u32 %v2494, %v2490
        %v2496 = vrot.slane %v2495, 4
        %v2498 = vshll.u32 %v2432, 16
        %v2500 = vrot.slane %v2498, 5
        %v2501 = vsel %vm867, %v2496, %v2500
        %v2503 = vshrl.u32 %v2433, 16
        %v2505 = vrot.slane %v2503, 4
        %v2506 = vshll.u32 %v2433, 16
        %v2508 = vrot.slane %v2506, 5
        %v2509 = vor.u32 %v2505, %v2508
        %v2510 = vrot.slane %v2509, 4
        %v2512 = vshll.u32 %v2434, 16
        %v2514 = vrot.slane %v2512, 5
        %v2515 = vsel %vm867, %v2510, %v2514
        %v2516 = vshrl.u32 %v2434, 16
        %v2518 = vrot.slane %v2516, 4
        %v2519 = vor.u32 %v2518, %v2514
        %v2520 = vrot.slane %v2519, 4
        %v2522 = vshll.u32 %v2435, 16
        %v2524 = vrot.slane %v2522, 5
        %v2525 = vsel %vm867, %v2520, %v2524
        %v2527 = vshrl.u32 %v2436, 16
        %v2529 = vrot.slane %v2527, 4
        %v2530 = vshll.u32 %v2436, 16
        %v2532 = vrot.slane %v2530, 5
        %v2533 = vor.u32 %v2529, %v2532
        %v2534 = vrot.slane %v2533, 4
        %v2536 = vshll.u32 %v2437, 16
        %v2538 = vrot.slane %v2536, 5
        %v2539 = vsel %vm867, %v2534, %v2538
        %v2540 = vshrl.u32 %v2437, 16
        %v2542 = vrot.slane %v2540, 4
        %v2543 = vor.u32 %v2542, %v2538
        %v2544 = vrot.slane %v2543, 4
        %v2546 = vshll.u32 %v2438, 16
        %v2548 = vrot.slane %v2546, 5
        %v2549 = vsel %vm867, %v2544, %v2548
        %v2551 = vshrl.u32 %v2439, 16
        %v2553 = vrot.slane %v2551, 4
        %v2554 = vshll.u32 %v2439, 16
        %v2556 = vrot.slane %v2554, 5
        %v2557 = vor.u32 %v2553, %v2556
        %v2558 = vrot.slane %v2557, 4
        %v2560 = vshll.u32 %v2440, 16
        %v2562 = vrot.slane %v2560, 5
        %v2563 = vsel %vm867, %v2558, %v2562
        %v2564 = vshrl.u32 %v2440, 16
        %v2566 = vrot.slane %v2564, 4
        %v2567 = vor.u32 %v2566, %v2562
        %v2568 = vrot.slane %v2567, 4
        %v2570 = vshll.u32 %v2441, 16
        %v2572 = vrot.slane %v2570, 5
        %v2573 = vsel %vm867, %v2568, %v2572
        %v2575 = vshrl.u32 %v2442, 16
        %v2577 = vrot.slane %v2575, 4
        %v2578 = vshll.u32 %v2442, 16
        %v2580 = vrot.slane %v2578, 5
        %v2581 = vor.u32 %v2577, %v2580
        %v2582 = vrot.slane %v2581, 4
        %v2584 = vshll.u32 %v2443, 16
        %v2586 = vrot.slane %v2584, 5
        %v2587 = vsel %vm867, %v2582, %v2586
        %v2588 = vshrl.u32 %v2443, 16
        %v2590 = vrot.slane %v2588, 4
        %v2591 = vor.u32 %v2590, %v2586
        %v2592 = vrot.slane %v2591, 4
        %v2594 = vshll.u32 %v2444, 16
        %v2596 = vrot.slane %v2594, 5
        %v2597 = vsel %vm867, %v2592, %v2596
        %v2599 = vshrl.u32 %v2445, 16
        %v2601 = vrot.slane %v2599, 4
        %v2602 = vshll.u32 %v2445, 16
        %v2604 = vrot.slane %v2602, 5
        %v2605 = vor.u32 %v2601, %v2604
        %v2606 = vrot.slane %v2605, 4
        %v2608 = vshll.u32 %v2446, 16
        %v2610 = vrot.slane %v2608, 5
        %v2611 = vsel %vm867, %v2606, %v2610
        %v2612 = vshrl.u32 %v2446, 16
        %v2614 = vrot.slane %v2612, 4
        %v2615 = vor.u32 %v2614, %v2610
        %v2616 = vrot.slane %v2615, 4
        %v2618 = vshll.u32 %v2447, 16
        %v2620 = vrot.slane %v2618, 5
        %v2621 = vsel %vm867, %v2616, %v2620
        %v2623 = vshrl.u32 %v2448, 16
        %v2625 = vrot.slane %v2623, 4
        %v2626 = vshll.u32 %v2448, 16
        %v2628 = vrot.slane %v2626, 5
        %v2629 = vor.u32 %v2625, %v2628
        %v2630 = vrot.slane %v2629, 4
        %v2632 = vshll.u32 %v2449, 16
        %v2634 = vrot.slane %v2632, 5
        %v2635 = vsel %vm867, %v2630, %v2634
        %v2636 = vshrl.u32 %v2449, 16
        %v2638 = vrot.slane %v2636, 4
        %v2639 = vor.u32 %v2638, %v2634
        %v2640 = vrot.slane %v2639, 4
        %v2642 = vshll.u32 %v2450, 16
        %v2644 = vrot.slane %v2642, 5
        %v2645 = vsel %vm867, %v2640, %v2644
        %v2647 = vshrl.u32 %v2451, 16
        %v2649 = vrot.slane %v2647, 4
        %v2650 = vshll.u32 %v2451, 16
        %v2652 = vrot.slane %v2650, 5
        %v2653 = vor.u32 %v2649, %v2652
        %v2654 = vrot.slane %v2653, 4
        %v2656 = vshll.u32 %v2452, 16
        %v2658 = vrot.slane %v2656, 5
        %v2659 = vsel %vm867, %v2654, %v2658
        %v2660 = vshrl.u32 %v2452, 16
        %v2662 = vrot.slane %v2660, 4
        %v2663 = vor.u32 %v2662, %v2658
        %v2664 = vrot.slane %v2663, 4
        %v2666 = vshll.u32 %v2453, 16
        %v2668 = vrot.slane %v2666, 5
        %v2669 = vsel %vm867, %v2664, %v2668
        %v2671 = vshrl.u32 %v2454, 16
        %v2673 = vrot.slane %v2671, 4
        %v2674 = vshll.u32 %v2454, 16
        %v2676 = vrot.slane %v2674, 5
        %v2677 = vor.u32 %v2673, %v2676
        %v2678 = vrot.slane %v2677, 4
        %v2680 = vshll.u32 %v2455, 16
        %v2682 = vrot.slane %v2680, 5
        %v2683 = vsel %vm867, %v2678, %v2682
        %v2684 = vshrl.u32 %v2455, 16
        %v2686 = vrot.slane %v2684, 4
        %v2687 = vor.u32 %v2686, %v2682
        %v2688 = vrot.slane %v2687, 4
        %v2690 = vshll.u32 %v2456, 16
        %v2692 = vrot.slane %v2690, 5
        %v2693 = vsel %vm867, %v2688, %v2692
        %v2695 = vshrl.u32 %v2457, 16
        %v2697 = vrot.slane %v2695, 4
        %v2698 = vshll.u32 %v2457, 16
        %v2700 = vrot.slane %v2698, 5
        %v2701 = vor.u32 %v2697, %v2700
        %v2702 = vrot.slane %v2701, 4
        %v2704 = vshll.u32 %v2458, 16
        %v2706 = vrot.slane %v2704, 5
        %v2707 = vsel %vm867, %v2702, %v2706
        %v2708 = vshrl.u32 %v2458, 16
        %v2710 = vrot.slane %v2708, 4
        %v2711 = vor.u32 %v2710, %v2706
        %v2712 = vrot.slane %v2711, 4
        %v2714 = vshll.u32 %v2459, 16
        %v2716 = vrot.slane %v2714, 5
        %v2717 = vsel %vm867, %v2712, %v2716
        %v2719 = vshrl.u32 %v2460, 16
        %v2721 = vrot.slane %v2719, 4
        %v2722 = vshll.u32 %v2460, 16
        %v2724 = vrot.slane %v2722, 5
        %v2725 = vor.u32 %v2721, %v2724
        %v2726 = vrot.slane %v2725, 4
        %v2728 = vshll.u32 %v2461, 16
        %v2730 = vrot.slane %v2728, 5
        %v2731 = vsel %vm867, %v2726, %v2730
        %v2732 = vshrl.u32 %v2461, 16
        %v2734 = vrot.slane %v2732, 4
        %v2735 = vor.u32 %v2734, %v2730
        %v2736 = vrot.slane %v2735, 4
        %v2738 = vshll.u32 %v2462, 16
        %v2740 = vrot.slane %v2738, 5
        %v2741 = vsel %vm867, %v2736, %v2740
        %v2743 = vshrl.u32 %v2463, 16
        %v2745 = vrot.slane %v2743, 4
        %v2746 = vshll.u32 %v2463, 16
        %v2748 = vrot.slane %v2746, 5
        %v2749 = vor.u32 %v2745, %v2748
        %v2750 = vrot.slane %v2749, 4
        %v2752 = vshll.u32 %v2464, 16
        %v2754 = vrot.slane %v2752, 5
        %v2755 = vsel %vm867, %v2750, %v2754
        %v2756 = vshrl.u32 %v2464, 16
        %v2758 = vrot.slane %v2756, 4
        %v2759 = vor.u32 %v2758, %v2754
        %v2760 = vrot.slane %v2759, 4
        %v2762 = vshll.u32 %v2465, 16
        %v2764 = vrot.slane %v2762, 5
        %v2765 = vsel %vm867, %v2760, %v2764
        %v2767 = vshrl.u32 %v2466, 16
        %v2769 = vrot.slane %v2767, 4
        %v2770 = vshll.u32 %v2466, 16
        %v2772 = vrot.slane %v2770, 5
        %v2773 = vor.u32 %v2769, %v2772
        %v2774 = vrot.slane %v2773, 4
        %v2776 = vshll.u32 %v2467, 16
        %v2778 = vrot.slane %v2776, 5
        %v2779 = vsel %vm867, %v2774, %v2778
        %v2780 = vshrl.u32 %v2467, 16
        %v2782 = vrot.slane %v2780, 4
        %v2783 = vor.u32 %v2782, %v2778
        %v2784 = vrot.slane %v2783, 4
        %v2786 = vshll.u32 %v2468, 16
        %v2788 = vrot.slane %v2786, 5
        %v2789 = vsel %vm867, %v2784, %v2788
        %v2791 = vshrl.u32 %v2469, 16
        %v2793 = vrot.slane %v2791, 4
        %v2794 = vshll.u32 %v2469, 16
        %v2796 = vrot.slane %v2794, 5
        %v2797 = vor.u32 %v2793, %v2796
        %v2798 = vrot.slane %v2797, 4
        %v2800 = vshll.u32 %v2470, 16
        %v2802 = vrot.slane %v2800, 5
        %v2803 = vsel %vm867, %v2798, %v2802
        %v2804 = vshrl.u32 %v2470, 16
        %v2806 = vrot.slane %v2804, 4
        %v2807 = vor.u32 %v2806, %v2802
        %v2808 = vrot.slane %v2807, 4
        %v2810 = vshll.u32 %v2471, 16
        %v2812 = vrot.slane %v2810, 5
        %v2813 = vsel %vm867, %v2808, %v2812
        %v2815 = vshrl.u32 %v2472, 16
        %v2817 = vrot.slane %v2815, 4
        %v2818 = vshll.u32 %v2472, 16
        %v2820 = vrot.slane %v2818, 5
        %v2821 = vor.u32 %v2817, %v2820
        %v2822 = vrot.slane %v2821, 4
        %v2824 = vshll.u32 %v2473, 16
        %v2826 = vrot.slane %v2824, 5
        %v2827 = vsel %vm867, %v2822, %v2826
        %v2828 = vshrl.u32 %v2473, 16
        %v2830 = vrot.slane %v2828, 4
        %v2831 = vor.u32 %v2830, %v2826
        %v2832 = vrot.slane %v2831, 4
        %v2834 = vshll.u32 %v2474, 16
        %v2836 = vrot.slane %v2834, 5
        %v2837 = vsel %vm867, %v2832, %v2836
        %v2839 = vshrl.u32 %v2475, 16
        %v2841 = vrot.slane %v2839, 4
        %v2842 = vshll.u32 %v2475, 16
        %v2844 = vrot.slane %v2842, 5
        %v2845 = vor.u32 %v2841, %v2844
        %v2846 = vrot.slane %v2845, 4
        %v2848 = vshll.u32 %v2476, 16
        %v2850 = vrot.slane %v2848, 5
        %v2851 = vsel %vm867, %v2846, %v2850
        %v2852 = vshrl.u32 %v2476, 16
        %v2854 = vrot.slane %v2852, 4
        %v2855 = vor.u32 %v2854, %v2850
        %v2856 = vrot.slane %v2855, 4
        %v2858 = vshll.u32 %v2477, 16
        %v2860 = vrot.slane %v2858, 5
        %v2861 = vsel %vm867, %v2856, %v2860
        %s2894 = scalar_lea.vmem %s1, 256
        %v2895 = vld [vmem:[%s2894] sm:$0xf]
        %v2896 = vld [vmem:[%s2894 + $0x4] sm:$0xf]
        %v2897 = vld [vmem:[%s2894 + $0x8] sm:$0xf]
        %v2898 = vld [vmem:[%s2894 + $0xc] sm:$0xf]
        %v2899 = vld [vmem:[%s2894 + $0x10] sm:$0xf]
        %v2900 = vld [vmem:[%s2894 + $0x14] sm:$0xf]
        %v2901 = vld [vmem:[%s2894 + $0x18] sm:$0xf]
        %v2902 = vld [vmem:[%s2894 + $0x1c] sm:$0xf]
        %v2903 = vld [vmem:[%s2894 + $0x20] sm:$0xf]
        %v2904 = vld [vmem:[%s2894 + $0x24] sm:$0xf]
        %v2905 = vld [vmem:[%s2894 + $0x28] sm:$0xf]
        %v2906 = vld [vmem:[%s2894 + $0x2c] sm:$0xf]
        %v2907 = vld [vmem:[%s2894 + $0x30] sm:$0xf]
        %v2908 = vld [vmem:[%s2894 + $0x34] sm:$0xf]
        %v2909 = vld [vmem:[%s2894 + $0x38] sm:$0xf]
        %v2910 = vld [vmem:[%s2894 + $0x3c] sm:$0xf]
        %v2911 = vunpack.c.l.b16 %v2491
        %v2912 = vunpack.c.l.b16 %v2501
        %v2913 = vunpack.c.l.b16 %v2515
        %v2914 = vunpack.c.l.b16 %v2525
        %v2915 = vunpack.c.l.b16 %v2539
        %v2916 = vunpack.c.l.b16 %v2549
        %v2917 = vunpack.c.l.b16 %v2563
        %v2918 = vunpack.c.l.b16 %v2573
        %v2919 = vunpack.c.l.b16 %v2587
        %v2920 = vunpack.c.l.b16 %v2597
        %v2921 = vunpack.c.l.b16 %v2611
        %v2922 = vunpack.c.l.b16 %v2621
        %v2923 = vunpack.c.l.b16 %v2635
        %v2924 = vunpack.c.l.b16 %v2645
        %v2925 = vunpack.c.l.b16 %v2659
        %v2926 = vunpack.c.l.b16 %v2669
        %v2927 = vunpack.c.l.b16 %v2683
        %v2928 = vunpack.c.l.b16 %v2693
        %v2929 = vunpack.c.l.b16 %v2707
        %v2930 = vunpack.c.l.b16 %v2717
        %v2931 = vunpack.c.l.b16 %v2731
        %v2932 = vunpack.c.l.b16 %v2741
        %v2933 = vunpack.c.l.b16 %v2755
        %v2934 = vunpack.c.l.b16 %v2765
        %v2935 = vunpack.c.l.b16 %v2779
        %v2936 = vunpack.c.l.b16 %v2789
        %v2937 = vunpack.c.l.b16 %v2803
        %v2938 = vunpack.c.l.b16 %v2813
        %v2939 = vunpack.c.l.b16 %v2827
        %v2940 = vunpack.c.l.b16 %v2837
        %v2941 = vunpack.c.l.b16 %v2851
        %v2942 = vunpack.c.l.b16 %v2861
        %v2943 = vpack.c.b16 %v2912, %v2911
        %v2944 = vpack.c.b16 %v2914, %v2913
        %v2945 = vpack.c.b16 %v2916, %v2915
        %v2946 = vpack.c.b16 %v2918, %v2917
        %v2947 = vpack.c.b16 %v2920, %v2919
        %v2948 = vpack.c.b16 %v2922, %v2921
        %v2949 = vpack.c.b16 %v2924, %v2923
        %v2950 = vpack.c.b16 %v2926, %v2925
        %v2951 = vpack.c.b16 %v2928, %v2927
        %v2952 = vpack.c.b16 %v2930, %v2929
        %v2953 = vpack.c.b16 %v2932, %v2931
        %v2954 = vpack.c.b16 %v2934, %v2933
        %v2955 = vpack.c.b16 %v2936, %v2935
        %v2956 = vpack.c.b16 %v2938, %v2937
        %v2957 = vpack.c.b16 %v2940, %v2939
        %v2958 = vpack.c.b16 %v2942, %v2941
        %v2991 = vunpack.c.l.b16 %v2895
        %v2992 = vunpack.c.l.b16 %v2896
        %v2993 = vunpack.c.l.b16 %v2897
        %v2994 = vunpack.c.l.b16 %v2898
        %v2995 = vunpack.c.l.b16 %v2899
        %v2996 = vunpack.c.l.b16 %v2900
        %v2997 = vunpack.c.l.b16 %v2901
        %v2998 = vunpack.c.l.b16 %v2902
        %v2999 = vunpack.c.l.b16 %v2903
        %v3000 = vunpack.c.l.b16 %v2904
        %v3001 = vunpack.c.l.b16 %v2905
        %v3002 = vunpack.c.l.b16 %v2906
        %v3003 = vunpack.c.l.b16 %v2907
        %v3004 = vunpack.c.l.b16 %v2908
        %v3005 = vunpack.c.l.b16 %v2909
        %v3006 = vunpack.c.l.b16 %v2910
        %v3007 = vpack.c.b16 %v2992, %v2991
        %v3008 = vpack.c.b16 %v2994, %v2993
        %v3009 = vpack.c.b16 %v2996, %v2995
        %v3010 = vpack.c.b16 %v2998, %v2997
        %v3011 = vpack.c.b16 %v3000, %v2999
        %v3012 = vpack.c.b16 %v3002, %v3001
        %v3013 = vpack.c.b16 %v3004, %v3003
        %v3014 = vpack.c.b16 %v3006, %v3005
        %3023 = vmatpush.bf16.msra.mxu0 %v3014
        %3024 = vmatpush.bf16.msra.mxu0 %v3013
        %3025 = vmatpush.bf16.msra.mxu0 %v3012
        %3026 = vmatpush.bf16.msra.mxu0 %v3011
        %3027 = vmatpush.bf16.msra.mxu0 %v3010
        %3028 = vmatpush.bf16.msra.mxu0 %v3009
        %3029 = vmatpush.bf16.msra.mxu0 %v3008
        %3030 = vmatpush.bf16.msra.mxu0 %v3007
        %3031 = vmatmul.bf16.gmra.mxu0 %v2943
        %v3032 = vpop.f32.mrf.mxu0
        %v3033 = vadd.f32 0.0, %v3032
        %v3034 = vpop.f32.mrf.mxu0
        %v3035 = vadd.f32 0.0, %v3034
        %3036 = vmatmul.bf16.gmra.mxu0 %v2944
        %v3037 = vpop.f32.mrf.mxu0
        %v3038 = vadd.f32 0.0, %v3037
        %v3039 = vpop.f32.mrf.mxu0
        %v3040 = vadd.f32 0.0, %v3039
        %3041 = vmatmul.bf16.gmra.mxu0 %v2945
        %v3042 = vpop.f32.mrf.mxu0
        %v3043 = vadd.f32 0.0, %v3042
        %v3044 = vpop.f32.mrf.mxu0
        %v3045 = vadd.f32 0.0, %v3044
        %3046 = vmatmul.bf16.gmra.mxu0 %v2946
        %v3047 = vpop.f32.mrf.mxu0
        %v3048 = vadd.f32 0.0, %v3047
        %v3049 = vpop.f32.mrf.mxu0
        %v3050 = vadd.f32 0.0, %v3049
        %3051 = vmatmul.bf16.gmra.mxu0 %v2947
        %v3052 = vpop.f32.mrf.mxu0
        %v3053 = vadd.f32 0.0, %v3052
        %v3054 = vpop.f32.mrf.mxu0
        %v3055 = vadd.f32 0.0, %v3054
        %3056 = vmatmul.bf16.gmra.mxu0 %v2948
        %v3057 = vpop.f32.mrf.mxu0
        %v3058 = vadd.f32 0.0, %v3057
        %v3059 = vpop.f32.mrf.mxu0
        %v3060 = vadd.f32 0.0, %v3059
        %3061 = vmatmul.bf16.gmra.mxu0 %v2949
        %v3062 = vpop.f32.mrf.mxu0
        %v3063 = vadd.f32 0.0, %v3062
        %v3064 = vpop.f32.mrf.mxu0
        %v3065 = vadd.f32 0.0, %v3064
        %3066 = vmatmul.bf16.gmra.mxu0 %v2950
        %v3067 = vpop.f32.mrf.mxu0
        %v3068 = vadd.f32 0.0, %v3067
        %v3069 = vpop.f32.mrf.mxu0
        %v3070 = vadd.f32 0.0, %v3069
        %3071 = vmatmul.bf16.gmra.mxu0 %v2951
        %v3072 = vpop.f32.mrf.mxu0
        %v3073 = vadd.f32 0.0, %v3072
        %v3074 = vpop.f32.mrf.mxu0
        %v3075 = vadd.f32 0.0, %v3074
        %3076 = vmatmul.bf16.gmra.mxu0 %v2952
        %v3077 = vpop.f32.mrf.mxu0
        %v3078 = vadd.f32 0.0, %v3077
        %v3079 = vpop.f32.mrf.mxu0
        %v3080 = vadd.f32 0.0, %v3079
        %3081 = vmatmul.bf16.gmra.mxu0 %v2953
        %v3082 = vpop.f32.mrf.mxu0
        %v3083 = vadd.f32 0.0, %v3082
        %v3084 = vpop.f32.mrf.mxu0
        %v3085 = vadd.f32 0.0, %v3084
        %3086 = vmatmul.bf16.gmra.mxu0 %v2954
        %v3087 = vpop.f32.mrf.mxu0
        %v3088 = vadd.f32 0.0, %v3087
        %v3089 = vpop.f32.mrf.mxu0
        %v3090 = vadd.f32 0.0, %v3089
        %3091 = vmatmul.bf16.gmra.mxu0 %v2955
        %v3092 = vpop.f32.mrf.mxu0
        %v3093 = vadd.f32 0.0, %v3092
        %v3094 = vpop.f32.mrf.mxu0
        %v3095 = vadd.f32 0.0, %v3094
        %3096 = vmatmul.bf16.gmra.mxu0 %v2956
        %v3097 = vpop.f32.mrf.mxu0
        %v3098 = vadd.f32 0.0, %v3097
        %v3099 = vpop.f32.mrf.mxu0
        %v3100 = vadd.f32 0.0, %v3099
        %3101 = vmatmul.bf16.gmra.mxu0 %v2957
        %v3102 = vpop.f32.mrf.mxu0
        %v3103 = vadd.f32 0.0, %v3102
        %v3104 = vpop.f32.mrf.mxu0
        %v3105 = vadd.f32 0.0, %v3104
        %3106 = vmatmul.bf16.gmra.mxu0 %v2958
        %v3107 = vpop.f32.mrf.mxu0
        %v3108 = vadd.f32 0.0, %v3107
        %v3109 = vpop.f32.mrf.mxu0
        %v3110 = vadd.f32 0.0, %v3109
        %3111 = vdwg.mxu0
        %v3112 = vadd.f32 %v2398, %v3033
        %v3113 = vadd.f32 %v2399, %v3035
        %v3114 = vadd.f32 %v2400, %v3038
        %v3115 = vadd.f32 %v2401, %v3040
        %v3116 = vadd.f32 %v2402, %v3043
        %v3117 = vadd.f32 %v2403, %v3045
        %v3118 = vadd.f32 %v2404, %v3048
        %v3119 = vadd.f32 %v2405, %v3050
        %v3120 = vadd.f32 %v2406, %v3053
        %v3121 = vadd.f32 %v2407, %v3055
        %v3122 = vadd.f32 %v2408, %v3058
        %v3123 = vadd.f32 %v2409, %v3060
        %v3124 = vadd.f32 %v2410, %v3063
        %v3125 = vadd.f32 %v2411, %v3065
        %v3126 = vadd.f32 %v2412, %v3068
        %v3127 = vadd.f32 %v2413, %v3070
        %v3128 = vadd.f32 %v2414, %v3073
        %v3129 = vadd.f32 %v2415, %v3075
        %v3130 = vadd.f32 %v2416, %v3078
        %v3131 = vadd.f32 %v2417, %v3080
        %v3132 = vadd.f32 %v2418, %v3083
        %v3133 = vadd.f32 %v2419, %v3085
        %v3134 = vadd.f32 %v2420, %v3088
        %v3135 = vadd.f32 %v2421, %v3090
        %v3136 = vadd.f32 %v2422, %v3093
        %v3137 = vadd.f32 %v2423, %v3095
        %v3138 = vadd.f32 %v2424, %v3098
        %v3139 = vadd.f32 %v2425, %v3100
        %v3140 = vadd.f32 %v2426, %v3103
        %v3141 = vadd.f32 %v2427, %v3105
        %v3142 = vadd.f32 %v2428, %v3108
        %v3143 = vadd.f32 %v2429, %v3110
        %v3144 = vld [vmem:[%s682] sm:$0xe]
        %v3145 = vld [vmem:[%s682 + $0xc] sm:$0xe]
        %v3146 = vld [vmem:[%s682 + $0x18] sm:$0xe]
        %v3147 = vld [vmem:[%s682 + $0x24] sm:$0xe]
        %v3148 = vld [vmem:[%s682 + $0x30] sm:$0xe]
        %v3149 = vld [vmem:[%s682 + $0x3c] sm:$0xe]
        %v3150 = vld [vmem:[%s682 + $0x48] sm:$0xe]
        %v3151 = vld [vmem:[%s682 + $0x54] sm:$0xe]
        %v3152 = vld [vmem:[%s682 + $0x60] sm:$0xe]
        %v3153 = vld [vmem:[%s682 + $0x6c] sm:$0xe]
        %v3154 = vld [vmem:[%s682 + $0x78] sm:$0xe]
        %v3155 = vld [vmem:[%s682 + $0x84] sm:$0xe]
        %v3156 = vld [vmem:[%s682 + $0x90] sm:$0xe]
        %v3157 = vld [vmem:[%s682 + $0x9c] sm:$0xe]
        %v3158 = vld [vmem:[%s682 + $0xa8] sm:$0xe]
        %v3159 = vld [vmem:[%s682 + $0xb4] sm:$0xe]
        %v3208 = vrot.slane %v3144, 5
        %v3209 = vrot.slane %v3208, 4
        %v3210 = vrot.slane %v2431, 5
        %v3211 = vsel %vm1753, %v3209, %v3210
        %v3212 = vrot.slane %v3210, 4
        %v3213 = vrot.slane %v2432, 5
        %v3214 = vsel %vm1753, %v3212, %v3213
        %v3215 = vrot.slane %v3145, 5
        %v3216 = vrot.slane %v3215, 4
        %v3217 = vrot.slane %v2434, 5
        %v3218 = vsel %vm1753, %v3216, %v3217
        %v3219 = vrot.slane %v3217, 4
        %v3220 = vrot.slane %v2435, 5
        %v3221 = vsel %vm1753, %v3219, %v3220
        %v3222 = vrot.slane %v3146, 5
        %v3223 = vrot.slane %v3222, 4
        %v3224 = vrot.slane %v2437, 5
        %v3225 = vsel %vm1753, %v3223, %v3224
        %v3226 = vrot.slane %v3224, 4
        %v3227 = vrot.slane %v2438, 5
        %v3228 = vsel %vm1753, %v3226, %v3227
        %v3229 = vrot.slane %v3147, 5
        %v3230 = vrot.slane %v3229, 4
        %v3231 = vrot.slane %v2440, 5
        %v3232 = vsel %vm1753, %v3230, %v3231
        %v3233 = vrot.slane %v3231, 4
        %v3234 = vrot.slane %v2441, 5
        %v3235 = vsel %vm1753, %v3233, %v3234
        %v3236 = vrot.slane %v3148, 5
        %v3237 = vrot.slane %v3236, 4
        %v3238 = vrot.slane %v2443, 5
        %v3239 = vsel %vm1753, %v3237, %v3238
        %v3240 = vrot.slane %v3238, 4
        %v3241 = vrot.slane %v2444, 5
        %v3242 = vsel %vm1753, %v3240, %v3241
        %v3243 = vrot.slane %v3149, 5
        %v3244 = vrot.slane %v3243, 4
        %v3245 = vrot.slane %v2446, 5
        %v3246 = vsel %vm1753, %v3244, %v3245
        %v3247 = vrot.slane %v3245, 4
        %v3248 = vrot.slane %v2447, 5
        %v3249 = vsel %vm1753, %v3247, %v3248
        %v3250 = vrot.slane %v3150, 5
        %v3251 = vrot.slane %v3250, 4
        %v3252 = vrot.slane %v2449, 5
        %v3253 = vsel %vm1753, %v3251, %v3252
        %v3254 = vrot.slane %v3252, 4
        %v3255 = vrot.slane %v2450, 5
        %v3256 = vsel %vm1753, %v3254, %v3255
        %v3257 = vrot.slane %v3151, 5
        %v3258 = vrot.slane %v3257, 4
        %v3259 = vrot.slane %v2452, 5
        %v3260 = vsel %vm1753, %v3258, %v3259
        %v3261 = vrot.slane %v3259, 4
        %v3262 = vrot.slane %v2453, 5
        %v3263 = vsel %vm1753, %v3261, %v3262
        %v3264 = vrot.slane %v3152, 5
        %v3265 = vrot.slane %v3264, 4
        %v3266 = vrot.slane %v2455, 5
        %v3267 = vsel %vm1753, %v3265, %v3266
        %v3268 = vrot.slane %v3266, 4
        %v3269 = vrot.slane %v2456, 5
        %v3270 = vsel %vm1753, %v3268, %v3269
        %v3271 = vrot.slane %v3153, 5
        %v3272 = vrot.slane %v3271, 4
        %v3273 = vrot.slane %v2458, 5
        %v3274 = vsel %vm1753, %v3272, %v3273
        %v3275 = vrot.slane %v3273, 4
        %v3276 = vrot.slane %v2459, 5
        %v3277 = vsel %vm1753, %v3275, %v3276
        %v3278 = vrot.slane %v3154, 5
        %v3279 = vrot.slane %v3278, 4
        %v3280 = vrot.slane %v2461, 5
        %v3281 = vsel %vm1753, %v3279, %v3280
        %v3282 = vrot.slane %v3280, 4
        %v3283 = vrot.slane %v2462, 5
        %v3284 = vsel %vm1753, %v3282, %v3283
        %v3285 = vrot.slane %v3155, 5
        %v3286 = vrot.slane %v3285, 4
        %v3287 = vrot.slane %v2464, 5
        %v3288 = vsel %vm1753, %v3286, %v3287
        %v3289 = vrot.slane %v3287, 4
        %v3290 = vrot.slane %v2465, 5
        %v3291 = vsel %vm1753, %v3289, %v3290
        %v3292 = vrot.slane %v3156, 5
        %v3293 = vrot.slane %v3292, 4
        %v3294 = vrot.slane %v2467, 5
        %v3295 = vsel %vm1753, %v3293, %v3294
        %v3296 = vrot.slane %v3294, 4
        %v3297 = vrot.slane %v2468, 5
        %v3298 = vsel %vm1753, %v3296, %v3297
        %v3299 = vrot.slane %v3157, 5
        %v3300 = vrot.slane %v3299, 4
        %v3301 = vrot.slane %v2470, 5
        %v3302 = vsel %vm1753, %v3300, %v3301
        %v3303 = vrot.slane %v3301, 4
        %v3304 = vrot.slane %v2471, 5
        %v3305 = vsel %vm1753, %v3303, %v3304
        %v3306 = vrot.slane %v3158, 5
        %v3307 = vrot.slane %v3306, 4
        %v3308 = vrot.slane %v2473, 5
        %v3309 = vsel %vm1753, %v3307, %v3308
        %v3310 = vrot.slane %v3308, 4
        %v3311 = vrot.slane %v2474, 5
        %v3312 = vsel %vm1753, %v3310, %v3311
        %v3313 = vrot.slane %v3159, 5
        %v3314 = vrot.slane %v3313, 4
        %v3315 = vrot.slane %v2476, 5
        %v3316 = vsel %vm1753, %v3314, %v3315
        %v3317 = vrot.slane %v3315, 4
        %v3318 = vrot.slane %v2477, 5
        %v3319 = vsel %vm1753, %v3317, %v3318
        %s3320 = scalar_lea.vmem %s1, 320
        %v3321 = vld [vmem:[%s3320] sm:$0xf]
        %v3322 = vld [vmem:[%s3320 + $0x4] sm:$0xf]
        %v3323 = vld [vmem:[%s3320 + $0x8] sm:$0xf]
        %v3324 = vld [vmem:[%s3320 + $0xc] sm:$0xf]
        %v3325 = vld [vmem:[%s3320 + $0x10] sm:$0xf]
        %v3326 = vld [vmem:[%s3320 + $0x14] sm:$0xf]
        %v3327 = vld [vmem:[%s3320 + $0x18] sm:$0xf]
        %v3328 = vld [vmem:[%s3320 + $0x1c] sm:$0xf]
        %v3329 = vld [vmem:[%s3320 + $0x20] sm:$0xf]
        %v3330 = vld [vmem:[%s3320 + $0x24] sm:$0xf]
        %v3331 = vld [vmem:[%s3320 + $0x28] sm:$0xf]
        %v3332 = vld [vmem:[%s3320 + $0x2c] sm:$0xf]
        %v3333 = vld [vmem:[%s3320 + $0x30] sm:$0xf]
        %v3334 = vld [vmem:[%s3320 + $0x34] sm:$0xf]
        %v3335 = vld [vmem:[%s3320 + $0x38] sm:$0xf]
        %v3336 = vld [vmem:[%s3320 + $0x3c] sm:$0xf]
        %v3337 = vunpack.c.l.b16 %v3211
        %v3338 = vunpack.c.l.b16 %v3214
        %v3339 = vunpack.c.l.b16 %v3218
        %v3340 = vunpack.c.l.b16 %v3221
        %v3341 = vunpack.c.l.b16 %v3225
        %v3342 = vunpack.c.l.b16 %v3228
        %v3343 = vunpack.c.l.b16 %v3232
        %v3344 = vunpack.c.l.b16 %v3235
        %v3345 = vunpack.c.l.b16 %v3239
        %v3346 = vunpack.c.l.b16 %v3242
        %v3347 = vunpack.c.l.b16 %v3246
        %v3348 = vunpack.c.l.b16 %v3249
        %v3349 = vunpack.c.l.b16 %v3253
        %v3350 = vunpack.c.l.b16 %v3256
        %v3351 = vunpack.c.l.b16 %v3260
        %v3352 = vunpack.c.l.b16 %v3263
        %v3353 = vunpack.c.l.b16 %v3267
        %v3354 = vunpack.c.l.b16 %v3270
        %v3355 = vunpack.c.l.b16 %v3274
        %v3356 = vunpack.c.l.b16 %v3277
        %v3357 = vunpack.c.l.b16 %v3281
        %v3358 = vunpack.c.l.b16 %v3284
        %v3359 = vunpack.c.l.b16 %v3288
        %v3360 = vunpack.c.l.b16 %v3291
        %v3361 = vunpack.c.l.b16 %v3295
        %v3362 = vunpack.c.l.b16 %v3298
        %v3363 = vunpack.c.l.b16 %v3302
        %v3364 = vunpack.c.l.b16 %v3305
        %v3365 = vunpack.c.l.b16 %v3309
        %v3366 = vunpack.c.l.b16 %v3312
        %v3367 = vunpack.c.l.b16 %v3316
        %v3368 = vunpack.c.l.b16 %v3319
        %v3369 = vpack.c.b16 %v3338, %v3337
        %v3370 = vpack.c.b16 %v3340, %v3339
        %v3371 = vpack.c.b16 %v3342, %v3341
        %v3372 = vpack.c.b16 %v3344, %v3343
        %v3373 = vpack.c.b16 %v3346, %v3345
        %v3374 = vpack.c.b16 %v3348, %v3347
        %v3375 = vpack.c.b16 %v3350, %v3349
        %v3376 = vpack.c.b16 %v3352, %v3351
        %v3377 = vpack.c.b16 %v3354, %v3353
        %v3378 = vpack.c.b16 %v3356, %v3355
        %v3379 = vpack.c.b16 %v3358, %v3357
        %v3380 = vpack.c.b16 %v3360, %v3359
        %v3381 = vpack.c.b16 %v3362, %v3361
        %v3382 = vpack.c.b16 %v3364, %v3363
        %v3383 = vpack.c.b16 %v3366, %v3365
        %v3384 = vpack.c.b16 %v3368, %v3367
        %v3417 = vunpack.c.l.b16 %v3321
        %v3418 = vunpack.c.l.b16 %v3322
        %v3419 = vunpack.c.l.b16 %v3323
        %v3420 = vunpack.c.l.b16 %v3324
        %v3421 = vunpack.c.l.b16 %v3325
        %v3422 = vunpack.c.l.b16 %v3326
        %v3423 = vunpack.c.l.b16 %v3327
        %v3424 = vunpack.c.l.b16 %v3328
        %v3425 = vunpack.c.l.b16 %v3329
        %v3426 = vunpack.c.l.b16 %v3330
        %v3427 = vunpack.c.l.b16 %v3331
        %v3428 = vunpack.c.l.b16 %v3332
        %v3429 = vunpack.c.l.b16 %v3333
        %v3430 = vunpack.c.l.b16 %v3334
        %v3431 = vunpack.c.l.b16 %v3335
        %v3432 = vunpack.c.l.b16 %v3336
        %v3433 = vpack.c.b16 %v3418, %v3417
        %v3434 = vpack.c.b16 %v3420, %v3419
        %v3435 = vpack.c.b16 %v3422, %v3421
        %v3436 = vpack.c.b16 %v3424, %v3423
        %v3437 = vpack.c.b16 %v3426, %v3425
        %v3438 = vpack.c.b16 %v3428, %v3427
        %v3439 = vpack.c.b16 %v3430, %v3429
        %v3440 = vpack.c.b16 %v3432, %v3431
        %3449 = vmatpush.bf16.msra.mxu0 %v3440
        %3450 = vmatpush.bf16.msra.mxu0 %v3439
        %3451 = vmatpush.bf16.msra.mxu0 %v3438
        %3452 = vmatpush.bf16.msra.mxu0 %v3437
        %3453 = vmatpush.bf16.msra.mxu0 %v3436
        %3454 = vmatpush.bf16.msra.mxu0 %v3435
        %3455 = vmatpush.bf16.msra.mxu0 %v3434
        %3456 = vmatpush.bf16.msra.mxu0 %v3433
        %3457 = vmatmul.bf16.gmra.mxu0 %v3369
        %v3458 = vpop.f32.mrf.mxu0
        %v3459 = vadd.f32 0.0, %v3458
        %v3460 = vpop.f32.mrf.mxu0
        %v3461 = vadd.f32 0.0, %v3460
        %3462 = vmatmul.bf16.gmra.mxu0 %v3370
        %v3463 = vpop.f32.mrf.mxu0
        %v3464 = vadd.f32 0.0, %v3463
        %v3465 = vpop.f32.mrf.mxu0
        %v3466 = vadd.f32 0.0, %v3465
        %3467 = vmatmul.bf16.gmra.mxu0 %v3371
        %v3468 = vpop.f32.mrf.mxu0
        %v3469 = vadd.f32 0.0, %v3468
        %v3470 = vpop.f32.mrf.mxu0
        %v3471 = vadd.f32 0.0, %v3470
        %3472 = vmatmul.bf16.gmra.mxu0 %v3372
        %v3473 = vpop.f32.mrf.mxu0
        %v3474 = vadd.f32 0.0, %v3473
        %v3475 = vpop.f32.mrf.mxu0
        %v3476 = vadd.f32 0.0, %v3475
        %3477 = vmatmul.bf16.gmra.mxu0 %v3373
        %v3478 = vpop.f32.mrf.mxu0
        %v3479 = vadd.f32 0.0, %v3478
        %v3480 = vpop.f32.mrf.mxu0
        %v3481 = vadd.f32 0.0, %v3480
        %3482 = vmatmul.bf16.gmra.mxu0 %v3374
        %v3483 = vpop.f32.mrf.mxu0
        %v3484 = vadd.f32 0.0, %v3483
        %v3485 = vpop.f32.mrf.mxu0
        %v3486 = vadd.f32 0.0, %v3485
        %3487 = vmatmul.bf16.gmra.mxu0 %v3375
        %v3488 = vpop.f32.mrf.mxu0
        %v3489 = vadd.f32 0.0, %v3488
        %v3490 = vpop.f32.mrf.mxu0
        %v3491 = vadd.f32 0.0, %v3490
        %3492 = vmatmul.bf16.gmra.mxu0 %v3376
        %v3493 = vpop.f32.mrf.mxu0
        %v3494 = vadd.f32 0.0, %v3493
        %v3495 = vpop.f32.mrf.mxu0
        %v3496 = vadd.f32 0.0, %v3495
        %3497 = vmatmul.bf16.gmra.mxu0 %v3377
        %v3498 = vpop.f32.mrf.mxu0
        %v3499 = vadd.f32 0.0, %v3498
        %v3500 = vpop.f32.mrf.mxu0
        %v3501 = vadd.f32 0.0, %v3500
        %3502 = vmatmul.bf16.gmra.mxu0 %v3378
        %v3503 = vpop.f32.mrf.mxu0
        %v3504 = vadd.f32 0.0, %v3503
        %v3505 = vpop.f32.mrf.mxu0
        %v3506 = vadd.f32 0.0, %v3505
        %3507 = vmatmul.bf16.gmra.mxu0 %v3379
        %v3508 = vpop.f32.mrf.mxu0
        %v3509 = vadd.f32 0.0, %v3508
        %v3510 = vpop.f32.mrf.mxu0
        %v3511 = vadd.f32 0.0, %v3510
        %3512 = vmatmul.bf16.gmra.mxu0 %v3380
        %v3513 = vpop.f32.mrf.mxu0
        %v3514 = vadd.f32 0.0, %v3513
        %v3515 = vpop.f32.mrf.mxu0
        %v3516 = vadd.f32 0.0, %v3515
        %3517 = vmatmul.bf16.gmra.mxu0 %v3381
        %v3518 = vpop.f32.mrf.mxu0
        %v3519 = vadd.f32 0.0, %v3518
        %v3520 = vpop.f32.mrf.mxu0
        %v3521 = vadd.f32 0.0, %v3520
        %3522 = vmatmul.bf16.gmra.mxu0 %v3382
        %v3523 = vpop.f32.mrf.mxu0
        %v3524 = vadd.f32 0.0, %v3523
        %v3525 = vpop.f32.mrf.mxu0
        %v3526 = vadd.f32 0.0, %v3525
        %3527 = vmatmul.bf16.gmra.mxu0 %v3383
        %v3528 = vpop.f32.mrf.mxu0
        %v3529 = vadd.f32 0.0, %v3528
        %v3530 = vpop.f32.mrf.mxu0
        %v3531 = vadd.f32 0.0, %v3530
        %3532 = vmatmul.bf16.gmra.mxu0 %v3384
        %v3533 = vpop.f32.mrf.mxu0
        %v3534 = vadd.f32 0.0, %v3533
        %v3535 = vpop.f32.mrf.mxu0
        %v3536 = vadd.f32 0.0, %v3535
        %3537 = vdwg.mxu0
        %v3538 = vadd.f32 %v3112, %v3459
        %v3539 = vadd.f32 %v3113, %v3461
        %v3540 = vadd.f32 %v3114, %v3464
        %v3541 = vadd.f32 %v3115, %v3466
        %v3542 = vadd.f32 %v3116, %v3469
        %v3543 = vadd.f32 %v3117, %v3471
        %v3544 = vadd.f32 %v3118, %v3474
        %v3545 = vadd.f32 %v3119, %v3476
        %v3546 = vadd.f32 %v3120, %v3479
        %v3547 = vadd.f32 %v3121, %v3481
        %v3548 = vadd.f32 %v3122, %v3484
        %v3549 = vadd.f32 %v3123, %v3486
        %v3550 = vadd.f32 %v3124, %v3489
        %v3551 = vadd.f32 %v3125, %v3491
        %v3552 = vadd.f32 %v3126, %v3494
        %v3553 = vadd.f32 %v3127, %v3496
        %v3554 = vadd.f32 %v3128, %v3499
        %v3555 = vadd.f32 %v3129, %v3501
        %v3556 = vadd.f32 %v3130, %v3504
        %v3557 = vadd.f32 %v3131, %v3506
        %v3558 = vadd.f32 %v3132, %v3509
        %v3559 = vadd.f32 %v3133, %v3511
        %v3560 = vadd.f32 %v3134, %v3514
        %v3561 = vadd.f32 %v3135, %v3516
        %v3562 = vadd.f32 %v3136, %v3519
        %v3563 = vadd.f32 %v3137, %v3521
        %v3564 = vadd.f32 %v3138, %v3524
        %v3565 = vadd.f32 %v3139, %v3526
        %v3566 = vadd.f32 %v3140, %v3529
        %v3567 = vadd.f32 %v3141, %v3531
        %v3568 = vadd.f32 %v3142, %v3534
        %v3569 = vadd.f32 %v3143, %v3536
        %s3570 = scalar_lea.vmem [#allocation2], 24
        %v3571 = vld [vmem:[%s3570] sm:$0xf]
        %v3572 = vld [vmem:[%s3570 + $0x4] sm:$0xf]
        %v3573 = vld [vmem:[%s3570 + $0xc] sm:$0xf]
        %v3574 = vld [vmem:[%s3570 + $0x10] sm:$0xf]
        %v3575 = vld [vmem:[%s3570 + $0x18] sm:$0xf]
        %v3576 = vld [vmem:[%s3570 + $0x1c] sm:$0xf]
        %v3577 = vld [vmem:[%s3570 + $0x24] sm:$0xf]
        %v3578 = vld [vmem:[%s3570 + $0x28] sm:$0xf]
        %v3579 = vld [vmem:[%s3570 + $0x30] sm:$0xf]
        %v3580 = vld [vmem:[%s3570 + $0x34] sm:$0xf]
        %v3581 = vld [vmem:[%s3570 + $0x3c] sm:$0xf]
        %v3582 = vld [vmem:[%s3570 + $0x40] sm:$0xf]
        %v3583 = vld [vmem:[%s3570 + $0x48] sm:$0xf]
        %v3584 = vld [vmem:[%s3570 + $0x4c] sm:$0xf]
        %v3585 = vld [vmem:[%s3570 + $0x54] sm:$0xf]
        %v3586 = vld [vmem:[%s3570 + $0x58] sm:$0xf]
        %v3587 = vld [vmem:[%s3570 + $0x60] sm:$0xf]
        %v3588 = vld [vmem:[%s3570 + $0x64] sm:$0xf]
        %v3589 = vld [vmem:[%s3570 + $0x6c] sm:$0xf]
        %v3590 = vld [vmem:[%s3570 + $0x70] sm:$0xf]
        %v3591 = vld [vmem:[%s3570 + $0x78] sm:$0xf]
        %v3592 = vld [vmem:[%s3570 + $0x7c] sm:$0xf]
        %v3593 = vld [vmem:[%s3570 + $0x84] sm:$0xf]
        %v3594 = vld [vmem:[%s3570 + $0x88] sm:$0xf]
        %v3595 = vld [vmem:[%s3570 + $0x90] sm:$0xf]
        %v3596 = vld [vmem:[%s3570 + $0x94] sm:$0xf]
        %v3597 = vld [vmem:[%s3570 + $0x9c] sm:$0xf]
        %v3598 = vld [vmem:[%s3570 + $0xa0] sm:$0xf]
        %v3599 = vld [vmem:[%s3570 + $0xa8] sm:$0xf]
        %v3600 = vld [vmem:[%s3570 + $0xac] sm:$0xf]
        %v3601 = vld [vmem:[%s3570 + $0xb4] sm:$0xf]
        %v3602 = vld [vmem:[%s3570 + $0xb8] sm:$0xf]
        %s3603 = scalar_lea.vmem %s1, 384
        %v3604 = vld [vmem:[%s3603] sm:$0xf]
        %v3605 = vld [vmem:[%s3603 + $0x4] sm:$0xf]
        %v3606 = vld [vmem:[%s3603 + $0x8] sm:$0xf]
        %v3607 = vld [vmem:[%s3603 + $0xc] sm:$0xf]
        %v3608 = vld [vmem:[%s3603 + $0x10] sm:$0xf]
        %v3609 = vld [vmem:[%s3603 + $0x14] sm:$0xf]
        %v3610 = vld [vmem:[%s3603 + $0x18] sm:$0xf]
        %v3611 = vld [vmem:[%s3603 + $0x1c] sm:$0xf]
        %v3612 = vld [vmem:[%s3603 + $0x20] sm:$0xf]
        %v3613 = vld [vmem:[%s3603 + $0x24] sm:$0xf]
        %v3614 = vld [vmem:[%s3603 + $0x28] sm:$0xf]
        %v3615 = vld [vmem:[%s3603 + $0x2c] sm:$0xf]
        %v3616 = vld [vmem:[%s3603 + $0x30] sm:$0xf]
        %v3617 = vld [vmem:[%s3603 + $0x34] sm:$0xf]
        %v3618 = vld [vmem:[%s3603 + $0x38] sm:$0xf]
        %v3619 = vld [vmem:[%s3603 + $0x3c] sm:$0xf]
        %v3652 = vunpack.c.l.b16 %v3571
        %v3653 = vunpack.c.l.b16 %v3572
        %v3654 = vunpack.c.l.b16 %v3573
        %v3655 = vunpack.c.l.b16 %v3574
        %v3656 = vunpack.c.l.b16 %v3575
        %v3657 = vunpack.c.l.b16 %v3576
        %v3658 = vunpack.c.l.b16 %v3577
        %v3659 = vunpack.c.l.b16 %v3578
        %v3660 = vunpack.c.l.b16 %v3579
        %v3661 = vunpack.c.l.b16 %v3580
        %v3662 = vunpack.c.l.b16 %v3581
        %v3663 = vunpack.c.l.b16 %v3582
        %v3664 = vunpack.c.l.b16 %v3583
        %v3665 = vunpack.c.l.b16 %v3584
        %v3666 = vunpack.c.l.b16 %v3585
        %v3667 = vunpack.c.l.b16 %v3586
        %v3668 = vunpack.c.l.b16 %v3587
        %v3669 = vunpack.c.l.b16 %v3588
        %v3670 = vunpack.c.l.b16 %v3589
        %v3671 = vunpack.c.l.b16 %v3590
        %v3672 = vunpack.c.l.b16 %v3591
        %v3673 = vunpack.c.l.b16 %v3592
        %v3674 = vunpack.c.l.b16 %v3593
        %v3675 = vunpack.c.l.b16 %v3594
        %v3676 = vunpack.c.l.b16 %v3595
        %v3677 = vunpack.c.l.b16 %v3596
        %v3678 = vunpack.c.l.b16 %v3597
        %v3679 = vunpack.c.l.b16 %v3598
        %v3680 = vunpack.c.l.b16 %v3599
        %v3681 = vunpack.c.l.b16 %v3600
        %v3682 = vunpack.c.l.b16 %v3601
        %v3683 = vunpack.c.l.b16 %v3602
        %v3684 = vpack.c.b16 %v3653, %v3652
        %v3685 = vpack.c.b16 %v3655, %v3654
        %v3686 = vpack.c.b16 %v3657, %v3656
        %v3687 = vpack.c.b16 %v3659, %v3658
        %v3688 = vpack.c.b16 %v3661, %v3660
        %v3689 = vpack.c.b16 %v3663, %v3662
        %v3690 = vpack.c.b16 %v3665, %v3664
        %v3691 = vpack.c.b16 %v3667, %v3666
        %v3692 = vpack.c.b16 %v3669, %v3668
        %v3693 = vpack.c.b16 %v3671, %v3670
        %v3694 = vpack.c.b16 %v3673, %v3672
        %v3695 = vpack.c.b16 %v3675, %v3674
        %v3696 = vpack.c.b16 %v3677, %v3676
        %v3697 = vpack.c.b16 %v3679, %v3678
        %v3698 = vpack.c.b16 %v3681, %v3680
        %v3699 = vpack.c.b16 %v3683, %v3682
        %v3732 = vunpack.c.l.b16 %v3604
        %v3733 = vunpack.c.l.b16 %v3605
        %v3734 = vunpack.c.l.b16 %v3606
        %v3735 = vunpack.c.l.b16 %v3607
        %v3736 = vunpack.c.l.b16 %v3608
        %v3737 = vunpack.c.l.b16 %v3609
        %v3738 = vunpack.c.l.b16 %v3610
        %v3739 = vunpack.c.l.b16 %v3611
        %v3740 = vunpack.c.l.b16 %v3612
        %v3741 = vunpack.c.l.b16 %v3613
        %v3742 = vunpack.c.l.b16 %v3614
        %v3743 = vunpack.c.l.b16 %v3615
        %v3744 = vunpack.c.l.b16 %v3616
        %v3745 = vunpack.c.l.b16 %v3617
        %v3746 = vunpack.c.l.b16 %v3618
        %v3747 = vunpack.c.l.b16 %v3619
        %v3748 = vpack.c.b16 %v3733, %v3732
        %v3749 = vpack.c.b16 %v3735, %v3734
        %v3750 = vpack.c.b16 %v3737, %v3736
        %v3751 = vpack.c.b16 %v3739, %v3738
        %v3752 = vpack.c.b16 %v3741, %v3740
        %v3753 = vpack.c.b16 %v3743, %v3742
        %v3754 = vpack.c.b16 %v3745, %v3744
        %v3755 = vpack.c.b16 %v3747, %v3746
        %3764 = vmatpush.bf16.msra.mxu0 %v3755
        %3765 = vmatpush.bf16.msra.mxu0 %v3754
        %3766 = vmatpush.bf16.msra.mxu0 %v3753
        %3767 = vmatpush.bf16.msra.mxu0 %v3752
        %3768 = vmatpush.bf16.msra.mxu0 %v3751
        %3769 = vmatpush.bf16.msra.mxu0 %v3750
        %3770 = vmatpush.bf16.msra.mxu0 %v3749
        %3771 = vmatpush.bf16.msra.mxu0 %v3748
        %3772 = vmatmul.bf16.gmra.mxu0 %v3684
        %v3773 = vpop.f32.mrf.mxu0
        %v3774 = vadd.f32 0.0, %v3773
        %v3775 = vpop.f32.mrf.mxu0
        %v3776 = vadd.f32 0.0, %v3775
        %3777 = vmatmul.bf16.gmra.mxu0 %v3685
        %v3778 = vpop.f32.mrf.mxu0
        %v3779 = vadd.f32 0.0, %v3778
        %v3780 = vpop.f32.mrf.mxu0
        %v3781 = vadd.f32 0.0, %v3780
        %3782 = vmatmul.bf16.gmra.mxu0 %v3686
        %v3783 = vpop.f32.mrf.mxu0
        %v3784 = vadd.f32 0.0, %v3783
        %v3785 = vpop.f32.mrf.mxu0
        %v3786 = vadd.f32 0.0, %v3785
        %3787 = vmatmul.bf16.gmra.mxu0 %v3687
        %v3788 = vpop.f32.mrf.mxu0
        %v3789 = vadd.f32 0.0, %v3788
        %v3790 = vpop.f32.mrf.mxu0
        %v3791 = vadd.f32 0.0, %v3790
        %3792 = vmatmul.bf16.gmra.mxu0 %v3688
        %v3793 = vpop.f32.mrf.mxu0
        %v3794 = vadd.f32 0.0, %v3793
        %v3795 = vpop.f32.mrf.mxu0
        %v3796 = vadd.f32 0.0, %v3795
        %3797 = vmatmul.bf16.gmra.mxu0 %v3689
        %v3798 = vpop.f32.mrf.mxu0
        %v3799 = vadd.f32 0.0, %v3798
        %v3800 = vpop.f32.mrf.mxu0
        %v3801 = vadd.f32 0.0, %v3800
        %3802 = vmatmul.bf16.gmra.mxu0 %v3690
        %v3803 = vpop.f32.mrf.mxu0
        %v3804 = vadd.f32 0.0, %v3803
        %v3805 = vpop.f32.mrf.mxu0
        %v3806 = vadd.f32 0.0, %v3805
        %3807 = vmatmul.bf16.gmra.mxu0 %v3691
        %v3808 = vpop.f32.mrf.mxu0
        %v3809 = vadd.f32 0.0, %v3808
        %v3810 = vpop.f32.mrf.mxu0
        %v3811 = vadd.f32 0.0, %v3810
        %3812 = vmatmul.bf16.gmra.mxu0 %v3692
        %v3813 = vpop.f32.mrf.mxu0
        %v3814 = vadd.f32 0.0, %v3813
        %v3815 = vpop.f32.mrf.mxu0
        %v3816 = vadd.f32 0.0, %v3815
        %3817 = vmatmul.bf16.gmra.mxu0 %v3693
        %v3818 = vpop.f32.mrf.mxu0
        %v3819 = vadd.f32 0.0, %v3818
        %v3820 = vpop.f32.mrf.mxu0
        %v3821 = vadd.f32 0.0, %v3820
        %3822 = vmatmul.bf16.gmra.mxu0 %v3694
        %v3823 = vpop.f32.mrf.mxu0
        %v3824 = vadd.f32 0.0, %v3823
        %v3825 = vpop.f32.mrf.mxu0
        %v3826 = vadd.f32 0.0, %v3825
        %3827 = vmatmul.bf16.gmra.mxu0 %v3695
        %v3828 = vpop.f32.mrf.mxu0
        %v3829 = vadd.f32 0.0, %v3828
        %v3830 = vpop.f32.mrf.mxu0
        %v3831 = vadd.f32 0.0, %v3830
        %3832 = vmatmul.bf16.gmra.mxu0 %v3696
        %v3833 = vpop.f32.mrf.mxu0
        %v3834 = vadd.f32 0.0, %v3833
        %v3835 = vpop.f32.mrf.mxu0
        %v3836 = vadd.f32 0.0, %v3835
        %3837 = vmatmul.bf16.gmra.mxu0 %v3697
        %v3838 = vpop.f32.mrf.mxu0
        %v3839 = vadd.f32 0.0, %v3838
        %v3840 = vpop.f32.mrf.mxu0
        %v3841 = vadd.f32 0.0, %v3840
        %3842 = vmatmul.bf16.gmra.mxu0 %v3698
        %v3843 = vpop.f32.mrf.mxu0
        %v3844 = vadd.f32 0.0, %v3843
        %v3845 = vpop.f32.mrf.mxu0
        %v3846 = vadd.f32 0.0, %v3845
        %3847 = vmatmul.bf16.gmra.mxu0 %v3699
        %v3848 = vpop.f32.mrf.mxu0
        %v3849 = vadd.f32 0.0, %v3848
        %v3850 = vpop.f32.mrf.mxu0
        %v3851 = vadd.f32 0.0, %v3850
        %3852 = vdwg.mxu0
        %v3853 = vadd.f32 %v3538, %v3774
        %v3854 = vadd.f32 %v3539, %v3776
        %v3855 = vadd.f32 %v3540, %v3779
        %v3856 = vadd.f32 %v3541, %v3781
        %v3857 = vadd.f32 %v3542, %v3784
        %v3858 = vadd.f32 %v3543, %v3786
        %v3859 = vadd.f32 %v3544, %v3789
        %v3860 = vadd.f32 %v3545, %v3791
        %v3861 = vadd.f32 %v3546, %v3794
        %v3862 = vadd.f32 %v3547, %v3796
        %v3863 = vadd.f32 %v3548, %v3799
        %v3864 = vadd.f32 %v3549, %v3801
        %v3865 = vadd.f32 %v3550, %v3804
        %v3866 = vadd.f32 %v3551, %v3806
        %v3867 = vadd.f32 %v3552, %v3809
        %v3868 = vadd.f32 %v3553, %v3811
        %v3869 = vadd.f32 %v3554, %v3814
        %v3870 = vadd.f32 %v3555, %v3816
        %v3871 = vadd.f32 %v3556, %v3819
        %v3872 = vadd.f32 %v3557, %v3821
        %v3873 = vadd.f32 %v3558, %v3824
        %v3874 = vadd.f32 %v3559, %v3826
        %v3875 = vadd.f32 %v3560, %v3829
        %v3876 = vadd.f32 %v3561, %v3831
        %v3877 = vadd.f32 %v3562, %v3834
        %v3878 = vadd.f32 %v3563, %v3836
        %v3879 = vadd.f32 %v3564, %v3839
        %v3880 = vadd.f32 %v3565, %v3841
        %v3881 = vadd.f32 %v3566, %v3844
        %v3882 = vadd.f32 %v3567, %v3846
        %v3883 = vadd.f32 %v3568, %v3849
        %v3884 = vadd.f32 %v3569, %v3851
        %v3885 = vld [vmem:[%s3570] sm:$0xf]
        %v3886 = vld [vmem:[%s3570 + $0x4] sm:$0xf]
        %v3887 = vld [vmem:[%s3570 + $0x8] sm:$0x1]
        %v3888 = vld [vmem:[%s3570 + $0xc] sm:$0xf]
        %v3889 = vld [vmem:[%s3570 + $0x10] sm:$0xf]
        %v3890 = vld [vmem:[%s3570 + $0x14] sm:$0x1]
        %v3891 = vld [vmem:[%s3570 + $0x18] sm:$0xf]
        %v3892 = vld [vmem:[%s3570 + $0x1c] sm:$0xf]
        %v3893 = vld [vmem:[%s3570 + $0x20] sm:$0x1]
        %v3894 = vld [vmem:[%s3570 + $0x24] sm:$0xf]
        %v3895 = vld [vmem:[%s3570 + $0x28] sm:$0xf]
        %v3896 = vld [vmem:[%s3570 + $0x2c] sm:$0x1]
        %v3897 = vld [vmem:[%s3570 + $0x30] sm:$0xf]
        %v3898 = vld [vmem:[%s3570 + $0x34] sm:$0xf]
        %v3899 = vld [vmem:[%s3570 + $0x38] sm:$0x1]
        %v3900 = vld [vmem:[%s3570 + $0x3c] sm:$0xf]
        %v3901 = vld [vmem:[%s3570 + $0x40] sm:$0xf]
        %v3902 = vld [vmem:[%s3570 + $0x44] sm:$0x1]
        %v3903 = vld [vmem:[%s3570 + $0x48] sm:$0xf]
        %v3904 = vld [vmem:[%s3570 + $0x4c] sm:$0xf]
        %v3905 = vld [vmem:[%s3570 + $0x50] sm:$0x1]
        %v3906 = vld [vmem:[%s3570 + $0x54] sm:$0xf]
        %v3907 = vld [vmem:[%s3570 + $0x58] sm:$0xf]
        %v3908 = vld [vmem:[%s3570 + $0x5c] sm:$0x1]
        %v3909 = vld [vmem:[%s3570 + $0x60] sm:$0xf]
        %v3910 = vld [vmem:[%s3570 + $0x64] sm:$0xf]
        %v3911 = vld [vmem:[%s3570 + $0x68] sm:$0x1]
        %v3912 = vld [vmem:[%s3570 + $0x6c] sm:$0xf]
        %v3913 = vld [vmem:[%s3570 + $0x70] sm:$0xf]
        %v3914 = vld [vmem:[%s3570 + $0x74] sm:$0x1]
        %v3915 = vld [vmem:[%s3570 + $0x78] sm:$0xf]
        %v3916 = vld [vmem:[%s3570 + $0x7c] sm:$0xf]
        %v3917 = vld [vmem:[%s3570 + $0x80] sm:$0x1]
        %v3918 = vld [vmem:[%s3570 + $0x84] sm:$0xf]
        %v3919 = vld [vmem:[%s3570 + $0x88] sm:$0xf]
        %v3920 = vld [vmem:[%s3570 + $0x8c] sm:$0x1]
        %v3921 = vld [vmem:[%s3570 + $0x90] sm:$0xf]
        %v3922 = vld [vmem:[%s3570 + $0x94] sm:$0xf]
        %v3923 = vld [vmem:[%s3570 + $0x98] sm:$0x1]
        %v3924 = vld [vmem:[%s3570 + $0x9c] sm:$0xf]
        %v3925 = vld [vmem:[%s3570 + $0xa0] sm:$0xf]
        %v3926 = vld [vmem:[%s3570 + $0xa4] sm:$0x1]
        %v3927 = vld [vmem:[%s3570 + $0xa8] sm:$0xf]
        %v3928 = vld [vmem:[%s3570 + $0xac] sm:$0xf]
        %v3929 = vld [vmem:[%s3570 + $0xb0] sm:$0x1]
        %v3930 = vld [vmem:[%s3570 + $0xb4] sm:$0xf]
        %v3931 = vld [vmem:[%s3570 + $0xb8] sm:$0xf]
        %v3932 = vld [vmem:[%s3570 + $0xbc] sm:$0x1]
        %v3934 = vshrl.u32 %v3885, 16
        %v3936 = vrot.slane %v3934, 4
        %v3937 = vshll.u32 %v3885, 16
        %v3939 = vrot.slane %v3937, 5
        %v3940 = vor.u32 %v3936, %v3939
        %v3941 = vrot.slane %v3940, 4
        %v3943 = vshll.u32 %v3886, 16
        %v3945 = vrot.slane %v3943, 5
        %v3946 = vsel %vm867, %v3941, %v3945
        %v3947 = vshrl.u32 %v3886, 16
        %v3949 = vrot.slane %v3947, 4
        %v3950 = vor.u32 %v3949, %v3945
        %v3951 = vrot.slane %v3950, 4
        %v3953 = vshll.u32 %v3887, 16
        %v3955 = vrot.slane %v3953, 5
        %v3956 = vsel %vm867, %v3951, %v3955
        %v3958 = vshrl.u32 %v3888, 16
        %v3960 = vrot.slane %v3958, 4
        %v3961 = vshll.u32 %v3888, 16
        %v3963 = vrot.slane %v3961, 5
        %v3964 = vor.u32 %v3960, %v3963
        %v3965 = vrot.slane %v3964, 4
        %v3967 = vshll.u32 %v3889, 16
        %v3969 = vrot.slane %v3967, 5
        %v3970 = vsel %vm867, %v3965, %v3969
        %v3971 = vshrl.u32 %v3889, 16
        %v3973 = vrot.slane %v3971, 4
        %v3974 = vor.u32 %v3973, %v3969
        %v3975 = vrot.slane %v3974, 4
        %v3977 = vshll.u32 %v3890, 16
        %v3979 = vrot.slane %v3977, 5
        %v3980 = vsel %vm867, %v3975, %v3979
        %v3982 = vshrl.u32 %v3891, 16
        %v3984 = vrot.slane %v3982, 4
        %v3985 = vshll.u32 %v3891, 16
        %v3987 = vrot.slane %v3985, 5
        %v3988 = vor.u32 %v3984, %v3987
        %v3989 = vrot.slane %v3988, 4
        %v3991 = vshll.u32 %v3892, 16
        %v3993 = vrot.slane %v3991, 5
        %v3994 = vsel %vm867, %v3989, %v3993
        %v3995 = vshrl.u32 %v3892, 16
        %v3997 = vrot.slane %v3995, 4
        %v3998 = vor.u32 %v3997, %v3993
        %v3999 = vrot.slane %v3998, 4
        %v4001 = vshll.u32 %v3893, 16
        %v4003 = vrot.slane %v4001, 5
        %v4004 = vsel %vm867, %v3999, %v4003
        %v4006 = vshrl.u32 %v3894, 16
        %v4008 = vrot.slane %v4006, 4
        %v4009 = vshll.u32 %v3894, 16
        %v4011 = vrot.slane %v4009, 5
        %v4012 = vor.u32 %v4008, %v4011
        %v4013 = vrot.slane %v4012, 4
        %v4015 = vshll.u32 %v3895, 16
        %v4017 = vrot.slane %v4015, 5
        %v4018 = vsel %vm867, %v4013, %v4017
        %v4019 = vshrl.u32 %v3895, 16
        %v4021 = vrot.slane %v4019, 4
        %v4022 = vor.u32 %v4021, %v4017
        %v4023 = vrot.slane %v4022, 4
        %v4025 = vshll.u32 %v3896, 16
        %v4027 = vrot.slane %v4025, 5
        %v4028 = vsel %vm867, %v4023, %v4027
        %v4030 = vshrl.u32 %v3897, 16
        %v4032 = vrot.slane %v4030, 4
        %v4033 = vshll.u32 %v3897, 16
        %v4035 = vrot.slane %v4033, 5
        %v4036 = vor.u32 %v4032, %v4035
        %v4037 = vrot.slane %v4036, 4
        %v4039 = vshll.u32 %v3898, 16
        %v4041 = vrot.slane %v4039, 5
        %v4042 = vsel %vm867, %v4037, %v4041
        %v4043 = vshrl.u32 %v3898, 16
        %v4045 = vrot.slane %v4043, 4
        %v4046 = vor.u32 %v4045, %v4041
        %v4047 = vrot.slane %v4046, 4
        %v4049 = vshll.u32 %v3899, 16
        %v4051 = vrot.slane %v4049, 5
        %v4052 = vsel %vm867, %v4047, %v4051
        %v4054 = vshrl.u32 %v3900, 16
        %v4056 = vrot.slane %v4054, 4
        %v4057 = vshll.u32 %v3900, 16
        %v4059 = vrot.slane %v4057, 5
        %v4060 = vor.u32 %v4056, %v4059
        %v4061 = vrot.slane %v4060, 4
        %v4063 = vshll.u32 %v3901, 16
        %v4065 = vrot.slane %v4063, 5
        %v4066 = vsel %vm867, %v4061, %v4065
        %v4067 = vshrl.u32 %v3901, 16
        %v4069 = vrot.slane %v4067, 4
        %v4070 = vor.u32 %v4069, %v4065
        %v4071 = vrot.slane %v4070, 4
        %v4073 = vshll.u32 %v3902, 16
        %v4075 = vrot.slane %v4073, 5
        %v4076 = vsel %vm867, %v4071, %v4075
        %v4078 = vshrl.u32 %v3903, 16
        %v4080 = vrot.slane %v4078, 4
        %v4081 = vshll.u32 %v3903, 16
        %v4083 = vrot.slane %v4081, 5
        %v4084 = vor.u32 %v4080, %v4083
        %v4085 = vrot.slane %v4084, 4
        %v4087 = vshll.u32 %v3904, 16
        %v4089 = vrot.slane %v4087, 5
        %v4090 = vsel %vm867, %v4085, %v4089
        %v4091 = vshrl.u32 %v3904, 16
        %v4093 = vrot.slane %v4091, 4
        %v4094 = vor.u32 %v4093, %v4089
        %v4095 = vrot.slane %v4094, 4
        %v4097 = vshll.u32 %v3905, 16
        %v4099 = vrot.slane %v4097, 5
        %v4100 = vsel %vm867, %v4095, %v4099
        %v4102 = vshrl.u32 %v3906, 16
        %v4104 = vrot.slane %v4102, 4
        %v4105 = vshll.u32 %v3906, 16
        %v4107 = vrot.slane %v4105, 5
        %v4108 = vor.u32 %v4104, %v4107
        %v4109 = vrot.slane %v4108, 4
        %v4111 = vshll.u32 %v3907, 16
        %v4113 = vrot.slane %v4111, 5
        %v4114 = vsel %vm867, %v4109, %v4113
        %v4115 = vshrl.u32 %v3907, 16
        %v4117 = vrot.slane %v4115, 4
        %v4118 = vor.u32 %v4117, %v4113
        %v4119 = vrot.slane %v4118, 4
        %v4121 = vshll.u32 %v3908, 16
        %v4123 = vrot.slane %v4121, 5
        %v4124 = vsel %vm867, %v4119, %v4123
        %v4126 = vshrl.u32 %v3909, 16
        %v4128 = vrot.slane %v4126, 4
        %v4129 = vshll.u32 %v3909, 16
        %v4131 = vrot.slane %v4129, 5
        %v4132 = vor.u32 %v4128, %v4131
        %v4133 = vrot.slane %v4132, 4
        %v4135 = vshll.u32 %v3910, 16
        %v4137 = vrot.slane %v4135, 5
        %v4138 = vsel %vm867, %v4133, %v4137
        %v4139 = vshrl.u32 %v3910, 16
        %v4141 = vrot.slane %v4139, 4
        %v4142 = vor.u32 %v4141, %v4137
        %v4143 = vrot.slane %v4142, 4
        %v4145 = vshll.u32 %v3911, 16
        %v4147 = vrot.slane %v4145, 5
        %v4148 = vsel %vm867, %v4143, %v4147
        %v4150 = vshrl.u32 %v3912, 16
        %v4152 = vrot.slane %v4150, 4
        %v4153 = vshll.u32 %v3912, 16
        %v4155 = vrot.slane %v4153, 5
        %v4156 = vor.u32 %v4152, %v4155
        %v4157 = vrot.slane %v4156, 4
        %v4159 = vshll.u32 %v3913, 16
        %v4161 = vrot.slane %v4159, 5
        %v4162 = vsel %vm867, %v4157, %v4161
        %v4163 = vshrl.u32 %v3913, 16
        %v4165 = vrot.slane %v4163, 4
        %v4166 = vor.u32 %v4165, %v4161
        %v4167 = vrot.slane %v4166, 4
        %v4169 = vshll.u32 %v3914, 16
        %v4171 = vrot.slane %v4169, 5
        %v4172 = vsel %vm867, %v4167, %v4171
        %v4174 = vshrl.u32 %v3915, 16
        %v4176 = vrot.slane %v4174, 4
        %v4177 = vshll.u32 %v3915, 16
        %v4179 = vrot.slane %v4177, 5
        %v4180 = vor.u32 %v4176, %v4179
        %v4181 = vrot.slane %v4180, 4
        %v4183 = vshll.u32 %v3916, 16
        %v4185 = vrot.slane %v4183, 5
        %v4186 = vsel %vm867, %v4181, %v4185
        %v4187 = vshrl.u32 %v3916, 16
        %v4189 = vrot.slane %v4187, 4
        %v4190 = vor.u32 %v4189, %v4185
        %v4191 = vrot.slane %v4190, 4
        %v4193 = vshll.u32 %v3917, 16
        %v4195 = vrot.slane %v4193, 5
        %v4196 = vsel %vm867, %v4191, %v4195
        %v4198 = vshrl.u32 %v3918, 16
        %v4200 = vrot.slane %v4198, 4
        %v4201 = vshll.u32 %v3918, 16
        %v4203 = vrot.slane %v4201, 5
        %v4204 = vor.u32 %v4200, %v4203
        %v4205 = vrot.slane %v4204, 4
        %v4207 = vshll.u32 %v3919, 16
        %v4209 = vrot.slane %v4207, 5
        %v4210 = vsel %vm867, %v4205, %v4209
        %v4211 = vshrl.u32 %v3919, 16
        %v4213 = vrot.slane %v4211, 4
        %v4214 = vor.u32 %v4213, %v4209
        %v4215 = vrot.slane %v4214, 4
        %v4217 = vshll.u32 %v3920, 16
        %v4219 = vrot.slane %v4217, 5
        %v4220 = vsel %vm867, %v4215, %v4219
        %v4222 = vshrl.u32 %v3921, 16
        %v4224 = vrot.slane %v4222, 4
        %v4225 = vshll.u32 %v3921, 16
        %v4227 = vrot.slane %v4225, 5
        %v4228 = vor.u32 %v4224, %v4227
        %v4229 = vrot.slane %v4228, 4
        %v4231 = vshll.u32 %v3922, 16
        %v4233 = vrot.slane %v4231, 5
        %v4234 = vsel %vm867, %v4229, %v4233
        %v4235 = vshrl.u32 %v3922, 16
        %v4237 = vrot.slane %v4235, 4
        %v4238 = vor.u32 %v4237, %v4233
        %v4239 = vrot.slane %v4238, 4
        %v4241 = vshll.u32 %v3923, 16
        %v4243 = vrot.slane %v4241, 5
        %v4244 = vsel %vm867, %v4239, %v4243
        %v4246 = vshrl.u32 %v3924, 16
        %v4248 = vrot.slane %v4246, 4
        %v4249 = vshll.u32 %v3924, 16
        %v4251 = vrot.slane %v4249, 5
        %v4252 = vor.u32 %v4248, %v4251
        %v4253 = vrot.slane %v4252, 4
        %v4255 = vshll.u32 %v3925, 16
        %v4257 = vrot.slane %v4255, 5
        %v4258 = vsel %vm867, %v4253, %v4257
        %v4259 = vshrl.u32 %v3925, 16
        %v4261 = vrot.slane %v4259, 4
        %v4262 = vor.u32 %v4261, %v4257
        %v4263 = vrot.slane %v4262, 4
        %v4265 = vshll.u32 %v3926, 16
        %v4267 = vrot.slane %v4265, 5
        %v4268 = vsel %vm867, %v4263, %v4267
        %v4270 = vshrl.u32 %v3927, 16
        %v4272 = vrot.slane %v4270, 4
        %v4273 = vshll.u32 %v3927, 16
        %v4275 = vrot.slane %v4273, 5
        %v4276 = vor.u32 %v4272, %v4275
        %v4277 = vrot.slane %v4276, 4
        %v4279 = vshll.u32 %v3928, 16
        %v4281 = vrot.slane %v4279, 5
        %v4282 = vsel %vm867, %v4277, %v4281
        %v4283 = vshrl.u32 %v3928, 16
        %v4285 = vrot.slane %v4283, 4
        %v4286 = vor.u32 %v4285, %v4281
        %v4287 = vrot.slane %v4286, 4
        %v4289 = vshll.u32 %v3929, 16
        %v4291 = vrot.slane %v4289, 5
        %v4292 = vsel %vm867, %v4287, %v4291
        %v4294 = vshrl.u32 %v3930, 16
        %v4296 = vrot.slane %v4294, 4
        %v4297 = vshll.u32 %v3930, 16
        %v4299 = vrot.slane %v4297, 5
        %v4300 = vor.u32 %v4296, %v4299
        %v4301 = vrot.slane %v4300, 4
        %v4303 = vshll.u32 %v3931, 16
        %v4305 = vrot.slane %v4303, 5
        %v4306 = vsel %vm867, %v4301, %v4305
        %v4307 = vshrl.u32 %v3931, 16
        %v4309 = vrot.slane %v4307, 4
        %v4310 = vor.u32 %v4309, %v4305
        %v4311 = vrot.slane %v4310, 4
        %v4313 = vshll.u32 %v3932, 16
        %v4315 = vrot.slane %v4313, 5
        %v4316 = vsel %vm867, %v4311, %v4315
        %s4317 = scalar_lea.vmem %s1, 448
        %v4318 = vld [vmem:[%s4317] sm:$0xf]
        %v4319 = vld [vmem:[%s4317 + $0x4] sm:$0xf]
        %v4320 = vld [vmem:[%s4317 + $0x8] sm:$0xf]
        %v4321 = vld [vmem:[%s4317 + $0xc] sm:$0xf]
        %v4322 = vld [vmem:[%s4317 + $0x10] sm:$0xf]
        %v4323 = vld [vmem:[%s4317 + $0x14] sm:$0xf]
        %v4324 = vld [vmem:[%s4317 + $0x18] sm:$0xf]
        %v4325 = vld [vmem:[%s4317 + $0x1c] sm:$0xf]
        %v4326 = vld [vmem:[%s4317 + $0x20] sm:$0xf]
        %v4327 = vld [vmem:[%s4317 + $0x24] sm:$0xf]
        %v4328 = vld [vmem:[%s4317 + $0x28] sm:$0xf]
        %v4329 = vld [vmem:[%s4317 + $0x2c] sm:$0xf]
        %v4330 = vld [vmem:[%s4317 + $0x30] sm:$0xf]
        %v4331 = vld [vmem:[%s4317 + $0x34] sm:$0xf]
        %v4332 = vld [vmem:[%s4317 + $0x38] sm:$0xf]
        %v4333 = vld [vmem:[%s4317 + $0x3c] sm:$0xf]
        %v4334 = vunpack.c.l.b16 %v3946
        %v4335 = vunpack.c.l.b16 %v3956
        %v4336 = vunpack.c.l.b16 %v3970
        %v4337 = vunpack.c.l.b16 %v3980
        %v4338 = vunpack.c.l.b16 %v3994
        %v4339 = vunpack.c.l.b16 %v4004
        %v4340 = vunpack.c.l.b16 %v4018
        %v4341 = vunpack.c.l.b16 %v4028
        %v4342 = vunpack.c.l.b16 %v4042
        %v4343 = vunpack.c.l.b16 %v4052
        %v4344 = vunpack.c.l.b16 %v4066
        %v4345 = vunpack.c.l.b16 %v4076
        %v4346 = vunpack.c.l.b16 %v4090
        %v4347 = vunpack.c.l.b16 %v4100
        %v4348 = vunpack.c.l.b16 %v4114
        %v4349 = vunpack.c.l.b16 %v4124
        %v4350 = vunpack.c.l.b16 %v4138
        %v4351 = vunpack.c.l.b16 %v4148
        %v4352 = vunpack.c.l.b16 %v4162
        %v4353 = vunpack.c.l.b16 %v4172
        %v4354 = vunpack.c.l.b16 %v4186
        %v4355 = vunpack.c.l.b16 %v4196
        %v4356 = vunpack.c.l.b16 %v4210
        %v4357 = vunpack.c.l.b16 %v4220
        %v4358 = vunpack.c.l.b16 %v4234
        %v4359 = vunpack.c.l.b16 %v4244
        %v4360 = vunpack.c.l.b16 %v4258
        %v4361 = vunpack.c.l.b16 %v4268
        %v4362 = vunpack.c.l.b16 %v4282
        %v4363 = vunpack.c.l.b16 %v4292
        %v4364 = vunpack.c.l.b16 %v4306
        %v4365 = vunpack.c.l.b16 %v4316
        %v4366 = vpack.c.b16 %v4335, %v4334
        %v4367 = vpack.c.b16 %v4337, %v4336
        %v4368 = vpack.c.b16 %v4339, %v4338
        %v4369 = vpack.c.b16 %v4341, %v4340
        %v4370 = vpack.c.b16 %v4343, %v4342
        %v4371 = vpack.c.b16 %v4345, %v4344
        %v4372 = vpack.c.b16 %v4347, %v4346
        %v4373 = vpack.c.b16 %v4349, %v4348
        %v4374 = vpack.c.b16 %v4351, %v4350
        %v4375 = vpack.c.b16 %v4353, %v4352
        %v4376 = vpack.c.b16 %v4355, %v4354
        %v4377 = vpack.c.b16 %v4357, %v4356
        %v4378 = vpack.c.b16 %v4359, %v4358
        %v4379 = vpack.c.b16 %v4361, %v4360
        %v4380 = vpack.c.b16 %v4363, %v4362
        %v4381 = vpack.c.b16 %v4365, %v4364
        %v4414 = vunpack.c.l.b16 %v4318
        %v4415 = vunpack.c.l.b16 %v4319
        %v4416 = vunpack.c.l.b16 %v4320
        %v4417 = vunpack.c.l.b16 %v4321
        %v4418 = vunpack.c.l.b16 %v4322
        %v4419 = vunpack.c.l.b16 %v4323
        %v4420 = vunpack.c.l.b16 %v4324
        %v4421 = vunpack.c.l.b16 %v4325
        %v4422 = vunpack.c.l.b16 %v4326
        %v4423 = vunpack.c.l.b16 %v4327
        %v4424 = vunpack.c.l.b16 %v4328
        %v4425 = vunpack.c.l.b16 %v4329
        %v4426 = vunpack.c.l.b16 %v4330
        %v4427 = vunpack.c.l.b16 %v4331
        %v4428 = vunpack.c.l.b16 %v4332
        %v4429 = vunpack.c.l.b16 %v4333
        %v4430 = vpack.c.b16 %v4415, %v4414
        %v4431 = vpack.c.b16 %v4417, %v4416
        %v4432 = vpack.c.b16 %v4419, %v4418
        %v4433 = vpack.c.b16 %v4421, %v4420
        %v4434 = vpack.c.b16 %v4423, %v4422
        %v4435 = vpack.c.b16 %v4425, %v4424
        %v4436 = vpack.c.b16 %v4427, %v4426
        %v4437 = vpack.c.b16 %v4429, %v4428
        %4446 = vmatpush.bf16.msra.mxu0 %v4437
        %4447 = vmatpush.bf16.msra.mxu0 %v4436
        %4448 = vmatpush.bf16.msra.mxu0 %v4435
        %4449 = vmatpush.bf16.msra.mxu0 %v4434
        %4450 = vmatpush.bf16.msra.mxu0 %v4433
        %4451 = vmatpush.bf16.msra.mxu0 %v4432
        %4452 = vmatpush.bf16.msra.mxu0 %v4431
        %4453 = vmatpush.bf16.msra.mxu0 %v4430
        %4454 = vmatmul.bf16.gmra.mxu0 %v4366
        %v4455 = vpop.f32.mrf.mxu0
        %v4456 = vadd.f32 0.0, %v4455
        %v4457 = vpop.f32.mrf.mxu0
        %v4458 = vadd.f32 0.0, %v4457
        %4459 = vmatmul.bf16.gmra.mxu0 %v4367
        %v4460 = vpop.f32.mrf.mxu0
        %v4461 = vadd.f32 0.0, %v4460
        %v4462 = vpop.f32.mrf.mxu0
        %v4463 = vadd.f32 0.0, %v4462
        %4464 = vmatmul.bf16.gmra.mxu0 %v4368
        %v4465 = vpop.f32.mrf.mxu0
        %v4466 = vadd.f32 0.0, %v4465
        %v4467 = vpop.f32.mrf.mxu0
        %v4468 = vadd.f32 0.0, %v4467
        %4469 = vmatmul.bf16.gmra.mxu0 %v4369
        %v4470 = vpop.f32.mrf.mxu0
        %v4471 = vadd.f32 0.0, %v4470
        %v4472 = vpop.f32.mrf.mxu0
        %v4473 = vadd.f32 0.0, %v4472
        %4474 = vmatmul.bf16.gmra.mxu0 %v4370
        %v4475 = vpop.f32.mrf.mxu0
        %v4476 = vadd.f32 0.0, %v4475
        %v4477 = vpop.f32.mrf.mxu0
        %v4478 = vadd.f32 0.0, %v4477
        %4479 = vmatmul.bf16.gmra.mxu0 %v4371
        %v4480 = vpop.f32.mrf.mxu0
        %v4481 = vadd.f32 0.0, %v4480
        %v4482 = vpop.f32.mrf.mxu0
        %v4483 = vadd.f32 0.0, %v4482
        %4484 = vmatmul.bf16.gmra.mxu0 %v4372
        %v4485 = vpop.f32.mrf.mxu0
        %v4486 = vadd.f32 0.0, %v4485
        %v4487 = vpop.f32.mrf.mxu0
        %v4488 = vadd.f32 0.0, %v4487
        %4489 = vmatmul.bf16.gmra.mxu0 %v4373
        %v4490 = vpop.f32.mrf.mxu0
        %v4491 = vadd.f32 0.0, %v4490
        %v4492 = vpop.f32.mrf.mxu0
        %v4493 = vadd.f32 0.0, %v4492
        %4494 = vmatmul.bf16.gmra.mxu0 %v4374
        %v4495 = vpop.f32.mrf.mxu0
        %v4496 = vadd.f32 0.0, %v4495
        %v4497 = vpop.f32.mrf.mxu0
        %v4498 = vadd.f32 0.0, %v4497
        %4499 = vmatmul.bf16.gmra.mxu0 %v4375
        %v4500 = vpop.f32.mrf.mxu0
        %v4501 = vadd.f32 0.0, %v4500
        %v4502 = vpop.f32.mrf.mxu0
        %v4503 = vadd.f32 0.0, %v4502
        %4504 = vmatmul.bf16.gmra.mxu0 %v4376
        %v4505 = vpop.f32.mrf.mxu0
        %v4506 = vadd.f32 0.0, %v4505
        %v4507 = vpop.f32.mrf.mxu0
        %v4508 = vadd.f32 0.0, %v4507
        %4509 = vmatmul.bf16.gmra.mxu0 %v4377
        %v4510 = vpop.f32.mrf.mxu0
        %v4511 = vadd.f32 0.0, %v4510
        %v4512 = vpop.f32.mrf.mxu0
        %v4513 = vadd.f32 0.0, %v4512
        %4514 = vmatmul.bf16.gmra.mxu0 %v4378
        %v4515 = vpop.f32.mrf.mxu0
        %v4516 = vadd.f32 0.0, %v4515
        %v4517 = vpop.f32.mrf.mxu0
        %v4518 = vadd.f32 0.0, %v4517
        %4519 = vmatmul.bf16.gmra.mxu0 %v4379
        %v4520 = vpop.f32.mrf.mxu0
        %v4521 = vadd.f32 0.0, %v4520
        %v4522 = vpop.f32.mrf.mxu0
        %v4523 = vadd.f32 0.0, %v4522
        %4524 = vmatmul.bf16.gmra.mxu0 %v4380
        %v4525 = vpop.f32.mrf.mxu0
        %v4526 = vadd.f32 0.0, %v4525
        %v4527 = vpop.f32.mrf.mxu0
        %v4528 = vadd.f32 0.0, %v4527
        %4529 = vmatmul.bf16.gmra.mxu0 %v4381
        %v4530 = vpop.f32.mrf.mxu0
        %v4531 = vadd.f32 0.0, %v4530
        %v4532 = vpop.f32.mrf.mxu0
        %v4533 = vadd.f32 0.0, %v4532
        %4534 = vdwg.mxu0
        %v4535 = vadd.f32 %v3853, %v4456
        %v4536 = vadd.f32 %v3854, %v4458
        %v4537 = vadd.f32 %v3855, %v4461
        %v4538 = vadd.f32 %v3856, %v4463
        %v4539 = vadd.f32 %v3857, %v4466
        %v4540 = vadd.f32 %v3858, %v4468
        %v4541 = vadd.f32 %v3859, %v4471
        %v4542 = vadd.f32 %v3860, %v4473
        %v4543 = vadd.f32 %v3861, %v4476
        %v4544 = vadd.f32 %v3862, %v4478
        %v4545 = vadd.f32 %v3863, %v4481
        %v4546 = vadd.f32 %v3864, %v4483
        %v4547 = vadd.f32 %v3865, %v4486
        %v4548 = vadd.f32 %v3866, %v4488
        %v4549 = vadd.f32 %v3867, %v4491
        %v4550 = vadd.f32 %v3868, %v4493
        %v4551 = vadd.f32 %v3869, %v4496
        %v4552 = vadd.f32 %v3870, %v4498
        %v4553 = vadd.f32 %v3871, %v4501
        %v4554 = vadd.f32 %v3872, %v4503
        %v4555 = vadd.f32 %v3873, %v4506
        %v4556 = vadd.f32 %v3874, %v4508
        %v4557 = vadd.f32 %v3875, %v4511
        %v4558 = vadd.f32 %v3876, %v4513
        %v4559 = vadd.f32 %v3877, %v4516
        %v4560 = vadd.f32 %v3878, %v4518
        %v4561 = vadd.f32 %v3879, %v4521
        %v4562 = vadd.f32 %v3880, %v4523
        %v4563 = vadd.f32 %v3881, %v4526
        %v4564 = vadd.f32 %v3882, %v4528
        %v4565 = vadd.f32 %v3883, %v4531
        %v4566 = vadd.f32 %v3884, %v4533
        %v4567 = vld [vmem:[%s3570] sm:$0xe]
        %v4568 = vld [vmem:[%s3570 + $0xc] sm:$0xe]
        %v4569 = vld [vmem:[%s3570 + $0x18] sm:$0xe]
        %v4570 = vld [vmem:[%s3570 + $0x24] sm:$0xe]
        %v4571 = vld [vmem:[%s3570 + $0x30] sm:$0xe]
        %v4572 = vld [vmem:[%s3570 + $0x3c] sm:$0xe]
        %v4573 = vld [vmem:[%s3570 + $0x48] sm:$0xe]
        %v4574 = vld [vmem:[%s3570 + $0x54] sm:$0xe]
        %v4575 = vld [vmem:[%s3570 + $0x60] sm:$0xe]
        %v4576 = vld [vmem:[%s3570 + $0x6c] sm:$0xe]
        %v4577 = vld [vmem:[%s3570 + $0x78] sm:$0xe]
        %v4578 = vld [vmem:[%s3570 + $0x84] sm:$0xe]
        %v4579 = vld [vmem:[%s3570 + $0x90] sm:$0xe]
        %v4580 = vld [vmem:[%s3570 + $0x9c] sm:$0xe]
        %v4581 = vld [vmem:[%s3570 + $0xa8] sm:$0xe]
        %v4582 = vld [vmem:[%s3570 + $0xb4] sm:$0xe]
        %v4631 = vrot.slane %v4567, 5
        %v4632 = vrot.slane %v4631, 4
        %v4633 = vrot.slane %v3886, 5
        %v4634 = vsel %vm1753, %v4632, %v4633
        %v4635 = vrot.slane %v4633, 4
        %v4636 = vrot.slane %v3887, 5
        %v4637 = vsel %vm1753, %v4635, %v4636
        %v4638 = vrot.slane %v4568, 5
        %v4639 = vrot.slane %v4638, 4
        %v4640 = vrot.slane %v3889, 5
        %v4641 = vsel %vm1753, %v4639, %v4640
        %v4642 = vrot.slane %v4640, 4
        %v4643 = vrot.slane %v3890, 5
        %v4644 = vsel %vm1753, %v4642, %v4643
        %v4645 = vrot.slane %v4569, 5
        %v4646 = vrot.slane %v4645, 4
        %v4647 = vrot.slane %v3892, 5
        %v4648 = vsel %vm1753, %v4646, %v4647
        %v4649 = vrot.slane %v4647, 4
        %v4650 = vrot.slane %v3893, 5
        %v4651 = vsel %vm1753, %v4649, %v4650
        %v4652 = vrot.slane %v4570, 5
        %v4653 = vrot.slane %v4652, 4
        %v4654 = vrot.slane %v3895, 5
        %v4655 = vsel %vm1753, %v4653, %v4654
        %v4656 = vrot.slane %v4654, 4
        %v4657 = vrot.slane %v3896, 5
        %v4658 = vsel %vm1753, %v4656, %v4657
        %v4659 = vrot.slane %v4571, 5
        %v4660 = vrot.slane %v4659, 4
        %v4661 = vrot.slane %v3898, 5
        %v4662 = vsel %vm1753, %v4660, %v4661
        %v4663 = vrot.slane %v4661, 4
        %v4664 = vrot.slane %v3899, 5
        %v4665 = vsel %vm1753, %v4663, %v4664
        %v4666 = vrot.slane %v4572, 5
        %v4667 = vrot.slane %v4666, 4
        %v4668 = vrot.slane %v3901, 5
        %v4669 = vsel %vm1753, %v4667, %v4668
        %v4670 = vrot.slane %v4668, 4
        %v4671 = vrot.slane %v3902, 5
        %v4672 = vsel %vm1753, %v4670, %v4671
        %v4673 = vrot.slane %v4573, 5
        %v4674 = vrot.slane %v4673, 4
        %v4675 = vrot.slane %v3904, 5
        %v4676 = vsel %vm1753, %v4674, %v4675
        %v4677 = vrot.slane %v4675, 4
        %v4678 = vrot.slane %v3905, 5
        %v4679 = vsel %vm1753, %v4677, %v4678
        %v4680 = vrot.slane %v4574, 5
        %v4681 = vrot.slane %v4680, 4
        %v4682 = vrot.slane %v3907, 5
        %v4683 = vsel %vm1753, %v4681, %v4682
        %v4684 = vrot.slane %v4682, 4
        %v4685 = vrot.slane %v3908, 5
        %v4686 = vsel %vm1753, %v4684, %v4685
        %v4687 = vrot.slane %v4575, 5
        %v4688 = vrot.slane %v4687, 4
        %v4689 = vrot.slane %v3910, 5
        %v4690 = vsel %vm1753, %v4688, %v4689
        %v4691 = vrot.slane %v4689, 4
        %v4692 = vrot.slane %v3911, 5
        %v4693 = vsel %vm1753, %v4691, %v4692
        %v4694 = vrot.slane %v4576, 5
        %v4695 = vrot.slane %v4694, 4
        %v4696 = vrot.slane %v3913, 5
        %v4697 = vsel %vm1753, %v4695, %v4696
        %v4698 = vrot.slane %v4696, 4
        %v4699 = vrot.slane %v3914, 5
        %v4700 = vsel %vm1753, %v4698, %v4699
        %v4701 = vrot.slane %v4577, 5
        %v4702 = vrot.slane %v4701, 4
        %v4703 = vrot.slane %v3916, 5
        %v4704 = vsel %vm1753, %v4702, %v4703
        %v4705 = vrot.slane %v4703, 4
        %v4706 = vrot.slane %v3917, 5
        %v4707 = vsel %vm1753, %v4705, %v4706
        %v4708 = vrot.slane %v4578, 5
        %v4709 = vrot.slane %v4708, 4
        %v4710 = vrot.slane %v3919, 5
        %v4711 = vsel %vm1753, %v4709, %v4710
        %v4712 = vrot.slane %v4710, 4
        %v4713 = vrot.slane %v3920, 5
        %v4714 = vsel %vm1753, %v4712, %v4713
        %v4715 = vrot.slane %v4579, 5
        %v4716 = vrot.slane %v4715, 4
        %v4717 = vrot.slane %v3922, 5
        %v4718 = vsel %vm1753, %v4716, %v4717
        %v4719 = vrot.slane %v4717, 4
        %v4720 = vrot.slane %v3923, 5
        %v4721 = vsel %vm1753, %v4719, %v4720
        %v4722 = vrot.slane %v4580, 5
        %v4723 = vrot.slane %v4722, 4
        %v4724 = vrot.slane %v3925, 5
        %v4725 = vsel %vm1753, %v4723, %v4724
        %v4726 = vrot.slane %v4724, 4
        %v4727 = vrot.slane %v3926, 5
        %v4728 = vsel %vm1753, %v4726, %v4727
        %v4729 = vrot.slane %v4581, 5
        %v4730 = vrot.slane %v4729, 4
        %v4731 = vrot.slane %v3928, 5
        %v4732 = vsel %vm1753, %v4730, %v4731
        %v4733 = vrot.slane %v4731, 4
        %v4734 = vrot.slane %v3929, 5
        %v4735 = vsel %vm1753, %v4733, %v4734
        %v4736 = vrot.slane %v4582, 5
        %v4737 = vrot.slane %v4736, 4
        %v4738 = vrot.slane %v3931, 5
        %v4739 = vsel %vm1753, %v4737, %v4738
        %v4740 = vrot.slane %v4738, 4
        %v4741 = vrot.slane %v3932, 5
        %v4742 = vsel %vm1753, %v4740, %v4741
        %s4743 = scalar_lea.vmem %s1, 512
        %v4744 = vld [vmem:[%s4743] sm:$0xf]
        %v4745 = vld [vmem:[%s4743 + $0x4] sm:$0xf]
        %v4746 = vld [vmem:[%s4743 + $0x8] sm:$0xf]
        %v4747 = vld [vmem:[%s4743 + $0xc] sm:$0xf]
        %v4748 = vld [vmem:[%s4743 + $0x10] sm:$0xf]
        %v4749 = vld [vmem:[%s4743 + $0x14] sm:$0xf]
        %v4750 = vld [vmem:[%s4743 + $0x18] sm:$0xf]
        %v4751 = vld [vmem:[%s4743 + $0x1c] sm:$0xf]
        %v4752 = vld [vmem:[%s4743 + $0x20] sm:$0xf]
        %v4753 = vld [vmem:[%s4743 + $0x24] sm:$0xf]
        %v4754 = vld [vmem:[%s4743 + $0x28] sm:$0xf]
        %v4755 = vld [vmem:[%s4743 + $0x2c] sm:$0xf]
        %v4756 = vld [vmem:[%s4743 + $0x30] sm:$0xf]
        %v4757 = vld [vmem:[%s4743 + $0x34] sm:$0xf]
        %v4758 = vld [vmem:[%s4743 + $0x38] sm:$0xf]
        %v4759 = vld [vmem:[%s4743 + $0x3c] sm:$0xf]
        %v4760 = vunpack.c.l.b16 %v4634
        %v4761 = vunpack.c.l.b16 %v4637
        %v4762 = vunpack.c.l.b16 %v4641
        %v4763 = vunpack.c.l.b16 %v4644
        %v4764 = vunpack.c.l.b16 %v4648
        %v4765 = vunpack.c.l.b16 %v4651
        %v4766 = vunpack.c.l.b16 %v4655
        %v4767 = vunpack.c.l.b16 %v4658
        %v4768 = vunpack.c.l.b16 %v4662
        %v4769 = vunpack.c.l.b16 %v4665
        %v4770 = vunpack.c.l.b16 %v4669
        %v4771 = vunpack.c.l.b16 %v4672
        %v4772 = vunpack.c.l.b16 %v4676
        %v4773 = vunpack.c.l.b16 %v4679
        %v4774 = vunpack.c.l.b16 %v4683
        %v4775 = vunpack.c.l.b16 %v4686
        %v4776 = vunpack.c.l.b16 %v4690
        %v4777 = vunpack.c.l.b16 %v4693
        %v4778 = vunpack.c.l.b16 %v4697
        %v4779 = vunpack.c.l.b16 %v4700
        %v4780 = vunpack.c.l.b16 %v4704
        %v4781 = vunpack.c.l.b16 %v4707
        %v4782 = vunpack.c.l.b16 %v4711
        %v4783 = vunpack.c.l.b16 %v4714
        %v4784 = vunpack.c.l.b16 %v4718
        %v4785 = vunpack.c.l.b16 %v4721
        %v4786 = vunpack.c.l.b16 %v4725
        %v4787 = vunpack.c.l.b16 %v4728
        %v4788 = vunpack.c.l.b16 %v4732
        %v4789 = vunpack.c.l.b16 %v4735
        %v4790 = vunpack.c.l.b16 %v4739
        %v4791 = vunpack.c.l.b16 %v4742
        %v4792 = vpack.c.b16 %v4761, %v4760
        %v4793 = vpack.c.b16 %v4763, %v4762
        %v4794 = vpack.c.b16 %v4765, %v4764
        %v4795 = vpack.c.b16 %v4767, %v4766
        %v4796 = vpack.c.b16 %v4769, %v4768
        %v4797 = vpack.c.b16 %v4771, %v4770
        %v4798 = vpack.c.b16 %v4773, %v4772
        %v4799 = vpack.c.b16 %v4775, %v4774
        %v4800 = vpack.c.b16 %v4777, %v4776
        %v4801 = vpack.c.b16 %v4779, %v4778
        %v4802 = vpack.c.b16 %v4781, %v4780
        %v4803 = vpack.c.b16 %v4783, %v4782
        %v4804 = vpack.c.b16 %v4785, %v4784
        %v4805 = vpack.c.b16 %v4787, %v4786
        %v4806 = vpack.c.b16 %v4789, %v4788
        %v4807 = vpack.c.b16 %v4791, %v4790
        %v4840 = vunpack.c.l.b16 %v4744
        %v4841 = vunpack.c.l.b16 %v4745
        %v4842 = vunpack.c.l.b16 %v4746
        %v4843 = vunpack.c.l.b16 %v4747
        %v4844 = vunpack.c.l.b16 %v4748
        %v4845 = vunpack.c.l.b16 %v4749
        %v4846 = vunpack.c.l.b16 %v4750
        %v4847 = vunpack.c.l.b16 %v4751
        %v4848 = vunpack.c.l.b16 %v4752
        %v4849 = vunpack.c.l.b16 %v4753
        %v4850 = vunpack.c.l.b16 %v4754
        %v4851 = vunpack.c.l.b16 %v4755
        %v4852 = vunpack.c.l.b16 %v4756
        %v4853 = vunpack.c.l.b16 %v4757
        %v4854 = vunpack.c.l.b16 %v4758
        %v4855 = vunpack.c.l.b16 %v4759
        %v4856 = vpack.c.b16 %v4841, %v4840
        %v4857 = vpack.c.b16 %v4843, %v4842
        %v4858 = vpack.c.b16 %v4845, %v4844
        %v4859 = vpack.c.b16 %v4847, %v4846
        %v4860 = vpack.c.b16 %v4849, %v4848
        %v4861 = vpack.c.b16 %v4851, %v4850
        %v4862 = vpack.c.b16 %v4853, %v4852
        %v4863 = vpack.c.b16 %v4855, %v4854
        %4872 = vmatpush.bf16.msra.mxu0 %v4863
        %4873 = vmatpush.bf16.msra.mxu0 %v4862
        %4874 = vmatpush.bf16.msra.mxu0 %v4861
        %4875 = vmatpush.bf16.msra.mxu0 %v4860
        %4876 = vmatpush.bf16.msra.mxu0 %v4859
        %4877 = vmatpush.bf16.msra.mxu0 %v4858
        %4878 = vmatpush.bf16.msra.mxu0 %v4857
        %4879 = vmatpush.bf16.msra.mxu0 %v4856
        %4880 = vmatmul.bf16.gmra.mxu0 %v4792
        %v4881 = vpop.f32.mrf.mxu0
        %v4882 = vadd.f32 0.0, %v4881
        %v4883 = vpop.f32.mrf.mxu0
        %v4884 = vadd.f32 0.0, %v4883
        %4885 = vmatmul.bf16.gmra.mxu0 %v4793
        %v4886 = vpop.f32.mrf.mxu0
        %v4887 = vadd.f32 0.0, %v4886
        %v4888 = vpop.f32.mrf.mxu0
        %v4889 = vadd.f32 0.0, %v4888
        %4890 = vmatmul.bf16.gmra.mxu0 %v4794
        %v4891 = vpop.f32.mrf.mxu0
        %v4892 = vadd.f32 0.0, %v4891
        %v4893 = vpop.f32.mrf.mxu0
        %v4894 = vadd.f32 0.0, %v4893
        %4895 = vmatmul.bf16.gmra.mxu0 %v4795
        %v4896 = vpop.f32.mrf.mxu0
        %v4897 = vadd.f32 0.0, %v4896
        %v4898 = vpop.f32.mrf.mxu0
        %v4899 = vadd.f32 0.0, %v4898
        %4900 = vmatmul.bf16.gmra.mxu0 %v4796
        %v4901 = vpop.f32.mrf.mxu0
        %v4902 = vadd.f32 0.0, %v4901
        %v4903 = vpop.f32.mrf.mxu0
        %v4904 = vadd.f32 0.0, %v4903
        %4905 = vmatmul.bf16.gmra.mxu0 %v4797
        %v4906 = vpop.f32.mrf.mxu0
        %v4907 = vadd.f32 0.0, %v4906
        %v4908 = vpop.f32.mrf.mxu0
        %v4909 = vadd.f32 0.0, %v4908
        %4910 = vmatmul.bf16.gmra.mxu0 %v4798
        %v4911 = vpop.f32.mrf.mxu0
        %v4912 = vadd.f32 0.0, %v4911
        %v4913 = vpop.f32.mrf.mxu0
        %v4914 = vadd.f32 0.0, %v4913
        %4915 = vmatmul.bf16.gmra.mxu0 %v4799
        %v4916 = vpop.f32.mrf.mxu0
        %v4917 = vadd.f32 0.0, %v4916
        %v4918 = vpop.f32.mrf.mxu0
        %v4919 = vadd.f32 0.0, %v4918
        %4920 = vmatmul.bf16.gmra.mxu0 %v4800
        %v4921 = vpop.f32.mrf.mxu0
        %v4922 = vadd.f32 0.0, %v4921
        %v4923 = vpop.f32.mrf.mxu0
        %v4924 = vadd.f32 0.0, %v4923
        %4925 = vmatmul.bf16.gmra.mxu0 %v4801
        %v4926 = vpop.f32.mrf.mxu0
        %v4927 = vadd.f32 0.0, %v4926
        %v4928 = vpop.f32.mrf.mxu0
        %v4929 = vadd.f32 0.0, %v4928
        %4930 = vmatmul.bf16.gmra.mxu0 %v4802
        %v4931 = vpop.f32.mrf.mxu0
        %v4932 = vadd.f32 0.0, %v4931
        %v4933 = vpop.f32.mrf.mxu0
        %v4934 = vadd.f32 0.0, %v4933
        %4935 = vmatmul.bf16.gmra.mxu0 %v4803
        %v4936 = vpop.f32.mrf.mxu0
        %v4937 = vadd.f32 0.0, %v4936
        %v4938 = vpop.f32.mrf.mxu0
        %v4939 = vadd.f32 0.0, %v4938
        %4940 = vmatmul.bf16.gmra.mxu0 %v4804
        %v4941 = vpop.f32.mrf.mxu0
        %v4942 = vadd.f32 0.0, %v4941
        %v4943 = vpop.f32.mrf.mxu0
        %v4944 = vadd.f32 0.0, %v4943
        %4945 = vmatmul.bf16.gmra.mxu0 %v4805
        %v4946 = vpop.f32.mrf.mxu0
        %v4947 = vadd.f32 0.0, %v4946
        %v4948 = vpop.f32.mrf.mxu0
        %v4949 = vadd.f32 0.0, %v4948
        %4950 = vmatmul.bf16.gmra.mxu0 %v4806
        %v4951 = vpop.f32.mrf.mxu0
        %v4952 = vadd.f32 0.0, %v4951
        %v4953 = vpop.f32.mrf.mxu0
        %v4954 = vadd.f32 0.0, %v4953
        %4955 = vmatmul.bf16.gmra.mxu0 %v4807
        %v4956 = vpop.f32.mrf.mxu0
        %v4957 = vadd.f32 0.0, %v4956
        %v4958 = vpop.f32.mrf.mxu0
        %v4959 = vadd.f32 0.0, %v4958
        %4960 = vdwg.mxu0
        %v4961 = vadd.f32 %v4535, %v4882
        %v4962 = vadd.f32 %v4536, %v4884
        %v4963 = vadd.f32 %v4537, %v4887
        %v4964 = vadd.f32 %v4538, %v4889
        %v4965 = vadd.f32 %v4539, %v4892
        %v4966 = vadd.f32 %v4540, %v4894
        %v4967 = vadd.f32 %v4541, %v4897
        %v4968 = vadd.f32 %v4542, %v4899
        %v4969 = vadd.f32 %v4543, %v4902
        %v4970 = vadd.f32 %v4544, %v4904
        %v4971 = vadd.f32 %v4545, %v4907
        %v4972 = vadd.f32 %v4546, %v4909
        %v4973 = vadd.f32 %v4547, %v4912
        %v4974 = vadd.f32 %v4548, %v4914
        %v4975 = vadd.f32 %v4549, %v4917
        %v4976 = vadd.f32 %v4550, %v4919
        %v4977 = vadd.f32 %v4551, %v4922
        %v4978 = vadd.f32 %v4552, %v4924
        %v4979 = vadd.f32 %v4553, %v4927
        %v4980 = vadd.f32 %v4554, %v4929
        %v4981 = vadd.f32 %v4555, %v4932
        %v4982 = vadd.f32 %v4556, %v4934
        %v4983 = vadd.f32 %v4557, %v4937
        %v4984 = vadd.f32 %v4558, %v4939
        %v4985 = vadd.f32 %v4559, %v4942
        %v4986 = vadd.f32 %v4560, %v4944
        %v4987 = vadd.f32 %v4561, %v4947
        %v4988 = vadd.f32 %v4562, %v4949
        %v4989 = vadd.f32 %v4563, %v4952
        %v4990 = vadd.f32 %v4564, %v4954
        %v4991 = vadd.f32 %v4565, %v4957
        %v4992 = vadd.f32 %v4566, %v4959
        %v4993 = vld [vmem:[%s3] sm:$0x1]
        %v4995 = vperm.slane %v4993, 0
        %v4997 = vadd.f32 %v4961, %v4995
        %v4998 = vadd.f32 %v4962, %v4995
        %v4999 = vadd.f32 %v4963, %v4995
        %v5000 = vadd.f32 %v4964, %v4995
        %v5001 = vadd.f32 %v4965, %v4995
        %v5002 = vadd.f32 %v4966, %v4995
        %v5003 = vadd.f32 %v4967, %v4995
        %v5004 = vadd.f32 %v4968, %v4995
        %v5005 = vadd.f32 %v4969, %v4995
        %v5006 = vadd.f32 %v4970, %v4995
        %v5007 = vadd.f32 %v4971, %v4995
        %v5008 = vadd.f32 %v4972, %v4995
        %v5009 = vadd.f32 %v4973, %v4995
        %v5010 = vadd.f32 %v4974, %v4995
        %v5011 = vadd.f32 %v4975, %v4995
        %v5012 = vadd.f32 %v4976, %v4995
        %v5013 = vadd.f32 %v4977, %v4995
        %v5014 = vadd.f32 %v4978, %v4995
        %v5015 = vadd.f32 %v4979, %v4995
        %v5016 = vadd.f32 %v4980, %v4995
        %v5017 = vadd.f32 %v4981, %v4995
        %v5018 = vadd.f32 %v4982, %v4995
        %v5019 = vadd.f32 %v4983, %v4995
        %v5020 = vadd.f32 %v4984, %v4995
        %v5021 = vadd.f32 %v4985, %v4995
        %v5022 = vadd.f32 %v4986, %v4995
        %v5023 = vadd.f32 %v4987, %v4995
        %v5024 = vadd.f32 %v4988, %v4995
        %v5025 = vadd.f32 %v4989, %v4995
        %v5026 = vadd.f32 %v4990, %v4995
        %v5027 = vadd.f32 %v4991, %v4995
        %v5028 = vadd.f32 %v4992, %v4995
        %v5029 = vmax.f32 %v4997, 0.0
        %v5030 = vmax.f32 %v4998, 0.0
        %v5031 = vmax.f32 %v4999, 0.0
        %v5032 = vmax.f32 %v5000, 0.0
        %v5033 = vmax.f32 %v5001, 0.0
        %v5034 = vmax.f32 %v5002, 0.0
        %v5035 = vmax.f32 %v5003, 0.0
        %v5036 = vmax.f32 %v5004, 0.0
        %v5037 = vmax.f32 %v5005, 0.0
        %v5038 = vmax.f32 %v5006, 0.0
        %v5039 = vmax.f32 %v5007, 0.0
        %v5040 = vmax.f32 %v5008, 0.0
        %v5041 = vmax.f32 %v5009, 0.0
        %v5042 = vmax.f32 %v5010, 0.0
        %v5043 = vmax.f32 %v5011, 0.0
        %v5044 = vmax.f32 %v5012, 0.0
        %v5045 = vmax.f32 %v5013, 0.0
        %v5046 = vmax.f32 %v5014, 0.0
        %v5047 = vmax.f32 %v5015, 0.0
        %v5048 = vmax.f32 %v5016, 0.0
        %v5049 = vmax.f32 %v5017, 0.0
        %v5050 = vmax.f32 %v5018, 0.0
        %v5051 = vmax.f32 %v5019, 0.0
        %v5052 = vmax.f32 %v5020, 0.0
        %v5053 = vmax.f32 %v5021, 0.0
        %v5054 = vmax.f32 %v5022, 0.0
        %v5055 = vmax.f32 %v5023, 0.0
        %v5056 = vmax.f32 %v5024, 0.0
        %v5057 = vmax.f32 %v5025, 0.0
        %v5058 = vmax.f32 %v5026, 0.0
        %v5059 = vmax.f32 %v5027, 0.0
        %v5060 = vmax.f32 %v5028, 0.0
        %v5061 = vunpack.c.l.bf16 %v2491
        %v5062 = vunpack.c.l.bf16 %v2501
        %v5063 = vunpack.c.l.bf16 %v2515
        %v5064 = vunpack.c.l.bf16 %v2525
        %v5065 = vunpack.c.l.bf16 %v2539
        %v5066 = vunpack.c.l.bf16 %v2549
        %v5067 = vunpack.c.l.bf16 %v2563
        %v5068 = vunpack.c.l.bf16 %v2573
        %v5069 = vunpack.c.l.bf16 %v2587
        %v5070 = vunpack.c.l.bf16 %v2597
        %v5071 = vunpack.c.l.bf16 %v2611
        %v5072 = vunpack.c.l.bf16 %v2621
        %v5073 = vunpack.c.l.bf16 %v2635
        %v5074 = vunpack.c.l.bf16 %v2645
        %v5075 = vunpack.c.l.bf16 %v2659
        %v5076 = vunpack.c.l.bf16 %v2669
        %v5077 = vunpack.c.l.bf16 %v2683
        %v5078 = vunpack.c.l.bf16 %v2693
        %v5079 = vunpack.c.l.bf16 %v2707
        %v5080 = vunpack.c.l.bf16 %v2717
        %v5081 = vunpack.c.l.bf16 %v2731
        %v5082 = vunpack.c.l.bf16 %v2741
        %v5083 = vunpack.c.l.bf16 %v2755
        %v5084 = vunpack.c.l.bf16 %v2765
        %v5085 = vunpack.c.l.bf16 %v2779
        %v5086 = vunpack.c.l.bf16 %v2789
        %v5087 = vunpack.c.l.bf16 %v2803
        %v5088 = vunpack.c.l.bf16 %v2813
        %v5089 = vunpack.c.l.bf16 %v2827
        %v5090 = vunpack.c.l.bf16 %v2837
        %v5091 = vunpack.c.l.bf16 %v2851
        %v5092 = vunpack.c.l.bf16 %v2861
        %v5093 = vpack.c.bf16 %v5029, %v5029
        %v5094 = vpack.c.bf16 %v5030, %v5030
        %v5095 = vpack.c.bf16 %v5031, %v5031
        %v5096 = vpack.c.bf16 %v5032, %v5032
        %v5097 = vpack.c.bf16 %v5033, %v5033
        %v5098 = vpack.c.bf16 %v5034, %v5034
        %v5099 = vpack.c.bf16 %v5035, %v5035
        %v5100 = vpack.c.bf16 %v5036, %v5036
        %v5101 = vpack.c.bf16 %v5037, %v5037
        %v5102 = vpack.c.bf16 %v5038, %v5038
        %v5103 = vpack.c.bf16 %v5039, %v5039
        %v5104 = vpack.c.bf16 %v5040, %v5040
        %v5105 = vpack.c.bf16 %v5041, %v5041
        %v5106 = vpack.c.bf16 %v5042, %v5042
        %v5107 = vpack.c.bf16 %v5043, %v5043
        %v5108 = vpack.c.bf16 %v5044, %v5044
        %v5109 = vpack.c.bf16 %v5045, %v5045
        %v5110 = vpack.c.bf16 %v5046, %v5046
        %v5111 = vpack.c.bf16 %v5047, %v5047
        %v5112 = vpack.c.bf16 %v5048, %v5048
        %v5113 = vpack.c.bf16 %v5049, %v5049
        %v5114 = vpack.c.bf16 %v5050, %v5050
        %v5115 = vpack.c.bf16 %v5051, %v5051
        %v5116 = vpack.c.bf16 %v5052, %v5052
        %v5117 = vpack.c.bf16 %v5053, %v5053
        %v5118 = vpack.c.bf16 %v5054, %v5054
        %v5119 = vpack.c.bf16 %v5055, %v5055
        %v5120 = vpack.c.bf16 %v5056, %v5056
        %v5121 = vpack.c.bf16 %v5057, %v5057
        %v5122 = vpack.c.bf16 %v5058, %v5058
        %v5123 = vpack.c.bf16 %v5059, %v5059
        %v5124 = vpack.c.bf16 %v5060, %v5060
        %v5126 = vshrl.u32 %v5093, 16
        %v5128 = vrot.slane %v5126, 7
        %v5129 = vshll.u32 %v5093, 16
        %v5131 = vor.u32 %v5128, %v5129
        %v5132 = vrot.slane %v5128, 4
        %v5134 = vshrl.u32 %v5094, 16
        %v5136 = vrot.slane %v5134, 7
        %v5137 = vshll.u32 %v5094, 16
        %v5139 = vor.u32 %v5136, %v5137
        %v5140 = vsel %vm361, %v5132, %v5139
        %v5141 = vrot.slane %v5136, 4
        %v5143 = vshrl.u32 %v5095, 16
        %v5145 = vrot.slane %v5143, 7
        %v5146 = vshll.u32 %v5095, 16
        %v5148 = vor.u32 %v5145, %v5146
        %v5149 = vrot.slane %v5145, 4
        %v5151 = vshrl.u32 %v5096, 16
        %v5153 = vrot.slane %v5151, 7
        %v5154 = vshll.u32 %v5096, 16
        %v5156 = vor.u32 %v5153, %v5154
        %v5157 = vsel %vm361, %v5149, %v5156
        %v5158 = vrot.slane %v5153, 4
        %v5160 = vshrl.u32 %v5097, 16
        %v5162 = vrot.slane %v5160, 7
        %v5163 = vshll.u32 %v5097, 16
        %v5165 = vor.u32 %v5162, %v5163
        %v5166 = vrot.slane %v5162, 4
        %v5168 = vshrl.u32 %v5098, 16
        %v5170 = vrot.slane %v5168, 7
        %v5171 = vshll.u32 %v5098, 16
        %v5173 = vor.u32 %v5170, %v5171
        %v5174 = vsel %vm361, %v5166, %v5173
        %v5175 = vrot.slane %v5170, 4
        %v5177 = vshrl.u32 %v5099, 16
        %v5179 = vrot.slane %v5177, 7
        %v5180 = vshll.u32 %v5099, 16
        %v5182 = vor.u32 %v5179, %v5180
        %v5183 = vrot.slane %v5179, 4
        %v5185 = vshrl.u32 %v5100, 16
        %v5187 = vrot.slane %v5185, 7
        %v5188 = vshll.u32 %v5100, 16
        %v5190 = vor.u32 %v5187, %v5188
        %v5191 = vsel %vm361, %v5183, %v5190
        %v5192 = vrot.slane %v5187, 4
        %v5194 = vshrl.u32 %v5101, 16
        %v5196 = vrot.slane %v5194, 7
        %v5197 = vshll.u32 %v5101, 16
        %v5199 = vor.u32 %v5196, %v5197
        %v5200 = vrot.slane %v5196, 4
        %v5202 = vshrl.u32 %v5102, 16
        %v5204 = vrot.slane %v5202, 7
        %v5205 = vshll.u32 %v5102, 16
        %v5207 = vor.u32 %v5204, %v5205
        %v5208 = vsel %vm361, %v5200, %v5207
        %v5209 = vrot.slane %v5204, 4
        %v5211 = vshrl.u32 %v5103, 16
        %v5213 = vrot.slane %v5211, 7
        %v5214 = vshll.u32 %v5103, 16
        %v5216 = vor.u32 %v5213, %v5214
        %v5217 = vrot.slane %v5213, 4
        %v5219 = vshrl.u32 %v5104, 16
        %v5221 = vrot.slane %v5219, 7
        %v5222 = vshll.u32 %v5104, 16
        %v5224 = vor.u32 %v5221, %v5222
        %v5225 = vsel %vm361, %v5217, %v5224
        %v5226 = vrot.slane %v5221, 4
        %v5228 = vshrl.u32 %v5105, 16
        %v5230 = vrot.slane %v5228, 7
        %v5231 = vshll.u32 %v5105, 16
        %v5233 = vor.u32 %v5230, %v5231
        %v5234 = vrot.slane %v5230, 4
        %v5236 = vshrl.u32 %v5106, 16
        %v5238 = vrot.slane %v5236, 7
        %v5239 = vshll.u32 %v5106, 16
        %v5241 = vor.u32 %v5238, %v5239
        %v5242 = vsel %vm361, %v5234, %v5241
        %v5243 = vrot.slane %v5238, 4
        %v5245 = vshrl.u32 %v5107, 16
        %v5247 = vrot.slane %v5245, 7
        %v5248 = vshll.u32 %v5107, 16
        %v5250 = vor.u32 %v5247, %v5248
        %v5251 = vrot.slane %v5247, 4
        %v5253 = vshrl.u32 %v5108, 16
        %v5255 = vrot.slane %v5253, 7
        %v5256 = vshll.u32 %v5108, 16
        %v5258 = vor.u32 %v5255, %v5256
        %v5259 = vsel %vm361, %v5251, %v5258
        %v5260 = vrot.slane %v5255, 4
        %v5262 = vshrl.u32 %v5109, 16
        %v5264 = vrot.slane %v5262, 7
        %v5265 = vshll.u32 %v5109, 16
        %v5267 = vor.u32 %v5264, %v5265
        %v5268 = vrot.slane %v5264, 4
        %v5270 = vshrl.u32 %v5110, 16
        %v5272 = vrot.slane %v5270, 7
        %v5273 = vshll.u32 %v5110, 16
        %v5275 = vor.u32 %v5272, %v5273
        %v5276 = vsel %vm361, %v5268, %v5275
        %v5277 = vrot.slane %v5272, 4
        %v5279 = vshrl.u32 %v5111, 16
        %v5281 = vrot.slane %v5279, 7
        %v5282 = vshll.u32 %v5111, 16
        %v5284 = vor.u32 %v5281, %v5282
        %v5285 = vrot.slane %v5281, 4
        %v5287 = vshrl.u32 %v5112, 16
        %v5289 = vrot.slane %v5287, 7
        %v5290 = vshll.u32 %v5112, 16
        %v5292 = vor.u32 %v5289, %v5290
        %v5293 = vsel %vm361, %v5285, %v5292
        %v5294 = vrot.slane %v5289, 4
        %v5296 = vshrl.u32 %v5113, 16
        %v5298 = vrot.slane %v5296, 7
        %v5299 = vshll.u32 %v5113, 16
        %v5301 = vor.u32 %v5298, %v5299
        %v5302 = vrot.slane %v5298, 4
        %v5304 = vshrl.u32 %v5114, 16
        %v5306 = vrot.slane %v5304, 7
        %v5307 = vshll.u32 %v5114, 16
        %v5309 = vor.u32 %v5306, %v5307
        %v5310 = vsel %vm361, %v5302, %v5309
        %v5311 = vrot.slane %v5306, 4
        %v5313 = vshrl.u32 %v5115, 16
        %v5315 = vrot.slane %v5313, 7
        %v5316 = vshll.u32 %v5115, 16
        %v5318 = vor.u32 %v5315, %v5316
        %v5319 = vrot.slane %v5315, 4
        %v5321 = vshrl.u32 %v5116, 16
        %v5323 = vrot.slane %v5321, 7
        %v5324 = vshll.u32 %v5116, 16
        %v5326 = vor.u32 %v5323, %v5324
        %v5327 = vsel %vm361, %v5319, %v5326
        %v5328 = vrot.slane %v5323, 4
        %v5330 = vshrl.u32 %v5117, 16
        %v5332 = vrot.slane %v5330, 7
        %v5333 = vshll.u32 %v5117, 16
        %v5335 = vor.u32 %v5332, %v5333
        %v5336 = vrot.slane %v5332, 4
        %v5338 = vshrl.u32 %v5118, 16
        %v5340 = vrot.slane %v5338, 7
        %v5341 = vshll.u32 %v5118, 16
        %v5343 = vor.u32 %v5340, %v5341
        %v5344 = vsel %vm361, %v5336, %v5343
        %v5345 = vrot.slane %v5340, 4
        %v5347 = vshrl.u32 %v5119, 16
        %v5349 = vrot.slane %v5347, 7
        %v5350 = vshll.u32 %v5119, 16
        %v5352 = vor.u32 %v5349, %v5350
        %v5353 = vrot.slane %v5349, 4
        %v5355 = vshrl.u32 %v5120, 16
        %v5357 = vrot.slane %v5355, 7
        %v5358 = vshll.u32 %v5120, 16
        %v5360 = vor.u32 %v5357, %v5358
        %v5361 = vsel %vm361, %v5353, %v5360
        %v5362 = vrot.slane %v5357, 4
        %v5364 = vshrl.u32 %v5121, 16
        %v5366 = vrot.slane %v5364, 7
        %v5367 = vshll.u32 %v5121, 16
        %v5369 = vor.u32 %v5366, %v5367
        %v5370 = vrot.slane %v5366, 4
        %v5372 = vshrl.u32 %v5122, 16
        %v5374 = vrot.slane %v5372, 7
        %v5375 = vshll.u32 %v5122, 16
        %v5377 = vor.u32 %v5374, %v5375
        %v5378 = vsel %vm361, %v5370, %v5377
        %v5379 = vrot.slane %v5374, 4
        %v5381 = vshrl.u32 %v5123, 16
        %v5383 = vrot.slane %v5381, 7
        %v5384 = vshll.u32 %v5123, 16
        %v5386 = vor.u32 %v5383, %v5384
        %v5387 = vrot.slane %v5383, 4
        %v5389 = vshrl.u32 %v5124, 16
        %v5391 = vrot.slane %v5389, 7
        %v5392 = vshll.u32 %v5124, 16
        %v5394 = vor.u32 %v5391, %v5392
        %v5395 = vsel %vm361, %v5387, %v5394
        %v5396 = vrot.slane %v5391, 4
        %vm5445 = vcmask 1043456
        %vm5446 = vmand %vm5445, %vm684
        %v5447 = vsel %vm5446, %v5131, %v2430
        %5448 = vst [vmem:[%s682] sm:$0xf] %v5447
        %5449 = vst [vmem:[%s682 + $0x4] sm:$0xf] %v5140
        %vm5450 = vcmask 1040384
        %vm5451 = vmand %vm5450, %vm359
        %v5452 = vld [vmem:[%s682 + $0x8] sm:$0x1]
        %v5453 = vsel %vm5451, %v5141, %v5452
        %5454 = vst [vmem:[%s682 + $0x8] sm:$0x1] %v5453
        %v5455 = vld [vmem:[%s682 + $0xc] sm:$0xf]
        %v5456 = vsel %vm5446, %v5148, %v5455
        %5457 = vst [vmem:[%s682 + $0xc] sm:$0xf] %v5456
        %5458 = vst [vmem:[%s682 + $0x10] sm:$0xf] %v5157
        %v5459 = vld [vmem:[%s682 + $0x14] sm:$0x1]
        %v5460 = vsel %vm5451, %v5158, %v5459
        %5461 = vst [vmem:[%s682 + $0x14] sm:$0x1] %v5460
        %v5462 = vld [vmem:[%s682 + $0x18] sm:$0xf]
        %v5463 = vsel %vm5446, %v5165, %v5462
        %5464 = vst [vmem:[%s682 + $0x18] sm:$0xf] %v5463
        %5465 = vst [vmem:[%s682 + $0x1c] sm:$0xf] %v5174
        %v5466 = vld [vmem:[%s682 + $0x20] sm:$0x1]
        %v5467 = vsel %vm5451, %v5175, %v5466
        %5468 = vst [vmem:[%s682 + $0x20] sm:$0x1] %v5467
        %v5469 = vld [vmem:[%s682 + $0x24] sm:$0xf]
        %v5470 = vsel %vm5446, %v5182, %v5469
        %5471 = vst [vmem:[%s682 + $0x24] sm:$0xf] %v5470
        %5472 = vst [vmem:[%s682 + $0x28] sm:$0xf] %v5191
        %v5473 = vld [vmem:[%s682 + $0x2c] sm:$0x1]
        %v5474 = vsel %vm5451, %v5192, %v5473
        %5475 = vst [vmem:[%s682 + $0x2c] sm:$0x1] %v5474
        %v5476 = vld [vmem:[%s682 + $0x30] sm:$0xf]
        %v5477 = vsel %vm5446, %v5199, %v5476
        %5478 = vst [vmem:[%s682 + $0x30] sm:$0xf] %v5477
        %5479 = vst [vmem:[%s682 + $0x34] sm:$0xf] %v5208
        %v5480 = vld [vmem:[%s682 + $0x38] sm:$0x1]
        %v5481 = vsel %vm5451, %v5209, %v5480
        %5482 = vst [vmem:[%s682 + $0x38] sm:$0x1] %v5481
        %v5483 = vld [vmem:[%s682 + $0x3c] sm:$0xf]
        %v5484 = vsel %vm5446, %v5216, %v5483
        %5485 = vst [vmem:[%s682 + $0x3c] sm:$0xf] %v5484
        %5486 = vst [vmem:[%s682 + $0x40] sm:$0xf] %v5225
        %v5487 = vld [vmem:[%s682 + $0x44] sm:$0x1]
        %v5488 = vsel %vm5451, %v5226, %v5487
        %5489 = vst [vmem:[%s682 + $0x44] sm:$0x1] %v5488
        %v5490 = vld [vmem:[%s682 + $0x48] sm:$0xf]
        %v5491 = vsel %vm5446, %v5233, %v5490
        %5492 = vst [vmem:[%s682 + $0x48] sm:$0xf] %v5491
        %5493 = vst [vmem:[%s682 + $0x4c] sm:$0xf] %v5242
        %v5494 = vld [vmem:[%s682 + $0x50] sm:$0x1]
        %v5495 = vsel %vm5451, %v5243, %v5494
        %5496 = vst [vmem:[%s682 + $0x50] sm:$0x1] %v5495
        %v5497 = vld [vmem:[%s682 + $0x54] sm:$0xf]
        %v5498 = vsel %vm5446, %v5250, %v5497
        %5499 = vst [vmem:[%s682 + $0x54] sm:$0xf] %v5498
        %5500 = vst [vmem:[%s682 + $0x58] sm:$0xf] %v5259
        %v5501 = vld [vmem:[%s682 + $0x5c] sm:$0x1]
        %v5502 = vsel %vm5451, %v5260, %v5501
        %5503 = vst [vmem:[%s682 + $0x5c] sm:$0x1] %v5502
        %v5504 = vld [vmem:[%s682 + $0x60] sm:$0xf]
        %v5505 = vsel %vm5446, %v5267, %v5504
        %5506 = vst [vmem:[%s682 + $0x60] sm:$0xf] %v5505
        %5507 = vst [vmem:[%s682 + $0x64] sm:$0xf] %v5276
        %v5508 = vld [vmem:[%s682 + $0x68] sm:$0x1]
        %v5509 = vsel %vm5451, %v5277, %v5508
        %5510 = vst [vmem:[%s682 + $0x68] sm:$0x1] %v5509
        %v5511 = vld [vmem:[%s682 + $0x6c] sm:$0xf]
        %v5512 = vsel %vm5446, %v5284, %v5511
        %5513 = vst [vmem:[%s682 + $0x6c] sm:$0xf] %v5512
        %5514 = vst [vmem:[%s682 + $0x70] sm:$0xf] %v5293
        %v5515 = vld [vmem:[%s682 + $0x74] sm:$0x1]
        %v5516 = vsel %vm5451, %v5294, %v5515
        %5517 = vst [vmem:[%s682 + $0x74] sm:$0x1] %v5516
        %v5518 = vld [vmem:[%s682 + $0x78] sm:$0xf]
        %v5519 = vsel %vm5446, %v5301, %v5518
        %5520 = vst [vmem:[%s682 + $0x78] sm:$0xf] %v5519
        %5521 = vst [vmem:[%s682 + $0x7c] sm:$0xf] %v5310
        %v5522 = vld [vmem:[%s682 + $0x80] sm:$0x1]
        %v5523 = vsel %vm5451, %v5311, %v5522
        %5524 = vst [vmem:[%s682 + $0x80] sm:$0x1] %v5523
        %v5525 = vld [vmem:[%s682 + $0x84] sm:$0xf]
        %v5526 = vsel %vm5446, %v5318, %v5525
        %5527 = vst [vmem:[%s682 + $0x84] sm:$0xf] %v5526
        %5528 = vst [vmem:[%s682 + $0x88] sm:$0xf] %v5327
        %v5529 = vld [vmem:[%s682 + $0x8c] sm:$0x1]
        %v5530 = vsel %vm5451, %v5328, %v5529
        %5531 = vst [vmem:[%s682 + $0x8c] sm:$0x1] %v5530
        %v5532 = vld [vmem:[%s682 + $0x90] sm:$0xf]
        %v5533 = vsel %vm5446, %v5335, %v5532
        %5534 = vst [vmem:[%s682 + $0x90] sm:$0xf] %v5533
        %5535 = vst [vmem:[%s682 + $0x94] sm:$0xf] %v5344
        %v5536 = vld [vmem:[%s682 + $0x98] sm:$0x1]
        %v5537 = vsel %vm5451, %v5345, %v5536
        %5538 = vst [vmem:[%s682 + $0x98] sm:$0x1] %v5537
        %v5539 = vld [vmem:[%s682 + $0x9c] sm:$0xf]
        %v5540 = vsel %vm5446, %v5352, %v5539
        %5541 = vst [vmem:[%s682 + $0x9c] sm:$0xf] %v5540
        %5542 = vst [vmem:[%s682 + $0xa0] sm:$0xf] %v5361
        %v5543 = vld [vmem:[%s682 + $0xa4] sm:$0x1]
        %v5544 = vsel %vm5451, %v5362, %v5543
        %5545 = vst [vmem:[%s682 + $0xa4] sm:$0x1] %v5544
        %v5546 = vld [vmem:[%s682 + $0xa8] sm:$0xf]
        %v5547 = vsel %vm5446, %v5369, %v5546
        %5548 = vst [vmem:[%s682 + $0xa8] sm:$0xf] %v5547
        %5549 = vst [vmem:[%s682 + $0xac] sm:$0xf] %v5378
        %v5550 = vld [vmem:[%s682 + $0xb0] sm:$0x1]
        %v5551 = vsel %vm5451, %v5379, %v5550
        %5552 = vst [vmem:[%s682 + $0xb0] sm:$0x1] %v5551
        %v5553 = vld [vmem:[%s682 + $0xb4] sm:$0xf]
        %v5554 = vsel %vm5446, %v5386, %v5553
        %5555 = vst [vmem:[%s682 + $0xb4] sm:$0xf] %v5554
        %5556 = vst [vmem:[%s682 + $0xb8] sm:$0xf] %v5395
        %v5557 = vld [vmem:[%s682 + $0xbc] sm:$0x1]
        %v5558 = vsel %vm5451, %v5396, %v5557
        %5559 = vst [vmem:[%s682 + $0xbc] sm:$0x1] %v5558
        %v5560 = vld [vmem:[#allocation2] sm:$0xf]
        %v5561 = vld [vmem:[#allocation2 + $0x4] sm:$0xf]
        %v5562 = vld [vmem:[#allocation2 + $0xc] sm:$0xf]
        %v5563 = vld [vmem:[#allocation2 + $0x10] sm:$0xf]
        %v5564 = vld [vmem:[#allocation2 + $0x18] sm:$0xf]
        %v5565 = vld [vmem:[#allocation2 + $0x1c] sm:$0xf]
        %v5566 = vld [vmem:[#allocation2 + $0x24] sm:$0xf]
        %v5567 = vld [vmem:[#allocation2 + $0x28] sm:$0xf]
        %v5568 = vld [vmem:[#allocation2 + $0x30] sm:$0xf]
        %v5569 = vld [vmem:[#allocation2 + $0x34] sm:$0xf]
        %v5570 = vld [vmem:[#allocation2 + $0x3c] sm:$0xf]
        %v5571 = vld [vmem:[#allocation2 + $0x40] sm:$0xf]
        %v5572 = vld [vmem:[#allocation2 + $0x48] sm:$0xf]
        %v5573 = vld [vmem:[#allocation2 + $0x4c] sm:$0xf]
        %v5574 = vld [vmem:[#allocation2 + $0x54] sm:$0xf]
        %v5575 = vld [vmem:[#allocation2 + $0x58] sm:$0xf]
        %v5576 = vld [vmem:[#allocation2 + $0x60] sm:$0xf]
        %v5577 = vld [vmem:[#allocation2 + $0x64] sm:$0xf]
        %v5578 = vld [vmem:[#allocation2 + $0x6c] sm:$0xf]
        %v5579 = vld [vmem:[#allocation2 + $0x70] sm:$0xf]
        %v5580 = vld [vmem:[#allocation2 + $0x78] sm:$0xf]
        %v5581 = vld [vmem:[#allocation2 + $0x7c] sm:$0xf]
        %v5582 = vld [vmem:[#allocation2 + $0x84] sm:$0xf]
        %v5583 = vld [vmem:[#allocation2 + $0x88] sm:$0xf]
        %v5584 = vld [vmem:[#allocation2 + $0x90] sm:$0xf]
        %v5585 = vld [vmem:[#allocation2 + $0x94] sm:$0xf]
        %v5586 = vld [vmem:[#allocation2 + $0x9c] sm:$0xf]
        %v5587 = vld [vmem:[#allocation2 + $0xa0] sm:$0xf]
        %v5588 = vld [vmem:[#allocation2 + $0xa8] sm:$0xf]
        %v5589 = vld [vmem:[#allocation2 + $0xac] sm:$0xf]
        %v5590 = vld [vmem:[#allocation2 + $0xb4] sm:$0xf]
        %v5591 = vld [vmem:[#allocation2 + $0xb8] sm:$0xf]
        %v5592 = vld [vmem:[#allocation3] sm:$0xf]
        %v5593 = vld [vmem:[#allocation3 + $0x4] sm:$0xf]
        %v5594 = vld [vmem:[#allocation3 + $0x8] sm:$0xf]
        %v5595 = vld [vmem:[#allocation3 + $0xc] sm:$0xf]
        %v5596 = vld [vmem:[#allocation3 + $0x10] sm:$0xf]
        %v5597 = vld [vmem:[#allocation3 + $0x14] sm:$0xf]
        %v5598 = vld [vmem:[#allocation3 + $0x18] sm:$0xf]
        %v5599 = vld [vmem:[#allocation3 + $0x1c] sm:$0xf]
        %v5600 = vld [vmem:[#allocation3 + $0x20] sm:$0xf]
        %v5601 = vld [vmem:[#allocation3 + $0x24] sm:$0xf]
        %v5602 = vld [vmem:[#allocation3 + $0x28] sm:$0xf]
        %v5603 = vld [vmem:[#allocation3 + $0x2c] sm:$0xf]
        %v5604 = vld [vmem:[#allocation3 + $0x30] sm:$0xf]
        %v5605 = vld [vmem:[#allocation3 + $0x34] sm:$0xf]
        %v5606 = vld [vmem:[#allocation3 + $0x38] sm:$0xf]
        %v5607 = vld [vmem:[#allocation3 + $0x3c] sm:$0xf]
        %v5608 = vld [vmem:[#allocation2 + $0x8] sm:$0x1]
        %v5609 = vld [vmem:[#allocation2 + $0x14] sm:$0x1]
        %v5610 = vld [vmem:[#allocation2 + $0x20] sm:$0x1]
        %v5611 = vld [vmem:[#allocation2 + $0x2c] sm:$0x1]
        %v5612 = vld [vmem:[#allocation2 + $0x38] sm:$0x1]
        %v5613 = vld [vmem:[#allocation2 + $0x44] sm:$0x1]
        %v5614 = vld [vmem:[#allocation2 + $0x50] sm:$0x1]
        %v5615 = vld [vmem:[#allocation2 + $0x5c] sm:$0x1]
        %v5616 = vld [vmem:[#allocation2 + $0x68] sm:$0x1]
        %v5617 = vld [vmem:[#allocation2 + $0x74] sm:$0x1]
        %v5618 = vld [vmem:[#allocation2 + $0x80] sm:$0x1]
        %v5619 = vld [vmem:[#allocation2 + $0x8c] sm:$0x1]
        %v5620 = vld [vmem:[#allocation2 + $0x98] sm:$0x1]
        %v5621 = vld [vmem:[#allocation2 + $0xa4] sm:$0x1]
        %v5622 = vld [vmem:[#allocation2 + $0xb0] sm:$0x1]
        %v5623 = vld [vmem:[#allocation2 + $0xbc] sm:$0x1]
        %v5625 = vshrl.u32 %v5560, 16
        %v5627 = vrot.slane %v5625, 4
        %v5628 = vshll.u32 %v5560, 16
        %v5630 = vrot.slane %v5628, 5
        %v5631 = vor.u32 %v5627, %v5630
        %v5632 = vrot.slane %v5631, 4
        %v5634 = vshll.u32 %v5561, 16
        %v5636 = vrot.slane %v5634, 5
        %v5637 = vsel %vm867, %v5632, %v5636
        %v5638 = vshrl.u32 %v5561, 16
        %v5640 = vrot.slane %v5638, 4
        %v5641 = vor.u32 %v5640, %v5636
        %v5642 = vrot.slane %v5641, 4
        %v5644 = vshll.u32 %v5608, 16
        %v5646 = vrot.slane %v5644, 5
        %v5647 = vsel %vm867, %v5642, %v5646
        %v5649 = vshrl.u32 %v5562, 16
        %v5651 = vrot.slane %v5649, 4
        %v5652 = vshll.u32 %v5562, 16
        %v5654 = vrot.slane %v5652, 5
        %v5655 = vor.u32 %v5651, %v5654
        %v5656 = vrot.slane %v5655, 4
        %v5658 = vshll.u32 %v5563, 16
        %v5660 = vrot.slane %v5658, 5
        %v5661 = vsel %vm867, %v5656, %v5660
        %v5662 = vshrl.u32 %v5563, 16
        %v5664 = vrot.slane %v5662, 4
        %v5665 = vor.u32 %v5664, %v5660
        %v5666 = vrot.slane %v5665, 4
        %v5668 = vshll.u32 %v5609, 16
        %v5670 = vrot.slane %v5668, 5
        %v5671 = vsel %vm867, %v5666, %v5670
        %v5673 = vshrl.u32 %v5564, 16
        %v5675 = vrot.slane %v5673, 4
        %v5676 = vshll.u32 %v5564, 16
        %v5678 = vrot.slane %v5676, 5
        %v5679 = vor.u32 %v5675, %v5678
        %v5680 = vrot.slane %v5679, 4
        %v5682 = vshll.u32 %v5565, 16
        %v5684 = vrot.slane %v5682, 5
        %v5685 = vsel %vm867, %v5680, %v5684
        %v5686 = vshrl.u32 %v5565, 16
        %v5688 = vrot.slane %v5686, 4
        %v5689 = vor.u32 %v5688, %v5684
        %v5690 = vrot.slane %v5689, 4
        %v5692 = vshll.u32 %v5610, 16
        %v5694 = vrot.slane %v5692, 5
        %v5695 = vsel %vm867, %v5690, %v5694
        %v5697 = vshrl.u32 %v5566, 16
        %v5699 = vrot.slane %v5697, 4
        %v5700 = vshll.u32 %v5566, 16
        %v5702 = vrot.slane %v5700, 5
        %v5703 = vor.u32 %v5699, %v5702
        %v5704 = vrot.slane %v5703, 4
        %v5706 = vshll.u32 %v5567, 16
        %v5708 = vrot.slane %v5706, 5
        %v5709 = vsel %vm867, %v5704, %v5708
        %v5710 = vshrl.u32 %v5567, 16
        %v5712 = vrot.slane %v5710, 4
        %v5713 = vor.u32 %v5712, %v5708
        %v5714 = vrot.slane %v5713, 4
        %v5716 = vshll.u32 %v5611, 16
        %v5718 = vrot.slane %v5716, 5
        %v5719 = vsel %vm867, %v5714, %v5718
        %v5721 = vshrl.u32 %v5568, 16
        %v5723 = vrot.slane %v5721, 4
        %v5724 = vshll.u32 %v5568, 16
        %v5726 = vrot.slane %v5724, 5
        %v5727 = vor.u32 %v5723, %v5726
        %v5728 = vrot.slane %v5727, 4
        %v5730 = vshll.u32 %v5569, 16
        %v5732 = vrot.slane %v5730, 5
        %v5733 = vsel %vm867, %v5728, %v5732
        %v5734 = vshrl.u32 %v5569, 16
        %v5736 = vrot.slane %v5734, 4
        %v5737 = vor.u32 %v5736, %v5732
        %v5738 = vrot.slane %v5737, 4
        %v5740 = vshll.u32 %v5612, 16
        %v5742 = vrot.slane %v5740, 5
        %v5743 = vsel %vm867, %v5738, %v5742
        %v5745 = vshrl.u32 %v5570, 16
        %v5747 = vrot.slane %v5745, 4
        %v5748 = vshll.u32 %v5570, 16
        %v5750 = vrot.slane %v5748, 5
        %v5751 = vor.u32 %v5747, %v5750
        %v5752 = vrot.slane %v5751, 4
        %v5754 = vshll.u32 %v5571, 16
        %v5756 = vrot.slane %v5754, 5
        %v5757 = vsel %vm867, %v5752, %v5756
        %v5758 = vshrl.u32 %v5571, 16
        %v5760 = vrot.slane %v5758, 4
        %v5761 = vor.u32 %v5760, %v5756
        %v5762 = vrot.slane %v5761, 4
        %v5764 = vshll.u32 %v5613, 16
        %v5766 = vrot.slane %v5764, 5
        %v5767 = vsel %vm867, %v5762, %v5766
        %v5769 = vshrl.u32 %v5572, 16
        %v5771 = vrot.slane %v5769, 4
        %v5772 = vshll.u32 %v5572, 16
        %v5774 = vrot.slane %v5772, 5
        %v5775 = vor.u32 %v5771, %v5774
        %v5776 = vrot.slane %v5775, 4
        %v5778 = vshll.u32 %v5573, 16
        %v5780 = vrot.slane %v5778, 5
        %v5781 = vsel %vm867, %v5776, %v5780
        %v5782 = vshrl.u32 %v5573, 16
        %v5784 = vrot.slane %v5782, 4
        %v5785 = vor.u32 %v5784, %v5780
        %v5786 = vrot.slane %v5785, 4
        %v5788 = vshll.u32 %v5614, 16
        %v5790 = vrot.slane %v5788, 5
        %v5791 = vsel %vm867, %v5786, %v5790
        %v5793 = vshrl.u32 %v5574, 16
        %v5795 = vrot.slane %v5793, 4
        %v5796 = vshll.u32 %v5574, 16
        %v5798 = vrot.slane %v5796, 5
        %v5799 = vor.u32 %v5795, %v5798
        %v5800 = vrot.slane %v5799, 4
        %v5802 = vshll.u32 %v5575, 16
        %v5804 = vrot.slane %v5802, 5
        %v5805 = vsel %vm867, %v5800, %v5804
        %v5806 = vshrl.u32 %v5575, 16
        %v5808 = vrot.slane %v5806, 4
        %v5809 = vor.u32 %v5808, %v5804
        %v5810 = vrot.slane %v5809, 4
        %v5812 = vshll.u32 %v5615, 16
        %v5814 = vrot.slane %v5812, 5
        %v5815 = vsel %vm867, %v5810, %v5814
        %v5817 = vshrl.u32 %v5576, 16
        %v5819 = vrot.slane %v5817, 4
        %v5820 = vshll.u32 %v5576, 16
        %v5822 = vrot.slane %v5820, 5
        %v5823 = vor.u32 %v5819, %v5822
        %v5824 = vrot.slane %v5823, 4
        %v5826 = vshll.u32 %v5577, 16
        %v5828 = vrot.slane %v5826, 5
        %v5829 = vsel %vm867, %v5824, %v5828
        %v5830 = vshrl.u32 %v5577, 16
        %v5832 = vrot.slane %v5830, 4
        %v5833 = vor.u32 %v5832, %v5828
        %v5834 = vrot.slane %v5833, 4
        %v5836 = vshll.u32 %v5616, 16
        %v5838 = vrot.slane %v5836, 5
        %v5839 = vsel %vm867, %v5834, %v5838
        %v5841 = vshrl.u32 %v5578, 16
        %v5843 = vrot.slane %v5841, 4
        %v5844 = vshll.u32 %v5578, 16
        %v5846 = vrot.slane %v5844, 5
        %v5847 = vor.u32 %v5843, %v5846
        %v5848 = vrot.slane %v5847, 4
        %v5850 = vshll.u32 %v5579, 16
        %v5852 = vrot.slane %v5850, 5
        %v5853 = vsel %vm867, %v5848, %v5852
        %v5854 = vshrl.u32 %v5579, 16
        %v5856 = vrot.slane %v5854, 4
        %v5857 = vor.u32 %v5856, %v5852
        %v5858 = vrot.slane %v5857, 4
        %v5860 = vshll.u32 %v5617, 16
        %v5862 = vrot.slane %v5860, 5
        %v5863 = vsel %vm867, %v5858, %v5862
        %v5865 = vshrl.u32 %v5580, 16
        %v5867 = vrot.slane %v5865, 4
        %v5868 = vshll.u32 %v5580, 16
        %v5870 = vrot.slane %v5868, 5
        %v5871 = vor.u32 %v5867, %v5870
        %v5872 = vrot.slane %v5871, 4
        %v5874 = vshll.u32 %v5581, 16
        %v5876 = vrot.slane %v5874, 5
        %v5877 = vsel %vm867, %v5872, %v5876
        %v5878 = vshrl.u32 %v5581, 16
        %v5880 = vrot.slane %v5878, 4
        %v5881 = vor.u32 %v5880, %v5876
        %v5882 = vrot.slane %v5881, 4
        %v5884 = vshll.u32 %v5618, 16
        %v5886 = vrot.slane %v5884, 5
        %v5887 = vsel %vm867, %v5882, %v5886
        %v5889 = vshrl.u32 %v5582, 16
        %v5891 = vrot.slane %v5889, 4
        %v5892 = vshll.u32 %v5582, 16
        %v5894 = vrot.slane %v5892, 5
        %v5895 = vor.u32 %v5891, %v5894
        %v5896 = vrot.slane %v5895, 4
        %v5898 = vshll.u32 %v5583, 16
        %v5900 = vrot.slane %v5898, 5
        %v5901 = vsel %vm867, %v5896, %v5900
        %v5902 = vshrl.u32 %v5583, 16
        %v5904 = vrot.slane %v5902, 4
        %v5905 = vor.u32 %v5904, %v5900
        %v5906 = vrot.slane %v5905, 4
        %v5908 = vshll.u32 %v5619, 16
        %v5910 = vrot.slane %v5908, 5
        %v5911 = vsel %vm867, %v5906, %v5910
        %v5913 = vshrl.u32 %v5584, 16
        %v5915 = vrot.slane %v5913, 4
        %v5916 = vshll.u32 %v5584, 16
        %v5918 = vrot.slane %v5916, 5
        %v5919 = vor.u32 %v5915, %v5918
        %v5920 = vrot.slane %v5919, 4
        %v5922 = vshll.u32 %v5585, 16
        %v5924 = vrot.slane %v5922, 5
        %v5925 = vsel %vm867, %v5920, %v5924
        %v5926 = vshrl.u32 %v5585, 16
        %v5928 = vrot.slane %v5926, 4
        %v5929 = vor.u32 %v5928, %v5924
        %v5930 = vrot.slane %v5929, 4
        %v5932 = vshll.u32 %v5620, 16
        %v5934 = vrot.slane %v5932, 5
        %v5935 = vsel %vm867, %v5930, %v5934
        %v5937 = vshrl.u32 %v5586, 16
        %v5939 = vrot.slane %v5937, 4
        %v5940 = vshll.u32 %v5586, 16
        %v5942 = vrot.slane %v5940, 5
        %v5943 = vor.u32 %v5939, %v5942
        %v5944 = vrot.slane %v5943, 4
        %v5946 = vshll.u32 %v5587, 16
        %v5948 = vrot.slane %v5946, 5
        %v5949 = vsel %vm867, %v5944, %v5948
        %v5950 = vshrl.u32 %v5587, 16
        %v5952 = vrot.slane %v5950, 4
        %v5953 = vor.u32 %v5952, %v5948
        %v5954 = vrot.slane %v5953, 4
        %v5956 = vshll.u32 %v5621, 16
        %v5958 = vrot.slane %v5956, 5
        %v5959 = vsel %vm867, %v5954, %v5958
        %v5961 = vshrl.u32 %v5588, 16
        %v5963 = vrot.slane %v5961, 4
        %v5964 = vshll.u32 %v5588, 16
        %v5966 = vrot.slane %v5964, 5
        %v5967 = vor.u32 %v5963, %v5966
        %v5968 = vrot.slane %v5967, 4
        %v5970 = vshll.u32 %v5589, 16
        %v5972 = vrot.slane %v5970, 5
        %v5973 = vsel %vm867, %v5968, %v5972
        %v5974 = vshrl.u32 %v5589, 16
        %v5976 = vrot.slane %v5974, 4
        %v5977 = vor.u32 %v5976, %v5972
        %v5978 = vrot.slane %v5977, 4
        %v5980 = vshll.u32 %v5622, 16
        %v5982 = vrot.slane %v5980, 5
        %v5983 = vsel %vm867, %v5978, %v5982
        %v5985 = vshrl.u32 %v5590, 16
        %v5987 = vrot.slane %v5985, 4
        %v5988 = vshll.u32 %v5590, 16
        %v5990 = vrot.slane %v5988, 5
        %v5991 = vor.u32 %v5987, %v5990
        %v5992 = vrot.slane %v5991, 4
        %v5994 = vshll.u32 %v5591, 16
        %v5996 = vrot.slane %v5994, 5
        %v5997 = vsel %vm867, %v5992, %v5996
        %v5998 = vshrl.u32 %v5591, 16
        %v6000 = vrot.slane %v5998, 4
        %v6001 = vor.u32 %v6000, %v5996
        %v6002 = vrot.slane %v6001, 4
        %v6004 = vshll.u32 %v5623, 16
        %v6006 = vrot.slane %v6004, 5
        %v6007 = vsel %vm867, %v6002, %v6006
        %s6008 = scalar_lea.vmem [#allocation3], 64
        %v6009 = vld [vmem:[%s6008] sm:$0xf]
        %v6010 = vld [vmem:[%s6008 + $0x4] sm:$0xf]
        %v6011 = vld [vmem:[%s6008 + $0x8] sm:$0xf]
        %v6012 = vld [vmem:[%s6008 + $0xc] sm:$0xf]
        %v6013 = vld [vmem:[%s6008 + $0x10] sm:$0xf]
        %v6014 = vld [vmem:[%s6008 + $0x14] sm:$0xf]
        %v6015 = vld [vmem:[%s6008 + $0x18] sm:$0xf]
        %v6016 = vld [vmem:[%s6008 + $0x1c] sm:$0xf]
        %v6017 = vld [vmem:[%s6008 + $0x20] sm:$0xf]
        %v6018 = vld [vmem:[%s6008 + $0x24] sm:$0xf]
        %v6019 = vld [vmem:[%s6008 + $0x28] sm:$0xf]
        %v6020 = vld [vmem:[%s6008 + $0x2c] sm:$0xf]
        %v6021 = vld [vmem:[%s6008 + $0x30] sm:$0xf]
        %v6022 = vld [vmem:[%s6008 + $0x34] sm:$0xf]
        %v6023 = vld [vmem:[%s6008 + $0x38] sm:$0xf]
        %v6024 = vld [vmem:[%s6008 + $0x3c] sm:$0xf]
        %v6025 = vunpack.c.l.b16 %v5637
        %v6026 = vunpack.c.l.b16 %v5647
        %v6027 = vunpack.c.l.b16 %v5661
        %v6028 = vunpack.c.l.b16 %v5671
        %v6029 = vunpack.c.l.b16 %v5685
        %v6030 = vunpack.c.l.b16 %v5695
        %v6031 = vunpack.c.l.b16 %v5709
        %v6032 = vunpack.c.l.b16 %v5719
        %v6033 = vunpack.c.l.b16 %v5733
        %v6034 = vunpack.c.l.b16 %v5743
        %v6035 = vunpack.c.l.b16 %v5757
        %v6036 = vunpack.c.l.b16 %v5767
        %v6037 = vunpack.c.l.b16 %v5781
        %v6038 = vunpack.c.l.b16 %v5791
        %v6039 = vunpack.c.l.b16 %v5805
        %v6040 = vunpack.c.l.b16 %v5815
        %v6041 = vunpack.c.l.b16 %v5829
        %v6042 = vunpack.c.l.b16 %v5839
        %v6043 = vunpack.c.l.b16 %v5853
        %v6044 = vunpack.c.l.b16 %v5863
        %v6045 = vunpack.c.l.b16 %v5877
        %v6046 = vunpack.c.l.b16 %v5887
        %v6047 = vunpack.c.l.b16 %v5901
        %v6048 = vunpack.c.l.b16 %v5911
        %v6049 = vunpack.c.l.b16 %v5925
        %v6050 = vunpack.c.l.b16 %v5935
        %v6051 = vunpack.c.l.b16 %v5949
        %v6052 = vunpack.c.l.b16 %v5959
        %v6053 = vunpack.c.l.b16 %v5973
        %v6054 = vunpack.c.l.b16 %v5983
        %v6055 = vunpack.c.l.b16 %v5997
        %v6056 = vunpack.c.l.b16 %v6007
        %v6057 = vpack.c.b16 %v6026, %v6025
        %v6058 = vpack.c.b16 %v6028, %v6027
        %v6059 = vpack.c.b16 %v6030, %v6029
        %v6060 = vpack.c.b16 %v6032, %v6031
        %v6061 = vpack.c.b16 %v6034, %v6033
        %v6062 = vpack.c.b16 %v6036, %v6035
        %v6063 = vpack.c.b16 %v6038, %v6037
        %v6064 = vpack.c.b16 %v6040, %v6039
        %v6065 = vpack.c.b16 %v6042, %v6041
        %v6066 = vpack.c.b16 %v6044, %v6043
        %v6067 = vpack.c.b16 %v6046, %v6045
        %v6068 = vpack.c.b16 %v6048, %v6047
        %v6069 = vpack.c.b16 %v6050, %v6049
        %v6070 = vpack.c.b16 %v6052, %v6051
        %v6071 = vpack.c.b16 %v6054, %v6053
        %v6072 = vpack.c.b16 %v6056, %v6055
        %v6105 = vunpack.c.l.b16 %v6009
        %v6106 = vunpack.c.l.b16 %v6010
        %v6107 = vunpack.c.l.b16 %v6011
        %v6108 = vunpack.c.l.b16 %v6012
        %v6109 = vunpack.c.l.b16 %v6013
        %v6110 = vunpack.c.l.b16 %v6014
        %v6111 = vunpack.c.l.b16 %v6015
        %v6112 = vunpack.c.l.b16 %v6016
        %v6113 = vunpack.c.l.b16 %v6017
        %v6114 = vunpack.c.l.b16 %v6018
        %v6115 = vunpack.c.l.b16 %v6019
        %v6116 = vunpack.c.l.b16 %v6020
        %v6117 = vunpack.c.l.b16 %v6021
        %v6118 = vunpack.c.l.b16 %v6022
        %v6119 = vunpack.c.l.b16 %v6023
        %v6120 = vunpack.c.l.b16 %v6024
        %v6121 = vpack.c.b16 %v6106, %v6105
        %v6122 = vpack.c.b16 %v6108, %v6107
        %v6123 = vpack.c.b16 %v6110, %v6109
        %v6124 = vpack.c.b16 %v6112, %v6111
        %v6125 = vpack.c.b16 %v6114, %v6113
        %v6126 = vpack.c.b16 %v6116, %v6115
        %v6127 = vpack.c.b16 %v6118, %v6117
        %v6128 = vpack.c.b16 %v6120, %v6119
        %6137 = vmatpush.bf16.msra.mxu0 %v6128
        %6138 = vmatpush.bf16.msra.mxu0 %v6127
        %6139 = vmatpush.bf16.msra.mxu0 %v6126
        %6140 = vmatpush.bf16.msra.mxu0 %v6125
        %6141 = vmatpush.bf16.msra.mxu0 %v6124
        %6142 = vmatpush.bf16.msra.mxu0 %v6123
        %6143 = vmatpush.bf16.msra.mxu0 %v6122
        %6144 = vmatpush.bf16.msra.mxu0 %v6121
        %6145 = vmatmul.bf16.gmra.mxu0 %v6057
        %v6146 = vpop.f32.mrf.mxu0
        %v6147 = vadd.f32 0.0, %v6146
        %v6148 = vpop.f32.mrf.mxu0
        %v6149 = vadd.f32 0.0, %v6148
        %6150 = vmatmul.bf16.gmra.mxu0 %v6058
        %v6151 = vpop.f32.mrf.mxu0
        %v6152 = vadd.f32 0.0, %v6151
        %v6153 = vpop.f32.mrf.mxu0
        %v6154 = vadd.f32 0.0, %v6153
        %6155 = vmatmul.bf16.gmra.mxu0 %v6059
        %v6156 = vpop.f32.mrf.mxu0
        %v6157 = vadd.f32 0.0, %v6156
        %v6158 = vpop.f32.mrf.mxu0
        %v6159 = vadd.f32 0.0, %v6158
        %6160 = vmatmul.bf16.gmra.mxu0 %v6060
        %v6161 = vpop.f32.mrf.mxu0
        %v6162 = vadd.f32 0.0, %v6161
        %v6163 = vpop.f32.mrf.mxu0
        %v6164 = vadd.f32 0.0, %v6163
        %6165 = vmatmul.bf16.gmra.mxu0 %v6061
        %v6166 = vpop.f32.mrf.mxu0
        %v6167 = vadd.f32 0.0, %v6166
        %v6168 = vpop.f32.mrf.mxu0
        %v6169 = vadd.f32 0.0, %v6168
        %6170 = vmatmul.bf16.gmra.mxu0 %v6062
        %v6171 = vpop.f32.mrf.mxu0
        %v6172 = vadd.f32 0.0, %v6171
        %v6173 = vpop.f32.mrf.mxu0
        %v6174 = vadd.f32 0.0, %v6173
        %6175 = vmatmul.bf16.gmra.mxu0 %v6063
        %v6176 = vpop.f32.mrf.mxu0
        %v6177 = vadd.f32 0.0, %v6176
        %v6178 = vpop.f32.mrf.mxu0
        %v6179 = vadd.f32 0.0, %v6178
        %6180 = vmatmul.bf16.gmra.mxu0 %v6064
        %v6181 = vpop.f32.mrf.mxu0
        %v6182 = vadd.f32 0.0, %v6181
        %v6183 = vpop.f32.mrf.mxu0
        %v6184 = vadd.f32 0.0, %v6183
        %6185 = vmatmul.bf16.gmra.mxu0 %v6065
        %v6186 = vpop.f32.mrf.mxu0
        %v6187 = vadd.f32 0.0, %v6186
        %v6188 = vpop.f32.mrf.mxu0
        %v6189 = vadd.f32 0.0, %v6188
        %6190 = vmatmul.bf16.gmra.mxu0 %v6066
        %v6191 = vpop.f32.mrf.mxu0
        %v6192 = vadd.f32 0.0, %v6191
        %v6193 = vpop.f32.mrf.mxu0
        %v6194 = vadd.f32 0.0, %v6193
        %6195 = vmatmul.bf16.gmra.mxu0 %v6067
        %v6196 = vpop.f32.mrf.mxu0
        %v6197 = vadd.f32 0.0, %v6196
        %v6198 = vpop.f32.mrf.mxu0
        %v6199 = vadd.f32 0.0, %v6198
        %6200 = vmatmul.bf16.gmra.mxu0 %v6068
        %v6201 = vpop.f32.mrf.mxu0
        %v6202 = vadd.f32 0.0, %v6201
        %v6203 = vpop.f32.mrf.mxu0
        %v6204 = vadd.f32 0.0, %v6203
        %6205 = vmatmul.bf16.gmra.mxu0 %v6069
        %v6206 = vpop.f32.mrf.mxu0
        %v6207 = vadd.f32 0.0, %v6206
        %v6208 = vpop.f32.mrf.mxu0
        %v6209 = vadd.f32 0.0, %v6208
        %6210 = vmatmul.bf16.gmra.mxu0 %v6070
        %v6211 = vpop.f32.mrf.mxu0
        %v6212 = vadd.f32 0.0, %v6211
        %v6213 = vpop.f32.mrf.mxu0
        %v6214 = vadd.f32 0.0, %v6213
        %6215 = vmatmul.bf16.gmra.mxu0 %v6071
        %v6216 = vpop.f32.mrf.mxu0
        %v6217 = vadd.f32 0.0, %v6216
        %v6218 = vpop.f32.mrf.mxu0
        %v6219 = vadd.f32 0.0, %v6218
        %6220 = vmatmul.bf16.gmra.mxu0 %v6072
        %v6221 = vpop.f32.mrf.mxu0
        %v6222 = vadd.f32 0.0, %v6221
        %v6223 = vpop.f32.mrf.mxu0
        %v6224 = vadd.f32 0.0, %v6223
        %6225 = vdwg.mxu0
        %v6258 = vunpack.c.l.b16 %v5560
        %v6259 = vunpack.c.l.b16 %v5561
        %v6260 = vunpack.c.l.b16 %v5562
        %v6261 = vunpack.c.l.b16 %v5563
        %v6262 = vunpack.c.l.b16 %v5564
        %v6263 = vunpack.c.l.b16 %v5565
        %v6264 = vunpack.c.l.b16 %v5566
        %v6265 = vunpack.c.l.b16 %v5567
        %v6266 = vunpack.c.l.b16 %v5568
        %v6267 = vunpack.c.l.b16 %v5569
        %v6268 = vunpack.c.l.b16 %v5570
        %v6269 = vunpack.c.l.b16 %v5571
        %v6270 = vunpack.c.l.b16 %v5572
        %v6271 = vunpack.c.l.b16 %v5573
        %v6272 = vunpack.c.l.b16 %v5574
        %v6273 = vunpack.c.l.b16 %v5575
        %v6274 = vunpack.c.l.b16 %v5576
        %v6275 = vunpack.c.l.b16 %v5577
        %v6276 = vunpack.c.l.b16 %v5578
        %v6277 = vunpack.c.l.b16 %v5579
        %v6278 = vunpack.c.l.b16 %v5580
        %v6279 = vunpack.c.l.b16 %v5581
        %v6280 = vunpack.c.l.b16 %v5582
        %v6281 = vunpack.c.l.b16 %v5583
        %v6282 = vunpack.c.l.b16 %v5584
        %v6283 = vunpack.c.l.b16 %v5585
        %v6284 = vunpack.c.l.b16 %v5586
        %v6285 = vunpack.c.l.b16 %v5587
        %v6286 = vunpack.c.l.b16 %v5588
        %v6287 = vunpack.c.l.b16 %v5589
        %v6288 = vunpack.c.l.b16 %v5590
        %v6289 = vunpack.c.l.b16 %v5591
        %v6290 = vpack.c.b16 %v6259, %v6258
        %v6291 = vpack.c.b16 %v6261, %v6260
        %v6292 = vpack.c.b16 %v6263, %v6262
        %v6293 = vpack.c.b16 %v6265, %v6264
        %v6294 = vpack.c.b16 %v6267, %v6266
        %v6295 = vpack.c.b16 %v6269, %v6268
        %v6296 = vpack.c.b16 %v6271, %v6270
        %v6297 = vpack.c.b16 %v6273, %v6272
        %v6298 = vpack.c.b16 %v6275, %v6274
        %v6299 = vpack.c.b16 %v6277, %v6276
        %v6300 = vpack.c.b16 %v6279, %v6278
        %v6301 = vpack.c.b16 %v6281, %v6280
        %v6302 = vpack.c.b16 %v6283, %v6282
        %v6303 = vpack.c.b16 %v6285, %v6284
        %v6304 = vpack.c.b16 %v6287, %v6286
        %v6305 = vpack.c.b16 %v6289, %v6288
        %v6338 = vunpack.c.l.b16 %v5592
        %v6339 = vunpack.c.l.b16 %v5593
        %v6340 = vunpack.c.l.b16 %v5594
        %v6341 = vunpack.c.l.b16 %v5595
        %v6342 = vunpack.c.l.b16 %v5596
        %v6343 = vunpack.c.l.b16 %v5597
        %v6344 = vunpack.c.l.b16 %v5598
        %v6345 = vunpack.c.l.b16 %v5599
        %v6346 = vunpack.c.l.b16 %v5600
        %v6347 = vunpack.c.l.b16 %v5601
        %v6348 = vunpack.c.l.b16 %v5602
        %v6349 = vunpack.c.l.b16 %v5603
        %v6350 = vunpack.c.l.b16 %v5604
        %v6351 = vunpack.c.l.b16 %v5605
        %v6352 = vunpack.c.l.b16 %v5606
        %v6353 = vunpack.c.l.b16 %v5607
        %v6354 = vpack.c.b16 %v6339, %v6338
        %v6355 = vpack.c.b16 %v6341, %v6340
        %v6356 = vpack.c.b16 %v6343, %v6342
        %v6357 = vpack.c.b16 %v6345, %v6344
        %v6358 = vpack.c.b16 %v6347, %v6346
        %v6359 = vpack.c.b16 %v6349, %v6348
        %v6360 = vpack.c.b16 %v6351, %v6350
        %v6361 = vpack.c.b16 %v6353, %v6352
        %6370 = vmatpush.bf16.msra.mxu0 %v6361
        %6371 = vmatpush.bf16.msra.mxu0 %v6360
        %6372 = vmatpush.bf16.msra.mxu0 %v6359
        %6373 = vmatpush.bf16.msra.mxu0 %v6358
        %6374 = vmatpush.bf16.msra.mxu0 %v6357
        %6375 = vmatpush.bf16.msra.mxu0 %v6356
        %6376 = vmatpush.bf16.msra.mxu0 %v6355
        %6377 = vmatpush.bf16.msra.mxu0 %v6354
        %6378 = vmatmul.bf16.gmra.mxu0 %v6290
        %v6379 = vpop.f32.mrf.mxu0
        %v6380 = vadd.f32 %v6147, %v6379
        %v6381 = vpop.f32.mrf.mxu0
        %v6382 = vadd.f32 %v6149, %v6381
        %6383 = vmatmul.bf16.gmra.mxu0 %v6291
        %v6384 = vpop.f32.mrf.mxu0
        %v6385 = vadd.f32 %v6152, %v6384
        %v6386 = vpop.f32.mrf.mxu0
        %v6387 = vadd.f32 %v6154, %v6386
        %6388 = vmatmul.bf16.gmra.mxu0 %v6292
        %v6389 = vpop.f32.mrf.mxu0
        %v6390 = vadd.f32 %v6157, %v6389
        %v6391 = vpop.f32.mrf.mxu0
        %v6392 = vadd.f32 %v6159, %v6391
        %6393 = vmatmul.bf16.gmra.mxu0 %v6293
        %v6394 = vpop.f32.mrf.mxu0
        %v6395 = vadd.f32 %v6162, %v6394
        %v6396 = vpop.f32.mrf.mxu0
        %v6397 = vadd.f32 %v6164, %v6396
        %6398 = vmatmul.bf16.gmra.mxu0 %v6294
        %v6399 = vpop.f32.mrf.mxu0
        %v6400 = vadd.f32 %v6167, %v6399
        %v6401 = vpop.f32.mrf.mxu0
        %v6402 = vadd.f32 %v6169, %v6401
        %6403 = vmatmul.bf16.gmra.mxu0 %v6295
        %v6404 = vpop.f32.mrf.mxu0
        %v6405 = vadd.f32 %v6172, %v6404
        %v6406 = vpop.f32.mrf.mxu0
        %v6407 = vadd.f32 %v6174, %v6406
        %6408 = vmatmul.bf16.gmra.mxu0 %v6296
        %v6409 = vpop.f32.mrf.mxu0
        %v6410 = vadd.f32 %v6177, %v6409
        %v6411 = vpop.f32.mrf.mxu0
        %v6412 = vadd.f32 %v6179, %v6411
        %6413 = vmatmul.bf16.gmra.mxu0 %v6297
        %v6414 = vpop.f32.mrf.mxu0
        %v6415 = vadd.f32 %v6182, %v6414
        %v6416 = vpop.f32.mrf.mxu0
        %v6417 = vadd.f32 %v6184, %v6416
        %6418 = vmatmul.bf16.gmra.mxu0 %v6298
        %v6419 = vpop.f32.mrf.mxu0
        %v6420 = vadd.f32 %v6187, %v6419
        %v6421 = vpop.f32.mrf.mxu0
        %v6422 = vadd.f32 %v6189, %v6421
        %6423 = vmatmul.bf16.gmra.mxu0 %v6299
        %v6424 = vpop.f32.mrf.mxu0
        %v6425 = vadd.f32 %v6192, %v6424
        %v6426 = vpop.f32.mrf.mxu0
        %v6427 = vadd.f32 %v6194, %v6426
        %6428 = vmatmul.bf16.gmra.mxu0 %v6300
        %v6429 = vpop.f32.mrf.mxu0
        %v6430 = vadd.f32 %v6197, %v6429
        %v6431 = vpop.f32.mrf.mxu0
        %v6432 = vadd.f32 %v6199, %v6431
        %6433 = vmatmul.bf16.gmra.mxu0 %v6301
        %v6434 = vpop.f32.mrf.mxu0
        %v6435 = vadd.f32 %v6202, %v6434
        %v6436 = vpop.f32.mrf.mxu0
        %v6437 = vadd.f32 %v6204, %v6436
        %6438 = vmatmul.bf16.gmra.mxu0 %v6302
        %v6439 = vpop.f32.mrf.mxu0
        %v6440 = vadd.f32 %v6207, %v6439
        %v6441 = vpop.f32.mrf.mxu0
        %v6442 = vadd.f32 %v6209, %v6441
        %6443 = vmatmul.bf16.gmra.mxu0 %v6303
        %v6444 = vpop.f32.mrf.mxu0
        %v6445 = vadd.f32 %v6212, %v6444
        %v6446 = vpop.f32.mrf.mxu0
        %v6447 = vadd.f32 %v6214, %v6446
        %6448 = vmatmul.bf16.gmra.mxu0 %v6304
        %v6449 = vpop.f32.mrf.mxu0
        %v6450 = vadd.f32 %v6217, %v6449
        %v6451 = vpop.f32.mrf.mxu0
        %v6452 = vadd.f32 %v6219, %v6451
        %6453 = vmatmul.bf16.gmra.mxu0 %v6305
        %v6454 = vpop.f32.mrf.mxu0
        %v6455 = vadd.f32 %v6222, %v6454
        %v6456 = vpop.f32.mrf.mxu0
        %v6457 = vadd.f32 %v6224, %v6456
        %6458 = vdwg.mxu0
        %v6459 = vld [vmem:[#allocation2] sm:$0xe]
        %v6460 = vld [vmem:[#allocation2 + $0xc] sm:$0xe]
        %v6461 = vld [vmem:[#allocation2 + $0x18] sm:$0xe]
        %v6462 = vld [vmem:[#allocation2 + $0x24] sm:$0xe]
        %v6463 = vld [vmem:[#allocation2 + $0x30] sm:$0xe]
        %v6464 = vld [vmem:[#allocation2 + $0x3c] sm:$0xe]
        %v6465 = vld [vmem:[#allocation2 + $0x48] sm:$0xe]
        %v6466 = vld [vmem:[#allocation2 + $0x54] sm:$0xe]
        %v6467 = vld [vmem:[#allocation2 + $0x60] sm:$0xe]
        %v6468 = vld [vmem:[#allocation2 + $0x6c] sm:$0xe]
        %v6469 = vld [vmem:[#allocation2 + $0x78] sm:$0xe]
        %v6470 = vld [vmem:[#allocation2 + $0x84] sm:$0xe]
        %v6471 = vld [vmem:[#allocation2 + $0x90] sm:$0xe]
        %v6472 = vld [vmem:[#allocation2 + $0x9c] sm:$0xe]
        %v6473 = vld [vmem:[#allocation2 + $0xa8] sm:$0xe]
        %v6474 = vld [vmem:[#allocation2 + $0xb4] sm:$0xe]
        %v6507 = vrot.slane %v6459, 5
        %v6508 = vrot.slane %v6507, 4
        %v6509 = vrot.slane %v5561, 5
        %v6510 = vsel %vm1753, %v6508, %v6509
        %v6511 = vrot.slane %v6509, 4
        %v6512 = vrot.slane %v5608, 5
        %v6513 = vsel %vm1753, %v6511, %v6512
        %v6514 = vrot.slane %v6460, 5
        %v6515 = vrot.slane %v6514, 4
        %v6516 = vrot.slane %v5563, 5
        %v6517 = vsel %vm1753, %v6515, %v6516
        %v6518 = vrot.slane %v6516, 4
        %v6519 = vrot.slane %v5609, 5
        %v6520 = vsel %vm1753, %v6518, %v6519
        %v6521 = vrot.slane %v6461, 5
        %v6522 = vrot.slane %v6521, 4
        %v6523 = vrot.slane %v5565, 5
        %v6524 = vsel %vm1753, %v6522, %v6523
        %v6525 = vrot.slane %v6523, 4
        %v6526 = vrot.slane %v5610, 5
        %v6527 = vsel %vm1753, %v6525, %v6526
        %v6528 = vrot.slane %v6462, 5
        %v6529 = vrot.slane %v6528, 4
        %v6530 = vrot.slane %v5567, 5
        %v6531 = vsel %vm1753, %v6529, %v6530
        %v6532 = vrot.slane %v6530, 4
        %v6533 = vrot.slane %v5611, 5
        %v6534 = vsel %vm1753, %v6532, %v6533
        %v6535 = vrot.slane %v6463, 5
        %v6536 = vrot.slane %v6535, 4
        %v6537 = vrot.slane %v5569, 5
        %v6538 = vsel %vm1753, %v6536, %v6537
        %v6539 = vrot.slane %v6537, 4
        %v6540 = vrot.slane %v5612, 5
        %v6541 = vsel %vm1753, %v6539, %v6540
        %v6542 = vrot.slane %v6464, 5
        %v6543 = vrot.slane %v6542, 4
        %v6544 = vrot.slane %v5571, 5
        %v6545 = vsel %vm1753, %v6543, %v6544
        %v6546 = vrot.slane %v6544, 4
        %v6547 = vrot.slane %v5613, 5
        %v6548 = vsel %vm1753, %v6546, %v6547
        %v6549 = vrot.slane %v6465, 5
        %v6550 = vrot.slane %v6549, 4
        %v6551 = vrot.slane %v5573, 5
        %v6552 = vsel %vm1753, %v6550, %v6551
        %v6553 = vrot.slane %v6551, 4
        %v6554 = vrot.slane %v5614, 5
        %v6555 = vsel %vm1753, %v6553, %v6554
        %v6556 = vrot.slane %v6466, 5
        %v6557 = vrot.slane %v6556, 4
        %v6558 = vrot.slane %v5575, 5
        %v6559 = vsel %vm1753, %v6557, %v6558
        %v6560 = vrot.slane %v6558, 4
        %v6561 = vrot.slane %v5615, 5
        %v6562 = vsel %vm1753, %v6560, %v6561
        %v6563 = vrot.slane %v6467, 5
        %v6564 = vrot.slane %v6563, 4
        %v6565 = vrot.slane %v5577, 5
        %v6566 = vsel %vm1753, %v6564, %v6565
        %v6567 = vrot.slane %v6565, 4
        %v6568 = vrot.slane %v5616, 5
        %v6569 = vsel %vm1753, %v6567, %v6568
        %v6570 = vrot.slane %v6468, 5
        %v6571 = vrot.slane %v6570, 4
        %v6572 = vrot.slane %v5579, 5
        %v6573 = vsel %vm1753, %v6571, %v6572
        %v6574 = vrot.slane %v6572, 4
        %v6575 = vrot.slane %v5617, 5
        %v6576 = vsel %vm1753, %v6574, %v6575
        %v6577 = vrot.slane %v6469, 5
        %v6578 = vrot.slane %v6577, 4
        %v6579 = vrot.slane %v5581, 5
        %v6580 = vsel %vm1753, %v6578, %v6579
        %v6581 = vrot.slane %v6579, 4
        %v6582 = vrot.slane %v5618, 5
        %v6583 = vsel %vm1753, %v6581, %v6582
        %v6584 = vrot.slane %v6470, 5
        %v6585 = vrot.slane %v6584, 4
        %v6586 = vrot.slane %v5583, 5
        %v6587 = vsel %vm1753, %v6585, %v6586
        %v6588 = vrot.slane %v6586, 4
        %v6589 = vrot.slane %v5619, 5
        %v6590 = vsel %vm1753, %v6588, %v6589
        %v6591 = vrot.slane %v6471, 5
        %v6592 = vrot.slane %v6591, 4
        %v6593 = vrot.slane %v5585, 5
        %v6594 = vsel %vm1753, %v6592, %v6593
        %v6595 = vrot.slane %v6593, 4
        %v6596 = vrot.slane %v5620, 5
        %v6597 = vsel %vm1753, %v6595, %v6596
        %v6598 = vrot.slane %v6472, 5
        %v6599 = vrot.slane %v6598, 4
        %v6600 = vrot.slane %v5587, 5
        %v6601 = vsel %vm1753, %v6599, %v6600
        %v6602 = vrot.slane %v6600, 4
        %v6603 = vrot.slane %v5621, 5
        %v6604 = vsel %vm1753, %v6602, %v6603
        %v6605 = vrot.slane %v6473, 5
        %v6606 = vrot.slane %v6605, 4
        %v6607 = vrot.slane %v5589, 5
        %v6608 = vsel %vm1753, %v6606, %v6607
        %v6609 = vrot.slane %v6607, 4
        %v6610 = vrot.slane %v5622, 5
        %v6611 = vsel %vm1753, %v6609, %v6610
        %v6612 = vrot.slane %v6474, 5
        %v6613 = vrot.slane %v6612, 4
        %v6614 = vrot.slane %v5591, 5
        %v6615 = vsel %vm1753, %v6613, %v6614
        %v6616 = vrot.slane %v6614, 4
        %v6617 = vrot.slane %v5623, 5
        %v6618 = vsel %vm1753, %v6616, %v6617
        %s6619 = scalar_lea.vmem [#allocation3], 128
        %v6620 = vld [vmem:[%s6619] sm:$0xf]
        %v6621 = vld [vmem:[%s6619 + $0x4] sm:$0xf]
        %v6622 = vld [vmem:[%s6619 + $0x8] sm:$0xf]
        %v6623 = vld [vmem:[%s6619 + $0xc] sm:$0xf]
        %v6624 = vld [vmem:[%s6619 + $0x10] sm:$0xf]
        %v6625 = vld [vmem:[%s6619 + $0x14] sm:$0xf]
        %v6626 = vld [vmem:[%s6619 + $0x18] sm:$0xf]
        %v6627 = vld [vmem:[%s6619 + $0x1c] sm:$0xf]
        %v6628 = vld [vmem:[%s6619 + $0x20] sm:$0xf]
        %v6629 = vld [vmem:[%s6619 + $0x24] sm:$0xf]
        %v6630 = vld [vmem:[%s6619 + $0x28] sm:$0xf]
        %v6631 = vld [vmem:[%s6619 + $0x2c] sm:$0xf]
        %v6632 = vld [vmem:[%s6619 + $0x30] sm:$0xf]
        %v6633 = vld [vmem:[%s6619 + $0x34] sm:$0xf]
        %v6634 = vld [vmem:[%s6619 + $0x38] sm:$0xf]
        %v6635 = vld [vmem:[%s6619 + $0x3c] sm:$0xf]
        %v6636 = vunpack.c.l.b16 %v6510
        %v6637 = vunpack.c.l.b16 %v6513
        %v6638 = vunpack.c.l.b16 %v6517
        %v6639 = vunpack.c.l.b16 %v6520
        %v6640 = vunpack.c.l.b16 %v6524
        %v6641 = vunpack.c.l.b16 %v6527
        %v6642 = vunpack.c.l.b16 %v6531
        %v6643 = vunpack.c.l.b16 %v6534
        %v6644 = vunpack.c.l.b16 %v6538
        %v6645 = vunpack.c.l.b16 %v6541
        %v6646 = vunpack.c.l.b16 %v6545
        %v6647 = vunpack.c.l.b16 %v6548
        %v6648 = vunpack.c.l.b16 %v6552
        %v6649 = vunpack.c.l.b16 %v6555
        %v6650 = vunpack.c.l.b16 %v6559
        %v6651 = vunpack.c.l.b16 %v6562
        %v6652 = vunpack.c.l.b16 %v6566
        %v6653 = vunpack.c.l.b16 %v6569
        %v6654 = vunpack.c.l.b16 %v6573
        %v6655 = vunpack.c.l.b16 %v6576
        %v6656 = vunpack.c.l.b16 %v6580
        %v6657 = vunpack.c.l.b16 %v6583
        %v6658 = vunpack.c.l.b16 %v6587
        %v6659 = vunpack.c.l.b16 %v6590
        %v6660 = vunpack.c.l.b16 %v6594
        %v6661 = vunpack.c.l.b16 %v6597
        %v6662 = vunpack.c.l.b16 %v6601
        %v6663 = vunpack.c.l.b16 %v6604
        %v6664 = vunpack.c.l.b16 %v6608
        %v6665 = vunpack.c.l.b16 %v6611
        %v6666 = vunpack.c.l.b16 %v6615
        %v6667 = vunpack.c.l.b16 %v6618
        %v6668 = vpack.c.b16 %v6637, %v6636
        %v6669 = vpack.c.b16 %v6639, %v6638
        %v6670 = vpack.c.b16 %v6641, %v6640
        %v6671 = vpack.c.b16 %v6643, %v6642
        %v6672 = vpack.c.b16 %v6645, %v6644
        %v6673 = vpack.c.b16 %v6647, %v6646
        %v6674 = vpack.c.b16 %v6649, %v6648
        %v6675 = vpack.c.b16 %v6651, %v6650
        %v6676 = vpack.c.b16 %v6653, %v6652
        %v6677 = vpack.c.b16 %v6655, %v6654
        %v6678 = vpack.c.b16 %v6657, %v6656
        %v6679 = vpack.c.b16 %v6659, %v6658
        %v6680 = vpack.c.b16 %v6661, %v6660
        %v6681 = vpack.c.b16 %v6663, %v6662
        %v6682 = vpack.c.b16 %v6665, %v6664
        %v6683 = vpack.c.b16 %v6667, %v6666
        %v6716 = vunpack.c.l.b16 %v6620
        %v6717 = vunpack.c.l.b16 %v6621
        %v6718 = vunpack.c.l.b16 %v6622
        %v6719 = vunpack.c.l.b16 %v6623
        %v6720 = vunpack.c.l.b16 %v6624
        %v6721 = vunpack.c.l.b16 %v6625
        %v6722 = vunpack.c.l.b16 %v6626
        %v6723 = vunpack.c.l.b16 %v6627
        %v6724 = vunpack.c.l.b16 %v6628
        %v6725 = vunpack.c.l.b16 %v6629
        %v6726 = vunpack.c.l.b16 %v6630
        %v6727 = vunpack.c.l.b16 %v6631
        %v6728 = vunpack.c.l.b16 %v6632
        %v6729 = vunpack.c.l.b16 %v6633
        %v6730 = vunpack.c.l.b16 %v6634
        %v6731 = vunpack.c.l.b16 %v6635
        %v6732 = vpack.c.b16 %v6717, %v6716
        %v6733 = vpack.c.b16 %v6719, %v6718
        %v6734 = vpack.c.b16 %v6721, %v6720
        %v6735 = vpack.c.b16 %v6723, %v6722
        %v6736 = vpack.c.b16 %v6725, %v6724
        %v6737 = vpack.c.b16 %v6727, %v6726
        %v6738 = vpack.c.b16 %v6729, %v6728
        %v6739 = vpack.c.b16 %v6731, %v6730
        %6748 = vmatpush.bf16.msra.mxu0 %v6739
        %6749 = vmatpush.bf16.msra.mxu0 %v6738
        %6750 = vmatpush.bf16.msra.mxu0 %v6737
        %6751 = vmatpush.bf16.msra.mxu0 %v6736
        %6752 = vmatpush.bf16.msra.mxu0 %v6735
        %6753 = vmatpush.bf16.msra.mxu0 %v6734
        %6754 = vmatpush.bf16.msra.mxu0 %v6733
        %6755 = vmatpush.bf16.msra.mxu0 %v6732
        %6756 = vmatmul.bf16.gmra.mxu0 %v6668
        %v6757 = vpop.f32.mrf.mxu0
        %v6758 = vadd.f32 0.0, %v6757
        %v6759 = vpop.f32.mrf.mxu0
        %v6760 = vadd.f32 0.0, %v6759
        %6761 = vmatmul.bf16.gmra.mxu0 %v6669
        %v6762 = vpop.f32.mrf.mxu0
        %v6763 = vadd.f32 0.0, %v6762
        %v6764 = vpop.f32.mrf.mxu0
        %v6765 = vadd.f32 0.0, %v6764
        %6766 = vmatmul.bf16.gmra.mxu0 %v6670
        %v6767 = vpop.f32.mrf.mxu0
        %v6768 = vadd.f32 0.0, %v6767
        %v6769 = vpop.f32.mrf.mxu0
        %v6770 = vadd.f32 0.0, %v6769
        %6771 = vmatmul.bf16.gmra.mxu0 %v6671
        %v6772 = vpop.f32.mrf.mxu0
        %v6773 = vadd.f32 0.0, %v6772
        %v6774 = vpop.f32.mrf.mxu0
        %v6775 = vadd.f32 0.0, %v6774
        %6776 = vmatmul.bf16.gmra.mxu0 %v6672
        %v6777 = vpop.f32.mrf.mxu0
        %v6778 = vadd.f32 0.0, %v6777
        %v6779 = vpop.f32.mrf.mxu0
        %v6780 = vadd.f32 0.0, %v6779
        %6781 = vmatmul.bf16.gmra.mxu0 %v6673
        %v6782 = vpop.f32.mrf.mxu0
        %v6783 = vadd.f32 0.0, %v6782
        %v6784 = vpop.f32.mrf.mxu0
        %v6785 = vadd.f32 0.0, %v6784
        %6786 = vmatmul.bf16.gmra.mxu0 %v6674
        %v6787 = vpop.f32.mrf.mxu0
        %v6788 = vadd.f32 0.0, %v6787
        %v6789 = vpop.f32.mrf.mxu0
        %v6790 = vadd.f32 0.0, %v6789
        %6791 = vmatmul.bf16.gmra.mxu0 %v6675
        %v6792 = vpop.f32.mrf.mxu0
        %v6793 = vadd.f32 0.0, %v6792
        %v6794 = vpop.f32.mrf.mxu0
        %v6795 = vadd.f32 0.0, %v6794
        %6796 = vmatmul.bf16.gmra.mxu0 %v6676
        %v6797 = vpop.f32.mrf.mxu0
        %v6798 = vadd.f32 0.0, %v6797
        %v6799 = vpop.f32.mrf.mxu0
        %v6800 = vadd.f32 0.0, %v6799
        %6801 = vmatmul.bf16.gmra.mxu0 %v6677
        %v6802 = vpop.f32.mrf.mxu0
        %v6803 = vadd.f32 0.0, %v6802
        %v6804 = vpop.f32.mrf.mxu0
        %v6805 = vadd.f32 0.0, %v6804
        %6806 = vmatmul.bf16.gmra.mxu0 %v6678
        %v6807 = vpop.f32.mrf.mxu0
        %v6808 = vadd.f32 0.0, %v6807
        %v6809 = vpop.f32.mrf.mxu0
        %v6810 = vadd.f32 0.0, %v6809
        %6811 = vmatmul.bf16.gmra.mxu0 %v6679
        %v6812 = vpop.f32.mrf.mxu0
        %v6813 = vadd.f32 0.0, %v6812
        %v6814 = vpop.f32.mrf.mxu0
        %v6815 = vadd.f32 0.0, %v6814
        %6816 = vmatmul.bf16.gmra.mxu0 %v6680
        %v6817 = vpop.f32.mrf.mxu0
        %v6818 = vadd.f32 0.0, %v6817
        %v6819 = vpop.f32.mrf.mxu0
        %v6820 = vadd.f32 0.0, %v6819
        %6821 = vmatmul.bf16.gmra.mxu0 %v6681
        %v6822 = vpop.f32.mrf.mxu0
        %v6823 = vadd.f32 0.0, %v6822
        %v6824 = vpop.f32.mrf.mxu0
        %v6825 = vadd.f32 0.0, %v6824
        %6826 = vmatmul.bf16.gmra.mxu0 %v6682
        %v6827 = vpop.f32.mrf.mxu0
        %v6828 = vadd.f32 0.0, %v6827
        %v6829 = vpop.f32.mrf.mxu0
        %v6830 = vadd.f32 0.0, %v6829
        %6831 = vmatmul.bf16.gmra.mxu0 %v6683
        %v6832 = vpop.f32.mrf.mxu0
        %v6833 = vadd.f32 0.0, %v6832
        %v6834 = vpop.f32.mrf.mxu0
        %v6835 = vadd.f32 0.0, %v6834
        %6836 = vdwg.mxu0
        %v6837 = vadd.f32 %v6380, %v6758
        %v6838 = vadd.f32 %v6382, %v6760
        %v6839 = vadd.f32 %v6385, %v6763
        %v6840 = vadd.f32 %v6387, %v6765
        %v6841 = vadd.f32 %v6390, %v6768
        %v6842 = vadd.f32 %v6392, %v6770
        %v6843 = vadd.f32 %v6395, %v6773
        %v6844 = vadd.f32 %v6397, %v6775
        %v6845 = vadd.f32 %v6400, %v6778
        %v6846 = vadd.f32 %v6402, %v6780
        %v6847 = vadd.f32 %v6405, %v6783
        %v6848 = vadd.f32 %v6407, %v6785
        %v6849 = vadd.f32 %v6410, %v6788
        %v6850 = vadd.f32 %v6412, %v6790
        %v6851 = vadd.f32 %v6415, %v6793
        %v6852 = vadd.f32 %v6417, %v6795
        %v6853 = vadd.f32 %v6420, %v6798
        %v6854 = vadd.f32 %v6422, %v6800
        %v6855 = vadd.f32 %v6425, %v6803
        %v6856 = vadd.f32 %v6427, %v6805
        %v6857 = vadd.f32 %v6430, %v6808
        %v6858 = vadd.f32 %v6432, %v6810
        %v6859 = vadd.f32 %v6435, %v6813
        %v6860 = vadd.f32 %v6437, %v6815
        %v6861 = vadd.f32 %v6440, %v6818
        %v6862 = vadd.f32 %v6442, %v6820
        %v6863 = vadd.f32 %v6445, %v6823
        %v6864 = vadd.f32 %v6447, %v6825
        %v6865 = vadd.f32 %v6450, %v6828
        %v6866 = vadd.f32 %v6452, %v6830
        %v6867 = vadd.f32 %v6455, %v6833
        %v6868 = vadd.f32 %v6457, %v6835
        %v6869 = vld [vmem:[%s682] sm:$0xf]
        %v6870 = vld [vmem:[%s682 + $0x4] sm:$0xf]
        %v6871 = vld [vmem:[%s682 + $0xc] sm:$0xf]
        %v6872 = vld [vmem:[%s682 + $0x10] sm:$0xf]
        %v6873 = vld [vmem:[%s682 + $0x18] sm:$0xf]
        %v6874 = vld [vmem:[%s682 + $0x1c] sm:$0xf]
        %v6875 = vld [vmem:[%s682 + $0x24] sm:$0xf]
        %v6876 = vld [vmem:[%s682 + $0x28] sm:$0xf]
        %v6877 = vld [vmem:[%s682 + $0x30] sm:$0xf]
        %v6878 = vld [vmem:[%s682 + $0x34] sm:$0xf]
        %v6879 = vld [vmem:[%s682 + $0x3c] sm:$0xf]
        %v6880 = vld [vmem:[%s682 + $0x40] sm:$0xf]
        %v6881 = vld [vmem:[%s682 + $0x48] sm:$0xf]
        %v6882 = vld [vmem:[%s682 + $0x4c] sm:$0xf]
        %v6883 = vld [vmem:[%s682 + $0x54] sm:$0xf]
        %v6884 = vld [vmem:[%s682 + $0x58] sm:$0xf]
        %v6885 = vld [vmem:[%s682 + $0x60] sm:$0xf]
        %v6886 = vld [vmem:[%s682 + $0x64] sm:$0xf]
        %v6887 = vld [vmem:[%s682 + $0x6c] sm:$0xf]
        %v6888 = vld [vmem:[%s682 + $0x70] sm:$0xf]
        %v6889 = vld [vmem:[%s682 + $0x78] sm:$0xf]
        %v6890 = vld [vmem:[%s682 + $0x7c] sm:$0xf]
        %v6891 = vld [vmem:[%s682 + $0x84] sm:$0xf]
        %v6892 = vld [vmem:[%s682 + $0x88] sm:$0xf]
        %v6893 = vld [vmem:[%s682 + $0x90] sm:$0xf]
        %v6894 = vld [vmem:[%s682 + $0x94] sm:$0xf]
        %v6895 = vld [vmem:[%s682 + $0x9c] sm:$0xf]
        %v6896 = vld [vmem:[%s682 + $0xa0] sm:$0xf]
        %v6897 = vld [vmem:[%s682 + $0xa8] sm:$0xf]
        %v6898 = vld [vmem:[%s682 + $0xac] sm:$0xf]
        %v6899 = vld [vmem:[%s682 + $0xb4] sm:$0xf]
        %v6900 = vld [vmem:[%s682 + $0xb8] sm:$0xf]
        %s6901 = scalar_lea.vmem [#allocation3], 192
        %v6902 = vld [vmem:[%s6901] sm:$0xf]
        %v6903 = vld [vmem:[%s6901 + $0x4] sm:$0xf]
        %v6904 = vld [vmem:[%s6901 + $0x8] sm:$0xf]
        %v6905 = vld [vmem:[%s6901 + $0xc] sm:$0xf]
        %v6906 = vld [vmem:[%s6901 + $0x10] sm:$0xf]
        %v6907 = vld [vmem:[%s6901 + $0x14] sm:$0xf]
        %v6908 = vld [vmem:[%s6901 + $0x18] sm:$0xf]
        %v6909 = vld [vmem:[%s6901 + $0x1c] sm:$0xf]
        %v6910 = vld [vmem:[%s6901 + $0x20] sm:$0xf]
        %v6911 = vld [vmem:[%s6901 + $0x24] sm:$0xf]
        %v6912 = vld [vmem:[%s6901 + $0x28] sm:$0xf]
        %v6913 = vld [vmem:[%s6901 + $0x2c] sm:$0xf]
        %v6914 = vld [vmem:[%s6901 + $0x30] sm:$0xf]
        %v6915 = vld [vmem:[%s6901 + $0x34] sm:$0xf]
        %v6916 = vld [vmem:[%s6901 + $0x38] sm:$0xf]
        %v6917 = vld [vmem:[%s6901 + $0x3c] sm:$0xf]
        %v6950 = vunpack.c.l.b16 %v6869
        %v6951 = vunpack.c.l.b16 %v6870
        %v6952 = vunpack.c.l.b16 %v6871
        %v6953 = vunpack.c.l.b16 %v6872
        %v6954 = vunpack.c.l.b16 %v6873
        %v6955 = vunpack.c.l.b16 %v6874
        %v6956 = vunpack.c.l.b16 %v6875
        %v6957 = vunpack.c.l.b16 %v6876
        %v6958 = vunpack.c.l.b16 %v6877
        %v6959 = vunpack.c.l.b16 %v6878
        %v6960 = vunpack.c.l.b16 %v6879
        %v6961 = vunpack.c.l.b16 %v6880
        %v6962 = vunpack.c.l.b16 %v6881
        %v6963 = vunpack.c.l.b16 %v6882
        %v6964 = vunpack.c.l.b16 %v6883
        %v6965 = vunpack.c.l.b16 %v6884
        %v6966 = vunpack.c.l.b16 %v6885
        %v6967 = vunpack.c.l.b16 %v6886
        %v6968 = vunpack.c.l.b16 %v6887
        %v6969 = vunpack.c.l.b16 %v6888
        %v6970 = vunpack.c.l.b16 %v6889
        %v6971 = vunpack.c.l.b16 %v6890
        %v6972 = vunpack.c.l.b16 %v6891
        %v6973 = vunpack.c.l.b16 %v6892
        %v6974 = vunpack.c.l.b16 %v6893
        %v6975 = vunpack.c.l.b16 %v6894
        %v6976 = vunpack.c.l.b16 %v6895
        %v6977 = vunpack.c.l.b16 %v6896
        %v6978 = vunpack.c.l.b16 %v6897
        %v6979 = vunpack.c.l.b16 %v6898
        %v6980 = vunpack.c.l.b16 %v6899
        %v6981 = vunpack.c.l.b16 %v6900
        %v6982 = vpack.c.b16 %v6951, %v6950
        %v6983 = vpack.c.b16 %v6953, %v6952
        %v6984 = vpack.c.b16 %v6955, %v6954
        %v6985 = vpack.c.b16 %v6957, %v6956
        %v6986 = vpack.c.b16 %v6959, %v6958
        %v6987 = vpack.c.b16 %v6961, %v6960
        %v6988 = vpack.c.b16 %v6963, %v6962
        %v6989 = vpack.c.b16 %v6965, %v6964
        %v6990 = vpack.c.b16 %v6967, %v6966
        %v6991 = vpack.c.b16 %v6969, %v6968
        %v6992 = vpack.c.b16 %v6971, %v6970
        %v6993 = vpack.c.b16 %v6973, %v6972
        %v6994 = vpack.c.b16 %v6975, %v6974
        %v6995 = vpack.c.b16 %v6977, %v6976
        %v6996 = vpack.c.b16 %v6979, %v6978
        %v6997 = vpack.c.b16 %v6981, %v6980
        %v7030 = vunpack.c.l.b16 %v6902
        %v7031 = vunpack.c.l.b16 %v6903
        %v7032 = vunpack.c.l.b16 %v6904
        %v7033 = vunpack.c.l.b16 %v6905
        %v7034 = vunpack.c.l.b16 %v6906
        %v7035 = vunpack.c.l.b16 %v6907
        %v7036 = vunpack.c.l.b16 %v6908
        %v7037 = vunpack.c.l.b16 %v6909
        %v7038 = vunpack.c.l.b16 %v6910
        %v7039 = vunpack.c.l.b16 %v6911
        %v7040 = vunpack.c.l.b16 %v6912
        %v7041 = vunpack.c.l.b16 %v6913
        %v7042 = vunpack.c.l.b16 %v6914
        %v7043 = vunpack.c.l.b16 %v6915
        %v7044 = vunpack.c.l.b16 %v6916
        %v7045 = vunpack.c.l.b16 %v6917
        %v7046 = vpack.c.b16 %v7031, %v7030
        %v7047 = vpack.c.b16 %v7033, %v7032
        %v7048 = vpack.c.b16 %v7035, %v7034
        %v7049 = vpack.c.b16 %v7037, %v7036
        %v7050 = vpack.c.b16 %v7039, %v7038
        %v7051 = vpack.c.b16 %v7041, %v7040
        %v7052 = vpack.c.b16 %v7043, %v7042
        %v7053 = vpack.c.b16 %v7045, %v7044
        %7062 = vmatpush.bf16.msra.mxu0 %v7053
        %7063 = vmatpush.bf16.msra.mxu0 %v7052
        %7064 = vmatpush.bf16.msra.mxu0 %v7051
        %7065 = vmatpush.bf16.msra.mxu0 %v7050
        %7066 = vmatpush.bf16.msra.mxu0 %v7049
        %7067 = vmatpush.bf16.msra.mxu0 %v7048
        %7068 = vmatpush.bf16.msra.mxu0 %v7047
        %7069 = vmatpush.bf16.msra.mxu0 %v7046
        %7070 = vmatmul.bf16.gmra.mxu0 %v6982
        %v7071 = vpop.f32.mrf.mxu0
        %v7072 = vadd.f32 0.0, %v7071
        %v7073 = vpop.f32.mrf.mxu0
        %v7074 = vadd.f32 0.0, %v7073
        %7075 = vmatmul.bf16.gmra.mxu0 %v6983
        %v7076 = vpop.f32.mrf.mxu0
        %v7077 = vadd.f32 0.0, %v7076
        %v7078 = vpop.f32.mrf.mxu0
        %v7079 = vadd.f32 0.0, %v7078
        %7080 = vmatmul.bf16.gmra.mxu0 %v6984
        %v7081 = vpop.f32.mrf.mxu0
        %v7082 = vadd.f32 0.0, %v7081
        %v7083 = vpop.f32.mrf.mxu0
        %v7084 = vadd.f32 0.0, %v7083
        %7085 = vmatmul.bf16.gmra.mxu0 %v6985
        %v7086 = vpop.f32.mrf.mxu0
        %v7087 = vadd.f32 0.0, %v7086
        %v7088 = vpop.f32.mrf.mxu0
        %v7089 = vadd.f32 0.0, %v7088
        %7090 = vmatmul.bf16.gmra.mxu0 %v6986
        %v7091 = vpop.f32.mrf.mxu0
        %v7092 = vadd.f32 0.0, %v7091
        %v7093 = vpop.f32.mrf.mxu0
        %v7094 = vadd.f32 0.0, %v7093
        %7095 = vmatmul.bf16.gmra.mxu0 %v6987
        %v7096 = vpop.f32.mrf.mxu0
        %v7097 = vadd.f32 0.0, %v7096
        %v7098 = vpop.f32.mrf.mxu0
        %v7099 = vadd.f32 0.0, %v7098
        %7100 = vmatmul.bf16.gmra.mxu0 %v6988
        %v7101 = vpop.f32.mrf.mxu0
        %v7102 = vadd.f32 0.0, %v7101
        %v7103 = vpop.f32.mrf.mxu0
        %v7104 = vadd.f32 0.0, %v7103
        %7105 = vmatmul.bf16.gmra.mxu0 %v6989
        %v7106 = vpop.f32.mrf.mxu0
        %v7107 = vadd.f32 0.0, %v7106
        %v7108 = vpop.f32.mrf.mxu0
        %v7109 = vadd.f32 0.0, %v7108
        %7110 = vmatmul.bf16.gmra.mxu0 %v6990
        %v7111 = vpop.f32.mrf.mxu0
        %v7112 = vadd.f32 0.0, %v7111
        %v7113 = vpop.f32.mrf.mxu0
        %v7114 = vadd.f32 0.0, %v7113
        %7115 = vmatmul.bf16.gmra.mxu0 %v6991
        %v7116 = vpop.f32.mrf.mxu0
        %v7117 = vadd.f32 0.0, %v7116
        %v7118 = vpop.f32.mrf.mxu0
        %v7119 = vadd.f32 0.0, %v7118
        %7120 = vmatmul.bf16.gmra.mxu0 %v6992
        %v7121 = vpop.f32.mrf.mxu0
        %v7122 = vadd.f32 0.0, %v7121
        %v7123 = vpop.f32.mrf.mxu0
        %v7124 = vadd.f32 0.0, %v7123
        %7125 = vmatmul.bf16.gmra.mxu0 %v6993
        %v7126 = vpop.f32.mrf.mxu0
        %v7127 = vadd.f32 0.0, %v7126
        %v7128 = vpop.f32.mrf.mxu0
        %v7129 = vadd.f32 0.0, %v7128
        %7130 = vmatmul.bf16.gmra.mxu0 %v6994
        %v7131 = vpop.f32.mrf.mxu0
        %v7132 = vadd.f32 0.0, %v7131
        %v7133 = vpop.f32.mrf.mxu0
        %v7134 = vadd.f32 0.0, %v7133
        %7135 = vmatmul.bf16.gmra.mxu0 %v6995
        %v7136 = vpop.f32.mrf.mxu0
        %v7137 = vadd.f32 0.0, %v7136
        %v7138 = vpop.f32.mrf.mxu0
        %v7139 = vadd.f32 0.0, %v7138
        %7140 = vmatmul.bf16.gmra.mxu0 %v6996
        %v7141 = vpop.f32.mrf.mxu0
        %v7142 = vadd.f32 0.0, %v7141
        %v7143 = vpop.f32.mrf.mxu0
        %v7144 = vadd.f32 0.0, %v7143
        %7145 = vmatmul.bf16.gmra.mxu0 %v6997
        %v7146 = vpop.f32.mrf.mxu0
        %v7147 = vadd.f32 0.0, %v7146
        %v7148 = vpop.f32.mrf.mxu0
        %v7149 = vadd.f32 0.0, %v7148
        %7150 = vdwg.mxu0
        %v7151 = vadd.f32 %v6837, %v7072
        %v7152 = vadd.f32 %v6838, %v7074
        %v7153 = vadd.f32 %v6839, %v7077
        %v7154 = vadd.f32 %v6840, %v7079
        %v7155 = vadd.f32 %v6841, %v7082
        %v7156 = vadd.f32 %v6842, %v7084
        %v7157 = vadd.f32 %v6843, %v7087
        %v7158 = vadd.f32 %v6844, %v7089
        %v7159 = vadd.f32 %v6845, %v7092
        %v7160 = vadd.f32 %v6846, %v7094
        %v7161 = vadd.f32 %v6847, %v7097
        %v7162 = vadd.f32 %v6848, %v7099
        %v7163 = vadd.f32 %v6849, %v7102
        %v7164 = vadd.f32 %v6850, %v7104
        %v7165 = vadd.f32 %v6851, %v7107
        %v7166 = vadd.f32 %v6852, %v7109
        %v7167 = vadd.f32 %v6853, %v7112
        %v7168 = vadd.f32 %v6854, %v7114
        %v7169 = vadd.f32 %v6855, %v7117
        %v7170 = vadd.f32 %v6856, %v7119
        %v7171 = vadd.f32 %v6857, %v7122
        %v7172 = vadd.f32 %v6858, %v7124
        %v7173 = vadd.f32 %v6859, %v7127
        %v7174 = vadd.f32 %v6860, %v7129
        %v7175 = vadd.f32 %v6861, %v7132
        %v7176 = vadd.f32 %v6862, %v7134
        %v7177 = vadd.f32 %v6863, %v7137
        %v7178 = vadd.f32 %v6864, %v7139
        %v7179 = vadd.f32 %v6865, %v7142
        %v7180 = vadd.f32 %v6866, %v7144
        %v7181 = vadd.f32 %v6867, %v7147
        %v7182 = vadd.f32 %v6868, %v7149
        %v7183 = vld [vmem:[%s682] sm:$0xf]
        %v7184 = vld [vmem:[%s682 + $0x4] sm:$0xf]
        %v7185 = vld [vmem:[%s682 + $0x8] sm:$0x1]
        %v7186 = vld [vmem:[%s682 + $0xc] sm:$0xf]
        %v7187 = vld [vmem:[%s682 + $0x10] sm:$0xf]
        %v7188 = vld [vmem:[%s682 + $0x14] sm:$0x1]
        %v7189 = vld [vmem:[%s682 + $0x18] sm:$0xf]
        %v7190 = vld [vmem:[%s682 + $0x1c] sm:$0xf]
        %v7191 = vld [vmem:[%s682 + $0x20] sm:$0x1]
        %v7192 = vld [vmem:[%s682 + $0x24] sm:$0xf]
        %v7193 = vld [vmem:[%s682 + $0x28] sm:$0xf]
        %v7194 = vld [vmem:[%s682 + $0x2c] sm:$0x1]
        %v7195 = vld [vmem:[%s682 + $0x30] sm:$0xf]
        %v7196 = vld [vmem:[%s682 + $0x34] sm:$0xf]
        %v7197 = vld [vmem:[%s682 + $0x38] sm:$0x1]
        %v7198 = vld [vmem:[%s682 + $0x3c] sm:$0xf]
        %v7199 = vld [vmem:[%s682 + $0x40] sm:$0xf]
        %v7200 = vld [vmem:[%s682 + $0x44] sm:$0x1]
        %v7201 = vld [vmem:[%s682 + $0x48] sm:$0xf]
        %v7202 = vld [vmem:[%s682 + $0x4c] sm:$0xf]
        %v7203 = vld [vmem:[%s682 + $0x50] sm:$0x1]
        %v7204 = vld [vmem:[%s682 + $0x54] sm:$0xf]
        %v7205 = vld [vmem:[%s682 + $0x58] sm:$0xf]
        %v7206 = vld [vmem:[%s682 + $0x5c] sm:$0x1]
        %v7207 = vld [vmem:[%s682 + $0x60] sm:$0xf]
        %v7208 = vld [vmem:[%s682 + $0x64] sm:$0xf]
        %v7209 = vld [vmem:[%s682 + $0x68] sm:$0x1]
        %v7210 = vld [vmem:[%s682 + $0x6c] sm:$0xf]
        %v7211 = vld [vmem:[%s682 + $0x70] sm:$0xf]
        %v7212 = vld [vmem:[%s682 + $0x74] sm:$0x1]
        %v7213 = vld [vmem:[%s682 + $0x78] sm:$0xf]
        %v7214 = vld [vmem:[%s682 + $0x7c] sm:$0xf]
        %v7215 = vld [vmem:[%s682 + $0x80] sm:$0x1]
        %v7216 = vld [vmem:[%s682 + $0x84] sm:$0xf]
        %v7217 = vld [vmem:[%s682 + $0x88] sm:$0xf]
        %v7218 = vld [vmem:[%s682 + $0x8c] sm:$0x1]
        %v7219 = vld [vmem:[%s682 + $0x90] sm:$0xf]
        %v7220 = vld [vmem:[%s682 + $0x94] sm:$0xf]
        %v7221 = vld [vmem:[%s682 + $0x98] sm:$0x1]
        %v7222 = vld [vmem:[%s682 + $0x9c] sm:$0xf]
        %v7223 = vld [vmem:[%s682 + $0xa0] sm:$0xf]
        %v7224 = vld [vmem:[%s682 + $0xa4] sm:$0x1]
        %v7225 = vld [vmem:[%s682 + $0xa8] sm:$0xf]
        %v7226 = vld [vmem:[%s682 + $0xac] sm:$0xf]
        %v7227 = vld [vmem:[%s682 + $0xb0] sm:$0x1]
        %v7228 = vld [vmem:[%s682 + $0xb4] sm:$0xf]
        %v7229 = vld [vmem:[%s682 + $0xb8] sm:$0xf]
        %v7230 = vld [vmem:[%s682 + $0xbc] sm:$0x1]
        %v7232 = vshrl.u32 %v7183, 16
        %v7234 = vrot.slane %v7232, 4
        %v7235 = vshll.u32 %v7183, 16
        %v7237 = vrot.slane %v7235, 5
        %v7238 = vor.u32 %v7234, %v7237
        %v7239 = vrot.slane %v7238, 4
        %v7241 = vshll.u32 %v7184, 16
        %v7243 = vrot.slane %v7241, 5
        %v7244 = vsel %vm867, %v7239, %v7243
        %v7245 = vshrl.u32 %v7184, 16
        %v7247 = vrot.slane %v7245, 4
        %v7248 = vor.u32 %v7247, %v7243
        %v7249 = vrot.slane %v7248, 4
        %v7251 = vshll.u32 %v7185, 16
        %v7253 = vrot.slane %v7251, 5
        %v7254 = vsel %vm867, %v7249, %v7253
        %v7256 = vshrl.u32 %v7186, 16
        %v7258 = vrot.slane %v7256, 4
        %v7259 = vshll.u32 %v7186, 16
        %v7261 = vrot.slane %v7259, 5
        %v7262 = vor.u32 %v7258, %v7261
        %v7263 = vrot.slane %v7262, 4
        %v7265 = vshll.u32 %v7187, 16
        %v7267 = vrot.slane %v7265, 5
        %v7268 = vsel %vm867, %v7263, %v7267
        %v7269 = vshrl.u32 %v7187, 16
        %v7271 = vrot.slane %v7269, 4
        %v7272 = vor.u32 %v7271, %v7267
        %v7273 = vrot.slane %v7272, 4
        %v7275 = vshll.u32 %v7188, 16
        %v7277 = vrot.slane %v7275, 5
        %v7278 = vsel %vm867, %v7273, %v7277
        %v7280 = vshrl.u32 %v7189, 16
        %v7282 = vrot.slane %v7280, 4
        %v7283 = vshll.u32 %v7189, 16
        %v7285 = vrot.slane %v7283, 5
        %v7286 = vor.u32 %v7282, %v7285
        %v7287 = vrot.slane %v7286, 4
        %v7289 = vshll.u32 %v7190, 16
        %v7291 = vrot.slane %v7289, 5
        %v7292 = vsel %vm867, %v7287, %v7291
        %v7293 = vshrl.u32 %v7190, 16
        %v7295 = vrot.slane %v7293, 4
        %v7296 = vor.u32 %v7295, %v7291
        %v7297 = vrot.slane %v7296, 4
        %v7299 = vshll.u32 %v7191, 16
        %v7301 = vrot.slane %v7299, 5
        %v7302 = vsel %vm867, %v7297, %v7301
        %v7304 = vshrl.u32 %v7192, 16
        %v7306 = vrot.slane %v7304, 4
        %v7307 = vshll.u32 %v7192, 16
        %v7309 = vrot.slane %v7307, 5
        %v7310 = vor.u32 %v7306, %v7309
        %v7311 = vrot.slane %v7310, 4
        %v7313 = vshll.u32 %v7193, 16
        %v7315 = vrot.slane %v7313, 5
        %v7316 = vsel %vm867, %v7311, %v7315
        %v7317 = vshrl.u32 %v7193, 16
        %v7319 = vrot.slane %v7317, 4
        %v7320 = vor.u32 %v7319, %v7315
        %v7321 = vrot.slane %v7320, 4
        %v7323 = vshll.u32 %v7194, 16
        %v7325 = vrot.slane %v7323, 5
        %v7326 = vsel %vm867, %v7321, %v7325
        %v7328 = vshrl.u32 %v7195, 16
        %v7330 = vrot.slane %v7328, 4
        %v7331 = vshll.u32 %v7195, 16
        %v7333 = vrot.slane %v7331, 5
        %v7334 = vor.u32 %v7330, %v7333
        %v7335 = vrot.slane %v7334, 4
        %v7337 = vshll.u32 %v7196, 16
        %v7339 = vrot.slane %v7337, 5
        %v7340 = vsel %vm867, %v7335, %v7339
        %v7341 = vshrl.u32 %v7196, 16
        %v7343 = vrot.slane %v7341, 4
        %v7344 = vor.u32 %v7343, %v7339
        %v7345 = vrot.slane %v7344, 4
        %v7347 = vshll.u32 %v7197, 16
        %v7349 = vrot.slane %v7347, 5
        %v7350 = vsel %vm867, %v7345, %v7349
        %v7352 = vshrl.u32 %v7198, 16
        %v7354 = vrot.slane %v7352, 4
        %v7355 = vshll.u32 %v7198, 16
        %v7357 = vrot.slane %v7355, 5
        %v7358 = vor.u32 %v7354, %v7357
        %v7359 = vrot.slane %v7358, 4
        %v7361 = vshll.u32 %v7199, 16
        %v7363 = vrot.slane %v7361, 5
        %v7364 = vsel %vm867, %v7359, %v7363
        %v7365 = vshrl.u32 %v7199, 16
        %v7367 = vrot.slane %v7365, 4
        %v7368 = vor.u32 %v7367, %v7363
        %v7369 = vrot.slane %v7368, 4
        %v7371 = vshll.u32 %v7200, 16
        %v7373 = vrot.slane %v7371, 5
        %v7374 = vsel %vm867, %v7369, %v7373
        %v7376 = vshrl.u32 %v7201, 16
        %v7378 = vrot.slane %v7376, 4
        %v7379 = vshll.u32 %v7201, 16
        %v7381 = vrot.slane %v7379, 5
        %v7382 = vor.u32 %v7378, %v7381
        %v7383 = vrot.slane %v7382, 4
        %v7385 = vshll.u32 %v7202, 16
        %v7387 = vrot.slane %v7385, 5
        %v7388 = vsel %vm867, %v7383, %v7387
        %v7389 = vshrl.u32 %v7202, 16
        %v7391 = vrot.slane %v7389, 4
        %v7392 = vor.u32 %v7391, %v7387
        %v7393 = vrot.slane %v7392, 4
        %v7395 = vshll.u32 %v7203, 16
        %v7397 = vrot.slane %v7395, 5
        %v7398 = vsel %vm867, %v7393, %v7397
        %v7400 = vshrl.u32 %v7204, 16
        %v7402 = vrot.slane %v7400, 4
        %v7403 = vshll.u32 %v7204, 16
        %v7405 = vrot.slane %v7403, 5
        %v7406 = vor.u32 %v7402, %v7405
        %v7407 = vrot.slane %v7406, 4
        %v7409 = vshll.u32 %v7205, 16
        %v7411 = vrot.slane %v7409, 5
        %v7412 = vsel %vm867, %v7407, %v7411
        %v7413 = vshrl.u32 %v7205, 16
        %v7415 = vrot.slane %v7413, 4
        %v7416 = vor.u32 %v7415, %v7411
        %v7417 = vrot.slane %v7416, 4
        %v7419 = vshll.u32 %v7206, 16
        %v7421 = vrot.slane %v7419, 5
        %v7422 = vsel %vm867, %v7417, %v7421
        %v7424 = vshrl.u32 %v7207, 16
        %v7426 = vrot.slane %v7424, 4
        %v7427 = vshll.u32 %v7207, 16
        %v7429 = vrot.slane %v7427, 5
        %v7430 = vor.u32 %v7426, %v7429
        %v7431 = vrot.slane %v7430, 4
        %v7433 = vshll.u32 %v7208, 16
        %v7435 = vrot.slane %v7433, 5
        %v7436 = vsel %vm867, %v7431, %v7435
        %v7437 = vshrl.u32 %v7208, 16
        %v7439 = vrot.slane %v7437, 4
        %v7440 = vor.u32 %v7439, %v7435
        %v7441 = vrot.slane %v7440, 4
        %v7443 = vshll.u32 %v7209, 16
        %v7445 = vrot.slane %v7443, 5
        %v7446 = vsel %vm867, %v7441, %v7445
        %v7448 = vshrl.u32 %v7210, 16
        %v7450 = vrot.slane %v7448, 4
        %v7451 = vshll.u32 %v7210, 16
        %v7453 = vrot.slane %v7451, 5
        %v7454 = vor.u32 %v7450, %v7453
        %v7455 = vrot.slane %v7454, 4
        %v7457 = vshll.u32 %v7211, 16
        %v7459 = vrot.slane %v7457, 5
        %v7460 = vsel %vm867, %v7455, %v7459
        %v7461 = vshrl.u32 %v7211, 16
        %v7463 = vrot.slane %v7461, 4
        %v7464 = vor.u32 %v7463, %v7459
        %v7465 = vrot.slane %v7464, 4
        %v7467 = vshll.u32 %v7212, 16
        %v7469 = vrot.slane %v7467, 5
        %v7470 = vsel %vm867, %v7465, %v7469
        %v7472 = vshrl.u32 %v7213, 16
        %v7474 = vrot.slane %v7472, 4
        %v7475 = vshll.u32 %v7213, 16
        %v7477 = vrot.slane %v7475, 5
        %v7478 = vor.u32 %v7474, %v7477
        %v7479 = vrot.slane %v7478, 4
        %v7481 = vshll.u32 %v7214, 16
        %v7483 = vrot.slane %v7481, 5
        %v7484 = vsel %vm867, %v7479, %v7483
        %v7485 = vshrl.u32 %v7214, 16
        %v7487 = vrot.slane %v7485, 4
        %v7488 = vor.u32 %v7487, %v7483
        %v7489 = vrot.slane %v7488, 4
        %v7491 = vshll.u32 %v7215, 16
        %v7493 = vrot.slane %v7491, 5
        %v7494 = vsel %vm867, %v7489, %v7493
        %v7496 = vshrl.u32 %v7216, 16
        %v7498 = vrot.slane %v7496, 4
        %v7499 = vshll.u32 %v7216, 16
        %v7501 = vrot.slane %v7499, 5
        %v7502 = vor.u32 %v7498, %v7501
        %v7503 = vrot.slane %v7502, 4
        %v7505 = vshll.u32 %v7217, 16
        %v7507 = vrot.slane %v7505, 5
        %v7508 = vsel %vm867, %v7503, %v7507
        %v7509 = vshrl.u32 %v7217, 16
        %v7511 = vrot.slane %v7509, 4
        %v7512 = vor.u32 %v7511, %v7507
        %v7513 = vrot.slane %v7512, 4
        %v7515 = vshll.u32 %v7218, 16
        %v7517 = vrot.slane %v7515, 5
        %v7518 = vsel %vm867, %v7513, %v7517
        %v7520 = vshrl.u32 %v7219, 16
        %v7522 = vrot.slane %v7520, 4
        %v7523 = vshll.u32 %v7219, 16
        %v7525 = vrot.slane %v7523, 5
        %v7526 = vor.u32 %v7522, %v7525
        %v7527 = vrot.slane %v7526, 4
        %v7529 = vshll.u32 %v7220, 16
        %v7531 = vrot.slane %v7529, 5
        %v7532 = vsel %vm867, %v7527, %v7531
        %v7533 = vshrl.u32 %v7220, 16
        %v7535 = vrot.slane %v7533, 4
        %v7536 = vor.u32 %v7535, %v7531
        %v7537 = vrot.slane %v7536, 4
        %v7539 = vshll.u32 %v7221, 16
        %v7541 = vrot.slane %v7539, 5
        %v7542 = vsel %vm867, %v7537, %v7541
        %v7544 = vshrl.u32 %v7222, 16
        %v7546 = vrot.slane %v7544, 4
        %v7547 = vshll.u32 %v7222, 16
        %v7549 = vrot.slane %v7547, 5
        %v7550 = vor.u32 %v7546, %v7549
        %v7551 = vrot.slane %v7550, 4
        %v7553 = vshll.u32 %v7223, 16
        %v7555 = vrot.slane %v7553, 5
        %v7556 = vsel %vm867, %v7551, %v7555
        %v7557 = vshrl.u32 %v7223, 16
        %v7559 = vrot.slane %v7557, 4
        %v7560 = vor.u32 %v7559, %v7555
        %v7561 = vrot.slane %v7560, 4
        %v7563 = vshll.u32 %v7224, 16
        %v7565 = vrot.slane %v7563, 5
        %v7566 = vsel %vm867, %v7561, %v7565
        %v7568 = vshrl.u32 %v7225, 16
        %v7570 = vrot.slane %v7568, 4
        %v7571 = vshll.u32 %v7225, 16
        %v7573 = vrot.slane %v7571, 5
        %v7574 = vor.u32 %v7570, %v7573
        %v7575 = vrot.slane %v7574, 4
        %v7577 = vshll.u32 %v7226, 16
        %v7579 = vrot.slane %v7577, 5
        %v7580 = vsel %vm867, %v7575, %v7579
        %v7581 = vshrl.u32 %v7226, 16
        %v7583 = vrot.slane %v7581, 4
        %v7584 = vor.u32 %v7583, %v7579
        %v7585 = vrot.slane %v7584, 4
        %v7587 = vshll.u32 %v7227, 16
        %v7589 = vrot.slane %v7587, 5
        %v7590 = vsel %vm867, %v7585, %v7589
        %v7592 = vshrl.u32 %v7228, 16
        %v7594 = vrot.slane %v7592, 4
        %v7595 = vshll.u32 %v7228, 16
        %v7597 = vrot.slane %v7595, 5
        %v7598 = vor.u32 %v7594, %v7597
        %v7599 = vrot.slane %v7598, 4
        %v7601 = vshll.u32 %v7229, 16
        %v7603 = vrot.slane %v7601, 5
        %v7604 = vsel %vm867, %v7599, %v7603
        %v7605 = vshrl.u32 %v7229, 16
        %v7607 = vrot.slane %v7605, 4
        %v7608 = vor.u32 %v7607, %v7603
        %v7609 = vrot.slane %v7608, 4
        %v7611 = vshll.u32 %v7230, 16
        %v7613 = vrot.slane %v7611, 5
        %v7614 = vsel %vm867, %v7609, %v7613
        %s7615 = scalar_lea.vmem [#allocation3], 256
        %v7616 = vld [vmem:[%s7615] sm:$0xf]
        %v7617 = vld [vmem:[%s7615 + $0x4] sm:$0xf]
        %v7618 = vld [vmem:[%s7615 + $0x8] sm:$0xf]
        %v7619 = vld [vmem:[%s7615 + $0xc] sm:$0xf]
        %v7620 = vld [vmem:[%s7615 + $0x10] sm:$0xf]
        %v7621 = vld [vmem:[%s7615 + $0x14] sm:$0xf]
        %v7622 = vld [vmem:[%s7615 + $0x18] sm:$0xf]
        %v7623 = vld [vmem:[%s7615 + $0x1c] sm:$0xf]
        %v7624 = vld [vmem:[%s7615 + $0x20] sm:$0xf]
        %v7625 = vld [vmem:[%s7615 + $0x24] sm:$0xf]
        %v7626 = vld [vmem:[%s7615 + $0x28] sm:$0xf]
        %v7627 = vld [vmem:[%s7615 + $0x2c] sm:$0xf]
        %v7628 = vld [vmem:[%s7615 + $0x30] sm:$0xf]
        %v7629 = vld [vmem:[%s7615 + $0x34] sm:$0xf]
        %v7630 = vld [vmem:[%s7615 + $0x38] sm:$0xf]
        %v7631 = vld [vmem:[%s7615 + $0x3c] sm:$0xf]
        %v7632 = vunpack.c.l.b16 %v7244
        %v7633 = vunpack.c.l.b16 %v7254
        %v7634 = vunpack.c.l.b16 %v7268
        %v7635 = vunpack.c.l.b16 %v7278
        %v7636 = vunpack.c.l.b16 %v7292
        %v7637 = vunpack.c.l.b16 %v7302
        %v7638 = vunpack.c.l.b16 %v7316
        %v7639 = vunpack.c.l.b16 %v7326
        %v7640 = vunpack.c.l.b16 %v7340
        %v7641 = vunpack.c.l.b16 %v7350
        %v7642 = vunpack.c.l.b16 %v7364
        %v7643 = vunpack.c.l.b16 %v7374
        %v7644 = vunpack.c.l.b16 %v7388
        %v7645 = vunpack.c.l.b16 %v7398
        %v7646 = vunpack.c.l.b16 %v7412
        %v7647 = vunpack.c.l.b16 %v7422
        %v7648 = vunpack.c.l.b16 %v7436
        %v7649 = vunpack.c.l.b16 %v7446
        %v7650 = vunpack.c.l.b16 %v7460
        %v7651 = vunpack.c.l.b16 %v7470
        %v7652 = vunpack.c.l.b16 %v7484
        %v7653 = vunpack.c.l.b16 %v7494
        %v7654 = vunpack.c.l.b16 %v7508
        %v7655 = vunpack.c.l.b16 %v7518
        %v7656 = vunpack.c.l.b16 %v7532
        %v7657 = vunpack.c.l.b16 %v7542
        %v7658 = vunpack.c.l.b16 %v7556
        %v7659 = vunpack.c.l.b16 %v7566
        %v7660 = vunpack.c.l.b16 %v7580
        %v7661 = vunpack.c.l.b16 %v7590
        %v7662 = vunpack.c.l.b16 %v7604
        %v7663 = vunpack.c.l.b16 %v7614
        %v7664 = vpack.c.b16 %v7633, %v7632
        %v7665 = vpack.c.b16 %v7635, %v7634
        %v7666 = vpack.c.b16 %v7637, %v7636
        %v7667 = vpack.c.b16 %v7639, %v7638
        %v7668 = vpack.c.b16 %v7641, %v7640
        %v7669 = vpack.c.b16 %v7643, %v7642
        %v7670 = vpack.c.b16 %v7645, %v7644
        %v7671 = vpack.c.b16 %v7647, %v7646
        %v7672 = vpack.c.b16 %v7649, %v7648
        %v7673 = vpack.c.b16 %v7651, %v7650
        %v7674 = vpack.c.b16 %v7653, %v7652
        %v7675 = vpack.c.b16 %v7655, %v7654
        %v7676 = vpack.c.b16 %v7657, %v7656
        %v7677 = vpack.c.b16 %v7659, %v7658
        %v7678 = vpack.c.b16 %v7661, %v7660
        %v7679 = vpack.c.b16 %v7663, %v7662
        %v7712 = vunpack.c.l.b16 %v7616
        %v7713 = vunpack.c.l.b16 %v7617
        %v7714 = vunpack.c.l.b16 %v7618
        %v7715 = vunpack.c.l.b16 %v7619
        %v7716 = vunpack.c.l.b16 %v7620
        %v7717 = vunpack.c.l.b16 %v7621
        %v7718 = vunpack.c.l.b16 %v7622
        %v7719 = vunpack.c.l.b16 %v7623
        %v7720 = vunpack.c.l.b16 %v7624
        %v7721 = vunpack.c.l.b16 %v7625
        %v7722 = vunpack.c.l.b16 %v7626
        %v7723 = vunpack.c.l.b16 %v7627
        %v7724 = vunpack.c.l.b16 %v7628
        %v7725 = vunpack.c.l.b16 %v7629
        %v7726 = vunpack.c.l.b16 %v7630
        %v7727 = vunpack.c.l.b16 %v7631
        %v7728 = vpack.c.b16 %v7713, %v7712
        %v7729 = vpack.c.b16 %v7715, %v7714
        %v7730 = vpack.c.b16 %v7717, %v7716
        %v7731 = vpack.c.b16 %v7719, %v7718
        %v7732 = vpack.c.b16 %v7721, %v7720
        %v7733 = vpack.c.b16 %v7723, %v7722
        %v7734 = vpack.c.b16 %v7725, %v7724
        %v7735 = vpack.c.b16 %v7727, %v7726
        %7744 = vmatpush.bf16.msra.mxu0 %v7735
        %7745 = vmatpush.bf16.msra.mxu0 %v7734
        %7746 = vmatpush.bf16.msra.mxu0 %v7733
        %7747 = vmatpush.bf16.msra.mxu0 %v7732
        %7748 = vmatpush.bf16.msra.mxu0 %v7731
        %7749 = vmatpush.bf16.msra.mxu0 %v7730
        %7750 = vmatpush.bf16.msra.mxu0 %v7729
        %7751 = vmatpush.bf16.msra.mxu0 %v7728
        %7752 = vmatmul.bf16.gmra.mxu0 %v7664
        %v7753 = vpop.f32.mrf.mxu0
        %v7754 = vadd.f32 0.0, %v7753
        %v7755 = vpop.f32.mrf.mxu0
        %v7756 = vadd.f32 0.0, %v7755
        %7757 = vmatmul.bf16.gmra.mxu0 %v7665
        %v7758 = vpop.f32.mrf.mxu0
        %v7759 = vadd.f32 0.0, %v7758
        %v7760 = vpop.f32.mrf.mxu0
        %v7761 = vadd.f32 0.0, %v7760
        %7762 = vmatmul.bf16.gmra.mxu0 %v7666
        %v7763 = vpop.f32.mrf.mxu0
        %v7764 = vadd.f32 0.0, %v7763
        %v7765 = vpop.f32.mrf.mxu0
        %v7766 = vadd.f32 0.0, %v7765
        %7767 = vmatmul.bf16.gmra.mxu0 %v7667
        %v7768 = vpop.f32.mrf.mxu0
        %v7769 = vadd.f32 0.0, %v7768
        %v7770 = vpop.f32.mrf.mxu0
        %v7771 = vadd.f32 0.0, %v7770
        %7772 = vmatmul.bf16.gmra.mxu0 %v7668
        %v7773 = vpop.f32.mrf.mxu0
        %v7774 = vadd.f32 0.0, %v7773
        %v7775 = vpop.f32.mrf.mxu0
        %v7776 = vadd.f32 0.0, %v7775
        %7777 = vmatmul.bf16.gmra.mxu0 %v7669
        %v7778 = vpop.f32.mrf.mxu0
        %v7779 = vadd.f32 0.0, %v7778
        %v7780 = vpop.f32.mrf.mxu0
        %v7781 = vadd.f32 0.0, %v7780
        %7782 = vmatmul.bf16.gmra.mxu0 %v7670
        %v7783 = vpop.f32.mrf.mxu0
        %v7784 = vadd.f32 0.0, %v7783
        %v7785 = vpop.f32.mrf.mxu0
        %v7786 = vadd.f32 0.0, %v7785
        %7787 = vmatmul.bf16.gmra.mxu0 %v7671
        %v7788 = vpop.f32.mrf.mxu0
        %v7789 = vadd.f32 0.0, %v7788
        %v7790 = vpop.f32.mrf.mxu0
        %v7791 = vadd.f32 0.0, %v7790
        %7792 = vmatmul.bf16.gmra.mxu0 %v7672
        %v7793 = vpop.f32.mrf.mxu0
        %v7794 = vadd.f32 0.0, %v7793
        %v7795 = vpop.f32.mrf.mxu0
        %v7796 = vadd.f32 0.0, %v7795
        %7797 = vmatmul.bf16.gmra.mxu0 %v7673
        %v7798 = vpop.f32.mrf.mxu0
        %v7799 = vadd.f32 0.0, %v7798
        %v7800 = vpop.f32.mrf.mxu0
        %v7801 = vadd.f32 0.0, %v7800
        %7802 = vmatmul.bf16.gmra.mxu0 %v7674
        %v7803 = vpop.f32.mrf.mxu0
        %v7804 = vadd.f32 0.0, %v7803
        %v7805 = vpop.f32.mrf.mxu0
        %v7806 = vadd.f32 0.0, %v7805
        %7807 = vmatmul.bf16.gmra.mxu0 %v7675
        %v7808 = vpop.f32.mrf.mxu0
        %v7809 = vadd.f32 0.0, %v7808
        %v7810 = vpop.f32.mrf.mxu0
        %v7811 = vadd.f32 0.0, %v7810
        %7812 = vmatmul.bf16.gmra.mxu0 %v7676
        %v7813 = vpop.f32.mrf.mxu0
        %v7814 = vadd.f32 0.0, %v7813
        %v7815 = vpop.f32.mrf.mxu0
        %v7816 = vadd.f32 0.0, %v7815
        %7817 = vmatmul.bf16.gmra.mxu0 %v7677
        %v7818 = vpop.f32.mrf.mxu0
        %v7819 = vadd.f32 0.0, %v7818
        %v7820 = vpop.f32.mrf.mxu0
        %v7821 = vadd.f32 0.0, %v7820
        %7822 = vmatmul.bf16.gmra.mxu0 %v7678
        %v7823 = vpop.f32.mrf.mxu0
        %v7824 = vadd.f32 0.0, %v7823
        %v7825 = vpop.f32.mrf.mxu0
        %v7826 = vadd.f32 0.0, %v7825
        %7827 = vmatmul.bf16.gmra.mxu0 %v7679
        %v7828 = vpop.f32.mrf.mxu0
        %v7829 = vadd.f32 0.0, %v7828
        %v7830 = vpop.f32.mrf.mxu0
        %v7831 = vadd.f32 0.0, %v7830
        %7832 = vdwg.mxu0
        %v7833 = vadd.f32 %v7151, %v7754
        %v7834 = vadd.f32 %v7152, %v7756
        %v7835 = vadd.f32 %v7153, %v7759
        %v7836 = vadd.f32 %v7154, %v7761
        %v7837 = vadd.f32 %v7155, %v7764
        %v7838 = vadd.f32 %v7156, %v7766
        %v7839 = vadd.f32 %v7157, %v7769
        %v7840 = vadd.f32 %v7158, %v7771
        %v7841 = vadd.f32 %v7159, %v7774
        %v7842 = vadd.f32 %v7160, %v7776
        %v7843 = vadd.f32 %v7161, %v7779
        %v7844 = vadd.f32 %v7162, %v7781
        %v7845 = vadd.f32 %v7163, %v7784
        %v7846 = vadd.f32 %v7164, %v7786
        %v7847 = vadd.f32 %v7165, %v7789
        %v7848 = vadd.f32 %v7166, %v7791
        %v7849 = vadd.f32 %v7167, %v7794
        %v7850 = vadd.f32 %v7168, %v7796
        %v7851 = vadd.f32 %v7169, %v7799
        %v7852 = vadd.f32 %v7170, %v7801
        %v7853 = vadd.f32 %v7171, %v7804
        %v7854 = vadd.f32 %v7172, %v7806
        %v7855 = vadd.f32 %v7173, %v7809
        %v7856 = vadd.f32 %v7174, %v7811
        %v7857 = vadd.f32 %v7175, %v7814
        %v7858 = vadd.f32 %v7176, %v7816
        %v7859 = vadd.f32 %v7177, %v7819
        %v7860 = vadd.f32 %v7178, %v7821
        %v7861 = vadd.f32 %v7179, %v7824
        %v7862 = vadd.f32 %v7180, %v7826
        %v7863 = vadd.f32 %v7181, %v7829
        %v7864 = vadd.f32 %v7182, %v7831
        %v7865 = vld [vmem:[%s682] sm:$0xe]
        %v7866 = vld [vmem:[%s682 + $0xc] sm:$0xe]
        %v7867 = vld [vmem:[%s682 + $0x18] sm:$0xe]
        %v7868 = vld [vmem:[%s682 + $0x24] sm:$0xe]
        %v7869 = vld [vmem:[%s682 + $0x30] sm:$0xe]
        %v7870 = vld [vmem:[%s682 + $0x3c] sm:$0xe]
        %v7871 = vld [vmem:[%s682 + $0x48] sm:$0xe]
        %v7872 = vld [vmem:[%s682 + $0x54] sm:$0xe]
        %v7873 = vld [vmem:[%s682 + $0x60] sm:$0xe]
        %v7874 = vld [vmem:[%s682 + $0x6c] sm:$0xe]
        %v7875 = vld [vmem:[%s682 + $0x78] sm:$0xe]
        %v7876 = vld [vmem:[%s682 + $0x84] sm:$0xe]
        %v7877 = vld [vmem:[%s682 + $0x90] sm:$0xe]
        %v7878 = vld [vmem:[%s682 + $0x9c] sm:$0xe]
        %v7879 = vld [vmem:[%s682 + $0xa8] sm:$0xe]
        %v7880 = vld [vmem:[%s682 + $0xb4] sm:$0xe]
        %v7929 = vrot.slane %v7865, 5
        %v7930 = vrot.slane %v7929, 4
        %v7931 = vrot.slane %v7184, 5
        %v7932 = vsel %vm1753, %v7930, %v7931
        %v7933 = vrot.slane %v7931, 4
        %v7934 = vrot.slane %v7185, 5
        %v7935 = vsel %vm1753, %v7933, %v7934
        %v7936 = vrot.slane %v7866, 5
        %v7937 = vrot.slane %v7936, 4
        %v7938 = vrot.slane %v7187, 5
        %v7939 = vsel %vm1753, %v7937, %v7938
        %v7940 = vrot.slane %v7938, 4
        %v7941 = vrot.slane %v7188, 5
        %v7942 = vsel %vm1753, %v7940, %v7941
        %v7943 = vrot.slane %v7867, 5
        %v7944 = vrot.slane %v7943, 4
        %v7945 = vrot.slane %v7190, 5
        %v7946 = vsel %vm1753, %v7944, %v7945
        %v7947 = vrot.slane %v7945, 4
        %v7948 = vrot.slane %v7191, 5
        %v7949 = vsel %vm1753, %v7947, %v7948
        %v7950 = vrot.slane %v7868, 5
        %v7951 = vrot.slane %v7950, 4
        %v7952 = vrot.slane %v7193, 5
        %v7953 = vsel %vm1753, %v7951, %v7952
        %v7954 = vrot.slane %v7952, 4
        %v7955 = vrot.slane %v7194, 5
        %v7956 = vsel %vm1753, %v7954, %v7955
        %v7957 = vrot.slane %v7869, 5
        %v7958 = vrot.slane %v7957, 4
        %v7959 = vrot.slane %v7196, 5
        %v7960 = vsel %vm1753, %v7958, %v7959
        %v7961 = vrot.slane %v7959, 4
        %v7962 = vrot.slane %v7197, 5
        %v7963 = vsel %vm1753, %v7961, %v7962
        %v7964 = vrot.slane %v7870, 5
        %v7965 = vrot.slane %v7964, 4
        %v7966 = vrot.slane %v7199, 5
        %v7967 = vsel %vm1753, %v7965, %v7966
        %v7968 = vrot.slane %v7966, 4
        %v7969 = vrot.slane %v7200, 5
        %v7970 = vsel %vm1753, %v7968, %v7969
        %v7971 = vrot.slane %v7871, 5
        %v7972 = vrot.slane %v7971, 4
        %v7973 = vrot.slane %v7202, 5
        %v7974 = vsel %vm1753, %v7972, %v7973
        %v7975 = vrot.slane %v7973, 4
        %v7976 = vrot.slane %v7203, 5
        %v7977 = vsel %vm1753, %v7975, %v7976
        %v7978 = vrot.slane %v7872, 5
        %v7979 = vrot.slane %v7978, 4
        %v7980 = vrot.slane %v7205, 5
        %v7981 = vsel %vm1753, %v7979, %v7980
        %v7982 = vrot.slane %v7980, 4
        %v7983 = vrot.slane %v7206, 5
        %v7984 = vsel %vm1753, %v7982, %v7983
        %v7985 = vrot.slane %v7873, 5
        %v7986 = vrot.slane %v7985, 4
        %v7987 = vrot.slane %v7208, 5
        %v7988 = vsel %vm1753, %v7986, %v7987
        %v7989 = vrot.slane %v7987, 4
        %v7990 = vrot.slane %v7209, 5
        %v7991 = vsel %vm1753, %v7989, %v7990
        %v7992 = vrot.slane %v7874, 5
        %v7993 = vrot.slane %v7992, 4
        %v7994 = vrot.slane %v7211, 5
        %v7995 = vsel %vm1753, %v7993, %v7994
        %v7996 = vrot.slane %v7994, 4
        %v7997 = vrot.slane %v7212, 5
        %v7998 = vsel %vm1753, %v7996, %v7997
        %v7999 = vrot.slane %v7875, 5
        %v8000 = vrot.slane %v7999, 4
        %v8001 = vrot.slane %v7214, 5
        %v8002 = vsel %vm1753, %v8000, %v8001
        %v8003 = vrot.slane %v8001, 4
        %v8004 = vrot.slane %v7215, 5
        %v8005 = vsel %vm1753, %v8003, %v8004
        %v8006 = vrot.slane %v7876, 5
        %v8007 = vrot.slane %v8006, 4
        %v8008 = vrot.slane %v7217, 5
        %v8009 = vsel %vm1753, %v8007, %v8008
        %v8010 = vrot.slane %v8008, 4
        %v8011 = vrot.slane %v7218, 5
        %v8012 = vsel %vm1753, %v8010, %v8011
        %v8013 = vrot.slane %v7877, 5
        %v8014 = vrot.slane %v8013, 4
        %v8015 = vrot.slane %v7220, 5
        %v8016 = vsel %vm1753, %v8014, %v8015
        %v8017 = vrot.slane %v8015, 4
        %v8018 = vrot.slane %v7221, 5
        %v8019 = vsel %vm1753, %v8017, %v8018
        %v8020 = vrot.slane %v7878, 5
        %v8021 = vrot.slane %v8020, 4
        %v8022 = vrot.slane %v7223, 5
        %v8023 = vsel %vm1753, %v8021, %v8022
        %v8024 = vrot.slane %v8022, 4
        %v8025 = vrot.slane %v7224, 5
        %v8026 = vsel %vm1753, %v8024, %v8025
        %v8027 = vrot.slane %v7879, 5
        %v8028 = vrot.slane %v8027, 4
        %v8029 = vrot.slane %v7226, 5
        %v8030 = vsel %vm1753, %v8028, %v8029
        %v8031 = vrot.slane %v8029, 4
        %v8032 = vrot.slane %v7227, 5
        %v8033 = vsel %vm1753, %v8031, %v8032
        %v8034 = vrot.slane %v7880, 5
        %v8035 = vrot.slane %v8034, 4
        %v8036 = vrot.slane %v7229, 5
        %v8037 = vsel %vm1753, %v8035, %v8036
        %v8038 = vrot.slane %v8036, 4
        %v8039 = vrot.slane %v7230, 5
        %v8040 = vsel %vm1753, %v8038, %v8039
        %s8041 = scalar_lea.vmem [#allocation3], 320
        %v8042 = vld [vmem:[%s8041] sm:$0xf]
        %v8043 = vld [vmem:[%s8041 + $0x4] sm:$0xf]
        %v8044 = vld [vmem:[%s8041 + $0x8] sm:$0xf]
        %v8045 = vld [vmem:[%s8041 + $0xc] sm:$0xf]
        %v8046 = vld [vmem:[%s8041 + $0x10] sm:$0xf]
        %v8047 = vld [vmem:[%s8041 + $0x14] sm:$0xf]
        %v8048 = vld [vmem:[%s8041 + $0x18] sm:$0xf]
        %v8049 = vld [vmem:[%s8041 + $0x1c] sm:$0xf]
        %v8050 = vld [vmem:[%s8041 + $0x20] sm:$0xf]
        %v8051 = vld [vmem:[%s8041 + $0x24] sm:$0xf]
        %v8052 = vld [vmem:[%s8041 + $0x28] sm:$0xf]
        %v8053 = vld [vmem:[%s8041 + $0x2c] sm:$0xf]
        %v8054 = vld [vmem:[%s8041 + $0x30] sm:$0xf]
        %v8055 = vld [vmem:[%s8041 + $0x34] sm:$0xf]
        %v8056 = vld [vmem:[%s8041 + $0x38] sm:$0xf]
        %v8057 = vld [vmem:[%s8041 + $0x3c] sm:$0xf]
        %v8058 = vunpack.c.l.b16 %v7932
        %v8059 = vunpack.c.l.b16 %v7935
        %v8060 = vunpack.c.l.b16 %v7939
        %v8061 = vunpack.c.l.b16 %v7942
        %v8062 = vunpack.c.l.b16 %v7946
        %v8063 = vunpack.c.l.b16 %v7949
        %v8064 = vunpack.c.l.b16 %v7953
        %v8065 = vunpack.c.l.b16 %v7956
        %v8066 = vunpack.c.l.b16 %v7960
        %v8067 = vunpack.c.l.b16 %v7963
        %v8068 = vunpack.c.l.b16 %v7967
        %v8069 = vunpack.c.l.b16 %v7970
        %v8070 = vunpack.c.l.b16 %v7974
        %v8071 = vunpack.c.l.b16 %v7977
        %v8072 = vunpack.c.l.b16 %v7981
        %v8073 = vunpack.c.l.b16 %v7984
        %v8074 = vunpack.c.l.b16 %v7988
        %v8075 = vunpack.c.l.b16 %v7991
        %v8076 = vunpack.c.l.b16 %v7995
        %v8077 = vunpack.c.l.b16 %v7998
        %v8078 = vunpack.c.l.b16 %v8002
        %v8079 = vunpack.c.l.b16 %v8005
        %v8080 = vunpack.c.l.b16 %v8009
        %v8081 = vunpack.c.l.b16 %v8012
        %v8082 = vunpack.c.l.b16 %v8016
        %v8083 = vunpack.c.l.b16 %v8019
        %v8084 = vunpack.c.l.b16 %v8023
        %v8085 = vunpack.c.l.b16 %v8026
        %v8086 = vunpack.c.l.b16 %v8030
        %v8087 = vunpack.c.l.b16 %v8033
        %v8088 = vunpack.c.l.b16 %v8037
        %v8089 = vunpack.c.l.b16 %v8040
        %v8090 = vpack.c.b16 %v8059, %v8058
        %v8091 = vpack.c.b16 %v8061, %v8060
        %v8092 = vpack.c.b16 %v8063, %v8062
        %v8093 = vpack.c.b16 %v8065, %v8064
        %v8094 = vpack.c.b16 %v8067, %v8066
        %v8095 = vpack.c.b16 %v8069, %v8068
        %v8096 = vpack.c.b16 %v8071, %v8070
        %v8097 = vpack.c.b16 %v8073, %v8072
        %v8098 = vpack.c.b16 %v8075, %v8074
        %v8099 = vpack.c.b16 %v8077, %v8076
        %v8100 = vpack.c.b16 %v8079, %v8078
        %v8101 = vpack.c.b16 %v8081, %v8080
        %v8102 = vpack.c.b16 %v8083, %v8082
        %v8103 = vpack.c.b16 %v8085, %v8084
        %v8104 = vpack.c.b16 %v8087, %v8086
        %v8105 = vpack.c.b16 %v8089, %v8088
        %v8138 = vunpack.c.l.b16 %v8042
        %v8139 = vunpack.c.l.b16 %v8043
        %v8140 = vunpack.c.l.b16 %v8044
        %v8141 = vunpack.c.l.b16 %v8045
        %v8142 = vunpack.c.l.b16 %v8046
        %v8143 = vunpack.c.l.b16 %v8047
        %v8144 = vunpack.c.l.b16 %v8048
        %v8145 = vunpack.c.l.b16 %v8049
        %v8146 = vunpack.c.l.b16 %v8050
        %v8147 = vunpack.c.l.b16 %v8051
        %v8148 = vunpack.c.l.b16 %v8052
        %v8149 = vunpack.c.l.b16 %v8053
        %v8150 = vunpack.c.l.b16 %v8054
        %v8151 = vunpack.c.l.b16 %v8055
        %v8152 = vunpack.c.l.b16 %v8056
        %v8153 = vunpack.c.l.b16 %v8057
        %v8154 = vpack.c.b16 %v8139, %v8138
        %v8155 = vpack.c.b16 %v8141, %v8140
        %v8156 = vpack.c.b16 %v8143, %v8142
        %v8157 = vpack.c.b16 %v8145, %v8144
        %v8158 = vpack.c.b16 %v8147, %v8146
        %v8159 = vpack.c.b16 %v8149, %v8148
        %v8160 = vpack.c.b16 %v8151, %v8150
        %v8161 = vpack.c.b16 %v8153, %v8152
        %8170 = vmatpush.bf16.msra.mxu0 %v8161
        %8171 = vmatpush.bf16.msra.mxu0 %v8160
        %8172 = vmatpush.bf16.msra.mxu0 %v8159
        %8173 = vmatpush.bf16.msra.mxu0 %v8158
        %8174 = vmatpush.bf16.msra.mxu0 %v8157
        %8175 = vmatpush.bf16.msra.mxu0 %v8156
        %8176 = vmatpush.bf16.msra.mxu0 %v8155
        %8177 = vmatpush.bf16.msra.mxu0 %v8154
        %8178 = vmatmul.bf16.gmra.mxu0 %v8090
        %v8179 = vpop.f32.mrf.mxu0
        %v8180 = vadd.f32 0.0, %v8179
        %v8181 = vpop.f32.mrf.mxu0
        %v8182 = vadd.f32 0.0, %v8181
        %8183 = vmatmul.bf16.gmra.mxu0 %v8091
        %v8184 = vpop.f32.mrf.mxu0
        %v8185 = vadd.f32 0.0, %v8184
        %v8186 = vpop.f32.mrf.mxu0
        %v8187 = vadd.f32 0.0, %v8186
        %8188 = vmatmul.bf16.gmra.mxu0 %v8092
        %v8189 = vpop.f32.mrf.mxu0
        %v8190 = vadd.f32 0.0, %v8189
        %v8191 = vpop.f32.mrf.mxu0
        %v8192 = vadd.f32 0.0, %v8191
        %8193 = vmatmul.bf16.gmra.mxu0 %v8093
        %v8194 = vpop.f32.mrf.mxu0
        %v8195 = vadd.f32 0.0, %v8194
        %v8196 = vpop.f32.mrf.mxu0
        %v8197 = vadd.f32 0.0, %v8196
        %8198 = vmatmul.bf16.gmra.mxu0 %v8094
        %v8199 = vpop.f32.mrf.mxu0
        %v8200 = vadd.f32 0.0, %v8199
        %v8201 = vpop.f32.mrf.mxu0
        %v8202 = vadd.f32 0.0, %v8201
        %8203 = vmatmul.bf16.gmra.mxu0 %v8095
        %v8204 = vpop.f32.mrf.mxu0
        %v8205 = vadd.f32 0.0, %v8204
        %v8206 = vpop.f32.mrf.mxu0
        %v8207 = vadd.f32 0.0, %v8206
        %8208 = vmatmul.bf16.gmra.mxu0 %v8096
        %v8209 = vpop.f32.mrf.mxu0
        %v8210 = vadd.f32 0.0, %v8209
        %v8211 = vpop.f32.mrf.mxu0
        %v8212 = vadd.f32 0.0, %v8211
        %8213 = vmatmul.bf16.gmra.mxu0 %v8097
        %v8214 = vpop.f32.mrf.mxu0
        %v8215 = vadd.f32 0.0, %v8214
        %v8216 = vpop.f32.mrf.mxu0
        %v8217 = vadd.f32 0.0, %v8216
        %8218 = vmatmul.bf16.gmra.mxu0 %v8098
        %v8219 = vpop.f32.mrf.mxu0
        %v8220 = vadd.f32 0.0, %v8219
        %v8221 = vpop.f32.mrf.mxu0
        %v8222 = vadd.f32 0.0, %v8221
        %8223 = vmatmul.bf16.gmra.mxu0 %v8099
        %v8224 = vpop.f32.mrf.mxu0
        %v8225 = vadd.f32 0.0, %v8224
        %v8226 = vpop.f32.mrf.mxu0
        %v8227 = vadd.f32 0.0, %v8226
        %8228 = vmatmul.bf16.gmra.mxu0 %v8100
        %v8229 = vpop.f32.mrf.mxu0
        %v8230 = vadd.f32 0.0, %v8229
        %v8231 = vpop.f32.mrf.mxu0
        %v8232 = vadd.f32 0.0, %v8231
        %8233 = vmatmul.bf16.gmra.mxu0 %v8101
        %v8234 = vpop.f32.mrf.mxu0
        %v8235 = vadd.f32 0.0, %v8234
        %v8236 = vpop.f32.mrf.mxu0
        %v8237 = vadd.f32 0.0, %v8236
        %8238 = vmatmul.bf16.gmra.mxu0 %v8102
        %v8239 = vpop.f32.mrf.mxu0
        %v8240 = vadd.f32 0.0, %v8239
        %v8241 = vpop.f32.mrf.mxu0
        %v8242 = vadd.f32 0.0, %v8241
        %8243 = vmatmul.bf16.gmra.mxu0 %v8103
        %v8244 = vpop.f32.mrf.mxu0
        %v8245 = vadd.f32 0.0, %v8244
        %v8246 = vpop.f32.mrf.mxu0
        %v8247 = vadd.f32 0.0, %v8246
        %8248 = vmatmul.bf16.gmra.mxu0 %v8104
        %v8249 = vpop.f32.mrf.mxu0
        %v8250 = vadd.f32 0.0, %v8249
        %v8251 = vpop.f32.mrf.mxu0
        %v8252 = vadd.f32 0.0, %v8251
        %8253 = vmatmul.bf16.gmra.mxu0 %v8105
        %v8254 = vpop.f32.mrf.mxu0
        %v8255 = vadd.f32 0.0, %v8254
        %v8256 = vpop.f32.mrf.mxu0
        %v8257 = vadd.f32 0.0, %v8256
        %8258 = vdwg.mxu0
        %v8259 = vadd.f32 %v7833, %v8180
        %v8260 = vadd.f32 %v7834, %v8182
        %v8261 = vadd.f32 %v7835, %v8185
        %v8262 = vadd.f32 %v7836, %v8187
        %v8263 = vadd.f32 %v7837, %v8190
        %v8264 = vadd.f32 %v7838, %v8192
        %v8265 = vadd.f32 %v7839, %v8195
        %v8266 = vadd.f32 %v7840, %v8197
        %v8267 = vadd.f32 %v7841, %v8200
        %v8268 = vadd.f32 %v7842, %v8202
        %v8269 = vadd.f32 %v7843, %v8205
        %v8270 = vadd.f32 %v7844, %v8207
        %v8271 = vadd.f32 %v7845, %v8210
        %v8272 = vadd.f32 %v7846, %v8212
        %v8273 = vadd.f32 %v7847, %v8215
        %v8274 = vadd.f32 %v7848, %v8217
        %v8275 = vadd.f32 %v7849, %v8220
        %v8276 = vadd.f32 %v7850, %v8222
        %v8277 = vadd.f32 %v7851, %v8225
        %v8278 = vadd.f32 %v7852, %v8227
        %v8279 = vadd.f32 %v7853, %v8230
        %v8280 = vadd.f32 %v7854, %v8232
        %v8281 = vadd.f32 %v7855, %v8235
        %v8282 = vadd.f32 %v7856, %v8237
        %v8283 = vadd.f32 %v7857, %v8240
        %v8284 = vadd.f32 %v7858, %v8242
        %v8285 = vadd.f32 %v7859, %v8245
        %v8286 = vadd.f32 %v7860, %v8247
        %v8287 = vadd.f32 %v7861, %v8250
        %v8288 = vadd.f32 %v7862, %v8252
        %v8289 = vadd.f32 %v7863, %v8255
        %v8290 = vadd.f32 %v7864, %v8257
        %v8291 = vld [vmem:[%s3570] sm:$0xf]
        %v8292 = vld [vmem:[%s3570 + $0x4] sm:$0xf]
        %v8293 = vld [vmem:[%s3570 + $0xc] sm:$0xf]
        %v8294 = vld [vmem:[%s3570 + $0x10] sm:$0xf]
        %v8295 = vld [vmem:[%s3570 + $0x18] sm:$0xf]
        %v8296 = vld [vmem:[%s3570 + $0x1c] sm:$0xf]
        %v8297 = vld [vmem:[%s3570 + $0x24] sm:$0xf]
        %v8298 = vld [vmem:[%s3570 + $0x28] sm:$0xf]
        %v8299 = vld [vmem:[%s3570 + $0x30] sm:$0xf]
        %v8300 = vld [vmem:[%s3570 + $0x34] sm:$0xf]
        %v8301 = vld [vmem:[%s3570 + $0x3c] sm:$0xf]
        %v8302 = vld [vmem:[%s3570 + $0x40] sm:$0xf]
        %v8303 = vld [vmem:[%s3570 + $0x48] sm:$0xf]
        %v8304 = vld [vmem:[%s3570 + $0x4c] sm:$0xf]
        %v8305 = vld [vmem:[%s3570 + $0x54] sm:$0xf]
        %v8306 = vld [vmem:[%s3570 + $0x58] sm:$0xf]
        %v8307 = vld [vmem:[%s3570 + $0x60] sm:$0xf]
        %v8308 = vld [vmem:[%s3570 + $0x64] sm:$0xf]
        %v8309 = vld [vmem:[%s3570 + $0x6c] sm:$0xf]
        %v8310 = vld [vmem:[%s3570 + $0x70] sm:$0xf]
        %v8311 = vld [vmem:[%s3570 + $0x78] sm:$0xf]
        %v8312 = vld [vmem:[%s3570 + $0x7c] sm:$0xf]
        %v8313 = vld [vmem:[%s3570 + $0x84] sm:$0xf]
        %v8314 = vld [vmem:[%s3570 + $0x88] sm:$0xf]
        %v8315 = vld [vmem:[%s3570 + $0x90] sm:$0xf]
        %v8316 = vld [vmem:[%s3570 + $0x94] sm:$0xf]
        %v8317 = vld [vmem:[%s3570 + $0x9c] sm:$0xf]
        %v8318 = vld [vmem:[%s3570 + $0xa0] sm:$0xf]
        %v8319 = vld [vmem:[%s3570 + $0xa8] sm:$0xf]
        %v8320 = vld [vmem:[%s3570 + $0xac] sm:$0xf]
        %v8321 = vld [vmem:[%s3570 + $0xb4] sm:$0xf]
        %v8322 = vld [vmem:[%s3570 + $0xb8] sm:$0xf]
        %s8323 = scalar_lea.vmem [#allocation3], 384
        %v8324 = vld [vmem:[%s8323] sm:$0xf]
        %v8325 = vld [vmem:[%s8323 + $0x4] sm:$0xf]
        %v8326 = vld [vmem:[%s8323 + $0x8] sm:$0xf]
        %v8327 = vld [vmem:[%s8323 + $0xc] sm:$0xf]
        %v8328 = vld [vmem:[%s8323 + $0x10] sm:$0xf]
        %v8329 = vld [vmem:[%s8323 + $0x14] sm:$0xf]
        %v8330 = vld [vmem:[%s8323 + $0x18] sm:$0xf]
        %v8331 = vld [vmem:[%s8323 + $0x1c] sm:$0xf]
        %v8332 = vld [vmem:[%s8323 + $0x20] sm:$0xf]
        %v8333 = vld [vmem:[%s8323 + $0x24] sm:$0xf]
        %v8334 = vld [vmem:[%s8323 + $0x28] sm:$0xf]
        %v8335 = vld [vmem:[%s8323 + $0x2c] sm:$0xf]
        %v8336 = vld [vmem:[%s8323 + $0x30] sm:$0xf]
        %v8337 = vld [vmem:[%s8323 + $0x34] sm:$0xf]
        %v8338 = vld [vmem:[%s8323 + $0x38] sm:$0xf]
        %v8339 = vld [vmem:[%s8323 + $0x3c] sm:$0xf]
        %v8372 = vunpack.c.l.b16 %v8291
        %v8373 = vunpack.c.l.b16 %v8292
        %v8374 = vunpack.c.l.b16 %v8293
        %v8375 = vunpack.c.l.b16 %v8294
        %v8376 = vunpack.c.l.b16 %v8295
        %v8377 = vunpack.c.l.b16 %v8296
        %v8378 = vunpack.c.l.b16 %v8297
        %v8379 = vunpack.c.l.b16 %v8298
        %v8380 = vunpack.c.l.b16 %v8299
        %v8381 = vunpack.c.l.b16 %v8300
        %v8382 = vunpack.c.l.b16 %v8301
        %v8383 = vunpack.c.l.b16 %v8302
        %v8384 = vunpack.c.l.b16 %v8303
        %v8385 = vunpack.c.l.b16 %v8304
        %v8386 = vunpack.c.l.b16 %v8305
        %v8387 = vunpack.c.l.b16 %v8306
        %v8388 = vunpack.c.l.b16 %v8307
        %v8389 = vunpack.c.l.b16 %v8308
        %v8390 = vunpack.c.l.b16 %v8309
        %v8391 = vunpack.c.l.b16 %v8310
        %v8392 = vunpack.c.l.b16 %v8311
        %v8393 = vunpack.c.l.b16 %v8312
        %v8394 = vunpack.c.l.b16 %v8313
        %v8395 = vunpack.c.l.b16 %v8314
        %v8396 = vunpack.c.l.b16 %v8315
        %v8397 = vunpack.c.l.b16 %v8316
        %v8398 = vunpack.c.l.b16 %v8317
        %v8399 = vunpack.c.l.b16 %v8318
        %v8400 = vunpack.c.l.b16 %v8319
        %v8401 = vunpack.c.l.b16 %v8320
        %v8402 = vunpack.c.l.b16 %v8321
        %v8403 = vunpack.c.l.b16 %v8322
        %v8404 = vpack.c.b16 %v8373, %v8372
        %v8405 = vpack.c.b16 %v8375, %v8374
        %v8406 = vpack.c.b16 %v8377, %v8376
        %v8407 = vpack.c.b16 %v8379, %v8378
        %v8408 = vpack.c.b16 %v8381, %v8380
        %v8409 = vpack.c.b16 %v8383, %v8382
        %v8410 = vpack.c.b16 %v8385, %v8384
        %v8411 = vpack.c.b16 %v8387, %v8386
        %v8412 = vpack.c.b16 %v8389, %v8388
        %v8413 = vpack.c.b16 %v8391, %v8390
        %v8414 = vpack.c.b16 %v8393, %v8392
        %v8415 = vpack.c.b16 %v8395, %v8394
        %v8416 = vpack.c.b16 %v8397, %v8396
        %v8417 = vpack.c.b16 %v8399, %v8398
        %v8418 = vpack.c.b16 %v8401, %v8400
        %v8419 = vpack.c.b16 %v8403, %v8402
        %v8452 = vunpack.c.l.b16 %v8324
        %v8453 = vunpack.c.l.b16 %v8325
        %v8454 = vunpack.c.l.b16 %v8326
        %v8455 = vunpack.c.l.b16 %v8327
        %v8456 = vunpack.c.l.b16 %v8328
        %v8457 = vunpack.c.l.b16 %v8329
        %v8458 = vunpack.c.l.b16 %v8330
        %v8459 = vunpack.c.l.b16 %v8331
        %v8460 = vunpack.c.l.b16 %v8332
        %v8461 = vunpack.c.l.b16 %v8333
        %v8462 = vunpack.c.l.b16 %v8334
        %v8463 = vunpack.c.l.b16 %v8335
        %v8464 = vunpack.c.l.b16 %v8336
        %v8465 = vunpack.c.l.b16 %v8337
        %v8466 = vunpack.c.l.b16 %v8338
        %v8467 = vunpack.c.l.b16 %v8339
        %v8468 = vpack.c.b16 %v8453, %v8452
        %v8469 = vpack.c.b16 %v8455, %v8454
        %v8470 = vpack.c.b16 %v8457, %v8456
        %v8471 = vpack.c.b16 %v8459, %v8458
        %v8472 = vpack.c.b16 %v8461, %v8460
        %v8473 = vpack.c.b16 %v8463, %v8462
        %v8474 = vpack.c.b16 %v8465, %v8464
        %v8475 = vpack.c.b16 %v8467, %v8466
        %8484 = vmatpush.bf16.msra.mxu0 %v8475
        %8485 = vmatpush.bf16.msra.mxu0 %v8474
        %8486 = vmatpush.bf16.msra.mxu0 %v8473
        %8487 = vmatpush.bf16.msra.mxu0 %v8472
        %8488 = vmatpush.bf16.msra.mxu0 %v8471
        %8489 = vmatpush.bf16.msra.mxu0 %v8470
        %8490 = vmatpush.bf16.msra.mxu0 %v8469
        %8491 = vmatpush.bf16.msra.mxu0 %v8468
        %8492 = vmatmul.bf16.gmra.mxu0 %v8404
        %v8493 = vpop.f32.mrf.mxu0
        %v8494 = vadd.f32 0.0, %v8493
        %v8495 = vpop.f32.mrf.mxu0
        %v8496 = vadd.f32 0.0, %v8495
        %8497 = vmatmul.bf16.gmra.mxu0 %v8405
        %v8498 = vpop.f32.mrf.mxu0
        %v8499 = vadd.f32 0.0, %v8498
        %v8500 = vpop.f32.mrf.mxu0
        %v8501 = vadd.f32 0.0, %v8500
        %8502 = vmatmul.bf16.gmra.mxu0 %v8406
        %v8503 = vpop.f32.mrf.mxu0
        %v8504 = vadd.f32 0.0, %v8503
        %v8505 = vpop.f32.mrf.mxu0
        %v8506 = vadd.f32 0.0, %v8505
        %8507 = vmatmul.bf16.gmra.mxu0 %v8407
        %v8508 = vpop.f32.mrf.mxu0
        %v8509 = vadd.f32 0.0, %v8508
        %v8510 = vpop.f32.mrf.mxu0
        %v8511 = vadd.f32 0.0, %v8510
        %8512 = vmatmul.bf16.gmra.mxu0 %v8408
        %v8513 = vpop.f32.mrf.mxu0
        %v8514 = vadd.f32 0.0, %v8513
        %v8515 = vpop.f32.mrf.mxu0
        %v8516 = vadd.f32 0.0, %v8515
        %8517 = vmatmul.bf16.gmra.mxu0 %v8409
        %v8518 = vpop.f32.mrf.mxu0
        %v8519 = vadd.f32 0.0, %v8518
        %v8520 = vpop.f32.mrf.mxu0
        %v8521 = vadd.f32 0.0, %v8520
        %8522 = vmatmul.bf16.gmra.mxu0 %v8410
        %v8523 = vpop.f32.mrf.mxu0
        %v8524 = vadd.f32 0.0, %v8523
        %v8525 = vpop.f32.mrf.mxu0
        %v8526 = vadd.f32 0.0, %v8525
        %8527 = vmatmul.bf16.gmra.mxu0 %v8411
        %v8528 = vpop.f32.mrf.mxu0
        %v8529 = vadd.f32 0.0, %v8528
        %v8530 = vpop.f32.mrf.mxu0
        %v8531 = vadd.f32 0.0, %v8530
        %8532 = vmatmul.bf16.gmra.mxu0 %v8412
        %v8533 = vpop.f32.mrf.mxu0
        %v8534 = vadd.f32 0.0, %v8533
        %v8535 = vpop.f32.mrf.mxu0
        %v8536 = vadd.f32 0.0, %v8535
        %8537 = vmatmul.bf16.gmra.mxu0 %v8413
        %v8538 = vpop.f32.mrf.mxu0
        %v8539 = vadd.f32 0.0, %v8538
        %v8540 = vpop.f32.mrf.mxu0
        %v8541 = vadd.f32 0.0, %v8540
        %8542 = vmatmul.bf16.gmra.mxu0 %v8414
        %v8543 = vpop.f32.mrf.mxu0
        %v8544 = vadd.f32 0.0, %v8543
        %v8545 = vpop.f32.mrf.mxu0
        %v8546 = vadd.f32 0.0, %v8545
        %8547 = vmatmul.bf16.gmra.mxu0 %v8415
        %v8548 = vpop.f32.mrf.mxu0
        %v8549 = vadd.f32 0.0, %v8548
        %v8550 = vpop.f32.mrf.mxu0
        %v8551 = vadd.f32 0.0, %v8550
        %8552 = vmatmul.bf16.gmra.mxu0 %v8416
        %v8553 = vpop.f32.mrf.mxu0
        %v8554 = vadd.f32 0.0, %v8553
        %v8555 = vpop.f32.mrf.mxu0
        %v8556 = vadd.f32 0.0, %v8555
        %8557 = vmatmul.bf16.gmra.mxu0 %v8417
        %v8558 = vpop.f32.mrf.mxu0
        %v8559 = vadd.f32 0.0, %v8558
        %v8560 = vpop.f32.mrf.mxu0
        %v8561 = vadd.f32 0.0, %v8560
        %8562 = vmatmul.bf16.gmra.mxu0 %v8418
        %v8563 = vpop.f32.mrf.mxu0
        %v8564 = vadd.f32 0.0, %v8563
        %v8565 = vpop.f32.mrf.mxu0
        %v8566 = vadd.f32 0.0, %v8565
        %8567 = vmatmul.bf16.gmra.mxu0 %v8419
        %v8568 = vpop.f32.mrf.mxu0
        %v8569 = vadd.f32 0.0, %v8568
        %v8570 = vpop.f32.mrf.mxu0
        %v8571 = vadd.f32 0.0, %v8570
        %8572 = vdwg.mxu0
        %v8573 = vadd.f32 %v8259, %v8494
        %v8574 = vadd.f32 %v8260, %v8496
        %v8575 = vadd.f32 %v8261, %v8499
        %v8576 = vadd.f32 %v8262, %v8501
        %v8577 = vadd.f32 %v8263, %v8504
        %v8578 = vadd.f32 %v8264, %v8506
        %v8579 = vadd.f32 %v8265, %v8509
        %v8580 = vadd.f32 %v8266, %v8511
        %v8581 = vadd.f32 %v8267, %v8514
        %v8582 = vadd.f32 %v8268, %v8516
        %v8583 = vadd.f32 %v8269, %v8519
        %v8584 = vadd.f32 %v8270, %v8521
        %v8585 = vadd.f32 %v8271, %v8524
        %v8586 = vadd.f32 %v8272, %v8526
        %v8587 = vadd.f32 %v8273, %v8529
        %v8588 = vadd.f32 %v8274, %v8531
        %v8589 = vadd.f32 %v8275, %v8534
        %v8590 = vadd.f32 %v8276, %v8536
        %v8591 = vadd.f32 %v8277, %v8539
        %v8592 = vadd.f32 %v8278, %v8541
        %v8593 = vadd.f32 %v8279, %v8544
        %v8594 = vadd.f32 %v8280, %v8546
        %v8595 = vadd.f32 %v8281, %v8549
        %v8596 = vadd.f32 %v8282, %v8551
        %v8597 = vadd.f32 %v8283, %v8554
        %v8598 = vadd.f32 %v8284, %v8556
        %v8599 = vadd.f32 %v8285, %v8559
        %v8600 = vadd.f32 %v8286, %v8561
        %v8601 = vadd.f32 %v8287, %v8564
        %v8602 = vadd.f32 %v8288, %v8566
        %v8603 = vadd.f32 %v8289, %v8569
        %v8604 = vadd.f32 %v8290, %v8571
        %v8605 = vld [vmem:[%s3570] sm:$0xf]
        %v8606 = vld [vmem:[%s3570 + $0x4] sm:$0xf]
        %v8607 = vld [vmem:[%s3570 + $0x8] sm:$0x1]
        %v8608 = vld [vmem:[%s3570 + $0xc] sm:$0xf]
        %v8609 = vld [vmem:[%s3570 + $0x10] sm:$0xf]
        %v8610 = vld [vmem:[%s3570 + $0x14] sm:$0x1]
        %v8611 = vld [vmem:[%s3570 + $0x18] sm:$0xf]
        %v8612 = vld [vmem:[%s3570 + $0x1c] sm:$0xf]
        %v8613 = vld [vmem:[%s3570 + $0x20] sm:$0x1]
        %v8614 = vld [vmem:[%s3570 + $0x24] sm:$0xf]
        %v8615 = vld [vmem:[%s3570 + $0x28] sm:$0xf]
        %v8616 = vld [vmem:[%s3570 + $0x2c] sm:$0x1]
        %v8617 = vld [vmem:[%s3570 + $0x30] sm:$0xf]
        %v8618 = vld [vmem:[%s3570 + $0x34] sm:$0xf]
        %v8619 = vld [vmem:[%s3570 + $0x38] sm:$0x1]
        %v8620 = vld [vmem:[%s3570 + $0x3c] sm:$0xf]
        %v8621 = vld [vmem:[%s3570 + $0x40] sm:$0xf]
        %v8622 = vld [vmem:[%s3570 + $0x44] sm:$0x1]
        %v8623 = vld [vmem:[%s3570 + $0x48] sm:$0xf]
        %v8624 = vld [vmem:[%s3570 + $0x4c] sm:$0xf]
        %v8625 = vld [vmem:[%s3570 + $0x50] sm:$0x1]
        %v8626 = vld [vmem:[%s3570 + $0x54] sm:$0xf]
        %v8627 = vld [vmem:[%s3570 + $0x58] sm:$0xf]
        %v8628 = vld [vmem:[%s3570 + $0x5c] sm:$0x1]
        %v8629 = vld [vmem:[%s3570 + $0x60] sm:$0xf]
        %v8630 = vld [vmem:[%s3570 + $0x64] sm:$0xf]
        %v8631 = vld [vmem:[%s3570 + $0x68] sm:$0x1]
        %v8632 = vld [vmem:[%s3570 + $0x6c] sm:$0xf]
        %v8633 = vld [vmem:[%s3570 + $0x70] sm:$0xf]
        %v8634 = vld [vmem:[%s3570 + $0x74] sm:$0x1]
        %v8635 = vld [vmem:[%s3570 + $0x78] sm:$0xf]
        %v8636 = vld [vmem:[%s3570 + $0x7c] sm:$0xf]
        %v8637 = vld [vmem:[%s3570 + $0x80] sm:$0x1]
        %v8638 = vld [vmem:[%s3570 + $0x84] sm:$0xf]
        %v8639 = vld [vmem:[%s3570 + $0x88] sm:$0xf]
        %v8640 = vld [vmem:[%s3570 + $0x8c] sm:$0x1]
        %v8641 = vld [vmem:[%s3570 + $0x90] sm:$0xf]
        %v8642 = vld [vmem:[%s3570 + $0x94] sm:$0xf]
        %v8643 = vld [vmem:[%s3570 + $0x98] sm:$0x1]
        %v8644 = vld [vmem:[%s3570 + $0x9c] sm:$0xf]
        %v8645 = vld [vmem:[%s3570 + $0xa0] sm:$0xf]
        %v8646 = vld [vmem:[%s3570 + $0xa4] sm:$0x1]
        %v8647 = vld [vmem:[%s3570 + $0xa8] sm:$0xf]
        %v8648 = vld [vmem:[%s3570 + $0xac] sm:$0xf]
        %v8649 = vld [vmem:[%s3570 + $0xb0] sm:$0x1]
        %v8650 = vld [vmem:[%s3570 + $0xb4] sm:$0xf]
        %v8651 = vld [vmem:[%s3570 + $0xb8] sm:$0xf]
        %v8652 = vld [vmem:[%s3570 + $0xbc] sm:$0x1]
        %v8654 = vshrl.u32 %v8605, 16
        %v8656 = vrot.slane %v8654, 4
        %v8657 = vshll.u32 %v8605, 16
        %v8659 = vrot.slane %v8657, 5
        %v8660 = vor.u32 %v8656, %v8659
        %v8661 = vrot.slane %v8660, 4
        %v8663 = vshll.u32 %v8606, 16
        %v8665 = vrot.slane %v8663, 5
        %v8666 = vsel %vm867, %v8661, %v8665
        %v8667 = vshrl.u32 %v8606, 16
        %v8669 = vrot.slane %v8667, 4
        %v8670 = vor.u32 %v8669, %v8665
        %v8671 = vrot.slane %v8670, 4
        %v8673 = vshll.u32 %v8607, 16
        %v8675 = vrot.slane %v8673, 5
        %v8676 = vsel %vm867, %v8671, %v8675
        %v8678 = vshrl.u32 %v8608, 16
        %v8680 = vrot.slane %v8678, 4
        %v8681 = vshll.u32 %v8608, 16
        %v8683 = vrot.slane %v8681, 5
        %v8684 = vor.u32 %v8680, %v8683
        %v8685 = vrot.slane %v8684, 4
        %v8687 = vshll.u32 %v8609, 16
        %v8689 = vrot.slane %v8687, 5
        %v8690 = vsel %vm867, %v8685, %v8689
        %v8691 = vshrl.u32 %v8609, 16
        %v8693 = vrot.slane %v8691, 4
        %v8694 = vor.u32 %v8693, %v8689
        %v8695 = vrot.slane %v8694, 4
        %v8697 = vshll.u32 %v8610, 16
        %v8699 = vrot.slane %v8697, 5
        %v8700 = vsel %vm867, %v8695, %v8699
        %v8702 = vshrl.u32 %v8611, 16
        %v8704 = vrot.slane %v8702, 4
        %v8705 = vshll.u32 %v8611, 16
        %v8707 = vrot.slane %v8705, 5
        %v8708 = vor.u32 %v8704, %v8707
        %v8709 = vrot.slane %v8708, 4
        %v8711 = vshll.u32 %v8612, 16
        %v8713 = vrot.slane %v8711, 5
        %v8714 = vsel %vm867, %v8709, %v8713
        %v8715 = vshrl.u32 %v8612, 16
        %v8717 = vrot.slane %v8715, 4
        %v8718 = vor.u32 %v8717, %v8713
        %v8719 = vrot.slane %v8718, 4
        %v8721 = vshll.u32 %v8613, 16
        %v8723 = vrot.slane %v8721, 5
        %v8724 = vsel %vm867, %v8719, %v8723
        %v8726 = vshrl.u32 %v8614, 16
        %v8728 = vrot.slane %v8726, 4
        %v8729 = vshll.u32 %v8614, 16
        %v8731 = vrot.slane %v8729, 5
        %v8732 = vor.u32 %v8728, %v8731
        %v8733 = vrot.slane %v8732, 4
        %v8735 = vshll.u32 %v8615, 16
        %v8737 = vrot.slane %v8735, 5
        %v8738 = vsel %vm867, %v8733, %v8737
        %v8739 = vshrl.u32 %v8615, 16
        %v8741 = vrot.slane %v8739, 4
        %v8742 = vor.u32 %v8741, %v8737
        %v8743 = vrot.slane %v8742, 4
        %v8745 = vshll.u32 %v8616, 16
        %v8747 = vrot.slane %v8745, 5
        %v8748 = vsel %vm867, %v8743, %v8747
        %v8750 = vshrl.u32 %v8617, 16
        %v8752 = vrot.slane %v8750, 4
        %v8753 = vshll.u32 %v8617, 16
        %v8755 = vrot.slane %v8753, 5
        %v8756 = vor.u32 %v8752, %v8755
        %v8757 = vrot.slane %v8756, 4
        %v8759 = vshll.u32 %v8618, 16
        %v8761 = vrot.slane %v8759, 5
        %v8762 = vsel %vm867, %v8757, %v8761
        %v8763 = vshrl.u32 %v8618, 16
        %v8765 = vrot.slane %v8763, 4
        %v8766 = vor.u32 %v8765, %v8761
        %v8767 = vrot.slane %v8766, 4
        %v8769 = vshll.u32 %v8619, 16
        %v8771 = vrot.slane %v8769, 5
        %v8772 = vsel %vm867, %v8767, %v8771
        %v8774 = vshrl.u32 %v8620, 16
        %v8776 = vrot.slane %v8774, 4
        %v8777 = vshll.u32 %v8620, 16
        %v8779 = vrot.slane %v8777, 5
        %v8780 = vor.u32 %v8776, %v8779
        %v8781 = vrot.slane %v8780, 4
        %v8783 = vshll.u32 %v8621, 16
        %v8785 = vrot.slane %v8783, 5
        %v8786 = vsel %vm867, %v8781, %v8785
        %v8787 = vshrl.u32 %v8621, 16
        %v8789 = vrot.slane %v8787, 4
        %v8790 = vor.u32 %v8789, %v8785
        %v8791 = vrot.slane %v8790, 4
        %v8793 = vshll.u32 %v8622, 16
        %v8795 = vrot.slane %v8793, 5
        %v8796 = vsel %vm867, %v8791, %v8795
        %v8798 = vshrl.u32 %v8623, 16
        %v8800 = vrot.slane %v8798, 4
        %v8801 = vshll.u32 %v8623, 16
        %v8803 = vrot.slane %v8801, 5
        %v8804 = vor.u32 %v8800, %v8803
        %v8805 = vrot.slane %v8804, 4
        %v8807 = vshll.u32 %v8624, 16
        %v8809 = vrot.slane %v8807, 5
        %v8810 = vsel %vm867, %v8805, %v8809
        %v8811 = vshrl.u32 %v8624, 16
        %v8813 = vrot.slane %v8811, 4
        %v8814 = vor.u32 %v8813, %v8809
        %v8815 = vrot.slane %v8814, 4
        %v8817 = vshll.u32 %v8625, 16
        %v8819 = vrot.slane %v8817, 5
        %v8820 = vsel %vm867, %v8815, %v8819
        %v8822 = vshrl.u32 %v8626, 16
        %v8824 = vrot.slane %v8822, 4
        %v8825 = vshll.u32 %v8626, 16
        %v8827 = vrot.slane %v8825, 5
        %v8828 = vor.u32 %v8824, %v8827
        %v8829 = vrot.slane %v8828, 4
        %v8831 = vshll.u32 %v8627, 16
        %v8833 = vrot.slane %v8831, 5
        %v8834 = vsel %vm867, %v8829, %v8833
        %v8835 = vshrl.u32 %v8627, 16
        %v8837 = vrot.slane %v8835, 4
        %v8838 = vor.u32 %v8837, %v8833
        %v8839 = vrot.slane %v8838, 4
        %v8841 = vshll.u32 %v8628, 16
        %v8843 = vrot.slane %v8841, 5
        %v8844 = vsel %vm867, %v8839, %v8843
        %v8846 = vshrl.u32 %v8629, 16
        %v8848 = vrot.slane %v8846, 4
        %v8849 = vshll.u32 %v8629, 16
        %v8851 = vrot.slane %v8849, 5
        %v8852 = vor.u32 %v8848, %v8851
        %v8853 = vrot.slane %v8852, 4
        %v8855 = vshll.u32 %v8630, 16
        %v8857 = vrot.slane %v8855, 5
        %v8858 = vsel %vm867, %v8853, %v8857
        %v8859 = vshrl.u32 %v8630, 16
        %v8861 = vrot.slane %v8859, 4
        %v8862 = vor.u32 %v8861, %v8857
        %v8863 = vrot.slane %v8862, 4
        %v8865 = vshll.u32 %v8631, 16
        %v8867 = vrot.slane %v8865, 5
        %v8868 = vsel %vm867, %v8863, %v8867
        %v8870 = vshrl.u32 %v8632, 16
        %v8872 = vrot.slane %v8870, 4
        %v8873 = vshll.u32 %v8632, 16
        %v8875 = vrot.slane %v8873, 5
        %v8876 = vor.u32 %v8872, %v8875
        %v8877 = vrot.slane %v8876, 4
        %v8879 = vshll.u32 %v8633, 16
        %v8881 = vrot.slane %v8879, 5
        %v8882 = vsel %vm867, %v8877, %v8881
        %v8883 = vshrl.u32 %v8633, 16
        %v8885 = vrot.slane %v8883, 4
        %v8886 = vor.u32 %v8885, %v8881
        %v8887 = vrot.slane %v8886, 4
        %v8889 = vshll.u32 %v8634, 16
        %v8891 = vrot.slane %v8889, 5
        %v8892 = vsel %vm867, %v8887, %v8891
        %v8894 = vshrl.u32 %v8635, 16
        %v8896 = vrot.slane %v8894, 4
        %v8897 = vshll.u32 %v8635, 16
        %v8899 = vrot.slane %v8897, 5
        %v8900 = vor.u32 %v8896, %v8899
        %v8901 = vrot.slane %v8900, 4
        %v8903 = vshll.u32 %v8636, 16
        %v8905 = vrot.slane %v8903, 5
        %v8906 = vsel %vm867, %v8901, %v8905
        %v8907 = vshrl.u32 %v8636, 16
        %v8909 = vrot.slane %v8907, 4
        %v8910 = vor.u32 %v8909, %v8905
        %v8911 = vrot.slane %v8910, 4
        %v8913 = vshll.u32 %v8637, 16
        %v8915 = vrot.slane %v8913, 5
        %v8916 = vsel %vm867, %v8911, %v8915
        %v8918 = vshrl.u32 %v8638, 16
        %v8920 = vrot.slane %v8918, 4
        %v8921 = vshll.u32 %v8638, 16
        %v8923 = vrot.slane %v8921, 5
        %v8924 = vor.u32 %v8920, %v8923
        %v8925 = vrot.slane %v8924, 4
        %v8927 = vshll.u32 %v8639, 16
        %v8929 = vrot.slane %v8927, 5
        %v8930 = vsel %vm867, %v8925, %v8929
        %v8931 = vshrl.u32 %v8639, 16
        %v8933 = vrot.slane %v8931, 4
        %v8934 = vor.u32 %v8933, %v8929
        %v8935 = vrot.slane %v8934, 4
        %v8937 = vshll.u32 %v8640, 16
        %v8939 = vrot.slane %v8937, 5
        %v8940 = vsel %vm867, %v8935, %v8939
        %v8942 = vshrl.u32 %v8641, 16
        %v8944 = vrot.slane %v8942, 4
        %v8945 = vshll.u32 %v8641, 16
        %v8947 = vrot.slane %v8945, 5
        %v8948 = vor.u32 %v8944, %v8947
        %v8949 = vrot.slane %v8948, 4
        %v8951 = vshll.u32 %v8642, 16
        %v8953 = vrot.slane %v8951, 5
        %v8954 = vsel %vm867, %v8949, %v8953
        %v8955 = vshrl.u32 %v8642, 16
        %v8957 = vrot.slane %v8955, 4
        %v8958 = vor.u32 %v8957, %v8953
        %v8959 = vrot.slane %v8958, 4
        %v8961 = vshll.u32 %v8643, 16
        %v8963 = vrot.slane %v8961, 5
        %v8964 = vsel %vm867, %v8959, %v8963
        %v8966 = vshrl.u32 %v8644, 16
        %v8968 = vrot.slane %v8966, 4
        %v8969 = vshll.u32 %v8644, 16
        %v8971 = vrot.slane %v8969, 5
        %v8972 = vor.u32 %v8968, %v8971
        %v8973 = vrot.slane %v8972, 4
        %v8975 = vshll.u32 %v8645, 16
        %v8977 = vrot.slane %v8975, 5
        %v8978 = vsel %vm867, %v8973, %v8977
        %v8979 = vshrl.u32 %v8645, 16
        %v8981 = vrot.slane %v8979, 4
        %v8982 = vor.u32 %v8981, %v8977
        %v8983 = vrot.slane %v8982, 4
        %v8985 = vshll.u32 %v8646, 16
        %v8987 = vrot.slane %v8985, 5
        %v8988 = vsel %vm867, %v8983, %v8987
        %v8990 = vshrl.u32 %v8647, 16
        %v8992 = vrot.slane %v8990, 4
        %v8993 = vshll.u32 %v8647, 16
        %v8995 = vrot.slane %v8993, 5
        %v8996 = vor.u32 %v8992, %v8995
        %v8997 = vrot.slane %v8996, 4
        %v8999 = vshll.u32 %v8648, 16
        %v9001 = vrot.slane %v8999, 5
        %v9002 = vsel %vm867, %v8997, %v9001
        %v9003 = vshrl.u32 %v8648, 16
        %v9005 = vrot.slane %v9003, 4
        %v9006 = vor.u32 %v9005, %v9001
        %v9007 = vrot.slane %v9006, 4
        %v9009 = vshll.u32 %v8649, 16
        %v9011 = vrot.slane %v9009, 5
        %v9012 = vsel %vm867, %v9007, %v9011
        %v9014 = vshrl.u32 %v8650, 16
        %v9016 = vrot.slane %v9014, 4
        %v9017 = vshll.u32 %v8650, 16
        %v9019 = vrot.slane %v9017, 5
        %v9020 = vor.u32 %v9016, %v9019
        %v9021 = vrot.slane %v9020, 4
        %v9023 = vshll.u32 %v8651, 16
        %v9025 = vrot.slane %v9023, 5
        %v9026 = vsel %vm867, %v9021, %v9025
        %v9027 = vshrl.u32 %v8651, 16
        %v9029 = vrot.slane %v9027, 4
        %v9030 = vor.u32 %v9029, %v9025
        %v9031 = vrot.slane %v9030, 4
        %v9033 = vshll.u32 %v8652, 16
        %v9035 = vrot.slane %v9033, 5
        %v9036 = vsel %vm867, %v9031, %v9035
        %s9037 = scalar_lea.vmem [#allocation3], 448
        %v9038 = vld [vmem:[%s9037] sm:$0xf]
        %v9039 = vld [vmem:[%s9037 + $0x4] sm:$0xf]
        %v9040 = vld [vmem:[%s9037 + $0x8] sm:$0xf]
        %v9041 = vld [vmem:[%s9037 + $0xc] sm:$0xf]
        %v9042 = vld [vmem:[%s9037 + $0x10] sm:$0xf]
        %v9043 = vld [vmem:[%s9037 + $0x14] sm:$0xf]
        %v9044 = vld [vmem:[%s9037 + $0x18] sm:$0xf]
        %v9045 = vld [vmem:[%s9037 + $0x1c] sm:$0xf]
        %v9046 = vld [vmem:[%s9037 + $0x20] sm:$0xf]
        %v9047 = vld [vmem:[%s9037 + $0x24] sm:$0xf]
        %v9048 = vld [vmem:[%s9037 + $0x28] sm:$0xf]
        %v9049 = vld [vmem:[%s9037 + $0x2c] sm:$0xf]
        %v9050 = vld [vmem:[%s9037 + $0x30] sm:$0xf]
        %v9051 = vld [vmem:[%s9037 + $0x34] sm:$0xf]
        %v9052 = vld [vmem:[%s9037 + $0x38] sm:$0xf]
        %v9053 = vld [vmem:[%s9037 + $0x3c] sm:$0xf]
        %v9054 = vunpack.c.l.b16 %v8666
        %v9055 = vunpack.c.l.b16 %v8676
        %v9056 = vunpack.c.l.b16 %v8690
        %v9057 = vunpack.c.l.b16 %v8700
        %v9058 = vunpack.c.l.b16 %v8714
        %v9059 = vunpack.c.l.b16 %v8724
        %v9060 = vunpack.c.l.b16 %v8738
        %v9061 = vunpack.c.l.b16 %v8748
        %v9062 = vunpack.c.l.b16 %v8762
        %v9063 = vunpack.c.l.b16 %v8772
        %v9064 = vunpack.c.l.b16 %v8786
        %v9065 = vunpack.c.l.b16 %v8796
        %v9066 = vunpack.c.l.b16 %v8810
        %v9067 = vunpack.c.l.b16 %v8820
        %v9068 = vunpack.c.l.b16 %v8834
        %v9069 = vunpack.c.l.b16 %v8844
        %v9070 = vunpack.c.l.b16 %v8858
        %v9071 = vunpack.c.l.b16 %v8868
        %v9072 = vunpack.c.l.b16 %v8882
        %v9073 = vunpack.c.l.b16 %v8892
        %v9074 = vunpack.c.l.b16 %v8906
        %v9075 = vunpack.c.l.b16 %v8916
        %v9076 = vunpack.c.l.b16 %v8930
        %v9077 = vunpack.c.l.b16 %v8940
        %v9078 = vunpack.c.l.b16 %v8954
        %v9079 = vunpack.c.l.b16 %v8964
        %v9080 = vunpack.c.l.b16 %v8978
        %v9081 = vunpack.c.l.b16 %v8988
        %v9082 = vunpack.c.l.b16 %v9002
        %v9083 = vunpack.c.l.b16 %v9012
        %v9084 = vunpack.c.l.b16 %v9026
        %v9085 = vunpack.c.l.b16 %v9036
        %v9086 = vpack.c.b16 %v9055, %v9054
        %v9087 = vpack.c.b16 %v9057, %v9056
        %v9088 = vpack.c.b16 %v9059, %v9058
        %v9089 = vpack.c.b16 %v9061, %v9060
        %v9090 = vpack.c.b16 %v9063, %v9062
        %v9091 = vpack.c.b16 %v9065, %v9064
        %v9092 = vpack.c.b16 %v9067, %v9066
        %v9093 = vpack.c.b16 %v9069, %v9068
        %v9094 = vpack.c.b16 %v9071, %v9070
        %v9095 = vpack.c.b16 %v9073, %v9072
        %v9096 = vpack.c.b16 %v9075, %v9074
        %v9097 = vpack.c.b16 %v9077, %v9076
        %v9098 = vpack.c.b16 %v9079, %v9078
        %v9099 = vpack.c.b16 %v9081, %v9080
        %v9100 = vpack.c.b16 %v9083, %v9082
        %v9101 = vpack.c.b16 %v9085, %v9084
        %v9134 = vunpack.c.l.b16 %v9038
        %v9135 = vunpack.c.l.b16 %v9039
        %v9136 = vunpack.c.l.b16 %v9040
        %v9137 = vunpack.c.l.b16 %v9041
        %v9138 = vunpack.c.l.b16 %v9042
        %v9139 = vunpack.c.l.b16 %v9043
        %v9140 = vunpack.c.l.b16 %v9044
        %v9141 = vunpack.c.l.b16 %v9045
        %v9142 = vunpack.c.l.b16 %v9046
        %v9143 = vunpack.c.l.b16 %v9047
        %v9144 = vunpack.c.l.b16 %v9048
        %v9145 = vunpack.c.l.b16 %v9049
        %v9146 = vunpack.c.l.b16 %v9050
        %v9147 = vunpack.c.l.b16 %v9051
        %v9148 = vunpack.c.l.b16 %v9052
        %v9149 = vunpack.c.l.b16 %v9053
        %v9150 = vpack.c.b16 %v9135, %v9134
        %v9151 = vpack.c.b16 %v9137, %v9136
        %v9152 = vpack.c.b16 %v9139, %v9138
        %v9153 = vpack.c.b16 %v9141, %v9140
        %v9154 = vpack.c.b16 %v9143, %v9142
        %v9155 = vpack.c.b16 %v9145, %v9144
        %v9156 = vpack.c.b16 %v9147, %v9146
        %v9157 = vpack.c.b16 %v9149, %v9148
        %9166 = vmatpush.bf16.msra.mxu0 %v9157
        %9167 = vmatpush.bf16.msra.mxu0 %v9156
        %9168 = vmatpush.bf16.msra.mxu0 %v9155
        %9169 = vmatpush.bf16.msra.mxu0 %v9154
        %9170 = vmatpush.bf16.msra.mxu0 %v9153
        %9171 = vmatpush.bf16.msra.mxu0 %v9152
        %9172 = vmatpush.bf16.msra.mxu0 %v9151
        %9173 = vmatpush.bf16.msra.mxu0 %v9150
        %9174 = vmatmul.bf16.gmra.mxu0 %v9086
        %v9175 = vpop.f32.mrf.mxu0
        %v9176 = vadd.f32 0.0, %v9175
        %v9177 = vpop.f32.mrf.mxu0
        %v9178 = vadd.f32 0.0, %v9177
        %9179 = vmatmul.bf16.gmra.mxu0 %v9087
        %v9180 = vpop.f32.mrf.mxu0
        %v9181 = vadd.f32 0.0, %v9180
        %v9182 = vpop.f32.mrf.mxu0
        %v9183 = vadd.f32 0.0, %v9182
        %9184 = vmatmul.bf16.gmra.mxu0 %v9088
        %v9185 = vpop.f32.mrf.mxu0
        %v9186 = vadd.f32 0.0, %v9185
        %v9187 = vpop.f32.mrf.mxu0
        %v9188 = vadd.f32 0.0, %v9187
        %9189 = vmatmul.bf16.gmra.mxu0 %v9089
        %v9190 = vpop.f32.mrf.mxu0
        %v9191 = vadd.f32 0.0, %v9190
        %v9192 = vpop.f32.mrf.mxu0
        %v9193 = vadd.f32 0.0, %v9192
        %9194 = vmatmul.bf16.gmra.mxu0 %v9090
        %v9195 = vpop.f32.mrf.mxu0
        %v9196 = vadd.f32 0.0, %v9195
        %v9197 = vpop.f32.mrf.mxu0
        %v9198 = vadd.f32 0.0, %v9197
        %9199 = vmatmul.bf16.gmra.mxu0 %v9091
        %v9200 = vpop.f32.mrf.mxu0
        %v9201 = vadd.f32 0.0, %v9200
        %v9202 = vpop.f32.mrf.mxu0
        %v9203 = vadd.f32 0.0, %v9202
        %9204 = vmatmul.bf16.gmra.mxu0 %v9092
        %v9205 = vpop.f32.mrf.mxu0
        %v9206 = vadd.f32 0.0, %v9205
        %v9207 = vpop.f32.mrf.mxu0
        %v9208 = vadd.f32 0.0, %v9207
        %9209 = vmatmul.bf16.gmra.mxu0 %v9093
        %v9210 = vpop.f32.mrf.mxu0
        %v9211 = vadd.f32 0.0, %v9210
        %v9212 = vpop.f32.mrf.mxu0
        %v9213 = vadd.f32 0.0, %v9212
        %9214 = vmatmul.bf16.gmra.mxu0 %v9094
        %v9215 = vpop.f32.mrf.mxu0
        %v9216 = vadd.f32 0.0, %v9215
        %v9217 = vpop.f32.mrf.mxu0
        %v9218 = vadd.f32 0.0, %v9217
        %9219 = vmatmul.bf16.gmra.mxu0 %v9095
        %v9220 = vpop.f32.mrf.mxu0
        %v9221 = vadd.f32 0.0, %v9220
        %v9222 = vpop.f32.mrf.mxu0
        %v9223 = vadd.f32 0.0, %v9222
        %9224 = vmatmul.bf16.gmra.mxu0 %v9096
        %v9225 = vpop.f32.mrf.mxu0
        %v9226 = vadd.f32 0.0, %v9225
        %v9227 = vpop.f32.mrf.mxu0
        %v9228 = vadd.f32 0.0, %v9227
        %9229 = vmatmul.bf16.gmra.mxu0 %v9097
        %v9230 = vpop.f32.mrf.mxu0
        %v9231 = vadd.f32 0.0, %v9230
        %v9232 = vpop.f32.mrf.mxu0
        %v9233 = vadd.f32 0.0, %v9232
        %9234 = vmatmul.bf16.gmra.mxu0 %v9098
        %v9235 = vpop.f32.mrf.mxu0
        %v9236 = vadd.f32 0.0, %v9235
        %v9237 = vpop.f32.mrf.mxu0
        %v9238 = vadd.f32 0.0, %v9237
        %9239 = vmatmul.bf16.gmra.mxu0 %v9099
        %v9240 = vpop.f32.mrf.mxu0
        %v9241 = vadd.f32 0.0, %v9240
        %v9242 = vpop.f32.mrf.mxu0
        %v9243 = vadd.f32 0.0, %v9242
        %9244 = vmatmul.bf16.gmra.mxu0 %v9100
        %v9245 = vpop.f32.mrf.mxu0
        %v9246 = vadd.f32 0.0, %v9245
        %v9247 = vpop.f32.mrf.mxu0
        %v9248 = vadd.f32 0.0, %v9247
        %9249 = vmatmul.bf16.gmra.mxu0 %v9101
        %v9250 = vpop.f32.mrf.mxu0
        %v9251 = vadd.f32 0.0, %v9250
        %v9252 = vpop.f32.mrf.mxu0
        %v9253 = vadd.f32 0.0, %v9252
        %9254 = vdwg.mxu0
        %v9255 = vadd.f32 %v8573, %v9176
        %v9256 = vadd.f32 %v8574, %v9178
        %v9257 = vadd.f32 %v8575, %v9181
        %v9258 = vadd.f32 %v8576, %v9183
        %v9259 = vadd.f32 %v8577, %v9186
        %v9260 = vadd.f32 %v8578, %v9188
        %v9261 = vadd.f32 %v8579, %v9191
        %v9262 = vadd.f32 %v8580, %v9193
        %v9263 = vadd.f32 %v8581, %v9196
        %v9264 = vadd.f32 %v8582, %v9198
        %v9265 = vadd.f32 %v8583, %v9201
        %v9266 = vadd.f32 %v8584, %v9203
        %v9267 = vadd.f32 %v8585, %v9206
        %v9268 = vadd.f32 %v8586, %v9208
        %v9269 = vadd.f32 %v8587, %v9211
        %v9270 = vadd.f32 %v8588, %v9213
        %v9271 = vadd.f32 %v8589, %v9216
        %v9272 = vadd.f32 %v8590, %v9218
        %v9273 = vadd.f32 %v8591, %v9221
        %v9274 = vadd.f32 %v8592, %v9223
        %v9275 = vadd.f32 %v8593, %v9226
        %v9276 = vadd.f32 %v8594, %v9228
        %v9277 = vadd.f32 %v8595, %v9231
        %v9278 = vadd.f32 %v8596, %v9233
        %v9279 = vadd.f32 %v8597, %v9236
        %v9280 = vadd.f32 %v8598, %v9238
        %v9281 = vadd.f32 %v8599, %v9241
        %v9282 = vadd.f32 %v8600, %v9243
        %v9283 = vadd.f32 %v8601, %v9246
        %v9284 = vadd.f32 %v8602, %v9248
        %v9285 = vadd.f32 %v8603, %v9251
        %v9286 = vadd.f32 %v8604, %v9253
        %v9287 = vld [vmem:[%s3570] sm:$0xe]
        %v9288 = vld [vmem:[%s3570 + $0xc] sm:$0xe]
        %v9289 = vld [vmem:[%s3570 + $0x18] sm:$0xe]
        %v9290 = vld [vmem:[%s3570 + $0x24] sm:$0xe]
        %v9291 = vld [vmem:[%s3570 + $0x30] sm:$0xe]
        %v9292 = vld [vmem:[%s3570 + $0x3c] sm:$0xe]
        %v9293 = vld [vmem:[%s3570 + $0x48] sm:$0xe]
        %v9294 = vld [vmem:[%s3570 + $0x54] sm:$0xe]
        %v9295 = vld [vmem:[%s3570 + $0x60] sm:$0xe]
        %v9296 = vld [vmem:[%s3570 + $0x6c] sm:$0xe]
        %v9297 = vld [vmem:[%s3570 + $0x78] sm:$0xe]
        %v9298 = vld [vmem:[%s3570 + $0x84] sm:$0xe]
        %v9299 = vld [vmem:[%s3570 + $0x90] sm:$0xe]
        %v9300 = vld [vmem:[%s3570 + $0x9c] sm:$0xe]
        %v9301 = vld [vmem:[%s3570 + $0xa8] sm:$0xe]
        %v9302 = vld [vmem:[%s3570 + $0xb4] sm:$0xe]
        %v9351 = vrot.slane %v9287, 5
        %v9352 = vrot.slane %v9351, 4
        %v9353 = vrot.slane %v8606, 5
        %v9354 = vsel %vm1753, %v9352, %v9353
        %v9355 = vrot.slane %v9353, 4
        %v9356 = vrot.slane %v8607, 5
        %v9357 = vsel %vm1753, %v9355, %v9356
        %v9358 = vrot.slane %v9288, 5
        %v9359 = vrot.slane %v9358, 4
        %v9360 = vrot.slane %v8609, 5
        %v9361 = vsel %vm1753, %v9359, %v9360
        %v9362 = vrot.slane %v9360, 4
        %v9363 = vrot.slane %v8610, 5
        %v9364 = vsel %vm1753, %v9362, %v9363
        %v9365 = vrot.slane %v9289, 5
        %v9366 = vrot.slane %v9365, 4
        %v9367 = vrot.slane %v8612, 5
        %v9368 = vsel %vm1753, %v9366, %v9367
        %v9369 = vrot.slane %v9367, 4
        %v9370 = vrot.slane %v8613, 5
        %v9371 = vsel %vm1753, %v9369, %v9370
        %v9372 = vrot.slane %v9290, 5
        %v9373 = vrot.slane %v9372, 4
        %v9374 = vrot.slane %v8615, 5
        %v9375 = vsel %vm1753, %v9373, %v9374
        %v9376 = vrot.slane %v9374, 4
        %v9377 = vrot.slane %v8616, 5
        %v9378 = vsel %vm1753, %v9376, %v9377
        %v9379 = vrot.slane %v9291, 5
        %v9380 = vrot.slane %v9379, 4
        %v9381 = vrot.slane %v8618, 5
        %v9382 = vsel %vm1753, %v9380, %v9381
        %v9383 = vrot.slane %v9381, 4
        %v9384 = vrot.slane %v8619, 5
        %v9385 = vsel %vm1753, %v9383, %v9384
        %v9386 = vrot.slane %v9292, 5
        %v9387 = vrot.slane %v9386, 4
        %v9388 = vrot.slane %v8621, 5
        %v9389 = vsel %vm1753, %v9387, %v9388
        %v9390 = vrot.slane %v9388, 4
        %v9391 = vrot.slane %v8622, 5
        %v9392 = vsel %vm1753, %v9390, %v9391
        %v9393 = vrot.slane %v9293, 5
        %v9394 = vrot.slane %v9393, 4
        %v9395 = vrot.slane %v8624, 5
        %v9396 = vsel %vm1753, %v9394, %v9395
        %v9397 = vrot.slane %v9395, 4
        %v9398 = vrot.slane %v8625, 5
        %v9399 = vsel %vm1753, %v9397, %v9398
        %v9400 = vrot.slane %v9294, 5
        %v9401 = vrot.slane %v9400, 4
        %v9402 = vrot.slane %v8627, 5
        %v9403 = vsel %vm1753, %v9401, %v9402
        %v9404 = vrot.slane %v9402, 4
        %v9405 = vrot.slane %v8628, 5
        %v9406 = vsel %vm1753, %v9404, %v9405
        %v9407 = vrot.slane %v9295, 5
        %v9408 = vrot.slane %v9407, 4
        %v9409 = vrot.slane %v8630, 5
        %v9410 = vsel %vm1753, %v9408, %v9409
        %v9411 = vrot.slane %v9409, 4
        %v9412 = vrot.slane %v8631, 5
        %v9413 = vsel %vm1753, %v9411, %v9412
        %v9414 = vrot.slane %v9296, 5
        %v9415 = vrot.slane %v9414, 4
        %v9416 = vrot.slane %v8633, 5
        %v9417 = vsel %vm1753, %v9415, %v9416
        %v9418 = vrot.slane %v9416, 4
        %v9419 = vrot.slane %v8634, 5
        %v9420 = vsel %vm1753, %v9418, %v9419
        %v9421 = vrot.slane %v9297, 5
        %v9422 = vrot.slane %v9421, 4
        %v9423 = vrot.slane %v8636, 5
        %v9424 = vsel %vm1753, %v9422, %v9423
        %v9425 = vrot.slane %v9423, 4
        %v9426 = vrot.slane %v8637, 5
        %v9427 = vsel %vm1753, %v9425, %v9426
        %v9428 = vrot.slane %v9298, 5
        %v9429 = vrot.slane %v9428, 4
        %v9430 = vrot.slane %v8639, 5
        %v9431 = vsel %vm1753, %v9429, %v9430
        %v9432 = vrot.slane %v9430, 4
        %v9433 = vrot.slane %v8640, 5
        %v9434 = vsel %vm1753, %v9432, %v9433
        %v9435 = vrot.slane %v9299, 5
        %v9436 = vrot.slane %v9435, 4
        %v9437 = vrot.slane %v8642, 5
        %v9438 = vsel %vm1753, %v9436, %v9437
        %v9439 = vrot.slane %v9437, 4
        %v9440 = vrot.slane %v8643, 5
        %v9441 = vsel %vm1753, %v9439, %v9440
        %v9442 = vrot.slane %v9300, 5
        %v9443 = vrot.slane %v9442, 4
        %v9444 = vrot.slane %v8645, 5
        %v9445 = vsel %vm1753, %v9443, %v9444
        %v9446 = vrot.slane %v9444, 4
        %v9447 = vrot.slane %v8646, 5
        %v9448 = vsel %vm1753, %v9446, %v9447
        %v9449 = vrot.slane %v9301, 5
        %v9450 = vrot.slane %v9449, 4
        %v9451 = vrot.slane %v8648, 5
        %v9452 = vsel %vm1753, %v9450, %v9451
        %v9453 = vrot.slane %v9451, 4
        %v9454 = vrot.slane %v8649, 5
        %v9455 = vsel %vm1753, %v9453, %v9454
        %v9456 = vrot.slane %v9302, 5
        %v9457 = vrot.slane %v9456, 4
        %v9458 = vrot.slane %v8651, 5
        %v9459 = vsel %vm1753, %v9457, %v9458
        %v9460 = vrot.slane %v9458, 4
        %v9461 = vrot.slane %v8652, 5
        %v9462 = vsel %vm1753, %v9460, %v9461
        %s9463 = scalar_lea.vmem [#allocation3], 512
        %v9464 = vld [vmem:[%s9463] sm:$0xf]
        %v9465 = vld [vmem:[%s9463 + $0x4] sm:$0xf]
        %v9466 = vld [vmem:[%s9463 + $0x8] sm:$0xf]
        %v9467 = vld [vmem:[%s9463 + $0xc] sm:$0xf]
        %v9468 = vld [vmem:[%s9463 + $0x10] sm:$0xf]
        %v9469 = vld [vmem:[%s9463 + $0x14] sm:$0xf]
        %v9470 = vld [vmem:[%s9463 + $0x18] sm:$0xf]
        %v9471 = vld [vmem:[%s9463 + $0x1c] sm:$0xf]
        %v9472 = vld [vmem:[%s9463 + $0x20] sm:$0xf]
        %v9473 = vld [vmem:[%s9463 + $0x24] sm:$0xf]
        %v9474 = vld [vmem:[%s9463 + $0x28] sm:$0xf]
        %v9475 = vld [vmem:[%s9463 + $0x2c] sm:$0xf]
        %v9476 = vld [vmem:[%s9463 + $0x30] sm:$0xf]
        %v9477 = vld [vmem:[%s9463 + $0x34] sm:$0xf]
        %v9478 = vld [vmem:[%s9463 + $0x38] sm:$0xf]
        %v9479 = vld [vmem:[%s9463 + $0x3c] sm:$0xf]
        %v9480 = vunpack.c.l.b16 %v9354
        %v9481 = vunpack.c.l.b16 %v9357
        %v9482 = vunpack.c.l.b16 %v9361
        %v9483 = vunpack.c.l.b16 %v9364
        %v9484 = vunpack.c.l.b16 %v9368
        %v9485 = vunpack.c.l.b16 %v9371
        %v9486 = vunpack.c.l.b16 %v9375
        %v9487 = vunpack.c.l.b16 %v9378
        %v9488 = vunpack.c.l.b16 %v9382
        %v9489 = vunpack.c.l.b16 %v9385
        %v9490 = vunpack.c.l.b16 %v9389
        %v9491 = vunpack.c.l.b16 %v9392
        %v9492 = vunpack.c.l.b16 %v9396
        %v9493 = vunpack.c.l.b16 %v9399
        %v9494 = vunpack.c.l.b16 %v9403
        %v9495 = vunpack.c.l.b16 %v9406
        %v9496 = vunpack.c.l.b16 %v9410
        %v9497 = vunpack.c.l.b16 %v9413
        %v9498 = vunpack.c.l.b16 %v9417
        %v9499 = vunpack.c.l.b16 %v9420
        %v9500 = vunpack.c.l.b16 %v9424
        %v9501 = vunpack.c.l.b16 %v9427
        %v9502 = vunpack.c.l.b16 %v9431
        %v9503 = vunpack.c.l.b16 %v9434
        %v9504 = vunpack.c.l.b16 %v9438
        %v9505 = vunpack.c.l.b16 %v9441
        %v9506 = vunpack.c.l.b16 %v9445
        %v9507 = vunpack.c.l.b16 %v9448
        %v9508 = vunpack.c.l.b16 %v9452
        %v9509 = vunpack.c.l.b16 %v9455
        %v9510 = vunpack.c.l.b16 %v9459
        %v9511 = vunpack.c.l.b16 %v9462
        %v9512 = vpack.c.b16 %v9481, %v9480
        %v9513 = vpack.c.b16 %v9483, %v9482
        %v9514 = vpack.c.b16 %v9485, %v9484
        %v9515 = vpack.c.b16 %v9487, %v9486
        %v9516 = vpack.c.b16 %v9489, %v9488
        %v9517 = vpack.c.b16 %v9491, %v9490
        %v9518 = vpack.c.b16 %v9493, %v9492
        %v9519 = vpack.c.b16 %v9495, %v9494
        %v9520 = vpack.c.b16 %v9497, %v9496
        %v9521 = vpack.c.b16 %v9499, %v9498
        %v9522 = vpack.c.b16 %v9501, %v9500
        %v9523 = vpack.c.b16 %v9503, %v9502
        %v9524 = vpack.c.b16 %v9505, %v9504
        %v9525 = vpack.c.b16 %v9507, %v9506
        %v9526 = vpack.c.b16 %v9509, %v9508
        %v9527 = vpack.c.b16 %v9511, %v9510
        %v9560 = vunpack.c.l.b16 %v9464
        %v9561 = vunpack.c.l.b16 %v9465
        %v9562 = vunpack.c.l.b16 %v9466
        %v9563 = vunpack.c.l.b16 %v9467
        %v9564 = vunpack.c.l.b16 %v9468
        %v9565 = vunpack.c.l.b16 %v9469
        %v9566 = vunpack.c.l.b16 %v9470
        %v9567 = vunpack.c.l.b16 %v9471
        %v9568 = vunpack.c.l.b16 %v9472
        %v9569 = vunpack.c.l.b16 %v9473
        %v9570 = vunpack.c.l.b16 %v9474
        %v9571 = vunpack.c.l.b16 %v9475
        %v9572 = vunpack.c.l.b16 %v9476
        %v9573 = vunpack.c.l.b16 %v9477
        %v9574 = vunpack.c.l.b16 %v9478
        %v9575 = vunpack.c.l.b16 %v9479
        %v9576 = vpack.c.b16 %v9561, %v9560
        %v9577 = vpack.c.b16 %v9563, %v9562
        %v9578 = vpack.c.b16 %v9565, %v9564
        %v9579 = vpack.c.b16 %v9567, %v9566
        %v9580 = vpack.c.b16 %v9569, %v9568
        %v9581 = vpack.c.b16 %v9571, %v9570
        %v9582 = vpack.c.b16 %v9573, %v9572
        %v9583 = vpack.c.b16 %v9575, %v9574
        %9592 = vmatpush.bf16.msra.mxu0 %v9583
        %9593 = vmatpush.bf16.msra.mxu0 %v9582
        %9594 = vmatpush.bf16.msra.mxu0 %v9581
        %9595 = vmatpush.bf16.msra.mxu0 %v9580
        %9596 = vmatpush.bf16.msra.mxu0 %v9579
        %9597 = vmatpush.bf16.msra.mxu0 %v9578
        %9598 = vmatpush.bf16.msra.mxu0 %v9577
        %9599 = vmatpush.bf16.msra.mxu0 %v9576
        %9600 = vmatmul.bf16.gmra.mxu0 %v9512
        %v9601 = vpop.f32.mrf.mxu0
        %v9602 = vadd.f32 0.0, %v9601
        %v9603 = vpop.f32.mrf.mxu0
        %v9604 = vadd.f32 0.0, %v9603
        %9605 = vmatmul.bf16.gmra.mxu0 %v9513
        %v9606 = vpop.f32.mrf.mxu0
        %v9607 = vadd.f32 0.0, %v9606
        %v9608 = vpop.f32.mrf.mxu0
        %v9609 = vadd.f32 0.0, %v9608
        %9610 = vmatmul.bf16.gmra.mxu0 %v9514
        %v9611 = vpop.f32.mrf.mxu0
        %v9612 = vadd.f32 0.0, %v9611
        %v9613 = vpop.f32.mrf.mxu0
        %v9614 = vadd.f32 0.0, %v9613
        %9615 = vmatmul.bf16.gmra.mxu0 %v9515
        %v9616 = vpop.f32.mrf.mxu0
        %v9617 = vadd.f32 0.0, %v9616
        %v9618 = vpop.f32.mrf.mxu0
        %v9619 = vadd.f32 0.0, %v9618
        %9620 = vmatmul.bf16.gmra.mxu0 %v9516
        %v9621 = vpop.f32.mrf.mxu0
        %v9622 = vadd.f32 0.0, %v9621
        %v9623 = vpop.f32.mrf.mxu0
        %v9624 = vadd.f32 0.0, %v9623
        %9625 = vmatmul.bf16.gmra.mxu0 %v9517
        %v9626 = vpop.f32.mrf.mxu0
        %v9627 = vadd.f32 0.0, %v9626
        %v9628 = vpop.f32.mrf.mxu0
        %v9629 = vadd.f32 0.0, %v9628
        %9630 = vmatmul.bf16.gmra.mxu0 %v9518
        %v9631 = vpop.f32.mrf.mxu0
        %v9632 = vadd.f32 0.0, %v9631
        %v9633 = vpop.f32.mrf.mxu0
        %v9634 = vadd.f32 0.0, %v9633
        %9635 = vmatmul.bf16.gmra.mxu0 %v9519
        %v9636 = vpop.f32.mrf.mxu0
        %v9637 = vadd.f32 0.0, %v9636
        %v9638 = vpop.f32.mrf.mxu0
        %v9639 = vadd.f32 0.0, %v9638
        %9640 = vmatmul.bf16.gmra.mxu0 %v9520
        %v9641 = vpop.f32.mrf.mxu0
        %v9642 = vadd.f32 0.0, %v9641
        %v9643 = vpop.f32.mrf.mxu0
        %v9644 = vadd.f32 0.0, %v9643
        %9645 = vmatmul.bf16.gmra.mxu0 %v9521
        %v9646 = vpop.f32.mrf.mxu0
        %v9647 = vadd.f32 0.0, %v9646
        %v9648 = vpop.f32.mrf.mxu0
        %v9649 = vadd.f32 0.0, %v9648
        %9650 = vmatmul.bf16.gmra.mxu0 %v9522
        %v9651 = vpop.f32.mrf.mxu0
        %v9652 = vadd.f32 0.0, %v9651
        %v9653 = vpop.f32.mrf.mxu0
        %v9654 = vadd.f32 0.0, %v9653
        %9655 = vmatmul.bf16.gmra.mxu0 %v9523
        %v9656 = vpop.f32.mrf.mxu0
        %v9657 = vadd.f32 0.0, %v9656
        %v9658 = vpop.f32.mrf.mxu0
        %v9659 = vadd.f32 0.0, %v9658
        %9660 = vmatmul.bf16.gmra.mxu0 %v9524
        %v9661 = vpop.f32.mrf.mxu0
        %v9662 = vadd.f32 0.0, %v9661
        %v9663 = vpop.f32.mrf.mxu0
        %v9664 = vadd.f32 0.0, %v9663
        %9665 = vmatmul.bf16.gmra.mxu0 %v9525
        %v9666 = vpop.f32.mrf.mxu0
        %v9667 = vadd.f32 0.0, %v9666
        %v9668 = vpop.f32.mrf.mxu0
        %v9669 = vadd.f32 0.0, %v9668
        %9670 = vmatmul.bf16.gmra.mxu0 %v9526
        %v9671 = vpop.f32.mrf.mxu0
        %v9672 = vadd.f32 0.0, %v9671
        %v9673 = vpop.f32.mrf.mxu0
        %v9674 = vadd.f32 0.0, %v9673
        %9675 = vmatmul.bf16.gmra.mxu0 %v9527
        %v9676 = vpop.f32.mrf.mxu0
        %v9677 = vadd.f32 0.0, %v9676
        %v9678 = vpop.f32.mrf.mxu0
        %v9679 = vadd.f32 0.0, %v9678
        %9680 = vdwg.mxu0
        %v9681 = vadd.f32 %v9255, %v9602
        %v9682 = vadd.f32 %v9256, %v9604
        %v9683 = vadd.f32 %v9257, %v9607
        %v9684 = vadd.f32 %v9258, %v9609
        %v9685 = vadd.f32 %v9259, %v9612
        %v9686 = vadd.f32 %v9260, %v9614
        %v9687 = vadd.f32 %v9261, %v9617
        %v9688 = vadd.f32 %v9262, %v9619
        %v9689 = vadd.f32 %v9263, %v9622
        %v9690 = vadd.f32 %v9264, %v9624
        %v9691 = vadd.f32 %v9265, %v9627
        %v9692 = vadd.f32 %v9266, %v9629
        %v9693 = vadd.f32 %v9267, %v9632
        %v9694 = vadd.f32 %v9268, %v9634
        %v9695 = vadd.f32 %v9269, %v9637
        %v9696 = vadd.f32 %v9270, %v9639
        %v9697 = vadd.f32 %v9271, %v9642
        %v9698 = vadd.f32 %v9272, %v9644
        %v9699 = vadd.f32 %v9273, %v9647
        %v9700 = vadd.f32 %v9274, %v9649
        %v9701 = vadd.f32 %v9275, %v9652
        %v9702 = vadd.f32 %v9276, %v9654
        %v9703 = vadd.f32 %v9277, %v9657
        %v9704 = vadd.f32 %v9278, %v9659
        %v9705 = vadd.f32 %v9279, %v9662
        %v9706 = vadd.f32 %v9280, %v9664
        %v9707 = vadd.f32 %v9281, %v9667
        %v9708 = vadd.f32 %v9282, %v9669
        %v9709 = vadd.f32 %v9283, %v9672
        %v9710 = vadd.f32 %v9284, %v9674
        %v9711 = vadd.f32 %v9285, %v9677
        %v9712 = vadd.f32 %v9286, %v9679
        %v9713 = vld [vmem:[%s4] sm:$0x1]
        %v9715 = vperm.slane %v9713, 0
        %v9717 = vadd.f32 %v9681, %v9715
        %v9718 = vadd.f32 %v9682, %v9715
        %v9719 = vadd.f32 %v9683, %v9715
        %v9720 = vadd.f32 %v9684, %v9715
        %v9721 = vadd.f32 %v9685, %v9715
        %v9722 = vadd.f32 %v9686, %v9715
        %v9723 = vadd.f32 %v9687, %v9715
        %v9724 = vadd.f32 %v9688, %v9715
        %v9725 = vadd.f32 %v9689, %v9715
        %v9726 = vadd.f32 %v9690, %v9715
        %v9727 = vadd.f32 %v9691, %v9715
        %v9728 = vadd.f32 %v9692, %v9715
        %v9729 = vadd.f32 %v9693, %v9715
        %v9730 = vadd.f32 %v9694, %v9715
        %v9731 = vadd.f32 %v9695, %v9715
        %v9732 = vadd.f32 %v9696, %v9715
        %v9733 = vadd.f32 %v9697, %v9715
        %v9734 = vadd.f32 %v9698, %v9715
        %v9735 = vadd.f32 %v9699, %v9715
        %v9736 = vadd.f32 %v9700, %v9715
        %v9737 = vadd.f32 %v9701, %v9715
        %v9738 = vadd.f32 %v9702, %v9715
        %v9739 = vadd.f32 %v9703, %v9715
        %v9740 = vadd.f32 %v9704, %v9715
        %v9741 = vadd.f32 %v9705, %v9715
        %v9742 = vadd.f32 %v9706, %v9715
        %v9743 = vadd.f32 %v9707, %v9715
        %v9744 = vadd.f32 %v9708, %v9715
        %v9745 = vadd.f32 %v9709, %v9715
        %v9746 = vadd.f32 %v9710, %v9715
        %v9747 = vadd.f32 %v9711, %v9715
        %v9748 = vadd.f32 %v9712, %v9715
        %v9749 = vadd.f32 %v9717, %v5061
        %v9750 = vadd.f32 %v9718, %v5062
        %v9751 = vadd.f32 %v9719, %v5063
        %v9752 = vadd.f32 %v9720, %v5064
        %v9753 = vadd.f32 %v9721, %v5065
        %v9754 = vadd.f32 %v9722, %v5066
        %v9755 = vadd.f32 %v9723, %v5067
        %v9756 = vadd.f32 %v9724, %v5068
        %v9757 = vadd.f32 %v9725, %v5069
        %v9758 = vadd.f32 %v9726, %v5070
        %v9759 = vadd.f32 %v9727, %v5071
        %v9760 = vadd.f32 %v9728, %v5072
        %v9761 = vadd.f32 %v9729, %v5073
        %v9762 = vadd.f32 %v9730, %v5074
        %v9763 = vadd.f32 %v9731, %v5075
        %v9764 = vadd.f32 %v9732, %v5076
        %v9765 = vadd.f32 %v9733, %v5077
        %v9766 = vadd.f32 %v9734, %v5078
        %v9767 = vadd.f32 %v9735, %v5079
        %v9768 = vadd.f32 %v9736, %v5080
        %v9769 = vadd.f32 %v9737, %v5081
        %v9770 = vadd.f32 %v9738, %v5082
        %v9771 = vadd.f32 %v9739, %v5083
        %v9772 = vadd.f32 %v9740, %v5084
        %v9773 = vadd.f32 %v9741, %v5085
        %v9774 = vadd.f32 %v9742, %v5086
        %v9775 = vadd.f32 %v9743, %v5087
        %v9776 = vadd.f32 %v9744, %v5088
        %v9777 = vadd.f32 %v9745, %v5089
        %v9778 = vadd.f32 %v9746, %v5090
        %v9779 = vadd.f32 %v9747, %v5091
        %v9780 = vadd.f32 %v9748, %v5092
        %v9781 = vmax.f32 %v9749, 0.0
        %v9782 = vmax.f32 %v9750, 0.0
        %v9783 = vmax.f32 %v9751, 0.0
        %v9784 = vmax.f32 %v9752, 0.0
        %v9785 = vmax.f32 %v9753, 0.0
        %v9786 = vmax.f32 %v9754, 0.0
        %v9787 = vmax.f32 %v9755, 0.0
        %v9788 = vmax.f32 %v9756, 0.0
        %v9789 = vmax.f32 %v9757, 0.0
        %v9790 = vmax.f32 %v9758, 0.0
        %v9791 = vmax.f32 %v9759, 0.0
        %v9792 = vmax.f32 %v9760, 0.0
        %v9793 = vmax.f32 %v9761, 0.0
        %v9794 = vmax.f32 %v9762, 0.0
        %v9795 = vmax.f32 %v9763, 0.0
        %v9796 = vmax.f32 %v9764, 0.0
        %v9797 = vmax.f32 %v9765, 0.0
        %v9798 = vmax.f32 %v9766, 0.0
        %v9799 = vmax.f32 %v9767, 0.0
        %v9800 = vmax.f32 %v9768, 0.0
        %v9801 = vmax.f32 %v9769, 0.0
        %v9802 = vmax.f32 %v9770, 0.0
        %v9803 = vmax.f32 %v9771, 0.0
        %v9804 = vmax.f32 %v9772, 0.0
        %v9805 = vmax.f32 %v9773, 0.0
        %v9806 = vmax.f32 %v9774, 0.0
        %v9807 = vmax.f32 %v9775, 0.0
        %v9808 = vmax.f32 %v9776, 0.0
        %v9809 = vmax.f32 %v9777, 0.0
        %v9810 = vmax.f32 %v9778, 0.0
        %v9811 = vmax.f32 %v9779, 0.0
        %v9812 = vmax.f32 %v9780, 0.0
        %9813 = vst [vmem:[%s234] sm:$0xff] %v9781
        %9814 = vst [vmem:[%s234 + $0x8] sm:$0xff] %v9782
        %9815 = vst [vmem:[%s234 + $0x10] sm:$0xff] %v9783
        %9816 = vst [vmem:[%s234 + $0x18] sm:$0xff] %v9784
        %9817 = vst [vmem:[%s234 + $0x20] sm:$0xff] %v9785
        %9818 = vst [vmem:[%s234 + $0x28] sm:$0xff] %v9786
        %9819 = vst [vmem:[%s234 + $0x30] sm:$0xff] %v9787
        %9820 = vst [vmem:[%s234 + $0x38] sm:$0xff] %v9788
        %9821 = vst [vmem:[%s234 + $0x40] sm:$0xff] %v9789
        %9822 = vst [vmem:[%s234 + $0x48] sm:$0xff] %v9790
        %9823 = vst [vmem:[%s234 + $0x50] sm:$0xff] %v9791
        %9824 = vst [vmem:[%s234 + $0x58] sm:$0xff] %v9792
        %9825 = vst [vmem:[%s234 + $0x60] sm:$0xff] %v9793
        %9826 = vst [vmem:[%s234 + $0x68] sm:$0xff] %v9794
        %9827 = vst [vmem:[%s234 + $0x70] sm:$0xff] %v9795
        %9828 = vst [vmem:[%s234 + $0x78] sm:$0xff] %v9796
        %9829 = vst [vmem:[%s234 + $0x80] sm:$0xff] %v9797
        %9830 = vst [vmem:[%s234 + $0x88] sm:$0xff] %v9798
        %9831 = vst [vmem:[%s234 + $0x90] sm:$0xff] %v9799
        %9832 = vst [vmem:[%s234 + $0x98] sm:$0xff] %v9800
        %9833 = vst [vmem:[%s234 + $0xa0] sm:$0xff] %v9801
        %9834 = vst [vmem:[%s234 + $0xa8] sm:$0xff] %v9802
        %9835 = vst [vmem:[%s234 + $0xb0] sm:$0xff] %v9803
        %9836 = vst [vmem:[%s234 + $0xb8] sm:$0xff] %v9804
        %9837 = vst [vmem:[%s234 + $0xc0] sm:$0xff] %v9805
        %9838 = vst [vmem:[%s234 + $0xc8] sm:$0xff] %v9806
        %9839 = vst [vmem:[%s234 + $0xd0] sm:$0xff] %v9807
        %9840 = vst [vmem:[%s234 + $0xd8] sm:$0xff] %v9808
        %9841 = vst [vmem:[%s234 + $0xe0] sm:$0xff] %v9809
        %9842 = vst [vmem:[%s234 + $0xe8] sm:$0xff] %v9810
        %9843 = vst [vmem:[%s234 + $0xf0] sm:$0xff] %v9811
        %9844 = vst [vmem:[%s234 + $0xf8] sm:$0xff] %v9812
        %s9845 = sand.u32 %s138, 1
        %s9846 = scalar_lea.sflag [#allocation5], %s9845
        %s9847 = sand.u32 %s138, 1
        %s9848 = smul.addr %s9847, 256
        %s9849 = scalar_lea.vmem [#allocation6], %s9848
        // Predicated region
        $region45: #{tpu_custom_call.1} parent=39 // pred_check
          %p9850 = pneg %p148
        $region46: #{tpu_custom_call.1} parent=39 // pred_check_branch
          %9852 = sbr.rel (%p9850) target = $region48
        $region47: #{tpu_custom_call.1} parent=39 // pred_region
          %9854 = vsyncadd %s9846, 0
          %s9855 = smul.addr %s20, 32
          %s9856 = smul.addr %s9855, 8
          %s9857 = scalar_lea.hbm %s5, %s9856
          %s9858 = sshll.u32 %s9849, 4
          %s9859 = int_to_ptr.vmem [resolvable:$true] %s9858
          %s9860 = sshll.u32 %s9857, 4
          %s9861 = int_to_ptr.hbm [resolvable:$true] %s9860
          %9866 = dma.vmem_to_hbm [thread:$0]  %s9859, 4096, %s9861, %s9846, 128, 128, 8
        $region48: #{tpu_custom_call.1} parent=39 // pred_fallthru
          _
      $region40: #{tpu_custom_call.1} parent=5 // pred_fallthru
        _
      %p9867 = scmp.le.s32.totalorder 2, %s15
      // Predicated region
      $region49: #{tpu_custom_call.1} parent=5 // pred_check
        %p9868 = pneg %p9867
      $region50: #{tpu_custom_call.1} parent=5 // pred_check_branch
        %9870 = sbr.rel (%p9868) target = $region52
      $region51: #{tpu_custom_call.1} parent=5 // pred_region
        %s9871 = ssub.s32 %s15, 2
        // Predicated region
        $region53: #{tpu_custom_call.1} parent=51 // pred_check
          %p9872 = pneg %p154
        $region54: #{tpu_custom_call.1} parent=51 // pred_check_branch
          %9874 = sbr.rel (%p9872) target = $region56
        $region55: #{tpu_custom_call.1} parent=51 // pred_region
          %s9875 = sand.u32 %s139, 1
          %s9876 = scalar_lea.sflag [#allocation5], %s9875
          %s9877 = sand.u32 %s139, 1
          %s9878 = smul.addr %s9877, 256
          %s9879 = scalar_lea.vmem [#allocation6], %s9878
          %9881 = dma.done %s9876, 4096
        $region56: #{tpu_custom_call.1} parent=51 // pred_fallthru
          _
      $region52: #{tpu_custom_call.1} parent=5 // pred_fallthru
        _
    $region6: #{tpu_custom_call.1} parent=1 // loop_footer
      %s19 = sadd.s32 1, %s15
    $region7: #{tpu_custom_call.1} parent=1 // loop_footer_branch
      %14 = sbr.rel target = $region3
    $region8: #{tpu_custom_call.1} parent=1 // loop_exit
      _
    %9882 = vsyncpa [#allocation4], 1
    %s9883 = scalar_lea.sflag [#allocation4], 1
    %9884 = vsyncpa %s9883, 1
    %9885 = vsyncpa [#allocation5], 1
    %s9886 = scalar_lea.sflag [#allocation5], 1
    %9887 = vsyncpa %s9886, 1

</llo_original>
